<compile_context>
chip_gen: v7x
topology: tpu7x:2x2x1
jax: 0.10.0
libtpu: 0.0.40
codegen_flags: <defaults>
</compile_context>

<pallas_src>
import jax
import jax.numpy as jnp
from jax import lax
from jax.experimental import pallas as pl
from jax.experimental.pallas import tpu as pltpu


def _round_up(n, m):
    return (n + m - 1) // m * m


# ------------------------------ Pallas kernel ------------------------------ #

def siamese_lstm_kernel(x_ref, lens_ref, wih_ref, b_ref, whh_f_ref, whh_b_ref,
                        w1a_ref, w1b_ref, w1c_ref, w1d_ref, b1_ref,
                        w2_ref, b2_ref, out_ref, gi_ref):
    """Fused bidirectional length-masked LSTM + Siamese MLP head.

    x_ref:    (S*B2, E)    bf16  time-major embedded tokens (time outer),
                                 rows [0, Bp) of each time step = q1,
                                 rows [Bp, 2Bp) = q2
    lens_ref: (B2, 1)      int32 per-row valid lengths
    wih_ref:  (E, 8*Hp)    bf16  [W_ih_fwd | W_ih_bwd], gate-padded to Hp
    b_ref:    (1, 8*Hp)    f32   biases, gate-padded
    whh_*:    (Hp, 4*Hp)   bf16  recurrent weights, gate-padded
    w1*_ref:  (Hp, Lp)     bf16  linear1 split per (question, direction)
    b1_ref:   (1, Lp)      f32
    w2_ref:   (Lp, 128)    bf16  linear2, column 0 real, rest zero
    b2_ref:   (1, 128)     f32
    out_ref:  (Bp, 128)    f32   column 0 = (out12 + out21) / 2
    gi_ref:   (S*B2, 8*Hp) f32   scratch: hoisted input projection
    """
    SB, E = x_ref.shape
    B2 = lens_ref.shape[0]
    S = SB // B2
    Bp = B2 // 2
    Hp = whh_f_ref.shape[0]
    H4 = 4 * Hp

    # Hoisted input projection: one large MXU matmul + one bias broadcast,
    # instead of S tiny matmuls on the sequential dependent chain.
    gi_ref[...] = (jnp.dot(x_ref[...], wih_ref[...],
                           preferred_element_type=jnp.float32) + b_ref[...])

    lens = lens_ref[...]                                     # hoisted (B2, 1)

    def lstm_cell(g, h, c, valid):
        # Hp is a multiple of 128 -> every gate slice is lane-dense.
        i_g = jax.nn.sigmoid(g[:, 0 * Hp:1 * Hp])
        f_g = jax.nn.sigmoid(g[:, 1 * Hp:2 * Hp])
        g_g = jnp.tanh(g[:, 2 * Hp:3 * Hp])
        o_g = jax.nn.sigmoid(g[:, 3 * Hp:4 * Hp])
        c_new = f_g * c + i_g * g_g
        h_new = o_g * jnp.tanh(c_new)
        h = jnp.where(valid, h_new, h)
        c = jnp.where(valid, c_new, c)
        return h, c

    def step(t, carry):
        hf, cf, hb, cb = carry                               # each (B2, Hp) f32
        tr = S - 1 - t
        row_f = pl.multiple_of(t * B2, 8)
        row_b = pl.multiple_of(tr * B2, 8)
        gi_f = gi_ref[pl.ds(row_f, B2), pl.ds(0, H4)]        # (B2, 4Hp)
        gi_b = gi_ref[pl.ds(row_b, B2), pl.ds(H4, H4)]       # (B2, 4Hp)
        # Two independent recurrent matmuls (fwd/bwd interleaved -> ILP).
        g_f = gi_f + jnp.dot(hf.astype(jnp.bfloat16), whh_f_ref[...],
                             preferred_element_type=jnp.float32)
        g_b = gi_b + jnp.dot(hb.astype(jnp.bfloat16), whh_b_ref[...],
                             preferred_element_type=jnp.float32)
        hf, cf = lstm_cell(g_f, hf, cf, t < lens)
        hb, cb = lstm_cell(g_b, hb, cb, tr < lens)
        return hf, cf, hb, cb

    z = jnp.zeros((B2, Hp), jnp.float32)
    hf, _, hb, _ = lax.fori_loop(0, S, step, (z, z, z, z), unroll=True)

    # ---- fused Siamese MLP head (split weights, no concatenation) ----------
    # Bp is a multiple of 8 -> these row slices are sublane-aligned.
    hf1 = hf[:Bp].astype(jnp.bfloat16)
    hf2 = hf[Bp:].astype(jnp.bfloat16)
    hb1 = hb[:Bp].astype(jnp.bfloat16)
    hb2 = hb[Bp:].astype(jnp.bfloat16)

    def dot(a, w):
        return jnp.dot(a, w, preferred_element_type=jnp.float32)

    w1a, w1b = w1a_ref[...], w1b_ref[...]
    w1c, w1d = w1c_ref[...], w1d_ref[...]
    b1 = b1_ref[...]
    pre12 = dot(hf1, w1a) + dot(hb1, w1b) + dot(hf2, w1c) + dot(hb2, w1d) + b1
    pre21 = dot(hf2, w1a) + dot(hb2, w1b) + dot(hf1, w1c) + dot(hb1, w1d) + b1
    # linear2 is linear -> averaging relu outputs first then one matmul is
    # exactly (linear2(relu12) + linear2(relu21)) / 2.
    h1 = (jnp.maximum(pre12, 0.0) + jnp.maximum(pre21, 0.0)) * 0.5
    out_ref[...] = dot(h1.astype(jnp.bfloat16), w2_ref[...]) + b2_ref[...]


# ------------------------------- wrapper ----------------------------------- #

_VMEM = pl.BlockSpec(memory_space=pltpu.MemorySpace.VMEM)


def _pad_gate_cols(w, H, Hp):
    """(..., 4H) -> (..., 4Hp); gate g occupies cols [g*Hp, g*Hp + H), zeros elsewhere."""
    if H == Hp:
        return w
    pad = [(0, 0)] * (w.ndim - 1) + [(0, Hp - H)]
    segs = [jnp.pad(w[..., g * H:(g + 1) * H], pad) for g in range(4)]
    return jnp.concatenate(segs, axis=-1)


def siamese_lstm_forward(tokens, params):
    B, two_s = tokens.shape
    S = two_s // 2
    emb = params["embedding"]
    E = emb.shape[1]
    H = params["whh_f"].shape[0]
    L = params["w1"].shape[1]
    Hp = _round_up(H, 128)          # pad hidden so every gate is 128-lane dense
    Lp = _round_up(L, 128)          # pad linear-hid so head matmuls are lane dense
    Bp = _round_up(B, 8)            # per-question batch padded to sublane multiple
    B2 = 2 * Bp

    # ---- stack q1 and q2 along batch -> single pallas_call, 2*Bp rows ------
    q1 = tokens[:, :S]
    q2 = tokens[:, S:]
    if Bp != B:
        padr = ((0, Bp - B), (0, 0))
        q1 = jnp.pad(q1, padr)      # padded rows are all-zero tokens
        q2 = jnp.pad(q2, padr)
    q = jnp.concatenate([q1, q2], axis=0)                          # (2*Bp, S)

    # per-row length = max nonzero index + 1 (all-zero rows -> 0 -> h stays 0;
    # PyTorch's pack_padded_sequence would raise on that degenerate input)
    idx = jnp.arange(S, dtype=jnp.int32)
    lens = jnp.max(jnp.where(q != 0, idx[None, :] + 1, 0), axis=1)
    lens = lens.astype(jnp.int32).reshape(B2, 1)

    # embedding gather, directly time-major (glue); flatten to (S*B2, E)
    x = emb.astype(jnp.bfloat16)[q.T].reshape(S * B2, E)

    # ---- gate-pad / fuse LSTM weights, bf16 for MXU -------------------------
    wih = jnp.concatenate(
        [_pad_gate_cols(params["wih_f"], H, Hp),
         _pad_gate_cols(params["wih_b"], H, Hp)], axis=-1).astype(jnp.bfloat16)
    b = jnp.concatenate(
        [_pad_gate_cols(params["b_f"], H, Hp),
         _pad_gate_cols(params["b_b"], H, Hp)], axis=-1).astype(jnp.float32)

    def pad_whh(w):
        w = jnp.pad(w, ((0, Hp - H), (0, 0)))
        return _pad_gate_cols(w, H, Hp).astype(jnp.bfloat16)

    whh_f = pad_whh(params["whh_f"])
    whh_b = pad_whh(params["whh_b"])

    # ---- head weights: split w1 (4H, L) into per-(question, direction) -----
    # chunks, zero-pad rows to Hp / cols to Lp so no slicing/concat in-kernel.
    w1 = params["w1"]

    def pad_w1(chunk):
        return jnp.pad(chunk, ((0, Hp - H), (0, Lp - L))).astype(jnp.bfloat16)

    w1a = pad_w1(w1[0 * H:1 * H])   # first question, forward hidden
    w1b = pad_w1(w1[1 * H:2 * H])   # first question, backward hidden
    w1c = pad_w1(w1[2 * H:3 * H])   # second question, forward hidden
    w1d = pad_w1(w1[3 * H:4 * H])   # second question, backward hidden
    b1 = jnp.pad(params["b1"], ((0, 0), (0, Lp - L))).astype(jnp.float32)
    # output widened to 128 lanes for a lane-dense final store (col 0 real)
    w2 = jnp.pad(params["w2"], ((0, Lp - L), (0, 127))).astype(jnp.bfloat16)
    b2 = jnp.pad(params["b2"], ((0, 0), (0, 127))).astype(jnp.float32)

    out = pl.pallas_call(
        siamese_lstm_kernel,
        out_shape=jax.ShapeDtypeStruct((Bp, 128), jnp.float32),
        in_specs=[_VMEM] * 13,
        out_specs=_VMEM,
        scratch_shapes=[pltpu.VMEM((S * B2, 8 * Hp), jnp.float32)],
    )(x, lens, wih, b, whh_f, whh_b, w1a, w1b, w1c, w1d, b1, w2, b2)

    return out[:B, :1]                                             # (B, 1)


# ------------------------------ param setup -------------------------------- #

def make_params(key, vocab, emb_dim, hidden, linear_hid):
    ks = jax.random.split(key, 12)
    s = 0.1
    H, E, L = hidden, emb_dim, linear_hid
    return {
        "embedding": jax.random.normal(ks[0], (vocab, E), jnp.float32) * s,
        # forward direction
        "wih_f": jax.random.normal(ks[1], (E, 4 * H), jnp.float32) * s,
        "whh_f": jax.random.normal(ks[2], (H, 4 * H), jnp.float32) * s,
        "b_f":   jax.random.normal(ks[3], (1, 4 * H), jnp.float32) * s,
        # backward direction
        "wih_b": jax.random.normal(ks[4], (E, 4 * H), jnp.float32) * s,
        "whh_b": jax.random.normal(ks[5], (H, 4 * H), jnp.float32) * s,
        "b_b":   jax.random.normal(ks[6], (1, 4 * H), jnp.float32) * s,
        # head: linear1 (2*num_directions*H -> L), linear2 (L -> 1)
        "w1": jax.random.normal(ks[7], (4 * H, L), jnp.float32) * s,
        "b1": jax.random.normal(ks[8], (1, L), jnp.float32) * s,
        "w2": jax.random.normal(ks[9], (L, 1), jnp.float32) * s,
        "b2": jax.random.normal(ks[10], (1, 1), jnp.float32) * s,
    }


if __name__ == "__main__":
    B, S = 4, 10            # batch, per-question sequence length (input is (B, 2*S))
    V, E, H, L = 64, 32, 32, 64

    key = jax.random.PRNGKey(0)
    k_tok, k_len, k_par = jax.random.split(key, 3)

    # build token ids: random ids in [1, V), zero-padded after a random length
    lengths = jax.random.randint(k_len, (B, 2), 3, S + 1)                  # per question
    ids = jax.random.randint(k_tok, (B, 2, S), 1, V)
    pos = jnp.arange(S)[None, None, :]
    ids = jnp.where(pos < lengths[:, :, None], ids, 0)
    tokens = ids.reshape(B, 2 * S).astype(jnp.int32)                       # (B, 2*S)

    params = make_params(k_par, V, E, H, L)

    out = jax.jit(siamese_lstm_forward)(tokens, params)
    out = jax.block_until_ready(out)
    assert out.shape == (B, 1) and bool(jnp.all(jnp.isfinite(out)))
    print("KERNEL_OK")
</pallas_src>

<mosaic_0001>
module attributes {stable_mosaic.version = 11 : i64} {
  func.func @siamese_lstm_kernel(%arg0: memref<160x32xbf16, #tpu.memory_space<vmem>>, %arg1: memref<16x1xi32, #tpu.memory_space<vmem>>, %arg2: memref<32x1024xbf16, #tpu.memory_space<vmem>>, %arg3: memref<1x1024xf32, #tpu.memory_space<vmem>>, %arg4: memref<128x512xbf16, #tpu.memory_space<vmem>>, %arg5: memref<128x512xbf16, #tpu.memory_space<vmem>>, %arg6: memref<128x128xbf16, #tpu.memory_space<vmem>>, %arg7: memref<128x128xbf16, #tpu.memory_space<vmem>>, %arg8: memref<128x128xbf16, #tpu.memory_space<vmem>>, %arg9: memref<128x128xbf16, #tpu.memory_space<vmem>>, %arg10: memref<1x128xf32, #tpu.memory_space<vmem>>, %arg11: memref<128x128xbf16, #tpu.memory_space<vmem>>, %arg12: memref<1x128xf32, #tpu.memory_space<vmem>>, %arg13: memref<8x128xf32, #tpu.memory_space<vmem>>, %arg14: memref<160x1024xf32, #tpu.memory_space<vmem>>) attributes {dimension_semantics = [], scalar_prefetch = 0 : i64, scratch_operands = 1 : i64, tpu.core_type = #tpu.core_type<tc>} {
    %c0 = arith.constant 0 : index
    %c0_0 = arith.constant 0 : index
    %0 = vector.load %arg0[%c0, %c0_0] : memref<160x32xbf16, #tpu.memory_space<vmem>>, vector<160x32xbf16>
    %c0_1 = arith.constant 0 : index
    %c0_2 = arith.constant 0 : index
    %1 = vector.load %arg2[%c0_1, %c0_2] : memref<32x1024xbf16, #tpu.memory_space<vmem>>, vector<32x1024xbf16>
    %cst = arith.constant dense<0.000000e+00> : vector<160x1024xf32>
    %2 = tpu.matmul %0, %1, %cst {dimension_numbers = #tpu.dot_dimension_numbers<[1], [0], [0], [1], [0, 0, 1, 1], [], []>} : vector<160x32xbf16>, vector<32x1024xbf16>, vector<160x1024xf32> -> vector<160x1024xf32>
    %c0_3 = arith.constant 0 : index
    %c0_4 = arith.constant 0 : index
    %3 = vector.load %arg3[%c0_3, %c0_4] : memref<1x1024xf32, #tpu.memory_space<vmem>>, vector<1x1024xf32>
    %4 = vector.broadcast %3 : vector<1x1024xf32> to vector<160x1024xf32>
    %5 = arith.addf %2, %4 : vector<160x1024xf32>
    %c0_5 = arith.constant 0 : index
    %c0_6 = arith.constant 0 : index
    %6 = vector.load %arg14[%c0_5, %c0_6] : memref<160x1024xf32, #tpu.memory_space<vmem>>, vector<160x1024xf32>
    tpu.vector_store %arg14[%c0_5, %c0_6], %5 {strides = array<i32>} : memref<160x1024xf32, #tpu.memory_space<vmem>>, vector<160x1024xf32>,
    %c0_7 = arith.constant 0 : index
    %c0_8 = arith.constant 0 : index
    %7 = vector.load %arg1[%c0_7, %c0_8] : memref<16x1xi32, #tpu.memory_space<vmem>>, vector<16x1xi32>
    %cst_9 = arith.constant 0.000000e+00 : f32
    %8 = vector.broadcast %cst_9 : f32 to vector<16x128xf32>
    %c0_i32 = arith.constant 0 : i32
    %c9_i32 = arith.constant 9 : i32
    %9 = arith.subi %c9_i32, %c0_i32 : i32
    %c16_i32 = arith.constant 16 : i32
    %10 = arith.muli %c0_i32, %c16_i32 : i32
    %11 = tpu.assume_multiple %10, 8 : i32
    %c16_i32_10 = arith.constant 16 : i32
    %12 = arith.muli %9, %c16_i32_10 : i32
    %13 = tpu.assume_multiple %12, 8 : i32
    %14 = arith.index_cast %11 : i32 to index
    %c0_11 = arith.constant 0 : index
    %15 = vector.load %arg14[%14, %c0_11] : memref<160x1024xf32, #tpu.memory_space<vmem>>, vector<16x512xf32>
    %16 = arith.index_cast %13 : i32 to index
    %c512 = arith.constant 512 : index
    %17 = vector.load %arg14[%16, %c512] : memref<160x1024xf32, #tpu.memory_space<vmem>>, vector<16x512xf32>
    %18 = arith.truncf %8 : vector<16x128xf32> to vector<16x128xbf16>
    %c0_12 = arith.constant 0 : index
    %c0_13 = arith.constant 0 : index
    %19 = vector.load %arg4[%c0_12, %c0_13] : memref<128x512xbf16, #tpu.memory_space<vmem>>, vector<128x512xbf16>
    %cst_14 = arith.constant dense<0.000000e+00> : vector<16x512xf32>
    %20 = tpu.matmul %18, %19, %cst_14 {dimension_numbers = #tpu.dot_dimension_numbers<[1], [0], [0], [1], [0, 0, 1, 1], [], []>} : vector<16x128xbf16>, vector<128x512xbf16>, vector<16x512xf32> -> vector<16x512xf32>
    %21 = arith.addf %15, %20 : vector<16x512xf32>
    %22 = arith.truncf %8 : vector<16x128xf32> to vector<16x128xbf16>
    %c0_15 = arith.constant 0 : index
    %c0_16 = arith.constant 0 : index
    %23 = vector.load %arg5[%c0_15, %c0_16] : memref<128x512xbf16, #tpu.memory_space<vmem>>, vector<128x512xbf16>
    %cst_17 = arith.constant dense<0.000000e+00> : vector<16x512xf32>
    %24 = tpu.matmul %22, %23, %cst_17 {dimension_numbers = #tpu.dot_dimension_numbers<[1], [0], [0], [1], [0, 0, 1, 1], [], []>} : vector<16x128xbf16>, vector<128x512xbf16>, vector<16x512xf32> -> vector<16x512xf32>
    %25 = arith.addf %17, %24 : vector<16x512xf32>
    %26 = vector.broadcast %c0_i32 : i32 to vector<16x1xi32>
    %27 = arith.cmpi slt, %26, %7 : vector<16x1xi32>
    %28 = vector.extract_strided_slice %21 {offsets = [0, 0], sizes = [16, 128], strides = [1, 1]} : vector<16x512xf32> to vector<16x128xf32>
    %29 = arith.negf %28 : vector<16x128xf32>
    %30 = math.exp %29 : vector<16x128xf32>
    %cst_18 = arith.constant 1.000000e+00 : f32
    %31 = vector.broadcast %cst_18 : f32 to vector<16x128xf32>
    %32 = arith.addf %31, %30 : vector<16x128xf32>
    %33 = arith.divf %31, %32 : vector<16x128xf32>
    %34 = vector.extract_strided_slice %21 {offsets = [0, 128], sizes = [16, 128], strides = [1, 1]} : vector<16x512xf32> to vector<16x128xf32>
    %35 = arith.negf %34 : vector<16x128xf32>
    %36 = math.exp %35 : vector<16x128xf32>
    %cst_19 = arith.constant 1.000000e+00 : f32
    %37 = vector.broadcast %cst_19 : f32 to vector<16x128xf32>
    %38 = arith.addf %37, %36 : vector<16x128xf32>
    %39 = arith.divf %37, %38 : vector<16x128xf32>
    %40 = vector.extract_strided_slice %21 {offsets = [0, 256], sizes = [16, 128], strides = [1, 1]} : vector<16x512xf32> to vector<16x128xf32>
    %41 = math.tanh %40 : vector<16x128xf32>
    %42 = vector.extract_strided_slice %21 {offsets = [0, 384], sizes = [16, 128], strides = [1, 1]} : vector<16x512xf32> to vector<16x128xf32>
    %43 = arith.negf %42 : vector<16x128xf32>
    %44 = math.exp %43 : vector<16x128xf32>
    %cst_20 = arith.constant 1.000000e+00 : f32
    %45 = vector.broadcast %cst_20 : f32 to vector<16x128xf32>
    %46 = arith.addf %45, %44 : vector<16x128xf32>
    %47 = arith.divf %45, %46 : vector<16x128xf32>
    %48 = arith.mulf %39, %8 : vector<16x128xf32>
    %49 = arith.mulf %33, %41 : vector<16x128xf32>
    %50 = arith.addf %48, %49 : vector<16x128xf32>
    %51 = math.tanh %50 : vector<16x128xf32>
    %52 = arith.mulf %47, %51 : vector<16x128xf32>
    %53 = vector.shape_cast %27 : vector<16x1xi1> to vector<16x1xi1>
    %54 = vector.broadcast %53 : vector<16x1xi1> to vector<16x128xi1>
    %55 = arith.select %54, %52, %8 : vector<16x128xi1>, vector<16x128xf32>
    %56 = vector.shape_cast %27 : vector<16x1xi1> to vector<16x1xi1>
    %57 = vector.broadcast %56 : vector<16x1xi1> to vector<16x128xi1>
    %58 = arith.select %57, %50, %8 : vector<16x128xi1>, vector<16x128xf32>
    %59 = vector.broadcast %9 : i32 to vector<16x1xi32>
    %60 = arith.cmpi slt, %59, %7 : vector<16x1xi32>
    %61 = vector.extract_strided_slice %25 {offsets = [0, 0], sizes = [16, 128], strides = [1, 1]} : vector<16x512xf32> to vector<16x128xf32>
    %62 = arith.negf %61 : vector<16x128xf32>
    %63 = math.exp %62 : vector<16x128xf32>
    %cst_21 = arith.constant 1.000000e+00 : f32
    %64 = vector.broadcast %cst_21 : f32 to vector<16x128xf32>
    %65 = arith.addf %64, %63 : vector<16x128xf32>
    %66 = arith.divf %64, %65 : vector<16x128xf32>
    %67 = vector.extract_strided_slice %25 {offsets = [0, 128], sizes = [16, 128], strides = [1, 1]} : vector<16x512xf32> to vector<16x128xf32>
    %68 = arith.negf %67 : vector<16x128xf32>
    %69 = math.exp %68 : vector<16x128xf32>
    %cst_22 = arith.constant 1.000000e+00 : f32
    %70 = vector.broadcast %cst_22 : f32 to vector<16x128xf32>
    %71 = arith.addf %70, %69 : vector<16x128xf32>
    %72 = arith.divf %70, %71 : vector<16x128xf32>
    %73 = vector.extract_strided_slice %25 {offsets = [0, 256], sizes = [16, 128], strides = [1, 1]} : vector<16x512xf32> to vector<16x128xf32>
    %74 = math.tanh %73 : vector<16x128xf32>
    %75 = vector.extract_strided_slice %25 {offsets = [0, 384], sizes = [16, 128], strides = [1, 1]} : vector<16x512xf32> to vector<16x128xf32>
    %76 = arith.negf %75 : vector<16x128xf32>
    %77 = math.exp %76 : vector<16x128xf32>
    %cst_23 = arith.constant 1.000000e+00 : f32
    %78 = vector.broadcast %cst_23 : f32 to vector<16x128xf32>
    %79 = arith.addf %78, %77 : vector<16x128xf32>
    %80 = arith.divf %78, %79 : vector<16x128xf32>
    %81 = arith.mulf %72, %8 : vector<16x128xf32>
    %82 = arith.mulf %66, %74 : vector<16x128xf32>
    %83 = arith.addf %81, %82 : vector<16x128xf32>
    %84 = math.tanh %83 : vector<16x128xf32>
    %85 = arith.mulf %80, %84 : vector<16x128xf32>
    %86 = vector.shape_cast %60 : vector<16x1xi1> to vector<16x1xi1>
    %87 = vector.broadcast %86 : vector<16x1xi1> to vector<16x128xi1>
    %88 = arith.select %87, %85, %8 : vector<16x128xi1>, vector<16x128xf32>
    %89 = vector.shape_cast %60 : vector<16x1xi1> to vector<16x1xi1>
    %90 = vector.broadcast %89 : vector<16x1xi1> to vector<16x128xi1>
    %91 = arith.select %90, %83, %8 : vector<16x128xi1>, vector<16x128xf32>
    %c1_i32 = arith.constant 1 : i32
    %c9_i32_24 = arith.constant 9 : i32
    %92 = arith.subi %c9_i32_24, %c1_i32 : i32
    %c16_i32_25 = arith.constant 16 : i32
    %93 = arith.muli %c1_i32, %c16_i32_25 : i32
    %94 = tpu.assume_multiple %93, 8 : i32
    %c16_i32_26 = arith.constant 16 : i32
    %95 = arith.muli %92, %c16_i32_26 : i32
    %96 = tpu.assume_multiple %95, 8 : i32
    %97 = arith.index_cast %94 : i32 to index
    %c0_27 = arith.constant 0 : index
    %98 = vector.load %arg14[%97, %c0_27] : memref<160x1024xf32, #tpu.memory_space<vmem>>, vector<16x512xf32>
    %99 = arith.index_cast %96 : i32 to index
    %c512_28 = arith.constant 512 : index
    %100 = vector.load %arg14[%99, %c512_28] : memref<160x1024xf32, #tpu.memory_space<vmem>>, vector<16x512xf32>
    %101 = arith.truncf %55 : vector<16x128xf32> to vector<16x128xbf16>
    %c0_29 = arith.constant 0 : index
    %c0_30 = arith.constant 0 : index
    %102 = vector.load %arg4[%c0_29, %c0_30] : memref<128x512xbf16, #tpu.memory_space<vmem>>, vector<128x512xbf16>
    %cst_31 = arith.constant dense<0.000000e+00> : vector<16x512xf32>
    %103 = tpu.matmul %101, %102, %cst_31 {dimension_numbers = #tpu.dot_dimension_numbers<[1], [0], [0], [1], [0, 0, 1, 1], [], []>} : vector<16x128xbf16>, vector<128x512xbf16>, vector<16x512xf32> -> vector<16x512xf32>
    %104 = arith.addf %98, %103 : vector<16x512xf32>
    %105 = arith.truncf %88 : vector<16x128xf32> to vector<16x128xbf16>
    %c0_32 = arith.constant 0 : index
    %c0_33 = arith.constant 0 : index
    %106 = vector.load %arg5[%c0_32, %c0_33] : memref<128x512xbf16, #tpu.memory_space<vmem>>, vector<128x512xbf16>
    %cst_34 = arith.constant dense<0.000000e+00> : vector<16x512xf32>
    %107 = tpu.matmul %105, %106, %cst_34 {dimension_numbers = #tpu.dot_dimension_numbers<[1], [0], [0], [1], [0, 0, 1, 1], [], []>} : vector<16x128xbf16>, vector<128x512xbf16>, vector<16x512xf32> -> vector<16x512xf32>
    %108 = arith.addf %100, %107 : vector<16x512xf32>
    %109 = vector.broadcast %c1_i32 : i32 to vector<16x1xi32>
    %110 = arith.cmpi slt, %109, %7 : vector<16x1xi32>
    %111 = vector.extract_strided_slice %104 {offsets = [0, 0], sizes = [16, 128], strides = [1, 1]} : vector<16x512xf32> to vector<16x128xf32>
    %112 = arith.negf %111 : vector<16x128xf32>
    %113 = math.exp %112 : vector<16x128xf32>
    %cst_35 = arith.constant 1.000000e+00 : f32
    %114 = vector.broadcast %cst_35 : f32 to vector<16x128xf32>
    %115 = arith.addf %114, %113 : vector<16x128xf32>
    %116 = arith.divf %114, %115 : vector<16x128xf32>
    %117 = vector.extract_strided_slice %104 {offsets = [0, 128], sizes = [16, 128], strides = [1, 1]} : vector<16x512xf32> to vector<16x128xf32>
    %118 = arith.negf %117 : vector<16x128xf32>
    %119 = math.exp %118 : vector<16x128xf32>
    %cst_36 = arith.constant 1.000000e+00 : f32
    %120 = vector.broadcast %cst_36 : f32 to vector<16x128xf32>
    %121 = arith.addf %120, %119 : vector<16x128xf32>
    %122 = arith.divf %120, %121 : vector<16x128xf32>
    %123 = vector.extract_strided_slice %104 {offsets = [0, 256], sizes = [16, 128], strides = [1, 1]} : vector<16x512xf32> to vector<16x128xf32>
    %124 = math.tanh %123 : vector<16x128xf32>
    %125 = vector.extract_strided_slice %104 {offsets = [0, 384], sizes = [16, 128], strides = [1, 1]} : vector<16x512xf32> to vector<16x128xf32>
    %126 = arith.negf %125 : vector<16x128xf32>
    %127 = math.exp %126 : vector<16x128xf32>
    %cst_37 = arith.constant 1.000000e+00 : f32
    %128 = vector.broadcast %cst_37 : f32 to vector<16x128xf32>
    %129 = arith.addf %128, %127 : vector<16x128xf32>
    %130 = arith.divf %128, %129 : vector<16x128xf32>
    %131 = arith.mulf %122, %58 : vector<16x128xf32>
    %132 = arith.mulf %116, %124 : vector<16x128xf32>
    %133 = arith.addf %131, %132 : vector<16x128xf32>
    %134 = math.tanh %133 : vector<16x128xf32>
    %135 = arith.mulf %130, %134 : vector<16x128xf32>
    %136 = vector.shape_cast %110 : vector<16x1xi1> to vector<16x1xi1>
    %137 = vector.broadcast %136 : vector<16x1xi1> to vector<16x128xi1>
    %138 = arith.select %137, %135, %55 : vector<16x128xi1>, vector<16x128xf32>
    %139 = vector.shape_cast %110 : vector<16x1xi1> to vector<16x1xi1>
    %140 = vector.broadcast %139 : vector<16x1xi1> to vector<16x128xi1>
    %141 = arith.select %140, %133, %58 : vector<16x128xi1>, vector<16x128xf32>
    %142 = vector.broadcast %92 : i32 to vector<16x1xi32>
    %143 = arith.cmpi slt, %142, %7 : vector<16x1xi32>
    %144 = vector.extract_strided_slice %108 {offsets = [0, 0], sizes = [16, 128], strides = [1, 1]} : vector<16x512xf32> to vector<16x128xf32>
    %145 = arith.negf %144 : vector<16x128xf32>
    %146 = math.exp %145 : vector<16x128xf32>
    %cst_38 = arith.constant 1.000000e+00 : f32
    %147 = vector.broadcast %cst_38 : f32 to vector<16x128xf32>
    %148 = arith.addf %147, %146 : vector<16x128xf32>
    %149 = arith.divf %147, %148 : vector<16x128xf32>
    %150 = vector.extract_strided_slice %108 {offsets = [0, 128], sizes = [16, 128], strides = [1, 1]} : vector<16x512xf32> to vector<16x128xf32>
    %151 = arith.negf %150 : vector<16x128xf32>
    %152 = math.exp %151 : vector<16x128xf32>
    %cst_39 = arith.constant 1.000000e+00 : f32
    %153 = vector.broadcast %cst_39 : f32 to vector<16x128xf32>
    %154 = arith.addf %153, %152 : vector<16x128xf32>
    %155 = arith.divf %153, %154 : vector<16x128xf32>
    %156 = vector.extract_strided_slice %108 {offsets = [0, 256], sizes = [16, 128], strides = [1, 1]} : vector<16x512xf32> to vector<16x128xf32>
    %157 = math.tanh %156 : vector<16x128xf32>
    %158 = vector.extract_strided_slice %108 {offsets = [0, 384], sizes = [16, 128], strides = [1, 1]} : vector<16x512xf32> to vector<16x128xf32>
    %159 = arith.negf %158 : vector<16x128xf32>
    %160 = math.exp %159 : vector<16x128xf32>
    %cst_40 = arith.constant 1.000000e+00 : f32
    %161 = vector.broadcast %cst_40 : f32 to vector<16x128xf32>
    %162 = arith.addf %161, %160 : vector<16x128xf32>
    %163 = arith.divf %161, %162 : vector<16x128xf32>
    %164 = arith.mulf %155, %91 : vector<16x128xf32>
    %165 = arith.mulf %149, %157 : vector<16x128xf32>
    %166 = arith.addf %164, %165 : vector<16x128xf32>
    %167 = math.tanh %166 : vector<16x128xf32>
    %168 = arith.mulf %163, %167 : vector<16x128xf32>
    %169 = vector.shape_cast %143 : vector<16x1xi1> to vector<16x1xi1>
    %170 = vector.broadcast %169 : vector<16x1xi1> to vector<16x128xi1>
    %171 = arith.select %170, %168, %88 : vector<16x128xi1>, vector<16x128xf32>
    %172 = vector.shape_cast %143 : vector<16x1xi1> to vector<16x1xi1>
    %173 = vector.broadcast %172 : vector<16x1xi1> to vector<16x128xi1>
    %174 = arith.select %173, %166, %91 : vector<16x128xi1>, vector<16x128xf32>
    %c2_i32 = arith.constant 2 : i32
    %c9_i32_41 = arith.constant 9 : i32
    %175 = arith.subi %c9_i32_41, %c2_i32 : i32
    %c16_i32_42 = arith.constant 16 : i32
    %176 = arith.muli %c2_i32, %c16_i32_42 : i32
    %177 = tpu.assume_multiple %176, 8 : i32
    %c16_i32_43 = arith.constant 16 : i32
    %178 = arith.muli %175, %c16_i32_43 : i32
    %179 = tpu.assume_multiple %178, 8 : i32
    %180 = arith.index_cast %177 : i32 to index
    %c0_44 = arith.constant 0 : index
    %181 = vector.load %arg14[%180, %c0_44] : memref<160x1024xf32, #tpu.memory_space<vmem>>, vector<16x512xf32>
    %182 = arith.index_cast %179 : i32 to index
    %c512_45 = arith.constant 512 : index
    %183 = vector.load %arg14[%182, %c512_45] : memref<160x1024xf32, #tpu.memory_space<vmem>>, vector<16x512xf32>
    %184 = arith.truncf %138 : vector<16x128xf32> to vector<16x128xbf16>
    %c0_46 = arith.constant 0 : index
    %c0_47 = arith.constant 0 : index
    %185 = vector.load %arg4[%c0_46, %c0_47] : memref<128x512xbf16, #tpu.memory_space<vmem>>, vector<128x512xbf16>
    %cst_48 = arith.constant dense<0.000000e+00> : vector<16x512xf32>
    %186 = tpu.matmul %184, %185, %cst_48 {dimension_numbers = #tpu.dot_dimension_numbers<[1], [0], [0], [1], [0, 0, 1, 1], [], []>} : vector<16x128xbf16>, vector<128x512xbf16>, vector<16x512xf32> -> vector<16x512xf32>
    %187 = arith.addf %181, %186 : vector<16x512xf32>
    %188 = arith.truncf %171 : vector<16x128xf32> to vector<16x128xbf16>
    %c0_49 = arith.constant 0 : index
    %c0_50 = arith.constant 0 : index
    %189 = vector.load %arg5[%c0_49, %c0_50] : memref<128x512xbf16, #tpu.memory_space<vmem>>, vector<128x512xbf16>
    %cst_51 = arith.constant dense<0.000000e+00> : vector<16x512xf32>
    %190 = tpu.matmul %188, %189, %cst_51 {dimension_numbers = #tpu.dot_dimension_numbers<[1], [0], [0], [1], [0, 0, 1, 1], [], []>} : vector<16x128xbf16>, vector<128x512xbf16>, vector<16x512xf32> -> vector<16x512xf32>
    %191 = arith.addf %183, %190 : vector<16x512xf32>
    %192 = vector.broadcast %c2_i32 : i32 to vector<16x1xi32>
    %193 = arith.cmpi slt, %192, %7 : vector<16x1xi32>
    %194 = vector.extract_strided_slice %187 {offsets = [0, 0], sizes = [16, 128], strides = [1, 1]} : vector<16x512xf32> to vector<16x128xf32>
    %195 = arith.negf %194 : vector<16x128xf32>
    %196 = math.exp %195 : vector<16x128xf32>
    %cst_52 = arith.constant 1.000000e+00 : f32
    %197 = vector.broadcast %cst_52 : f32 to vector<16x128xf32>
    %198 = arith.addf %197, %196 : vector<16x128xf32>
    %199 = arith.divf %197, %198 : vector<16x128xf32>
    %200 = vector.extract_strided_slice %187 {offsets = [0, 128], sizes = [16, 128], strides = [1, 1]} : vector<16x512xf32> to vector<16x128xf32>
    %201 = arith.negf %200 : vector<16x128xf32>
    %202 = math.exp %201 : vector<16x128xf32>
    %cst_53 = arith.constant 1.000000e+00 : f32
    %203 = vector.broadcast %cst_53 : f32 to vector<16x128xf32>
    %204 = arith.addf %203, %202 : vector<16x128xf32>
    %205 = arith.divf %203, %204 : vector<16x128xf32>
    %206 = vector.extract_strided_slice %187 {offsets = [0, 256], sizes = [16, 128], strides = [1, 1]} : vector<16x512xf32> to vector<16x128xf32>
    %207 = math.tanh %206 : vector<16x128xf32>
    %208 = vector.extract_strided_slice %187 {offsets = [0, 384], sizes = [16, 128], strides = [1, 1]} : vector<16x512xf32> to vector<16x128xf32>
    %209 = arith.negf %208 : vector<16x128xf32>
    %210 = math.exp %209 : vector<16x128xf32>
    %cst_54 = arith.constant 1.000000e+00 : f32
    %211 = vector.broadcast %cst_54 : f32 to vector<16x128xf32>
    %212 = arith.addf %211, %210 : vector<16x128xf32>
    %213 = arith.divf %211, %212 : vector<16x128xf32>
    %214 = arith.mulf %205, %141 : vector<16x128xf32>
    %215 = arith.mulf %199, %207 : vector<16x128xf32>
    %216 = arith.addf %214, %215 : vector<16x128xf32>
    %217 = math.tanh %216 : vector<16x128xf32>
    %218 = arith.mulf %213, %217 : vector<16x128xf32>
    %219 = vector.shape_cast %193 : vector<16x1xi1> to vector<16x1xi1>
    %220 = vector.broadcast %219 : vector<16x1xi1> to vector<16x128xi1>
    %221 = arith.select %220, %218, %138 : vector<16x128xi1>, vector<16x128xf32>
    %222 = vector.shape_cast %193 : vector<16x1xi1> to vector<16x1xi1>
    %223 = vector.broadcast %222 : vector<16x1xi1> to vector<16x128xi1>
    %224 = arith.select %223, %216, %141 : vector<16x128xi1>, vector<16x128xf32>
    %225 = vector.broadcast %175 : i32 to vector<16x1xi32>
    %226 = arith.cmpi slt, %225, %7 : vector<16x1xi32>
    %227 = vector.extract_strided_slice %191 {offsets = [0, 0], sizes = [16, 128], strides = [1, 1]} : vector<16x512xf32> to vector<16x128xf32>
    %228 = arith.negf %227 : vector<16x128xf32>
    %229 = math.exp %228 : vector<16x128xf32>
    %cst_55 = arith.constant 1.000000e+00 : f32
    %230 = vector.broadcast %cst_55 : f32 to vector<16x128xf32>
    %231 = arith.addf %230, %229 : vector<16x128xf32>
    %232 = arith.divf %230, %231 : vector<16x128xf32>
    %233 = vector.extract_strided_slice %191 {offsets = [0, 128], sizes = [16, 128], strides = [1, 1]} : vector<16x512xf32> to vector<16x128xf32>
    %234 = arith.negf %233 : vector<16x128xf32>
    %235 = math.exp %234 : vector<16x128xf32>
    %cst_56 = arith.constant 1.000000e+00 : f32
    %236 = vector.broadcast %cst_56 : f32 to vector<16x128xf32>
    %237 = arith.addf %236, %235 : vector<16x128xf32>
    %238 = arith.divf %236, %237 : vector<16x128xf32>
    %239 = vector.extract_strided_slice %191 {offsets = [0, 256], sizes = [16, 128], strides = [1, 1]} : vector<16x512xf32> to vector<16x128xf32>
    %240 = math.tanh %239 : vector<16x128xf32>
    %241 = vector.extract_strided_slice %191 {offsets = [0, 384], sizes = [16, 128], strides = [1, 1]} : vector<16x512xf32> to vector<16x128xf32>
    %242 = arith.negf %241 : vector<16x128xf32>
    %243 = math.exp %242 : vector<16x128xf32>
    %cst_57 = arith.constant 1.000000e+00 : f32
    %244 = vector.broadcast %cst_57 : f32 to vector<16x128xf32>
    %245 = arith.addf %244, %243 : vector<16x128xf32>
    %246 = arith.divf %244, %245 : vector<16x128xf32>
    %247 = arith.mulf %238, %174 : vector<16x128xf32>
    %248 = arith.mulf %232, %240 : vector<16x128xf32>
    %249 = arith.addf %247, %248 : vector<16x128xf32>
    %250 = math.tanh %249 : vector<16x128xf32>
    %251 = arith.mulf %246, %250 : vector<16x128xf32>
    %252 = vector.shape_cast %226 : vector<16x1xi1> to vector<16x1xi1>
    %253 = vector.broadcast %252 : vector<16x1xi1> to vector<16x128xi1>
    %254 = arith.select %253, %251, %171 : vector<16x128xi1>, vector<16x128xf32>
    %255 = vector.shape_cast %226 : vector<16x1xi1> to vector<16x1xi1>
    %256 = vector.broadcast %255 : vector<16x1xi1> to vector<16x128xi1>
    %257 = arith.select %256, %249, %174 : vector<16x128xi1>, vector<16x128xf32>
    %c3_i32 = arith.constant 3 : i32
    %c9_i32_58 = arith.constant 9 : i32
    %258 = arith.subi %c9_i32_58, %c3_i32 : i32
    %c16_i32_59 = arith.constant 16 : i32
    %259 = arith.muli %c3_i32, %c16_i32_59 : i32
    %260 = tpu.assume_multiple %259, 8 : i32
    %c16_i32_60 = arith.constant 16 : i32
    %261 = arith.muli %258, %c16_i32_60 : i32
    %262 = tpu.assume_multiple %261, 8 : i32
    %263 = arith.index_cast %260 : i32 to index
    %c0_61 = arith.constant 0 : index
    %264 = vector.load %arg14[%263, %c0_61] : memref<160x1024xf32, #tpu.memory_space<vmem>>, vector<16x512xf32>
    %265 = arith.index_cast %262 : i32 to index
    %c512_62 = arith.constant 512 : index
    %266 = vector.load %arg14[%265, %c512_62] : memref<160x1024xf32, #tpu.memory_space<vmem>>, vector<16x512xf32>
    %267 = arith.truncf %221 : vector<16x128xf32> to vector<16x128xbf16>
    %c0_63 = arith.constant 0 : index
    %c0_64 = arith.constant 0 : index
    %268 = vector.load %arg4[%c0_63, %c0_64] : memref<128x512xbf16, #tpu.memory_space<vmem>>, vector<128x512xbf16>
    %cst_65 = arith.constant dense<0.000000e+00> : vector<16x512xf32>
    %269 = tpu.matmul %267, %268, %cst_65 {dimension_numbers = #tpu.dot_dimension_numbers<[1], [0], [0], [1], [0, 0, 1, 1], [], []>} : vector<16x128xbf16>, vector<128x512xbf16>, vector<16x512xf32> -> vector<16x512xf32>
    %270 = arith.addf %264, %269 : vector<16x512xf32>
    %271 = arith.truncf %254 : vector<16x128xf32> to vector<16x128xbf16>
    %c0_66 = arith.constant 0 : index
    %c0_67 = arith.constant 0 : index
    %272 = vector.load %arg5[%c0_66, %c0_67] : memref<128x512xbf16, #tpu.memory_space<vmem>>, vector<128x512xbf16>
    %cst_68 = arith.constant dense<0.000000e+00> : vector<16x512xf32>
    %273 = tpu.matmul %271, %272, %cst_68 {dimension_numbers = #tpu.dot_dimension_numbers<[1], [0], [0], [1], [0, 0, 1, 1], [], []>} : vector<16x128xbf16>, vector<128x512xbf16>, vector<16x512xf32> -> vector<16x512xf32>
    %274 = arith.addf %266, %273 : vector<16x512xf32>
    %275 = vector.broadcast %c3_i32 : i32 to vector<16x1xi32>
    %276 = arith.cmpi slt, %275, %7 : vector<16x1xi32>
    %277 = vector.extract_strided_slice %270 {offsets = [0, 0], sizes = [16, 128], strides = [1, 1]} : vector<16x512xf32> to vector<16x128xf32>
    %278 = arith.negf %277 : vector<16x128xf32>
    %279 = math.exp %278 : vector<16x128xf32>
    %cst_69 = arith.constant 1.000000e+00 : f32
    %280 = vector.broadcast %cst_69 : f32 to vector<16x128xf32>
    %281 = arith.addf %280, %279 : vector<16x128xf32>
    %282 = arith.divf %280, %281 : vector<16x128xf32>
    %283 = vector.extract_strided_slice %270 {offsets = [0, 128], sizes = [16, 128], strides = [1, 1]} : vector<16x512xf32> to vector<16x128xf32>
    %284 = arith.negf %283 : vector<16x128xf32>
    %285 = math.exp %284 : vector<16x128xf32>
    %cst_70 = arith.constant 1.000000e+00 : f32
    %286 = vector.broadcast %cst_70 : f32 to vector<16x128xf32>
    %287 = arith.addf %286, %285 : vector<16x128xf32>
    %288 = arith.divf %286, %287 : vector<16x128xf32>
    %289 = vector.extract_strided_slice %270 {offsets = [0, 256], sizes = [16, 128], strides = [1, 1]} : vector<16x512xf32> to vector<16x128xf32>
    %290 = math.tanh %289 : vector<16x128xf32>
    %291 = vector.extract_strided_slice %270 {offsets = [0, 384], sizes = [16, 128], strides = [1, 1]} : vector<16x512xf32> to vector<16x128xf32>
    %292 = arith.negf %291 : vector<16x128xf32>
    %293 = math.exp %292 : vector<16x128xf32>
    %cst_71 = arith.constant 1.000000e+00 : f32
    %294 = vector.broadcast %cst_71 : f32 to vector<16x128xf32>
    %295 = arith.addf %294, %293 : vector<16x128xf32>
    %296 = arith.divf %294, %295 : vector<16x128xf32>
    %297 = arith.mulf %288, %224 : vector<16x128xf32>
    %298 = arith.mulf %282, %290 : vector<16x128xf32>
    %299 = arith.addf %297, %298 : vector<16x128xf32>
    %300 = math.tanh %299 : vector<16x128xf32>
    %301 = arith.mulf %296, %300 : vector<16x128xf32>
    %302 = vector.shape_cast %276 : vector<16x1xi1> to vector<16x1xi1>
    %303 = vector.broadcast %302 : vector<16x1xi1> to vector<16x128xi1>
    %304 = arith.select %303, %301, %221 : vector<16x128xi1>, vector<16x128xf32>
    %305 = vector.shape_cast %276 : vector<16x1xi1> to vector<16x1xi1>
    %306 = vector.broadcast %305 : vector<16x1xi1> to vector<16x128xi1>
    %307 = arith.select %306, %299, %224 : vector<16x128xi1>, vector<16x128xf32>
    %308 = vector.broadcast %258 : i32 to vector<16x1xi32>
    %309 = arith.cmpi slt, %308, %7 : vector<16x1xi32>
    %310 = vector.extract_strided_slice %274 {offsets = [0, 0], sizes = [16, 128], strides = [1, 1]} : vector<16x512xf32> to vector<16x128xf32>
    %311 = arith.negf %310 : vector<16x128xf32>
    %312 = math.exp %311 : vector<16x128xf32>
    %cst_72 = arith.constant 1.000000e+00 : f32
    %313 = vector.broadcast %cst_72 : f32 to vector<16x128xf32>
    %314 = arith.addf %313, %312 : vector<16x128xf32>
    %315 = arith.divf %313, %314 : vector<16x128xf32>
    %316 = vector.extract_strided_slice %274 {offsets = [0, 128], sizes = [16, 128], strides = [1, 1]} : vector<16x512xf32> to vector<16x128xf32>
    %317 = arith.negf %316 : vector<16x128xf32>
    %318 = math.exp %317 : vector<16x128xf32>
    %cst_73 = arith.constant 1.000000e+00 : f32
    %319 = vector.broadcast %cst_73 : f32 to vector<16x128xf32>
    %320 = arith.addf %319, %318 : vector<16x128xf32>
    %321 = arith.divf %319, %320 : vector<16x128xf32>
    %322 = vector.extract_strided_slice %274 {offsets = [0, 256], sizes = [16, 128], strides = [1, 1]} : vector<16x512xf32> to vector<16x128xf32>
    %323 = math.tanh %322 : vector<16x128xf32>
    %324 = vector.extract_strided_slice %274 {offsets = [0, 384], sizes = [16, 128], strides = [1, 1]} : vector<16x512xf32> to vector<16x128xf32>
    %325 = arith.negf %324 : vector<16x128xf32>
    %326 = math.exp %325 : vector<16x128xf32>
    %cst_74 = arith.constant 1.000000e+00 : f32
    %327 = vector.broadcast %cst_74 : f32 to vector<16x128xf32>
    %328 = arith.addf %327, %326 : vector<16x128xf32>
    %329 = arith.divf %327, %328 : vector<16x128xf32>
    %330 = arith.mulf %321, %257 : vector<16x128xf32>
    %331 = arith.mulf %315, %323 : vector<16x128xf32>
    %332 = arith.addf %330, %331 : vector<16x128xf32>
    %333 = math.tanh %332 : vector<16x128xf32>
    %334 = arith.mulf %329, %333 : vector<16x128xf32>
    %335 = vector.shape_cast %309 : vector<16x1xi1> to vector<16x1xi1>
    %336 = vector.broadcast %335 : vector<16x1xi1> to vector<16x128xi1>
    %337 = arith.select %336, %334, %254 : vector<16x128xi1>, vector<16x128xf32>
    %338 = vector.shape_cast %309 : vector<16x1xi1> to vector<16x1xi1>
    %339 = vector.broadcast %338 : vector<16x1xi1> to vector<16x128xi1>
    %340 = arith.select %339, %332, %257 : vector<16x128xi1>, vector<16x128xf32>
    %c4_i32 = arith.constant 4 : i32
    %c9_i32_75 = arith.constant 9 : i32
    %341 = arith.subi %c9_i32_75, %c4_i32 : i32
    %c16_i32_76 = arith.constant 16 : i32
    %342 = arith.muli %c4_i32, %c16_i32_76 : i32
    %343 = tpu.assume_multiple %342, 8 : i32
    %c16_i32_77 = arith.constant 16 : i32
    %344 = arith.muli %341, %c16_i32_77 : i32
    %345 = tpu.assume_multiple %344, 8 : i32
    %346 = arith.index_cast %343 : i32 to index
    %c0_78 = arith.constant 0 : index
    %347 = vector.load %arg14[%346, %c0_78] : memref<160x1024xf32, #tpu.memory_space<vmem>>, vector<16x512xf32>
    %348 = arith.index_cast %345 : i32 to index
    %c512_79 = arith.constant 512 : index
    %349 = vector.load %arg14[%348, %c512_79] : memref<160x1024xf32, #tpu.memory_space<vmem>>, vector<16x512xf32>
    %350 = arith.truncf %304 : vector<16x128xf32> to vector<16x128xbf16>
    %c0_80 = arith.constant 0 : index
    %c0_81 = arith.constant 0 : index
    %351 = vector.load %arg4[%c0_80, %c0_81] : memref<128x512xbf16, #tpu.memory_space<vmem>>, vector<128x512xbf16>
    %cst_82 = arith.constant dense<0.000000e+00> : vector<16x512xf32>
    %352 = tpu.matmul %350, %351, %cst_82 {dimension_numbers = #tpu.dot_dimension_numbers<[1], [0], [0], [1], [0, 0, 1, 1], [], []>} : vector<16x128xbf16>, vector<128x512xbf16>, vector<16x512xf32> -> vector<16x512xf32>
    %353 = arith.addf %347, %352 : vector<16x512xf32>
    %354 = arith.truncf %337 : vector<16x128xf32> to vector<16x128xbf16>
    %c0_83 = arith.constant 0 : index
    %c0_84 = arith.constant 0 : index
    %355 = vector.load %arg5[%c0_83, %c0_84] : memref<128x512xbf16, #tpu.memory_space<vmem>>, vector<128x512xbf16>
    %cst_85 = arith.constant dense<0.000000e+00> : vector<16x512xf32>
    %356 = tpu.matmul %354, %355, %cst_85 {dimension_numbers = #tpu.dot_dimension_numbers<[1], [0], [0], [1], [0, 0, 1, 1], [], []>} : vector<16x128xbf16>, vector<128x512xbf16>, vector<16x512xf32> -> vector<16x512xf32>
    %357 = arith.addf %349, %356 : vector<16x512xf32>
    %358 = vector.broadcast %c4_i32 : i32 to vector<16x1xi32>
    %359 = arith.cmpi slt, %358, %7 : vector<16x1xi32>
    %360 = vector.extract_strided_slice %353 {offsets = [0, 0], sizes = [16, 128], strides = [1, 1]} : vector<16x512xf32> to vector<16x128xf32>
    %361 = arith.negf %360 : vector<16x128xf32>
    %362 = math.exp %361 : vector<16x128xf32>
    %cst_86 = arith.constant 1.000000e+00 : f32
    %363 = vector.broadcast %cst_86 : f32 to vector<16x128xf32>
    %364 = arith.addf %363, %362 : vector<16x128xf32>
    %365 = arith.divf %363, %364 : vector<16x128xf32>
    %366 = vector.extract_strided_slice %353 {offsets = [0, 128], sizes = [16, 128], strides = [1, 1]} : vector<16x512xf32> to vector<16x128xf32>
    %367 = arith.negf %366 : vector<16x128xf32>
    %368 = math.exp %367 : vector<16x128xf32>
    %cst_87 = arith.constant 1.000000e+00 : f32
    %369 = vector.broadcast %cst_87 : f32 to vector<16x128xf32>
    %370 = arith.addf %369, %368 : vector<16x128xf32>
    %371 = arith.divf %369, %370 : vector<16x128xf32>
    %372 = vector.extract_strided_slice %353 {offsets = [0, 256], sizes = [16, 128], strides = [1, 1]} : vector<16x512xf32> to vector<16x128xf32>
    %373 = math.tanh %372 : vector<16x128xf32>
    %374 = vector.extract_strided_slice %353 {offsets = [0, 384], sizes = [16, 128], strides = [1, 1]} : vector<16x512xf32> to vector<16x128xf32>
    %375 = arith.negf %374 : vector<16x128xf32>
    %376 = math.exp %375 : vector<16x128xf32>
    %cst_88 = arith.constant 1.000000e+00 : f32
    %377 = vector.broadcast %cst_88 : f32 to vector<16x128xf32>
    %378 = arith.addf %377, %376 : vector<16x128xf32>
    %379 = arith.divf %377, %378 : vector<16x128xf32>
    %380 = arith.mulf %371, %307 : vector<16x128xf32>
    %381 = arith.mulf %365, %373 : vector<16x128xf32>
    %382 = arith.addf %380, %381 : vector<16x128xf32>
    %383 = math.tanh %382 : vector<16x128xf32>
    %384 = arith.mulf %379, %383 : vector<16x128xf32>
    %385 = vector.shape_cast %359 : vector<16x1xi1> to vector<16x1xi1>
    %386 = vector.broadcast %385 : vector<16x1xi1> to vector<16x128xi1>
    %387 = arith.select %386, %384, %304 : vector<16x128xi1>, vector<16x128xf32>
    %388 = vector.shape_cast %359 : vector<16x1xi1> to vector<16x1xi1>
    %389 = vector.broadcast %388 : vector<16x1xi1> to vector<16x128xi1>
    %390 = arith.select %389, %382, %307 : vector<16x128xi1>, vector<16x128xf32>
    %391 = vector.broadcast %341 : i32 to vector<16x1xi32>
    %392 = arith.cmpi slt, %391, %7 : vector<16x1xi32>
    %393 = vector.extract_strided_slice %357 {offsets = [0, 0], sizes = [16, 128], strides = [1, 1]} : vector<16x512xf32> to vector<16x128xf32>
    %394 = arith.negf %393 : vector<16x128xf32>
    %395 = math.exp %394 : vector<16x128xf32>
    %cst_89 = arith.constant 1.000000e+00 : f32
    %396 = vector.broadcast %cst_89 : f32 to vector<16x128xf32>
    %397 = arith.addf %396, %395 : vector<16x128xf32>
    %398 = arith.divf %396, %397 : vector<16x128xf32>
    %399 = vector.extract_strided_slice %357 {offsets = [0, 128], sizes = [16, 128], strides = [1, 1]} : vector<16x512xf32> to vector<16x128xf32>
    %400 = arith.negf %399 : vector<16x128xf32>
    %401 = math.exp %400 : vector<16x128xf32>
    %cst_90 = arith.constant 1.000000e+00 : f32
    %402 = vector.broadcast %cst_90 : f32 to vector<16x128xf32>
    %403 = arith.addf %402, %401 : vector<16x128xf32>
    %404 = arith.divf %402, %403 : vector<16x128xf32>
    %405 = vector.extract_strided_slice %357 {offsets = [0, 256], sizes = [16, 128], strides = [1, 1]} : vector<16x512xf32> to vector<16x128xf32>
    %406 = math.tanh %405 : vector<16x128xf32>
    %407 = vector.extract_strided_slice %357 {offsets = [0, 384], sizes = [16, 128], strides = [1, 1]} : vector<16x512xf32> to vector<16x128xf32>
    %408 = arith.negf %407 : vector<16x128xf32>
    %409 = math.exp %408 : vector<16x128xf32>
    %cst_91 = arith.constant 1.000000e+00 : f32
    %410 = vector.broadcast %cst_91 : f32 to vector<16x128xf32>
    %411 = arith.addf %410, %409 : vector<16x128xf32>
    %412 = arith.divf %410, %411 : vector<16x128xf32>
    %413 = arith.mulf %404, %340 : vector<16x128xf32>
    %414 = arith.mulf %398, %406 : vector<16x128xf32>
    %415 = arith.addf %413, %414 : vector<16x128xf32>
    %416 = math.tanh %415 : vector<16x128xf32>
    %417 = arith.mulf %412, %416 : vector<16x128xf32>
    %418 = vector.shape_cast %392 : vector<16x1xi1> to vector<16x1xi1>
    %419 = vector.broadcast %418 : vector<16x1xi1> to vector<16x128xi1>
    %420 = arith.select %419, %417, %337 : vector<16x128xi1>, vector<16x128xf32>
    %421 = vector.shape_cast %392 : vector<16x1xi1> to vector<16x1xi1>
    %422 = vector.broadcast %421 : vector<16x1xi1> to vector<16x128xi1>
    %423 = arith.select %422, %415, %340 : vector<16x128xi1>, vector<16x128xf32>
    %c5_i32 = arith.constant 5 : i32
    %c9_i32_92 = arith.constant 9 : i32
    %424 = arith.subi %c9_i32_92, %c5_i32 : i32
    %c16_i32_93 = arith.constant 16 : i32
    %425 = arith.muli %c5_i32, %c16_i32_93 : i32
    %426 = tpu.assume_multiple %425, 8 : i32
    %c16_i32_94 = arith.constant 16 : i32
    %427 = arith.muli %424, %c16_i32_94 : i32
    %428 = tpu.assume_multiple %427, 8 : i32
    %429 = arith.index_cast %426 : i32 to index
    %c0_95 = arith.constant 0 : index
    %430 = vector.load %arg14[%429, %c0_95] : memref<160x1024xf32, #tpu.memory_space<vmem>>, vector<16x512xf32>
    %431 = arith.index_cast %428 : i32 to index
    %c512_96 = arith.constant 512 : index
    %432 = vector.load %arg14[%431, %c512_96] : memref<160x1024xf32, #tpu.memory_space<vmem>>, vector<16x512xf32>
    %433 = arith.truncf %387 : vector<16x128xf32> to vector<16x128xbf16>
    %c0_97 = arith.constant 0 : index
    %c0_98 = arith.constant 0 : index
    %434 = vector.load %arg4[%c0_97, %c0_98] : memref<128x512xbf16, #tpu.memory_space<vmem>>, vector<128x512xbf16>
    %cst_99 = arith.constant dense<0.000000e+00> : vector<16x512xf32>
    %435 = tpu.matmul %433, %434, %cst_99 {dimension_numbers = #tpu.dot_dimension_numbers<[1], [0], [0], [1], [0, 0, 1, 1], [], []>} : vector<16x128xbf16>, vector<128x512xbf16>, vector<16x512xf32> -> vector<16x512xf32>
    %436 = arith.addf %430, %435 : vector<16x512xf32>
    %437 = arith.truncf %420 : vector<16x128xf32> to vector<16x128xbf16>
    %c0_100 = arith.constant 0 : index
    %c0_101 = arith.constant 0 : index
    %438 = vector.load %arg5[%c0_100, %c0_101] : memref<128x512xbf16, #tpu.memory_space<vmem>>, vector<128x512xbf16>
    %cst_102 = arith.constant dense<0.000000e+00> : vector<16x512xf32>
    %439 = tpu.matmul %437, %438, %cst_102 {dimension_numbers = #tpu.dot_dimension_numbers<[1], [0], [0], [1], [0, 0, 1, 1], [], []>} : vector<16x128xbf16>, vector<128x512xbf16>, vector<16x512xf32> -> vector<16x512xf32>
    %440 = arith.addf %432, %439 : vector<16x512xf32>
    %441 = vector.broadcast %c5_i32 : i32 to vector<16x1xi32>
    %442 = arith.cmpi slt, %441, %7 : vector<16x1xi32>
    %443 = vector.extract_strided_slice %436 {offsets = [0, 0], sizes = [16, 128], strides = [1, 1]} : vector<16x512xf32> to vector<16x128xf32>
    %444 = arith.negf %443 : vector<16x128xf32>
    %445 = math.exp %444 : vector<16x128xf32>
    %cst_103 = arith.constant 1.000000e+00 : f32
    %446 = vector.broadcast %cst_103 : f32 to vector<16x128xf32>
    %447 = arith.addf %446, %445 : vector<16x128xf32>
    %448 = arith.divf %446, %447 : vector<16x128xf32>
    %449 = vector.extract_strided_slice %436 {offsets = [0, 128], sizes = [16, 128], strides = [1, 1]} : vector<16x512xf32> to vector<16x128xf32>
    %450 = arith.negf %449 : vector<16x128xf32>
    %451 = math.exp %450 : vector<16x128xf32>
    %cst_104 = arith.constant 1.000000e+00 : f32
    %452 = vector.broadcast %cst_104 : f32 to vector<16x128xf32>
    %453 = arith.addf %452, %451 : vector<16x128xf32>
    %454 = arith.divf %452, %453 : vector<16x128xf32>
    %455 = vector.extract_strided_slice %436 {offsets = [0, 256], sizes = [16, 128], strides = [1, 1]} : vector<16x512xf32> to vector<16x128xf32>
    %456 = math.tanh %455 : vector<16x128xf32>
    %457 = vector.extract_strided_slice %436 {offsets = [0, 384], sizes = [16, 128], strides = [1, 1]} : vector<16x512xf32> to vector<16x128xf32>
    %458 = arith.negf %457 : vector<16x128xf32>
    %459 = math.exp %458 : vector<16x128xf32>
    %cst_105 = arith.constant 1.000000e+00 : f32
    %460 = vector.broadcast %cst_105 : f32 to vector<16x128xf32>
    %461 = arith.addf %460, %459 : vector<16x128xf32>
    %462 = arith.divf %460, %461 : vector<16x128xf32>
    %463 = arith.mulf %454, %390 : vector<16x128xf32>
    %464 = arith.mulf %448, %456 : vector<16x128xf32>
    %465 = arith.addf %463, %464 : vector<16x128xf32>
    %466 = math.tanh %465 : vector<16x128xf32>
    %467 = arith.mulf %462, %466 : vector<16x128xf32>
    %468 = vector.shape_cast %442 : vector<16x1xi1> to vector<16x1xi1>
    %469 = vector.broadcast %468 : vector<16x1xi1> to vector<16x128xi1>
    %470 = arith.select %469, %467, %387 : vector<16x128xi1>, vector<16x128xf32>
    %471 = vector.shape_cast %442 : vector<16x1xi1> to vector<16x1xi1>
    %472 = vector.broadcast %471 : vector<16x1xi1> to vector<16x128xi1>
    %473 = arith.select %472, %465, %390 : vector<16x128xi1>, vector<16x128xf32>
    %474 = vector.broadcast %424 : i32 to vector<16x1xi32>
    %475 = arith.cmpi slt, %474, %7 : vector<16x1xi32>
    %476 = vector.extract_strided_slice %440 {offsets = [0, 0], sizes = [16, 128], strides = [1, 1]} : vector<16x512xf32> to vector<16x128xf32>
    %477 = arith.negf %476 : vector<16x128xf32>
    %478 = math.exp %477 : vector<16x128xf32>
    %cst_106 = arith.constant 1.000000e+00 : f32
    %479 = vector.broadcast %cst_106 : f32 to vector<16x128xf32>
    %480 = arith.addf %479, %478 : vector<16x128xf32>
    %481 = arith.divf %479, %480 : vector<16x128xf32>
    %482 = vector.extract_strided_slice %440 {offsets = [0, 128], sizes = [16, 128], strides = [1, 1]} : vector<16x512xf32> to vector<16x128xf32>
    %483 = arith.negf %482 : vector<16x128xf32>
    %484 = math.exp %483 : vector<16x128xf32>
    %cst_107 = arith.constant 1.000000e+00 : f32
    %485 = vector.broadcast %cst_107 : f32 to vector<16x128xf32>
    %486 = arith.addf %485, %484 : vector<16x128xf32>
    %487 = arith.divf %485, %486 : vector<16x128xf32>
    %488 = vector.extract_strided_slice %440 {offsets = [0, 256], sizes = [16, 128], strides = [1, 1]} : vector<16x512xf32> to vector<16x128xf32>
    %489 = math.tanh %488 : vector<16x128xf32>
    %490 = vector.extract_strided_slice %440 {offsets = [0, 384], sizes = [16, 128], strides = [1, 1]} : vector<16x512xf32> to vector<16x128xf32>
    %491 = arith.negf %490 : vector<16x128xf32>
    %492 = math.exp %491 : vector<16x128xf32>
    %cst_108 = arith.constant 1.000000e+00 : f32
    %493 = vector.broadcast %cst_108 : f32 to vector<16x128xf32>
    %494 = arith.addf %493, %492 : vector<16x128xf32>
    %495 = arith.divf %493, %494 : vector<16x128xf32>
    %496 = arith.mulf %487, %423 : vector<16x128xf32>
    %497 = arith.mulf %481, %489 : vector<16x128xf32>
    %498 = arith.addf %496, %497 : vector<16x128xf32>
    %499 = math.tanh %498 : vector<16x128xf32>
    %500 = arith.mulf %495, %499 : vector<16x128xf32>
    %501 = vector.shape_cast %475 : vector<16x1xi1> to vector<16x1xi1>
    %502 = vector.broadcast %501 : vector<16x1xi1> to vector<16x128xi1>
    %503 = arith.select %502, %500, %420 : vector<16x128xi1>, vector<16x128xf32>
    %504 = vector.shape_cast %475 : vector<16x1xi1> to vector<16x1xi1>
    %505 = vector.broadcast %504 : vector<16x1xi1> to vector<16x128xi1>
    %506 = arith.select %505, %498, %423 : vector<16x128xi1>, vector<16x128xf32>
    %c6_i32 = arith.constant 6 : i32
    %c9_i32_109 = arith.constant 9 : i32
    %507 = arith.subi %c9_i32_109, %c6_i32 : i32
    %c16_i32_110 = arith.constant 16 : i32
    %508 = arith.muli %c6_i32, %c16_i32_110 : i32
    %509 = tpu.assume_multiple %508, 8 : i32
    %c16_i32_111 = arith.constant 16 : i32
    %510 = arith.muli %507, %c16_i32_111 : i32
    %511 = tpu.assume_multiple %510, 8 : i32
    %512 = arith.index_cast %509 : i32 to index
    %c0_112 = arith.constant 0 : index
    %513 = vector.load %arg14[%512, %c0_112] : memref<160x1024xf32, #tpu.memory_space<vmem>>, vector<16x512xf32>
    %514 = arith.index_cast %511 : i32 to index
    %c512_113 = arith.constant 512 : index
    %515 = vector.load %arg14[%514, %c512_113] : memref<160x1024xf32, #tpu.memory_space<vmem>>, vector<16x512xf32>
    %516 = arith.truncf %470 : vector<16x128xf32> to vector<16x128xbf16>
    %c0_114 = arith.constant 0 : index
    %c0_115 = arith.constant 0 : index
    %517 = vector.load %arg4[%c0_114, %c0_115] : memref<128x512xbf16, #tpu.memory_space<vmem>>, vector<128x512xbf16>
    %cst_116 = arith.constant dense<0.000000e+00> : vector<16x512xf32>
    %518 = tpu.matmul %516, %517, %cst_116 {dimension_numbers = #tpu.dot_dimension_numbers<[1], [0], [0], [1], [0, 0, 1, 1], [], []>} : vector<16x128xbf16>, vector<128x512xbf16>, vector<16x512xf32> -> vector<16x512xf32>
    %519 = arith.addf %513, %518 : vector<16x512xf32>
    %520 = arith.truncf %503 : vector<16x128xf32> to vector<16x128xbf16>
    %c0_117 = arith.constant 0 : index
    %c0_118 = arith.constant 0 : index
    %521 = vector.load %arg5[%c0_117, %c0_118] : memref<128x512xbf16, #tpu.memory_space<vmem>>, vector<128x512xbf16>
    %cst_119 = arith.constant dense<0.000000e+00> : vector<16x512xf32>
    %522 = tpu.matmul %520, %521, %cst_119 {dimension_numbers = #tpu.dot_dimension_numbers<[1], [0], [0], [1], [0, 0, 1, 1], [], []>} : vector<16x128xbf16>, vector<128x512xbf16>, vector<16x512xf32> -> vector<16x512xf32>
    %523 = arith.addf %515, %522 : vector<16x512xf32>
    %524 = vector.broadcast %c6_i32 : i32 to vector<16x1xi32>
    %525 = arith.cmpi slt, %524, %7 : vector<16x1xi32>
    %526 = vector.extract_strided_slice %519 {offsets = [0, 0], sizes = [16, 128], strides = [1, 1]} : vector<16x512xf32> to vector<16x128xf32>
    %527 = arith.negf %526 : vector<16x128xf32>
    %528 = math.exp %527 : vector<16x128xf32>
    %cst_120 = arith.constant 1.000000e+00 : f32
    %529 = vector.broadcast %cst_120 : f32 to vector<16x128xf32>
    %530 = arith.addf %529, %528 : vector<16x128xf32>
    %531 = arith.divf %529, %530 : vector<16x128xf32>
    %532 = vector.extract_strided_slice %519 {offsets = [0, 128], sizes = [16, 128], strides = [1, 1]} : vector<16x512xf32> to vector<16x128xf32>
    %533 = arith.negf %532 : vector<16x128xf32>
    %534 = math.exp %533 : vector<16x128xf32>
    %cst_121 = arith.constant 1.000000e+00 : f32
    %535 = vector.broadcast %cst_121 : f32 to vector<16x128xf32>
    %536 = arith.addf %535, %534 : vector<16x128xf32>
    %537 = arith.divf %535, %536 : vector<16x128xf32>
    %538 = vector.extract_strided_slice %519 {offsets = [0, 256], sizes = [16, 128], strides = [1, 1]} : vector<16x512xf32> to vector<16x128xf32>
    %539 = math.tanh %538 : vector<16x128xf32>
    %540 = vector.extract_strided_slice %519 {offsets = [0, 384], sizes = [16, 128], strides = [1, 1]} : vector<16x512xf32> to vector<16x128xf32>
    %541 = arith.negf %540 : vector<16x128xf32>
    %542 = math.exp %541 : vector<16x128xf32>
    %cst_122 = arith.constant 1.000000e+00 : f32
    %543 = vector.broadcast %cst_122 : f32 to vector<16x128xf32>
    %544 = arith.addf %543, %542 : vector<16x128xf32>
    %545 = arith.divf %543, %544 : vector<16x128xf32>
    %546 = arith.mulf %537, %473 : vector<16x128xf32>
    %547 = arith.mulf %531, %539 : vector<16x128xf32>
    %548 = arith.addf %546, %547 : vector<16x128xf32>
    %549 = math.tanh %548 : vector<16x128xf32>
    %550 = arith.mulf %545, %549 : vector<16x128xf32>
    %551 = vector.shape_cast %525 : vector<16x1xi1> to vector<16x1xi1>
    %552 = vector.broadcast %551 : vector<16x1xi1> to vector<16x128xi1>
    %553 = arith.select %552, %550, %470 : vector<16x128xi1>, vector<16x128xf32>
    %554 = vector.shape_cast %525 : vector<16x1xi1> to vector<16x1xi1>
    %555 = vector.broadcast %554 : vector<16x1xi1> to vector<16x128xi1>
    %556 = arith.select %555, %548, %473 : vector<16x128xi1>, vector<16x128xf32>
    %557 = vector.broadcast %507 : i32 to vector<16x1xi32>
    %558 = arith.cmpi slt, %557, %7 : vector<16x1xi32>
    %559 = vector.extract_strided_slice %523 {offsets = [0, 0], sizes = [16, 128], strides = [1, 1]} : vector<16x512xf32> to vector<16x128xf32>
    %560 = arith.negf %559 : vector<16x128xf32>
    %561 = math.exp %560 : vector<16x128xf32>
    %cst_123 = arith.constant 1.000000e+00 : f32
    %562 = vector.broadcast %cst_123 : f32 to vector<16x128xf32>
    %563 = arith.addf %562, %561 : vector<16x128xf32>
    %564 = arith.divf %562, %563 : vector<16x128xf32>
    %565 = vector.extract_strided_slice %523 {offsets = [0, 128], sizes = [16, 128], strides = [1, 1]} : vector<16x512xf32> to vector<16x128xf32>
    %566 = arith.negf %565 : vector<16x128xf32>
    %567 = math.exp %566 : vector<16x128xf32>
    %cst_124 = arith.constant 1.000000e+00 : f32
    %568 = vector.broadcast %cst_124 : f32 to vector<16x128xf32>
    %569 = arith.addf %568, %567 : vector<16x128xf32>
    %570 = arith.divf %568, %569 : vector<16x128xf32>
    %571 = vector.extract_strided_slice %523 {offsets = [0, 256], sizes = [16, 128], strides = [1, 1]} : vector<16x512xf32> to vector<16x128xf32>
    %572 = math.tanh %571 : vector<16x128xf32>
    %573 = vector.extract_strided_slice %523 {offsets = [0, 384], sizes = [16, 128], strides = [1, 1]} : vector<16x512xf32> to vector<16x128xf32>
    %574 = arith.negf %573 : vector<16x128xf32>
    %575 = math.exp %574 : vector<16x128xf32>
    %cst_125 = arith.constant 1.000000e+00 : f32
    %576 = vector.broadcast %cst_125 : f32 to vector<16x128xf32>
    %577 = arith.addf %576, %575 : vector<16x128xf32>
    %578 = arith.divf %576, %577 : vector<16x128xf32>
    %579 = arith.mulf %570, %506 : vector<16x128xf32>
    %580 = arith.mulf %564, %572 : vector<16x128xf32>
    %581 = arith.addf %579, %580 : vector<16x128xf32>
    %582 = math.tanh %581 : vector<16x128xf32>
    %583 = arith.mulf %578, %582 : vector<16x128xf32>
    %584 = vector.shape_cast %558 : vector<16x1xi1> to vector<16x1xi1>
    %585 = vector.broadcast %584 : vector<16x1xi1> to vector<16x128xi1>
    %586 = arith.select %585, %583, %503 : vector<16x128xi1>, vector<16x128xf32>
    %587 = vector.shape_cast %558 : vector<16x1xi1> to vector<16x1xi1>
    %588 = vector.broadcast %587 : vector<16x1xi1> to vector<16x128xi1>
    %589 = arith.select %588, %581, %506 : vector<16x128xi1>, vector<16x128xf32>
    %c7_i32 = arith.constant 7 : i32
    %c9_i32_126 = arith.constant 9 : i32
    %590 = arith.subi %c9_i32_126, %c7_i32 : i32
    %c16_i32_127 = arith.constant 16 : i32
    %591 = arith.muli %c7_i32, %c16_i32_127 : i32
    %592 = tpu.assume_multiple %591, 8 : i32
    %c16_i32_128 = arith.constant 16 : i32
    %593 = arith.muli %590, %c16_i32_128 : i32
    %594 = tpu.assume_multiple %593, 8 : i32
    %595 = arith.index_cast %592 : i32 to index
    %c0_129 = arith.constant 0 : index
    %596 = vector.load %arg14[%595, %c0_129] : memref<160x1024xf32, #tpu.memory_space<vmem>>, vector<16x512xf32>
    %597 = arith.index_cast %594 : i32 to index
    %c512_130 = arith.constant 512 : index
    %598 = vector.load %arg14[%597, %c512_130] : memref<160x1024xf32, #tpu.memory_space<vmem>>, vector<16x512xf32>
    %599 = arith.truncf %553 : vector<16x128xf32> to vector<16x128xbf16>
    %c0_131 = arith.constant 0 : index
    %c0_132 = arith.constant 0 : index
    %600 = vector.load %arg4[%c0_131, %c0_132] : memref<128x512xbf16, #tpu.memory_space<vmem>>, vector<128x512xbf16>
    %cst_133 = arith.constant dense<0.000000e+00> : vector<16x512xf32>
    %601 = tpu.matmul %599, %600, %cst_133 {dimension_numbers = #tpu.dot_dimension_numbers<[1], [0], [0], [1], [0, 0, 1, 1], [], []>} : vector<16x128xbf16>, vector<128x512xbf16>, vector<16x512xf32> -> vector<16x512xf32>
    %602 = arith.addf %596, %601 : vector<16x512xf32>
    %603 = arith.truncf %586 : vector<16x128xf32> to vector<16x128xbf16>
    %c0_134 = arith.constant 0 : index
    %c0_135 = arith.constant 0 : index
    %604 = vector.load %arg5[%c0_134, %c0_135] : memref<128x512xbf16, #tpu.memory_space<vmem>>, vector<128x512xbf16>
    %cst_136 = arith.constant dense<0.000000e+00> : vector<16x512xf32>
    %605 = tpu.matmul %603, %604, %cst_136 {dimension_numbers = #tpu.dot_dimension_numbers<[1], [0], [0], [1], [0, 0, 1, 1], [], []>} : vector<16x128xbf16>, vector<128x512xbf16>, vector<16x512xf32> -> vector<16x512xf32>
    %606 = arith.addf %598, %605 : vector<16x512xf32>
    %607 = vector.broadcast %c7_i32 : i32 to vector<16x1xi32>
    %608 = arith.cmpi slt, %607, %7 : vector<16x1xi32>
    %609 = vector.extract_strided_slice %602 {offsets = [0, 0], sizes = [16, 128], strides = [1, 1]} : vector<16x512xf32> to vector<16x128xf32>
    %610 = arith.negf %609 : vector<16x128xf32>
    %611 = math.exp %610 : vector<16x128xf32>
    %cst_137 = arith.constant 1.000000e+00 : f32
    %612 = vector.broadcast %cst_137 : f32 to vector<16x128xf32>
    %613 = arith.addf %612, %611 : vector<16x128xf32>
    %614 = arith.divf %612, %613 : vector<16x128xf32>
    %615 = vector.extract_strided_slice %602 {offsets = [0, 128], sizes = [16, 128], strides = [1, 1]} : vector<16x512xf32> to vector<16x128xf32>
    %616 = arith.negf %615 : vector<16x128xf32>
    %617 = math.exp %616 : vector<16x128xf32>
    %cst_138 = arith.constant 1.000000e+00 : f32
    %618 = vector.broadcast %cst_138 : f32 to vector<16x128xf32>
    %619 = arith.addf %618, %617 : vector<16x128xf32>
    %620 = arith.divf %618, %619 : vector<16x128xf32>
    %621 = vector.extract_strided_slice %602 {offsets = [0, 256], sizes = [16, 128], strides = [1, 1]} : vector<16x512xf32> to vector<16x128xf32>
    %622 = math.tanh %621 : vector<16x128xf32>
    %623 = vector.extract_strided_slice %602 {offsets = [0, 384], sizes = [16, 128], strides = [1, 1]} : vector<16x512xf32> to vector<16x128xf32>
    %624 = arith.negf %623 : vector<16x128xf32>
    %625 = math.exp %624 : vector<16x128xf32>
    %cst_139 = arith.constant 1.000000e+00 : f32
    %626 = vector.broadcast %cst_139 : f32 to vector<16x128xf32>
    %627 = arith.addf %626, %625 : vector<16x128xf32>
    %628 = arith.divf %626, %627 : vector<16x128xf32>
    %629 = arith.mulf %620, %556 : vector<16x128xf32>
    %630 = arith.mulf %614, %622 : vector<16x128xf32>
    %631 = arith.addf %629, %630 : vector<16x128xf32>
    %632 = math.tanh %631 : vector<16x128xf32>
    %633 = arith.mulf %628, %632 : vector<16x128xf32>
    %634 = vector.shape_cast %608 : vector<16x1xi1> to vector<16x1xi1>
    %635 = vector.broadcast %634 : vector<16x1xi1> to vector<16x128xi1>
    %636 = arith.select %635, %633, %553 : vector<16x128xi1>, vector<16x128xf32>
    %637 = vector.shape_cast %608 : vector<16x1xi1> to vector<16x1xi1>
    %638 = vector.broadcast %637 : vector<16x1xi1> to vector<16x128xi1>
    %639 = arith.select %638, %631, %556 : vector<16x128xi1>, vector<16x128xf32>
    %640 = vector.broadcast %590 : i32 to vector<16x1xi32>
    %641 = arith.cmpi slt, %640, %7 : vector<16x1xi32>
    %642 = vector.extract_strided_slice %606 {offsets = [0, 0], sizes = [16, 128], strides = [1, 1]} : vector<16x512xf32> to vector<16x128xf32>
    %643 = arith.negf %642 : vector<16x128xf32>
    %644 = math.exp %643 : vector<16x128xf32>
    %cst_140 = arith.constant 1.000000e+00 : f32
    %645 = vector.broadcast %cst_140 : f32 to vector<16x128xf32>
    %646 = arith.addf %645, %644 : vector<16x128xf32>
    %647 = arith.divf %645, %646 : vector<16x128xf32>
    %648 = vector.extract_strided_slice %606 {offsets = [0, 128], sizes = [16, 128], strides = [1, 1]} : vector<16x512xf32> to vector<16x128xf32>
    %649 = arith.negf %648 : vector<16x128xf32>
    %650 = math.exp %649 : vector<16x128xf32>
    %cst_141 = arith.constant 1.000000e+00 : f32
    %651 = vector.broadcast %cst_141 : f32 to vector<16x128xf32>
    %652 = arith.addf %651, %650 : vector<16x128xf32>
    %653 = arith.divf %651, %652 : vector<16x128xf32>
    %654 = vector.extract_strided_slice %606 {offsets = [0, 256], sizes = [16, 128], strides = [1, 1]} : vector<16x512xf32> to vector<16x128xf32>
    %655 = math.tanh %654 : vector<16x128xf32>
    %656 = vector.extract_strided_slice %606 {offsets = [0, 384], sizes = [16, 128], strides = [1, 1]} : vector<16x512xf32> to vector<16x128xf32>
    %657 = arith.negf %656 : vector<16x128xf32>
    %658 = math.exp %657 : vector<16x128xf32>
    %cst_142 = arith.constant 1.000000e+00 : f32
    %659 = vector.broadcast %cst_142 : f32 to vector<16x128xf32>
    %660 = arith.addf %659, %658 : vector<16x128xf32>
    %661 = arith.divf %659, %660 : vector<16x128xf32>
    %662 = arith.mulf %653, %589 : vector<16x128xf32>
    %663 = arith.mulf %647, %655 : vector<16x128xf32>
    %664 = arith.addf %662, %663 : vector<16x128xf32>
    %665 = math.tanh %664 : vector<16x128xf32>
    %666 = arith.mulf %661, %665 : vector<16x128xf32>
    %667 = vector.shape_cast %641 : vector<16x1xi1> to vector<16x1xi1>
    %668 = vector.broadcast %667 : vector<16x1xi1> to vector<16x128xi1>
    %669 = arith.select %668, %666, %586 : vector<16x128xi1>, vector<16x128xf32>
    %670 = vector.shape_cast %641 : vector<16x1xi1> to vector<16x1xi1>
    %671 = vector.broadcast %670 : vector<16x1xi1> to vector<16x128xi1>
    %672 = arith.select %671, %664, %589 : vector<16x128xi1>, vector<16x128xf32>
    %c8_i32 = arith.constant 8 : i32
    %c9_i32_143 = arith.constant 9 : i32
    %673 = arith.subi %c9_i32_143, %c8_i32 : i32
    %c16_i32_144 = arith.constant 16 : i32
    %674 = arith.muli %c8_i32, %c16_i32_144 : i32
    %675 = tpu.assume_multiple %674, 8 : i32
    %c16_i32_145 = arith.constant 16 : i32
    %676 = arith.muli %673, %c16_i32_145 : i32
    %677 = tpu.assume_multiple %676, 8 : i32
    %678 = arith.index_cast %675 : i32 to index
    %c0_146 = arith.constant 0 : index
    %679 = vector.load %arg14[%678, %c0_146] : memref<160x1024xf32, #tpu.memory_space<vmem>>, vector<16x512xf32>
    %680 = arith.index_cast %677 : i32 to index
    %c512_147 = arith.constant 512 : index
    %681 = vector.load %arg14[%680, %c512_147] : memref<160x1024xf32, #tpu.memory_space<vmem>>, vector<16x512xf32>
    %682 = arith.truncf %636 : vector<16x128xf32> to vector<16x128xbf16>
    %c0_148 = arith.constant 0 : index
    %c0_149 = arith.constant 0 : index
    %683 = vector.load %arg4[%c0_148, %c0_149] : memref<128x512xbf16, #tpu.memory_space<vmem>>, vector<128x512xbf16>
    %cst_150 = arith.constant dense<0.000000e+00> : vector<16x512xf32>
    %684 = tpu.matmul %682, %683, %cst_150 {dimension_numbers = #tpu.dot_dimension_numbers<[1], [0], [0], [1], [0, 0, 1, 1], [], []>} : vector<16x128xbf16>, vector<128x512xbf16>, vector<16x512xf32> -> vector<16x512xf32>
    %685 = arith.addf %679, %684 : vector<16x512xf32>
    %686 = arith.truncf %669 : vector<16x128xf32> to vector<16x128xbf16>
    %c0_151 = arith.constant 0 : index
    %c0_152 = arith.constant 0 : index
    %687 = vector.load %arg5[%c0_151, %c0_152] : memref<128x512xbf16, #tpu.memory_space<vmem>>, vector<128x512xbf16>
    %cst_153 = arith.constant dense<0.000000e+00> : vector<16x512xf32>
    %688 = tpu.matmul %686, %687, %cst_153 {dimension_numbers = #tpu.dot_dimension_numbers<[1], [0], [0], [1], [0, 0, 1, 1], [], []>} : vector<16x128xbf16>, vector<128x512xbf16>, vector<16x512xf32> -> vector<16x512xf32>
    %689 = arith.addf %681, %688 : vector<16x512xf32>
    %690 = vector.broadcast %c8_i32 : i32 to vector<16x1xi32>
    %691 = arith.cmpi slt, %690, %7 : vector<16x1xi32>
    %692 = vector.extract_strided_slice %685 {offsets = [0, 0], sizes = [16, 128], strides = [1, 1]} : vector<16x512xf32> to vector<16x128xf32>
    %693 = arith.negf %692 : vector<16x128xf32>
    %694 = math.exp %693 : vector<16x128xf32>
    %cst_154 = arith.constant 1.000000e+00 : f32
    %695 = vector.broadcast %cst_154 : f32 to vector<16x128xf32>
    %696 = arith.addf %695, %694 : vector<16x128xf32>
    %697 = arith.divf %695, %696 : vector<16x128xf32>
    %698 = vector.extract_strided_slice %685 {offsets = [0, 128], sizes = [16, 128], strides = [1, 1]} : vector<16x512xf32> to vector<16x128xf32>
    %699 = arith.negf %698 : vector<16x128xf32>
    %700 = math.exp %699 : vector<16x128xf32>
    %cst_155 = arith.constant 1.000000e+00 : f32
    %701 = vector.broadcast %cst_155 : f32 to vector<16x128xf32>
    %702 = arith.addf %701, %700 : vector<16x128xf32>
    %703 = arith.divf %701, %702 : vector<16x128xf32>
    %704 = vector.extract_strided_slice %685 {offsets = [0, 256], sizes = [16, 128], strides = [1, 1]} : vector<16x512xf32> to vector<16x128xf32>
    %705 = math.tanh %704 : vector<16x128xf32>
    %706 = vector.extract_strided_slice %685 {offsets = [0, 384], sizes = [16, 128], strides = [1, 1]} : vector<16x512xf32> to vector<16x128xf32>
    %707 = arith.negf %706 : vector<16x128xf32>
    %708 = math.exp %707 : vector<16x128xf32>
    %cst_156 = arith.constant 1.000000e+00 : f32
    %709 = vector.broadcast %cst_156 : f32 to vector<16x128xf32>
    %710 = arith.addf %709, %708 : vector<16x128xf32>
    %711 = arith.divf %709, %710 : vector<16x128xf32>
    %712 = arith.mulf %703, %639 : vector<16x128xf32>
    %713 = arith.mulf %697, %705 : vector<16x128xf32>
    %714 = arith.addf %712, %713 : vector<16x128xf32>
    %715 = math.tanh %714 : vector<16x128xf32>
    %716 = arith.mulf %711, %715 : vector<16x128xf32>
    %717 = vector.shape_cast %691 : vector<16x1xi1> to vector<16x1xi1>
    %718 = vector.broadcast %717 : vector<16x1xi1> to vector<16x128xi1>
    %719 = arith.select %718, %716, %636 : vector<16x128xi1>, vector<16x128xf32>
    %720 = vector.shape_cast %691 : vector<16x1xi1> to vector<16x1xi1>
    %721 = vector.broadcast %720 : vector<16x1xi1> to vector<16x128xi1>
    %722 = arith.select %721, %714, %639 : vector<16x128xi1>, vector<16x128xf32>
    %723 = vector.broadcast %673 : i32 to vector<16x1xi32>
    %724 = arith.cmpi slt, %723, %7 : vector<16x1xi32>
    %725 = vector.extract_strided_slice %689 {offsets = [0, 0], sizes = [16, 128], strides = [1, 1]} : vector<16x512xf32> to vector<16x128xf32>
    %726 = arith.negf %725 : vector<16x128xf32>
    %727 = math.exp %726 : vector<16x128xf32>
    %cst_157 = arith.constant 1.000000e+00 : f32
    %728 = vector.broadcast %cst_157 : f32 to vector<16x128xf32>
    %729 = arith.addf %728, %727 : vector<16x128xf32>
    %730 = arith.divf %728, %729 : vector<16x128xf32>
    %731 = vector.extract_strided_slice %689 {offsets = [0, 128], sizes = [16, 128], strides = [1, 1]} : vector<16x512xf32> to vector<16x128xf32>
    %732 = arith.negf %731 : vector<16x128xf32>
    %733 = math.exp %732 : vector<16x128xf32>
    %cst_158 = arith.constant 1.000000e+00 : f32
    %734 = vector.broadcast %cst_158 : f32 to vector<16x128xf32>
    %735 = arith.addf %734, %733 : vector<16x128xf32>
    %736 = arith.divf %734, %735 : vector<16x128xf32>
    %737 = vector.extract_strided_slice %689 {offsets = [0, 256], sizes = [16, 128], strides = [1, 1]} : vector<16x512xf32> to vector<16x128xf32>
    %738 = math.tanh %737 : vector<16x128xf32>
    %739 = vector.extract_strided_slice %689 {offsets = [0, 384], sizes = [16, 128], strides = [1, 1]} : vector<16x512xf32> to vector<16x128xf32>
    %740 = arith.negf %739 : vector<16x128xf32>
    %741 = math.exp %740 : vector<16x128xf32>
    %cst_159 = arith.constant 1.000000e+00 : f32
    %742 = vector.broadcast %cst_159 : f32 to vector<16x128xf32>
    %743 = arith.addf %742, %741 : vector<16x128xf32>
    %744 = arith.divf %742, %743 : vector<16x128xf32>
    %745 = arith.mulf %736, %672 : vector<16x128xf32>
    %746 = arith.mulf %730, %738 : vector<16x128xf32>
    %747 = arith.addf %745, %746 : vector<16x128xf32>
    %748 = math.tanh %747 : vector<16x128xf32>
    %749 = arith.mulf %744, %748 : vector<16x128xf32>
    %750 = vector.shape_cast %724 : vector<16x1xi1> to vector<16x1xi1>
    %751 = vector.broadcast %750 : vector<16x1xi1> to vector<16x128xi1>
    %752 = arith.select %751, %749, %669 : vector<16x128xi1>, vector<16x128xf32>
    %753 = vector.shape_cast %724 : vector<16x1xi1> to vector<16x1xi1>
    %754 = vector.broadcast %753 : vector<16x1xi1> to vector<16x128xi1>
    %755 = arith.select %754, %747, %672 : vector<16x128xi1>, vector<16x128xf32>
    %c9_i32_160 = arith.constant 9 : i32
    %c9_i32_161 = arith.constant 9 : i32
    %756 = arith.subi %c9_i32_161, %c9_i32_160 : i32
    %c16_i32_162 = arith.constant 16 : i32
    %757 = arith.muli %c9_i32_160, %c16_i32_162 : i32
    %758 = tpu.assume_multiple %757, 8 : i32
    %c16_i32_163 = arith.constant 16 : i32
    %759 = arith.muli %756, %c16_i32_163 : i32
    %760 = tpu.assume_multiple %759, 8 : i32
    %761 = arith.index_cast %758 : i32 to index
    %c0_164 = arith.constant 0 : index
    %762 = vector.load %arg14[%761, %c0_164] : memref<160x1024xf32, #tpu.memory_space<vmem>>, vector<16x512xf32>
    %763 = arith.index_cast %760 : i32 to index
    %c512_165 = arith.constant 512 : index
    %764 = vector.load %arg14[%763, %c512_165] : memref<160x1024xf32, #tpu.memory_space<vmem>>, vector<16x512xf32>
    %765 = arith.truncf %719 : vector<16x128xf32> to vector<16x128xbf16>
    %c0_166 = arith.constant 0 : index
    %c0_167 = arith.constant 0 : index
    %766 = vector.load %arg4[%c0_166, %c0_167] : memref<128x512xbf16, #tpu.memory_space<vmem>>, vector<128x512xbf16>
    %cst_168 = arith.constant dense<0.000000e+00> : vector<16x512xf32>
    %767 = tpu.matmul %765, %766, %cst_168 {dimension_numbers = #tpu.dot_dimension_numbers<[1], [0], [0], [1], [0, 0, 1, 1], [], []>} : vector<16x128xbf16>, vector<128x512xbf16>, vector<16x512xf32> -> vector<16x512xf32>
    %768 = arith.addf %762, %767 : vector<16x512xf32>
    %769 = arith.truncf %752 : vector<16x128xf32> to vector<16x128xbf16>
    %c0_169 = arith.constant 0 : index
    %c0_170 = arith.constant 0 : index
    %770 = vector.load %arg5[%c0_169, %c0_170] : memref<128x512xbf16, #tpu.memory_space<vmem>>, vector<128x512xbf16>
    %cst_171 = arith.constant dense<0.000000e+00> : vector<16x512xf32>
    %771 = tpu.matmul %769, %770, %cst_171 {dimension_numbers = #tpu.dot_dimension_numbers<[1], [0], [0], [1], [0, 0, 1, 1], [], []>} : vector<16x128xbf16>, vector<128x512xbf16>, vector<16x512xf32> -> vector<16x512xf32>
    %772 = arith.addf %764, %771 : vector<16x512xf32>
    %773 = vector.broadcast %c9_i32_160 : i32 to vector<16x1xi32>
    %774 = arith.cmpi slt, %773, %7 : vector<16x1xi32>
    %775 = vector.extract_strided_slice %768 {offsets = [0, 0], sizes = [16, 128], strides = [1, 1]} : vector<16x512xf32> to vector<16x128xf32>
    %776 = arith.negf %775 : vector<16x128xf32>
    %777 = math.exp %776 : vector<16x128xf32>
    %cst_172 = arith.constant 1.000000e+00 : f32
    %778 = vector.broadcast %cst_172 : f32 to vector<16x128xf32>
    %779 = arith.addf %778, %777 : vector<16x128xf32>
    %780 = arith.divf %778, %779 : vector<16x128xf32>
    %781 = vector.extract_strided_slice %768 {offsets = [0, 128], sizes = [16, 128], strides = [1, 1]} : vector<16x512xf32> to vector<16x128xf32>
    %782 = arith.negf %781 : vector<16x128xf32>
    %783 = math.exp %782 : vector<16x128xf32>
    %cst_173 = arith.constant 1.000000e+00 : f32
    %784 = vector.broadcast %cst_173 : f32 to vector<16x128xf32>
    %785 = arith.addf %784, %783 : vector<16x128xf32>
    %786 = arith.divf %784, %785 : vector<16x128xf32>
    %787 = vector.extract_strided_slice %768 {offsets = [0, 256], sizes = [16, 128], strides = [1, 1]} : vector<16x512xf32> to vector<16x128xf32>
    %788 = math.tanh %787 : vector<16x128xf32>
    %789 = vector.extract_strided_slice %768 {offsets = [0, 384], sizes = [16, 128], strides = [1, 1]} : vector<16x512xf32> to vector<16x128xf32>
    %790 = arith.negf %789 : vector<16x128xf32>
    %791 = math.exp %790 : vector<16x128xf32>
    %cst_174 = arith.constant 1.000000e+00 : f32
    %792 = vector.broadcast %cst_174 : f32 to vector<16x128xf32>
    %793 = arith.addf %792, %791 : vector<16x128xf32>
    %794 = arith.divf %792, %793 : vector<16x128xf32>
    %795 = arith.mulf %786, %722 : vector<16x128xf32>
    %796 = arith.mulf %780, %788 : vector<16x128xf32>
    %797 = arith.addf %795, %796 : vector<16x128xf32>
    %798 = math.tanh %797 : vector<16x128xf32>
    %799 = arith.mulf %794, %798 : vector<16x128xf32>
    %800 = vector.shape_cast %774 : vector<16x1xi1> to vector<16x1xi1>
    %801 = vector.broadcast %800 : vector<16x1xi1> to vector<16x128xi1>
    %802 = arith.select %801, %799, %719 : vector<16x128xi1>, vector<16x128xf32>
    %803 = vector.shape_cast %774 : vector<16x1xi1> to vector<16x1xi1>
    %804 = vector.broadcast %803 : vector<16x1xi1> to vector<16x128xi1>
    %805 = arith.select %804, %797, %722 : vector<16x128xi1>, vector<16x128xf32>
    %806 = vector.broadcast %756 : i32 to vector<16x1xi32>
    %807 = arith.cmpi slt, %806, %7 : vector<16x1xi32>
    %808 = vector.extract_strided_slice %772 {offsets = [0, 0], sizes = [16, 128], strides = [1, 1]} : vector<16x512xf32> to vector<16x128xf32>
    %809 = arith.negf %808 : vector<16x128xf32>
    %810 = math.exp %809 : vector<16x128xf32>
    %cst_175 = arith.constant 1.000000e+00 : f32
    %811 = vector.broadcast %cst_175 : f32 to vector<16x128xf32>
    %812 = arith.addf %811, %810 : vector<16x128xf32>
    %813 = arith.divf %811, %812 : vector<16x128xf32>
    %814 = vector.extract_strided_slice %772 {offsets = [0, 128], sizes = [16, 128], strides = [1, 1]} : vector<16x512xf32> to vector<16x128xf32>
    %815 = arith.negf %814 : vector<16x128xf32>
    %816 = math.exp %815 : vector<16x128xf32>
    %cst_176 = arith.constant 1.000000e+00 : f32
    %817 = vector.broadcast %cst_176 : f32 to vector<16x128xf32>
    %818 = arith.addf %817, %816 : vector<16x128xf32>
    %819 = arith.divf %817, %818 : vector<16x128xf32>
    %820 = vector.extract_strided_slice %772 {offsets = [0, 256], sizes = [16, 128], strides = [1, 1]} : vector<16x512xf32> to vector<16x128xf32>
    %821 = math.tanh %820 : vector<16x128xf32>
    %822 = vector.extract_strided_slice %772 {offsets = [0, 384], sizes = [16, 128], strides = [1, 1]} : vector<16x512xf32> to vector<16x128xf32>
    %823 = arith.negf %822 : vector<16x128xf32>
    %824 = math.exp %823 : vector<16x128xf32>
    %cst_177 = arith.constant 1.000000e+00 : f32
    %825 = vector.broadcast %cst_177 : f32 to vector<16x128xf32>
    %826 = arith.addf %825, %824 : vector<16x128xf32>
    %827 = arith.divf %825, %826 : vector<16x128xf32>
    %828 = arith.mulf %819, %755 : vector<16x128xf32>
    %829 = arith.mulf %813, %821 : vector<16x128xf32>
    %830 = arith.addf %828, %829 : vector<16x128xf32>
    %831 = math.tanh %830 : vector<16x128xf32>
    %832 = arith.mulf %827, %831 : vector<16x128xf32>
    %833 = vector.shape_cast %807 : vector<16x1xi1> to vector<16x1xi1>
    %834 = vector.broadcast %833 : vector<16x1xi1> to vector<16x128xi1>
    %835 = arith.select %834, %832, %752 : vector<16x128xi1>, vector<16x128xf32>
    %836 = vector.shape_cast %807 : vector<16x1xi1> to vector<16x1xi1>
    %837 = vector.broadcast %836 : vector<16x1xi1> to vector<16x128xi1>
    %838 = arith.select %837, %830, %755 : vector<16x128xi1>, vector<16x128xf32>
    %c10_i32 = arith.constant 10 : i32
    %839 = vector.extract_strided_slice %802 {offsets = [0, 0], sizes = [8, 128], strides = [1, 1]} : vector<16x128xf32> to vector<8x128xf32>
    %840 = arith.truncf %839 : vector<8x128xf32> to vector<8x128xbf16>
    %841 = vector.extract_strided_slice %802 {offsets = [8, 0], sizes = [8, 128], strides = [1, 1]} : vector<16x128xf32> to vector<8x128xf32>
    %842 = arith.truncf %841 : vector<8x128xf32> to vector<8x128xbf16>
    %843 = vector.extract_strided_slice %835 {offsets = [0, 0], sizes = [8, 128], strides = [1, 1]} : vector<16x128xf32> to vector<8x128xf32>
    %844 = arith.truncf %843 : vector<8x128xf32> to vector<8x128xbf16>
    %845 = vector.extract_strided_slice %835 {offsets = [8, 0], sizes = [8, 128], strides = [1, 1]} : vector<16x128xf32> to vector<8x128xf32>
    %846 = arith.truncf %845 : vector<8x128xf32> to vector<8x128xbf16>
    %c0_178 = arith.constant 0 : index
    %c0_179 = arith.constant 0 : index
    %847 = vector.load %arg6[%c0_178, %c0_179] : memref<128x128xbf16, #tpu.memory_space<vmem>>, vector<128x128xbf16>
    %c0_180 = arith.constant 0 : index
    %c0_181 = arith.constant 0 : index
    %848 = vector.load %arg7[%c0_180, %c0_181] : memref<128x128xbf16, #tpu.memory_space<vmem>>, vector<128x128xbf16>
    %c0_182 = arith.constant 0 : index
    %c0_183 = arith.constant 0 : index
    %849 = vector.load %arg8[%c0_182, %c0_183] : memref<128x128xbf16, #tpu.memory_space<vmem>>, vector<128x128xbf16>
    %c0_184 = arith.constant 0 : index
    %c0_185 = arith.constant 0 : index
    %850 = vector.load %arg9[%c0_184, %c0_185] : memref<128x128xbf16, #tpu.memory_space<vmem>>, vector<128x128xbf16>
    %c0_186 = arith.constant 0 : index
    %c0_187 = arith.constant 0 : index
    %851 = vector.load %arg10[%c0_186, %c0_187] : memref<1x128xf32, #tpu.memory_space<vmem>>, vector<1x128xf32>
    %cst_188 = arith.constant dense<0.000000e+00> : vector<8x128xf32>
    %852 = tpu.matmul %840, %847, %cst_188 {dimension_numbers = #tpu.dot_dimension_numbers<[1], [0], [0], [1], [0, 0, 1, 1], [], []>} : vector<8x128xbf16>, vector<128x128xbf16>, vector<8x128xf32> -> vector<8x128xf32>
    %cst_189 = arith.constant dense<0.000000e+00> : vector<8x128xf32>
    %853 = tpu.matmul %844, %848, %cst_189 {dimension_numbers = #tpu.dot_dimension_numbers<[1], [0], [0], [1], [0, 0, 1, 1], [], []>} : vector<8x128xbf16>, vector<128x128xbf16>, vector<8x128xf32> -> vector<8x128xf32>
    %854 = arith.addf %852, %853 : vector<8x128xf32>
    %cst_190 = arith.constant dense<0.000000e+00> : vector<8x128xf32>
    %855 = tpu.matmul %842, %849, %cst_190 {dimension_numbers = #tpu.dot_dimension_numbers<[1], [0], [0], [1], [0, 0, 1, 1], [], []>} : vector<8x128xbf16>, vector<128x128xbf16>, vector<8x128xf32> -> vector<8x128xf32>
    %856 = arith.addf %854, %855 : vector<8x128xf32>
    %cst_191 = arith.constant dense<0.000000e+00> : vector<8x128xf32>
    %857 = tpu.matmul %846, %850, %cst_191 {dimension_numbers = #tpu.dot_dimension_numbers<[1], [0], [0], [1], [0, 0, 1, 1], [], []>} : vector<8x128xbf16>, vector<128x128xbf16>, vector<8x128xf32> -> vector<8x128xf32>
    %858 = arith.addf %856, %857 : vector<8x128xf32>
    %859 = vector.broadcast %851 : vector<1x128xf32> to vector<8x128xf32>
    %860 = arith.addf %858, %859 : vector<8x128xf32>
    %cst_192 = arith.constant dense<0.000000e+00> : vector<8x128xf32>
    %861 = tpu.matmul %842, %847, %cst_192 {dimension_numbers = #tpu.dot_dimension_numbers<[1], [0], [0], [1], [0, 0, 1, 1], [], []>} : vector<8x128xbf16>, vector<128x128xbf16>, vector<8x128xf32> -> vector<8x128xf32>
    %cst_193 = arith.constant dense<0.000000e+00> : vector<8x128xf32>
    %862 = tpu.matmul %846, %848, %cst_193 {dimension_numbers = #tpu.dot_dimension_numbers<[1], [0], [0], [1], [0, 0, 1, 1], [], []>} : vector<8x128xbf16>, vector<128x128xbf16>, vector<8x128xf32> -> vector<8x128xf32>
    %863 = arith.addf %861, %862 : vector<8x128xf32>
    %cst_194 = arith.constant dense<0.000000e+00> : vector<8x128xf32>
    %864 = tpu.matmul %840, %849, %cst_194 {dimension_numbers = #tpu.dot_dimension_numbers<[1], [0], [0], [1], [0, 0, 1, 1], [], []>} : vector<8x128xbf16>, vector<128x128xbf16>, vector<8x128xf32> -> vector<8x128xf32>
    %865 = arith.addf %863, %864 : vector<8x128xf32>
    %cst_195 = arith.constant dense<0.000000e+00> : vector<8x128xf32>
    %866 = tpu.matmul %844, %850, %cst_195 {dimension_numbers = #tpu.dot_dimension_numbers<[1], [0], [0], [1], [0, 0, 1, 1], [], []>} : vector<8x128xbf16>, vector<128x128xbf16>, vector<8x128xf32> -> vector<8x128xf32>
    %867 = arith.addf %865, %866 : vector<8x128xf32>
    %868 = vector.broadcast %851 : vector<1x128xf32> to vector<8x128xf32>
    %869 = arith.addf %867, %868 : vector<8x128xf32>
    %cst_196 = arith.constant 0.000000e+00 : f32
    %870 = vector.broadcast %cst_196 : f32 to vector<8x128xf32>
    %871 = arith.maximumf %860, %870 : vector<8x128xf32>
    %cst_197 = arith.constant 0.000000e+00 : f32
    %872 = vector.broadcast %cst_197 : f32 to vector<8x128xf32>
    %873 = arith.maximumf %869, %872 : vector<8x128xf32>
    %874 = arith.addf %871, %873 : vector<8x128xf32>
    %cst_198 = arith.constant 5.000000e-01 : f32
    %875 = vector.broadcast %cst_198 : f32 to vector<8x128xf32>
    %876 = arith.mulf %874, %875 : vector<8x128xf32>
    %877 = arith.truncf %876 : vector<8x128xf32> to vector<8x128xbf16>
    %c0_199 = arith.constant 0 : index
    %c0_200 = arith.constant 0 : index
    %878 = vector.load %arg11[%c0_199, %c0_200] : memref<128x128xbf16, #tpu.memory_space<vmem>>, vector<128x128xbf16>
    %cst_201 = arith.constant dense<0.000000e+00> : vector<8x128xf32>
    %879 = tpu.matmul %877, %878, %cst_201 {dimension_numbers = #tpu.dot_dimension_numbers<[1], [0], [0], [1], [0, 0, 1, 1], [], []>} : vector<8x128xbf16>, vector<128x128xbf16>, vector<8x128xf32> -> vector<8x128xf32>
    %c0_202 = arith.constant 0 : index
    %c0_203 = arith.constant 0 : index
    %880 = vector.load %arg12[%c0_202, %c0_203] : memref<1x128xf32, #tpu.memory_space<vmem>>, vector<1x128xf32>
    %881 = vector.broadcast %880 : vector<1x128xf32> to vector<8x128xf32>
    %882 = arith.addf %879, %881 : vector<8x128xf32>
    %c0_204 = arith.constant 0 : index
    %c0_205 = arith.constant 0 : index
    %883 = vector.load %arg13[%c0_204, %c0_205] : memref<8x128xf32, #tpu.memory_space<vmem>>, vector<8x128xf32>
    tpu.vector_store %arg13[%c0_204, %c0_205], %882 {strides = array<i32>} : memref<8x128xf32, #tpu.memory_space<vmem>>, vector<8x128xf32>,
    return
  }
}

</mosaic_0001>

<llo_original>
// kernel: siamese_lstm_forward.1
$region0: #{siamese_lstm_forward.1}
  #allocation0 [shape = 'u32[]', space=smem, size = 0x4, offset = 0x4, fixed_abs, tag = 'smem constant byte address 0x4 - core index']
  #allocation1 [shape = 'u32[144,128]{1,0:T(1,128)}', space=vmem, size = 0x12000, scoped, tag = 'internal scratch']
  #allocation2 [shape = 'f32[160,1024]{1,0:T(8,128)}', space=vmem, size = 0xa0000, scoped, tag = 'scratch operand']
  %s0 = inlined_call_operand.vmem [shape: bf16[160,32], index: 0, kind: input, shape index: {}]
  %s1 = inlined_call_operand.vmem [shape: s32[16,1], index: 1, kind: input, shape index: {}]
  %s2 = inlined_call_operand.vmem [shape: bf16[32,1024], index: 2, kind: input, shape index: {}]
  %s3 = inlined_call_operand.vmem [shape: f32[1,1024], index: 3, kind: input, shape index: {}]
  %s4 = inlined_call_operand.vmem [shape: bf16[128,512], index: 4, kind: input, shape index: {}]
  %s5 = inlined_call_operand.vmem [shape: bf16[128,512], index: 5, kind: input, shape index: {}]
  %s6 = inlined_call_operand.vmem [shape: bf16[128,128], index: 6, kind: input, shape index: {}]
  %s7 = inlined_call_operand.vmem [shape: bf16[128,128], index: 7, kind: input, shape index: {}]
  %s8 = inlined_call_operand.vmem [shape: bf16[128,128], index: 8, kind: input, shape index: {}]
  %s9 = inlined_call_operand.vmem [shape: bf16[128,128], index: 9, kind: input, shape index: {}]
  %s10 = inlined_call_operand.vmem [shape: f32[1,128], index: 10, kind: input, shape index: {}]
  %s11 = inlined_call_operand.vmem [shape: bf16[128,128], index: 11, kind: input, shape index: {}]
  %s12 = inlined_call_operand.vmem [shape: f32[1,128], index: 12, kind: input, shape index: {}]
  %s13 = inlined_call_operand.vmem [shape: f32[8,128], index: 13, kind: output, shape index: {}]
  %s14 = sld [smem:[#allocation0]]
  $region62: #{siamese_lstm_forward.1} parent=0
    _
  %s16 = ssub.s32 1, %s14
  %s17 = scalar_select 0, %s16, %s14
  // Predicated region
  $region2: #{siamese_lstm_forward.1} parent=0 // pred_check
    _
  $region3: #{siamese_lstm_forward.1} parent=0 // pred_check_branch
    %19 = sbr.rel (0) target = $region5
  $region4: #{siamese_lstm_forward.1} parent=0 // pred_region
    _
  $region5: #{siamese_lstm_forward.1} parent=0 // pred_fallthru
    _
  // Predicated region
  $region6: #{siamese_lstm_forward.1} parent=0 // pred_check
    _
  $region7: #{siamese_lstm_forward.1} parent=0 // pred_check_branch
    %21 = sbr.rel (0) target = $region9
  $region8: #{siamese_lstm_forward.1} parent=0 // pred_region
    _
  $region9: #{siamese_lstm_forward.1} parent=0 // pred_fallthru
    _
  // Predicated region
  $region10: #{siamese_lstm_forward.1} parent=0 // pred_check
    _
  $region11: #{siamese_lstm_forward.1} parent=0 // pred_check_branch
    %23 = sbr.rel (0) target = $region13
  $region12: #{siamese_lstm_forward.1} parent=0 // pred_region
    _
  $region13: #{siamese_lstm_forward.1} parent=0 // pred_fallthru
    _
  // Predicated region
  $region14: #{siamese_lstm_forward.1} parent=0 // pred_check
    _
  $region15: #{siamese_lstm_forward.1} parent=0 // pred_check_branch
    %25 = sbr.rel (0) target = $region17
  $region16: #{siamese_lstm_forward.1} parent=0 // pred_region
    _
  $region17: #{siamese_lstm_forward.1} parent=0 // pred_fallthru
    _
  // Predicated region
  $region18: #{siamese_lstm_forward.1} parent=0 // pred_check
    _
  $region19: #{siamese_lstm_forward.1} parent=0 // pred_check_branch
    %27 = sbr.rel (0) target = $region21
  $region20: #{siamese_lstm_forward.1} parent=0 // pred_region
    _
  $region21: #{siamese_lstm_forward.1} parent=0 // pred_fallthru
    _
  // Predicated region
  $region22: #{siamese_lstm_forward.1} parent=0 // pred_check
    _
  $region23: #{siamese_lstm_forward.1} parent=0 // pred_check_branch
    %29 = sbr.rel (0) target = $region25
  $region24: #{siamese_lstm_forward.1} parent=0 // pred_region
    _
  $region25: #{siamese_lstm_forward.1} parent=0 // pred_fallthru
    _
  // Predicated region
  $region26: #{siamese_lstm_forward.1} parent=0 // pred_check
    _
  $region27: #{siamese_lstm_forward.1} parent=0 // pred_check_branch
    %31 = sbr.rel (0) target = $region29
  $region28: #{siamese_lstm_forward.1} parent=0 // pred_region
    _
  $region29: #{siamese_lstm_forward.1} parent=0 // pred_fallthru
    _
  // Predicated region
  $region30: #{siamese_lstm_forward.1} parent=0 // pred_check
    _
  $region31: #{siamese_lstm_forward.1} parent=0 // pred_check_branch
    %33 = sbr.rel (0) target = $region33
  $region32: #{siamese_lstm_forward.1} parent=0 // pred_region
    _
  $region33: #{siamese_lstm_forward.1} parent=0 // pred_fallthru
    _
  // Predicated region
  $region34: #{siamese_lstm_forward.1} parent=0 // pred_check
    _
  $region35: #{siamese_lstm_forward.1} parent=0 // pred_check_branch
    %35 = sbr.rel (0) target = $region37
  $region36: #{siamese_lstm_forward.1} parent=0 // pred_region
    _
  $region37: #{siamese_lstm_forward.1} parent=0 // pred_fallthru
    _
  // Predicated region
  $region38: #{siamese_lstm_forward.1} parent=0 // pred_check
    _
  $region39: #{siamese_lstm_forward.1} parent=0 // pred_check_branch
    %37 = sbr.rel (0) target = $region41
  $region40: #{siamese_lstm_forward.1} parent=0 // pred_region
    _
  $region41: #{siamese_lstm_forward.1} parent=0 // pred_fallthru
    _
  // Predicated region
  $region42: #{siamese_lstm_forward.1} parent=0 // pred_check
    _
  $region43: #{siamese_lstm_forward.1} parent=0 // pred_check_branch
    %39 = sbr.rel (0) target = $region45
  $region44: #{siamese_lstm_forward.1} parent=0 // pred_region
    _
  $region45: #{siamese_lstm_forward.1} parent=0 // pred_fallthru
    _
  // Predicated region
  $region46: #{siamese_lstm_forward.1} parent=0 // pred_check
    _
  $region47: #{siamese_lstm_forward.1} parent=0 // pred_check_branch
    %41 = sbr.rel (0) target = $region49
  $region48: #{siamese_lstm_forward.1} parent=0 // pred_region
    _
  $region49: #{siamese_lstm_forward.1} parent=0 // pred_fallthru
    _
  // Predicated region
  $region50: #{siamese_lstm_forward.1} parent=0 // pred_check
    _
  $region51: #{siamese_lstm_forward.1} parent=0 // pred_check_branch
    %43 = sbr.rel (0) target = $region53
  $region52: #{siamese_lstm_forward.1} parent=0 // pred_region
    _
  $region53: #{siamese_lstm_forward.1} parent=0 // pred_fallthru
    _
  %v45 = vld [vmem:[%s0] sm:$0xf]
  %v46 = vld [vmem:[%s0 + $0x4] sm:$0xf]
  %v47 = vld [vmem:[%s0 + $0x8] sm:$0xf]
  %v48 = vld [vmem:[%s0 + $0xc] sm:$0xf]
  %v49 = vld [vmem:[%s0 + $0x10] sm:$0xf]
  %v50 = vld [vmem:[%s0 + $0x14] sm:$0xf]
  %v51 = vld [vmem:[%s0 + $0x18] sm:$0xf]
  %v52 = vld [vmem:[%s0 + $0x1c] sm:$0xf]
  %v53 = vld [vmem:[%s0 + $0x20] sm:$0xf]
  %v54 = vld [vmem:[%s0 + $0x24] sm:$0xf]
  %v55 = vld [vmem:[%s0 + $0x28] sm:$0xf]
  %v56 = vld [vmem:[%s0 + $0x2c] sm:$0xf]
  %v57 = vld [vmem:[%s0 + $0x30] sm:$0xf]
  %v58 = vld [vmem:[%s0 + $0x34] sm:$0xf]
  %v59 = vld [vmem:[%s0 + $0x38] sm:$0xf]
  %v60 = vld [vmem:[%s0 + $0x3c] sm:$0xf]
  %v61 = vld [vmem:[%s0 + $0x40] sm:$0xf]
  %v62 = vld [vmem:[%s0 + $0x44] sm:$0xf]
  %v63 = vld [vmem:[%s0 + $0x48] sm:$0xf]
  %v64 = vld [vmem:[%s0 + $0x4c] sm:$0xf]
  %v65 = vld [vmem:[%s2] sm:$0xff]
  %v66 = vld [vmem:[%s2 + $0x8] sm:$0xff]
  %v67 = vld [vmem:[%s2 + $0x10] sm:$0xff]
  %v68 = vld [vmem:[%s2 + $0x18] sm:$0xff]
  %v69 = vld [vmem:[%s2 + $0x20] sm:$0xff]
  %v70 = vld [vmem:[%s2 + $0x28] sm:$0xff]
  %v71 = vld [vmem:[%s2 + $0x30] sm:$0xff]
  %v72 = vld [vmem:[%s2 + $0x38] sm:$0xff]
  %v73 = vld [vmem:[%s2 + $0x40] sm:$0xff]
  %v74 = vld [vmem:[%s2 + $0x48] sm:$0xff]
  %v75 = vld [vmem:[%s2 + $0x50] sm:$0xff]
  %v76 = vld [vmem:[%s2 + $0x58] sm:$0xff]
  %v77 = vld [vmem:[%s2 + $0x60] sm:$0xff]
  %v78 = vld [vmem:[%s2 + $0x68] sm:$0xff]
  %v79 = vld [vmem:[%s2 + $0x70] sm:$0xff]
  %v80 = vld [vmem:[%s2 + $0x78] sm:$0xff]
  %v81 = vld [vmem:[%s3] sm:$0xff]
  %v83 = vlaneseq
  %v84 = vshrl.u32 %v83, 7
  %v85 = vsub.s32 0, %v84
  %v86 = vrot.slane %v81, %v85
  %v87 = vlaneseq
  %v88 = vshrl.u32 %v87, 7
  %v89 = vsub.s32 1, %v88
  %v90 = vrot.slane %v81, %v89
  %v91 = vlaneseq
  %v92 = vshrl.u32 %v91, 7
  %v93 = vsub.s32 2, %v92
  %v94 = vrot.slane %v81, %v93
  %v95 = vlaneseq
  %v96 = vshrl.u32 %v95, 7
  %v97 = vsub.s32 3, %v96
  %v98 = vrot.slane %v81, %v97
  %v99 = vlaneseq
  %v100 = vshrl.u32 %v99, 7
  %v101 = vsub.s32 4, %v100
  %v102 = vrot.slane %v81, %v101
  %v103 = vlaneseq
  %v104 = vshrl.u32 %v103, 7
  %v105 = vsub.s32 5, %v104
  %v106 = vrot.slane %v81, %v105
  %v107 = vlaneseq
  %v108 = vshrl.u32 %v107, 7
  %v109 = vsub.s32 6, %v108
  %v110 = vrot.slane %v81, %v109
  %v111 = vlaneseq
  %v112 = vshrl.u32 %v111, 7
  %v113 = vsub.s32 7, %v112
  %v114 = vrot.slane %v81, %v113
  %v143 = vunpack.c.l.b16 %v45
  %v144 = vunpack.c.l.b16 %v46
  %v145 = vunpack.c.l.b16 %v47
  %v146 = vunpack.c.l.b16 %v48
  %v147 = vunpack.c.l.b16 %v49
  %v148 = vunpack.c.l.b16 %v50
  %v149 = vunpack.c.l.b16 %v51
  %v150 = vunpack.c.l.b16 %v52
  %v151 = vunpack.c.l.b16 %v53
  %v152 = vunpack.c.l.b16 %v54
  %v153 = vunpack.c.l.b16 %v55
  %v154 = vunpack.c.l.b16 %v56
  %v155 = vunpack.c.l.b16 %v57
  %v156 = vunpack.c.l.b16 %v58
  %v157 = vunpack.c.l.b16 %v59
  %v158 = vunpack.c.l.b16 %v60
  %v159 = vunpack.c.l.b16 %v61
  %v160 = vunpack.c.l.b16 %v62
  %v161 = vunpack.c.l.b16 %v63
  %v162 = vunpack.c.l.b16 %v64
  %v163 = vpack.c.b16 %v144, %v143
  %v164 = vpack.c.b16 %v146, %v145
  %v165 = vpack.c.b16 %v148, %v147
  %v166 = vpack.c.b16 %v150, %v149
  %v167 = vpack.c.b16 %v152, %v151
  %v168 = vpack.c.b16 %v154, %v153
  %v169 = vpack.c.b16 %v156, %v155
  %v170 = vpack.c.b16 %v158, %v157
  %v171 = vpack.c.b16 %v160, %v159
  %v172 = vpack.c.b16 %v162, %v161
  %v189 = vunpack.c.l.b16 %v65
  %v190 = vunpack.c.h.b16 %v65
  %v191 = vunpack.c.l.b16 %v66
  %v192 = vunpack.c.h.b16 %v66
  %v193 = vunpack.c.l.b16 %v67
  %v194 = vunpack.c.h.b16 %v67
  %v195 = vunpack.c.l.b16 %v68
  %v196 = vunpack.c.h.b16 %v68
  %v197 = vunpack.c.l.b16 %v69
  %v198 = vunpack.c.h.b16 %v69
  %v199 = vunpack.c.l.b16 %v70
  %v200 = vunpack.c.h.b16 %v70
  %v201 = vunpack.c.l.b16 %v71
  %v202 = vunpack.c.h.b16 %v71
  %v203 = vunpack.c.l.b16 %v72
  %v204 = vunpack.c.h.b16 %v72
  %v205 = vunpack.c.l.b16 %v73
  %v206 = vunpack.c.h.b16 %v73
  %v207 = vunpack.c.l.b16 %v74
  %v208 = vunpack.c.h.b16 %v74
  %v209 = vunpack.c.l.b16 %v75
  %v210 = vunpack.c.h.b16 %v75
  %v211 = vunpack.c.l.b16 %v76
  %v212 = vunpack.c.h.b16 %v76
  %v213 = vunpack.c.l.b16 %v77
  %v214 = vunpack.c.h.b16 %v77
  %v215 = vunpack.c.l.b16 %v78
  %v216 = vunpack.c.h.b16 %v78
  %v217 = vunpack.c.l.b16 %v79
  %v218 = vunpack.c.h.b16 %v79
  %v219 = vunpack.c.l.b16 %v80
  %v220 = vunpack.c.h.b16 %v80
  %v221 = vpack.c.b16 %v197, %v189
  %v222 = vpack.c.b16 %v198, %v190
  %v223 = vpack.c.b16 %v199, %v191
  %v224 = vpack.c.b16 %v200, %v192
  %v225 = vpack.c.b16 %v201, %v193
  %v226 = vpack.c.b16 %v202, %v194
  %v227 = vpack.c.b16 %v203, %v195
  %v228 = vpack.c.b16 %v204, %v196
  %v229 = vpack.c.b16 %v213, %v205
  %v230 = vpack.c.b16 %v214, %v206
  %v231 = vpack.c.b16 %v215, %v207
  %v232 = vpack.c.b16 %v216, %v208
  %v233 = vpack.c.b16 %v217, %v209
  %v234 = vpack.c.b16 %v218, %v210
  %v235 = vpack.c.b16 %v219, %v211
  %v236 = vpack.c.b16 %v220, %v212
  %vm253 = vcmask 261120
  %v255 = vsel %vm253, %v163, 0
  %v258 = vsel %vm253, %v164, 0
  %v261 = vsel %vm253, %v165, 0
  %v264 = vsel %vm253, %v166, 0
  %v267 = vsel %vm253, %v167, 0
  %v270 = vsel %vm253, %v168, 0
  %v273 = vsel %vm253, %v169, 0
  %v276 = vsel %vm253, %v170, 0
  %v279 = vsel %vm253, %v171, 0
  %v282 = vsel %vm253, %v172, 0
  %284 = vmatprep.subr.bf16.mxu0 %v222
  %285 = vmatpush1.bf16.msra.mxu0 %v221
  %286 = vmatprep.subr.bf16.mxu0 %v230
  %287 = vmatpush1.bf16.msra.mxu0 %v229
  %288 = vmatprep.subr.bf16.mxu0 0
  %289 = vmatpush1.bf16.msra.mxu0 0
  %290 = vmatprep.subr.bf16.mxu0 0
  %291 = vmatpush1.bf16.msra.mxu0 0
  %292 = vmatprep.subr.bf16.mxu0 0
  %293 = vmatpush1.bf16.msra.mxu0 0
  %294 = vmatprep.subr.bf16.mxu0 0
  %295 = vmatpush1.bf16.msra.mxu0 0
  %296 = vmatprep.subr.bf16.mxu0 0
  %297 = vmatpush1.bf16.msra.mxu0 0
  %298 = vmatprep.subr.bf16.mxu0 0
  %299 = vmatpush1.bf16.msra.mxu0 0
  %300 = vmatprep.subr.bf16.mxu0 0
  %301 = vmatpush1.bf16.msra.mxu0 0
  %302 = vmatprep.subr.bf16.mxu0 0
  %303 = vmatpush1.bf16.msra.mxu0 0
  %304 = vmatprep.subr.bf16.mxu0 0
  %305 = vmatpush1.bf16.msra.mxu0 0
  %306 = vmatprep.subr.bf16.mxu0 0
  %307 = vmatpush1.bf16.msra.mxu0 0
  %308 = vmatprep.subr.bf16.mxu0 0
  %309 = vmatpush1.bf16.msra.mxu0 0
  %310 = vmatprep.subr.bf16.mxu0 0
  %311 = vmatpush1.bf16.msra.mxu0 0
  %312 = vmatprep.subr.bf16.mxu0 0
  %313 = vmatpush1.bf16.msra.mxu0 0
  %314 = vmatprep.subr.bf16.mxu0 0
  %315 = vmatpush1.bf16.msra.mxu0 0
  %316 = vmatprep.mubr.bf16.mxu0 0
  %317 = vmatmul.mubr.bf16.gmra.mrb[0].mxu0 %v255
  %v318 = vpop.f32.mrb[0].mxu0
  %v319 = vadd.f32 %v86, %v318
  %v320 = vpop.f32.mrb[0].mxu0
  %v321 = vadd.f32 %v90, %v320
  %v322 = vpop.f32.mrb[0].mxu0
  %v323 = vadd.f32 %v86, %v322
  %v324 = vpop.f32.mrb[0].mxu0
  %v325 = vadd.f32 %v90, %v324
  %326 = vmatprep.mubr.bf16.mxu0 0
  %327 = vmatmul.mubr.bf16.gmra.mrb[0].mxu0 %v258
  %v328 = vpop.f32.mrb[0].mxu0
  %v329 = vadd.f32 %v86, %v328
  %v330 = vpop.f32.mrb[0].mxu0
  %v331 = vadd.f32 %v90, %v330
  %v332 = vpop.f32.mrb[0].mxu0
  %v333 = vadd.f32 %v86, %v332
  %v334 = vpop.f32.mrb[0].mxu0
  %v335 = vadd.f32 %v90, %v334
  %336 = vmatprep.mubr.bf16.mxu0 0
  %337 = vmatmul.mubr.bf16.gmra.mrb[0].mxu0 %v261
  %v338 = vpop.f32.mrb[0].mxu0
  %v339 = vadd.f32 %v86, %v338
  %v340 = vpop.f32.mrb[0].mxu0
  %v341 = vadd.f32 %v90, %v340
  %v342 = vpop.f32.mrb[0].mxu0
  %v343 = vadd.f32 %v86, %v342
  %v344 = vpop.f32.mrb[0].mxu0
  %v345 = vadd.f32 %v90, %v344
  %346 = vmatprep.mubr.bf16.mxu0 0
  %347 = vmatmul.mubr.bf16.gmra.mrb[0].mxu0 %v264
  %v348 = vpop.f32.mrb[0].mxu0
  %v349 = vadd.f32 %v86, %v348
  %v350 = vpop.f32.mrb[0].mxu0
  %v351 = vadd.f32 %v90, %v350
  %v352 = vpop.f32.mrb[0].mxu0
  %v353 = vadd.f32 %v86, %v352
  %v354 = vpop.f32.mrb[0].mxu0
  %v355 = vadd.f32 %v90, %v354
  %356 = vmatprep.mubr.bf16.mxu0 0
  %357 = vmatmul.mubr.bf16.gmra.mrb[0].mxu0 %v267
  %v358 = vpop.f32.mrb[0].mxu0
  %v359 = vadd.f32 %v86, %v358
  %v360 = vpop.f32.mrb[0].mxu0
  %v361 = vadd.f32 %v90, %v360
  %v362 = vpop.f32.mrb[0].mxu0
  %v363 = vadd.f32 %v86, %v362
  %v364 = vpop.f32.mrb[0].mxu0
  %v365 = vadd.f32 %v90, %v364
  %366 = vmatprep.mubr.bf16.mxu0 0
  %367 = vmatmul.mubr.bf16.gmra.mrb[0].mxu0 %v270
  %v368 = vpop.f32.mrb[0].mxu0
  %v369 = vadd.f32 %v86, %v368
  %v370 = vpop.f32.mrb[0].mxu0
  %v371 = vadd.f32 %v90, %v370
  %v372 = vpop.f32.mrb[0].mxu0
  %v373 = vadd.f32 %v86, %v372
  %v374 = vpop.f32.mrb[0].mxu0
  %v375 = vadd.f32 %v90, %v374
  %376 = vmatprep.mubr.bf16.mxu0 0
  %377 = vmatmul.mubr.bf16.gmra.mrb[0].mxu0 %v273
  %v378 = vpop.f32.mrb[0].mxu0
  %v379 = vadd.f32 %v86, %v378
  %v380 = vpop.f32.mrb[0].mxu0
  %v381 = vadd.f32 %v90, %v380
  %v382 = vpop.f32.mrb[0].mxu0
  %v383 = vadd.f32 %v86, %v382
  %v384 = vpop.f32.mrb[0].mxu0
  %v385 = vadd.f32 %v90, %v384
  %386 = vmatprep.mubr.bf16.mxu0 0
  %387 = vmatmul.mubr.bf16.gmra.mrb[0].mxu0 %v276
  %v388 = vpop.f32.mrb[0].mxu0
  %v389 = vadd.f32 %v86, %v388
  %v390 = vpop.f32.mrb[0].mxu0
  %v391 = vadd.f32 %v90, %v390
  %v392 = vpop.f32.mrb[0].mxu0
  %v393 = vadd.f32 %v86, %v392
  %v394 = vpop.f32.mrb[0].mxu0
  %v395 = vadd.f32 %v90, %v394
  %396 = vmatprep.mubr.bf16.mxu0 0
  %397 = vmatmul.mubr.bf16.gmra.mrb[0].mxu0 %v279
  %v398 = vpop.f32.mrb[0].mxu0
  %v399 = vadd.f32 %v86, %v398
  %v400 = vpop.f32.mrb[0].mxu0
  %v401 = vadd.f32 %v90, %v400
  %v402 = vpop.f32.mrb[0].mxu0
  %v403 = vadd.f32 %v86, %v402
  %v404 = vpop.f32.mrb[0].mxu0
  %v405 = vadd.f32 %v90, %v404
  %406 = vmatprep.mubr.bf16.mxu0 0
  %407 = vmatmul.mubr.bf16.gmra.mrb[0].mxu0 %v282
  %v408 = vpop.f32.mrb[0].mxu0
  %v409 = vadd.f32 %v86, %v408
  %v410 = vpop.f32.mrb[0].mxu0
  %v411 = vadd.f32 %v90, %v410
  %v412 = vpop.f32.mrb[0].mxu0
  %v413 = vadd.f32 %v86, %v412
  %v414 = vpop.f32.mrb[0].mxu0
  %v415 = vadd.f32 %v90, %v414
  %416 = vdwg.mxu0
  %417 = vmatprep.subr.bf16.mxu0 %v224
  %418 = vmatpush1.bf16.msra.mxu0 %v223
  %419 = vmatprep.subr.bf16.mxu0 %v232
  %420 = vmatpush1.bf16.msra.mxu0 %v231
  %421 = vmatprep.subr.bf16.mxu0 0
  %422 = vmatpush1.bf16.msra.mxu0 0
  %423 = vmatprep.subr.bf16.mxu0 0
  %424 = vmatpush1.bf16.msra.mxu0 0
  %425 = vmatprep.subr.bf16.mxu0 0
  %426 = vmatpush1.bf16.msra.mxu0 0
  %427 = vmatprep.subr.bf16.mxu0 0
  %428 = vmatpush1.bf16.msra.mxu0 0
  %429 = vmatprep.subr.bf16.mxu0 0
  %430 = vmatpush1.bf16.msra.mxu0 0
  %431 = vmatprep.subr.bf16.mxu0 0
  %432 = vmatpush1.bf16.msra.mxu0 0
  %433 = vmatprep.subr.bf16.mxu0 0
  %434 = vmatpush1.bf16.msra.mxu0 0
  %435 = vmatprep.subr.bf16.mxu0 0
  %436 = vmatpush1.bf16.msra.mxu0 0
  %437 = vmatprep.subr.bf16.mxu0 0
  %438 = vmatpush1.bf16.msra.mxu0 0
  %439 = vmatprep.subr.bf16.mxu0 0
  %440 = vmatpush1.bf16.msra.mxu0 0
  %441 = vmatprep.subr.bf16.mxu0 0
  %442 = vmatpush1.bf16.msra.mxu0 0
  %443 = vmatprep.subr.bf16.mxu0 0
  %444 = vmatpush1.bf16.msra.mxu0 0
  %445 = vmatprep.subr.bf16.mxu0 0
  %446 = vmatpush1.bf16.msra.mxu0 0
  %447 = vmatprep.subr.bf16.mxu0 0
  %448 = vmatpush1.bf16.msra.mxu0 0
  %449 = vmatprep.mubr.bf16.mxu0 0
  %450 = vmatmul.mubr.bf16.gmra.mrb[0].mxu0 %v255
  %v451 = vpop.f32.mrb[0].mxu0
  %v452 = vadd.f32 %v94, %v451
  %v453 = vpop.f32.mrb[0].mxu0
  %v454 = vadd.f32 %v98, %v453
  %v455 = vpop.f32.mrb[0].mxu0
  %v456 = vadd.f32 %v94, %v455
  %v457 = vpop.f32.mrb[0].mxu0
  %v458 = vadd.f32 %v98, %v457
  %459 = vmatprep.mubr.bf16.mxu0 0
  %460 = vmatmul.mubr.bf16.gmra.mrb[0].mxu0 %v258
  %v461 = vpop.f32.mrb[0].mxu0
  %v462 = vadd.f32 %v94, %v461
  %v463 = vpop.f32.mrb[0].mxu0
  %v464 = vadd.f32 %v98, %v463
  %v465 = vpop.f32.mrb[0].mxu0
  %v466 = vadd.f32 %v94, %v465
  %v467 = vpop.f32.mrb[0].mxu0
  %v468 = vadd.f32 %v98, %v467
  %469 = vmatprep.mubr.bf16.mxu0 0
  %470 = vmatmul.mubr.bf16.gmra.mrb[0].mxu0 %v261
  %v471 = vpop.f32.mrb[0].mxu0
  %v472 = vadd.f32 %v94, %v471
  %v473 = vpop.f32.mrb[0].mxu0
  %v474 = vadd.f32 %v98, %v473
  %v475 = vpop.f32.mrb[0].mxu0
  %v476 = vadd.f32 %v94, %v475
  %v477 = vpop.f32.mrb[0].mxu0
  %v478 = vadd.f32 %v98, %v477
  %479 = vmatprep.mubr.bf16.mxu0 0
  %480 = vmatmul.mubr.bf16.gmra.mrb[0].mxu0 %v264
  %v481 = vpop.f32.mrb[0].mxu0
  %v482 = vadd.f32 %v94, %v481
  %v483 = vpop.f32.mrb[0].mxu0
  %v484 = vadd.f32 %v98, %v483
  %v485 = vpop.f32.mrb[0].mxu0
  %v486 = vadd.f32 %v94, %v485
  %v487 = vpop.f32.mrb[0].mxu0
  %v488 = vadd.f32 %v98, %v487
  %489 = vmatprep.mubr.bf16.mxu0 0
  %490 = vmatmul.mubr.bf16.gmra.mrb[0].mxu0 %v267
  %v491 = vpop.f32.mrb[0].mxu0
  %v492 = vadd.f32 %v94, %v491
  %v493 = vpop.f32.mrb[0].mxu0
  %v494 = vadd.f32 %v98, %v493
  %v495 = vpop.f32.mrb[0].mxu0
  %v496 = vadd.f32 %v94, %v495
  %v497 = vpop.f32.mrb[0].mxu0
  %v498 = vadd.f32 %v98, %v497
  %499 = vmatprep.mubr.bf16.mxu0 0
  %500 = vmatmul.mubr.bf16.gmra.mrb[0].mxu0 %v270
  %v501 = vpop.f32.mrb[0].mxu0
  %v502 = vadd.f32 %v94, %v501
  %v503 = vpop.f32.mrb[0].mxu0
  %v504 = vadd.f32 %v98, %v503
  %v505 = vpop.f32.mrb[0].mxu0
  %v506 = vadd.f32 %v94, %v505
  %v507 = vpop.f32.mrb[0].mxu0
  %v508 = vadd.f32 %v98, %v507
  %509 = vmatprep.mubr.bf16.mxu0 0
  %510 = vmatmul.mubr.bf16.gmra.mrb[0].mxu0 %v273
  %v511 = vpop.f32.mrb[0].mxu0
  %v512 = vadd.f32 %v94, %v511
  %v513 = vpop.f32.mrb[0].mxu0
  %v514 = vadd.f32 %v98, %v513
  %v515 = vpop.f32.mrb[0].mxu0
  %v516 = vadd.f32 %v94, %v515
  %v517 = vpop.f32.mrb[0].mxu0
  %v518 = vadd.f32 %v98, %v517
  %519 = vmatprep.mubr.bf16.mxu0 0
  %520 = vmatmul.mubr.bf16.gmra.mrb[0].mxu0 %v276
  %v521 = vpop.f32.mrb[0].mxu0
  %v522 = vadd.f32 %v94, %v521
  %v523 = vpop.f32.mrb[0].mxu0
  %v524 = vadd.f32 %v98, %v523
  %v525 = vpop.f32.mrb[0].mxu0
  %v526 = vadd.f32 %v94, %v525
  %v527 = vpop.f32.mrb[0].mxu0
  %v528 = vadd.f32 %v98, %v527
  %529 = vmatprep.mubr.bf16.mxu0 0
  %530 = vmatmul.mubr.bf16.gmra.mrb[0].mxu0 %v279
  %v531 = vpop.f32.mrb[0].mxu0
  %v532 = vadd.f32 %v94, %v531
  %v533 = vpop.f32.mrb[0].mxu0
  %v534 = vadd.f32 %v98, %v533
  %v535 = vpop.f32.mrb[0].mxu0
  %v536 = vadd.f32 %v94, %v535
  %v537 = vpop.f32.mrb[0].mxu0
  %v538 = vadd.f32 %v98, %v537
  %539 = vmatprep.mubr.bf16.mxu0 0
  %540 = vmatmul.mubr.bf16.gmra.mrb[0].mxu0 %v282
  %v541 = vpop.f32.mrb[0].mxu0
  %v542 = vadd.f32 %v94, %v541
  %v543 = vpop.f32.mrb[0].mxu0
  %v544 = vadd.f32 %v98, %v543
  %v545 = vpop.f32.mrb[0].mxu0
  %v546 = vadd.f32 %v94, %v545
  %v547 = vpop.f32.mrb[0].mxu0
  %v548 = vadd.f32 %v98, %v547
  %549 = vdwg.mxu0
  %550 = vmatprep.subr.bf16.mxu0 %v226
  %551 = vmatpush1.bf16.msra.mxu0 %v225
  %552 = vmatprep.subr.bf16.mxu0 %v234
  %553 = vmatpush1.bf16.msra.mxu0 %v233
  %554 = vmatprep.subr.bf16.mxu0 0
  %555 = vmatpush1.bf16.msra.mxu0 0
  %556 = vmatprep.subr.bf16.mxu0 0
  %557 = vmatpush1.bf16.msra.mxu0 0
  %558 = vmatprep.subr.bf16.mxu0 0
  %559 = vmatpush1.bf16.msra.mxu0 0
  %560 = vmatprep.subr.bf16.mxu0 0
  %561 = vmatpush1.bf16.msra.mxu0 0
  %562 = vmatprep.subr.bf16.mxu0 0
  %563 = vmatpush1.bf16.msra.mxu0 0
  %564 = vmatprep.subr.bf16.mxu0 0
  %565 = vmatpush1.bf16.msra.mxu0 0
  %566 = vmatprep.subr.bf16.mxu0 0
  %567 = vmatpush1.bf16.msra.mxu0 0
  %568 = vmatprep.subr.bf16.mxu0 0
  %569 = vmatpush1.bf16.msra.mxu0 0
  %570 = vmatprep.subr.bf16.mxu0 0
  %571 = vmatpush1.bf16.msra.mxu0 0
  %572 = vmatprep.subr.bf16.mxu0 0
  %573 = vmatpush1.bf16.msra.mxu0 0
  %574 = vmatprep.subr.bf16.mxu0 0
  %575 = vmatpush1.bf16.msra.mxu0 0
  %576 = vmatprep.subr.bf16.mxu0 0
  %577 = vmatpush1.bf16.msra.mxu0 0
  %578 = vmatprep.subr.bf16.mxu0 0
  %579 = vmatpush1.bf16.msra.mxu0 0
  %580 = vmatprep.subr.bf16.mxu0 0
  %581 = vmatpush1.bf16.msra.mxu0 0
  %582 = vmatprep.mubr.bf16.mxu0 0
  %583 = vmatmul.mubr.bf16.gmra.mrb[0].mxu0 %v255
  %v584 = vpop.f32.mrb[0].mxu0
  %v585 = vadd.f32 %v102, %v584
  %v586 = vpop.f32.mrb[0].mxu0
  %v587 = vadd.f32 %v106, %v586
  %v588 = vpop.f32.mrb[0].mxu0
  %v589 = vadd.f32 %v102, %v588
  %v590 = vpop.f32.mrb[0].mxu0
  %v591 = vadd.f32 %v106, %v590
  %592 = vmatprep.mubr.bf16.mxu0 0
  %593 = vmatmul.mubr.bf16.gmra.mrb[0].mxu0 %v258
  %v594 = vpop.f32.mrb[0].mxu0
  %v595 = vadd.f32 %v102, %v594
  %v596 = vpop.f32.mrb[0].mxu0
  %v597 = vadd.f32 %v106, %v596
  %v598 = vpop.f32.mrb[0].mxu0
  %v599 = vadd.f32 %v102, %v598
  %v600 = vpop.f32.mrb[0].mxu0
  %v601 = vadd.f32 %v106, %v600
  %602 = vmatprep.mubr.bf16.mxu0 0
  %603 = vmatmul.mubr.bf16.gmra.mrb[0].mxu0 %v261
  %v604 = vpop.f32.mrb[0].mxu0
  %v605 = vadd.f32 %v102, %v604
  %v606 = vpop.f32.mrb[0].mxu0
  %v607 = vadd.f32 %v106, %v606
  %v608 = vpop.f32.mrb[0].mxu0
  %v609 = vadd.f32 %v102, %v608
  %v610 = vpop.f32.mrb[0].mxu0
  %v611 = vadd.f32 %v106, %v610
  %612 = vmatprep.mubr.bf16.mxu0 0
  %613 = vmatmul.mubr.bf16.gmra.mrb[0].mxu0 %v264
  %v614 = vpop.f32.mrb[0].mxu0
  %v615 = vadd.f32 %v102, %v614
  %v616 = vpop.f32.mrb[0].mxu0
  %v617 = vadd.f32 %v106, %v616
  %v618 = vpop.f32.mrb[0].mxu0
  %v619 = vadd.f32 %v102, %v618
  %v620 = vpop.f32.mrb[0].mxu0
  %v621 = vadd.f32 %v106, %v620
  %622 = vmatprep.mubr.bf16.mxu0 0
  %623 = vmatmul.mubr.bf16.gmra.mrb[0].mxu0 %v267
  %v624 = vpop.f32.mrb[0].mxu0
  %v625 = vadd.f32 %v102, %v624
  %v626 = vpop.f32.mrb[0].mxu0
  %v627 = vadd.f32 %v106, %v626
  %v628 = vpop.f32.mrb[0].mxu0
  %v629 = vadd.f32 %v102, %v628
  %v630 = vpop.f32.mrb[0].mxu0
  %v631 = vadd.f32 %v106, %v630
  %632 = vmatprep.mubr.bf16.mxu0 0
  %633 = vmatmul.mubr.bf16.gmra.mrb[0].mxu0 %v270
  %v634 = vpop.f32.mrb[0].mxu0
  %v635 = vadd.f32 %v102, %v634
  %v636 = vpop.f32.mrb[0].mxu0
  %v637 = vadd.f32 %v106, %v636
  %v638 = vpop.f32.mrb[0].mxu0
  %v639 = vadd.f32 %v102, %v638
  %v640 = vpop.f32.mrb[0].mxu0
  %v641 = vadd.f32 %v106, %v640
  %642 = vmatprep.mubr.bf16.mxu0 0
  %643 = vmatmul.mubr.bf16.gmra.mrb[0].mxu0 %v273
  %v644 = vpop.f32.mrb[0].mxu0
  %v645 = vadd.f32 %v102, %v644
  %v646 = vpop.f32.mrb[0].mxu0
  %v647 = vadd.f32 %v106, %v646
  %v648 = vpop.f32.mrb[0].mxu0
  %v649 = vadd.f32 %v102, %v648
  %v650 = vpop.f32.mrb[0].mxu0
  %v651 = vadd.f32 %v106, %v650
  %652 = vmatprep.mubr.bf16.mxu0 0
  %653 = vmatmul.mubr.bf16.gmra.mrb[0].mxu0 %v276
  %v654 = vpop.f32.mrb[0].mxu0
  %v655 = vadd.f32 %v102, %v654
  %v656 = vpop.f32.mrb[0].mxu0
  %v657 = vadd.f32 %v106, %v656
  %v658 = vpop.f32.mrb[0].mxu0
  %v659 = vadd.f32 %v102, %v658
  %v660 = vpop.f32.mrb[0].mxu0
  %v661 = vadd.f32 %v106, %v660
  %662 = vmatprep.mubr.bf16.mxu0 0
  %663 = vmatmul.mubr.bf16.gmra.mrb[0].mxu0 %v279
  %v664 = vpop.f32.mrb[0].mxu0
  %v665 = vadd.f32 %v102, %v664
  %v666 = vpop.f32.mrb[0].mxu0
  %v667 = vadd.f32 %v106, %v666
  %v668 = vpop.f32.mrb[0].mxu0
  %v669 = vadd.f32 %v102, %v668
  %v670 = vpop.f32.mrb[0].mxu0
  %v671 = vadd.f32 %v106, %v670
  %672 = vmatprep.mubr.bf16.mxu0 0
  %673 = vmatmul.mubr.bf16.gmra.mrb[0].mxu0 %v282
  %v674 = vpop.f32.mrb[0].mxu0
  %v675 = vadd.f32 %v102, %v674
  %v676 = vpop.f32.mrb[0].mxu0
  %v677 = vadd.f32 %v106, %v676
  %v678 = vpop.f32.mrb[0].mxu0
  %v679 = vadd.f32 %v102, %v678
  %v680 = vpop.f32.mrb[0].mxu0
  %v681 = vadd.f32 %v106, %v680
  %682 = vdwg.mxu0
  %683 = vmatprep.subr.bf16.mxu0 %v228
  %684 = vmatpush1.bf16.msra.mxu0 %v227
  %685 = vmatprep.subr.bf16.mxu0 %v236
  %686 = vmatpush1.bf16.msra.mxu0 %v235
  %687 = vmatprep.subr.bf16.mxu0 0
  %688 = vmatpush1.bf16.msra.mxu0 0
  %689 = vmatprep.subr.bf16.mxu0 0
  %690 = vmatpush1.bf16.msra.mxu0 0
  %691 = vmatprep.subr.bf16.mxu0 0
  %692 = vmatpush1.bf16.msra.mxu0 0
  %693 = vmatprep.subr.bf16.mxu0 0
  %694 = vmatpush1.bf16.msra.mxu0 0
  %695 = vmatprep.subr.bf16.mxu0 0
  %696 = vmatpush1.bf16.msra.mxu0 0
  %697 = vmatprep.subr.bf16.mxu0 0
  %698 = vmatpush1.bf16.msra.mxu0 0
  %699 = vmatprep.subr.bf16.mxu0 0
  %700 = vmatpush1.bf16.msra.mxu0 0
  %701 = vmatprep.subr.bf16.mxu0 0
  %702 = vmatpush1.bf16.msra.mxu0 0
  %703 = vmatprep.subr.bf16.mxu0 0
  %704 = vmatpush1.bf16.msra.mxu0 0
  %705 = vmatprep.subr.bf16.mxu0 0
  %706 = vmatpush1.bf16.msra.mxu0 0
  %707 = vmatprep.subr.bf16.mxu0 0
  %708 = vmatpush1.bf16.msra.mxu0 0
  %709 = vmatprep.subr.bf16.mxu0 0
  %710 = vmatpush1.bf16.msra.mxu0 0
  %711 = vmatprep.subr.bf16.mxu0 0
  %712 = vmatpush1.bf16.msra.mxu0 0
  %713 = vmatprep.subr.bf16.mxu0 0
  %714 = vmatpush1.bf16.msra.mxu0 0
  %715 = vmatprep.mubr.bf16.mxu0 0
  %716 = vmatmul.mubr.bf16.gmra.mrb[0].mxu0 %v255
  %v717 = vpop.f32.mrb[0].mxu0
  %v718 = vadd.f32 %v110, %v717
  %v719 = vpop.f32.mrb[0].mxu0
  %v720 = vadd.f32 %v114, %v719
  %v721 = vpop.f32.mrb[0].mxu0
  %v722 = vadd.f32 %v110, %v721
  %v723 = vpop.f32.mrb[0].mxu0
  %v724 = vadd.f32 %v114, %v723
  %725 = vmatprep.mubr.bf16.mxu0 0
  %726 = vmatmul.mubr.bf16.gmra.mrb[0].mxu0 %v258
  %v727 = vpop.f32.mrb[0].mxu0
  %v728 = vadd.f32 %v110, %v727
  %v729 = vpop.f32.mrb[0].mxu0
  %v730 = vadd.f32 %v114, %v729
  %v731 = vpop.f32.mrb[0].mxu0
  %v732 = vadd.f32 %v110, %v731
  %v733 = vpop.f32.mrb[0].mxu0
  %v734 = vadd.f32 %v114, %v733
  %735 = vmatprep.mubr.bf16.mxu0 0
  %736 = vmatmul.mubr.bf16.gmra.mrb[0].mxu0 %v261
  %v737 = vpop.f32.mrb[0].mxu0
  %v738 = vadd.f32 %v110, %v737
  %v739 = vpop.f32.mrb[0].mxu0
  %v740 = vadd.f32 %v114, %v739
  %v741 = vpop.f32.mrb[0].mxu0
  %v742 = vadd.f32 %v110, %v741
  %v743 = vpop.f32.mrb[0].mxu0
  %v744 = vadd.f32 %v114, %v743
  %745 = vmatprep.mubr.bf16.mxu0 0
  %746 = vmatmul.mubr.bf16.gmra.mrb[0].mxu0 %v264
  %v747 = vpop.f32.mrb[0].mxu0
  %v748 = vadd.f32 %v110, %v747
  %v749 = vpop.f32.mrb[0].mxu0
  %v750 = vadd.f32 %v114, %v749
  %v751 = vpop.f32.mrb[0].mxu0
  %v752 = vadd.f32 %v110, %v751
  %v753 = vpop.f32.mrb[0].mxu0
  %v754 = vadd.f32 %v114, %v753
  %755 = vmatprep.mubr.bf16.mxu0 0
  %756 = vmatmul.mubr.bf16.gmra.mrb[0].mxu0 %v267
  %v757 = vpop.f32.mrb[0].mxu0
  %v758 = vadd.f32 %v110, %v757
  %v759 = vpop.f32.mrb[0].mxu0
  %v760 = vadd.f32 %v114, %v759
  %v761 = vpop.f32.mrb[0].mxu0
  %v762 = vadd.f32 %v110, %v761
  %v763 = vpop.f32.mrb[0].mxu0
  %v764 = vadd.f32 %v114, %v763
  %765 = vmatprep.mubr.bf16.mxu0 0
  %766 = vmatmul.mubr.bf16.gmra.mrb[0].mxu0 %v270
  %v767 = vpop.f32.mrb[0].mxu0
  %v768 = vadd.f32 %v110, %v767
  %v769 = vpop.f32.mrb[0].mxu0
  %v770 = vadd.f32 %v114, %v769
  %v771 = vpop.f32.mrb[0].mxu0
  %v772 = vadd.f32 %v110, %v771
  %v773 = vpop.f32.mrb[0].mxu0
  %v774 = vadd.f32 %v114, %v773
  %775 = vmatprep.mubr.bf16.mxu0 0
  %776 = vmatmul.mubr.bf16.gmra.mrb[0].mxu0 %v273
  %v777 = vpop.f32.mrb[0].mxu0
  %v778 = vadd.f32 %v110, %v777
  %v779 = vpop.f32.mrb[0].mxu0
  %v780 = vadd.f32 %v114, %v779
  %v781 = vpop.f32.mrb[0].mxu0
  %v782 = vadd.f32 %v110, %v781
  %v783 = vpop.f32.mrb[0].mxu0
  %v784 = vadd.f32 %v114, %v783
  %785 = vmatprep.mubr.bf16.mxu0 0
  %786 = vmatmul.mubr.bf16.gmra.mrb[0].mxu0 %v276
  %v787 = vpop.f32.mrb[0].mxu0
  %v788 = vadd.f32 %v110, %v787
  %v789 = vpop.f32.mrb[0].mxu0
  %v790 = vadd.f32 %v114, %v789
  %v791 = vpop.f32.mrb[0].mxu0
  %v792 = vadd.f32 %v110, %v791
  %v793 = vpop.f32.mrb[0].mxu0
  %v794 = vadd.f32 %v114, %v793
  %795 = vmatprep.mubr.bf16.mxu0 0
  %796 = vmatmul.mubr.bf16.gmra.mrb[0].mxu0 %v279
  %v797 = vpop.f32.mrb[0].mxu0
  %v798 = vadd.f32 %v110, %v797
  %v799 = vpop.f32.mrb[0].mxu0
  %v800 = vadd.f32 %v114, %v799
  %v801 = vpop.f32.mrb[0].mxu0
  %v802 = vadd.f32 %v110, %v801
  %v803 = vpop.f32.mrb[0].mxu0
  %v804 = vadd.f32 %v114, %v803
  %805 = vmatprep.mubr.bf16.mxu0 0
  %806 = vmatmul.mubr.bf16.gmra.mrb[0].mxu0 %v282
  %v807 = vpop.f32.mrb[0].mxu0
  %v808 = vadd.f32 %v110, %v807
  %v809 = vpop.f32.mrb[0].mxu0
  %v810 = vadd.f32 %v114, %v809
  %v811 = vpop.f32.mrb[0].mxu0
  %v812 = vadd.f32 %v110, %v811
  %v813 = vpop.f32.mrb[0].mxu0
  %v814 = vadd.f32 %v114, %v813
  %815 = vdwg.mxu0
  %816 = vst [vmem:[#allocation2] sm:$0xff] %v319
  %817 = vst [vmem:[#allocation2 + $0x8] sm:$0xff] %v321
  %818 = vst [vmem:[#allocation2 + $0x10] sm:$0xff] %v452
  %819 = vst [vmem:[#allocation2 + $0x18] sm:$0xff] %v454
  %820 = vst [vmem:[#allocation2 + $0x20] sm:$0xff] %v585
  %821 = vst [vmem:[#allocation2 + $0x28] sm:$0xff] %v587
  %822 = vst [vmem:[#allocation2 + $0x30] sm:$0xff] %v718
  %823 = vst [vmem:[#allocation2 + $0x38] sm:$0xff] %v720
  %824 = vst [vmem:[#allocation2 + $0x40] sm:$0xff] %v323
  %825 = vst [vmem:[#allocation2 + $0x48] sm:$0xff] %v325
  %826 = vst [vmem:[#allocation2 + $0x50] sm:$0xff] %v456
  %827 = vst [vmem:[#allocation2 + $0x58] sm:$0xff] %v458
  %828 = vst [vmem:[#allocation2 + $0x60] sm:$0xff] %v589
  %829 = vst [vmem:[#allocation2 + $0x68] sm:$0xff] %v591
  %830 = vst [vmem:[#allocation2 + $0x70] sm:$0xff] %v722
  %831 = vst [vmem:[#allocation2 + $0x78] sm:$0xff] %v724
  %832 = vst [vmem:[#allocation2 + $0x80] sm:$0xff] %v329
  %833 = vst [vmem:[#allocation2 + $0x88] sm:$0xff] %v331
  %834 = vst [vmem:[#allocation2 + $0x90] sm:$0xff] %v462
  %835 = vst [vmem:[#allocation2 + $0x98] sm:$0xff] %v464
  %836 = vst [vmem:[#allocation2 + $0xa0] sm:$0xff] %v595
  %837 = vst [vmem:[#allocation2 + $0xa8] sm:$0xff] %v597
  %838 = vst [vmem:[#allocation2 + $0xb0] sm:$0xff] %v728
  %839 = vst [vmem:[#allocation2 + $0xb8] sm:$0xff] %v730
  %840 = vst [vmem:[#allocation2 + $0xc0] sm:$0xff] %v333
  %841 = vst [vmem:[#allocation2 + $0xc8] sm:$0xff] %v335
  %842 = vst [vmem:[#allocation2 + $0xd0] sm:$0xff] %v466
  %843 = vst [vmem:[#allocation2 + $0xd8] sm:$0xff] %v468
  %844 = vst [vmem:[#allocation2 + $0xe0] sm:$0xff] %v599
  %845 = vst [vmem:[#allocation2 + $0xe8] sm:$0xff] %v601
  %846 = vst [vmem:[#allocation2 + $0xf0] sm:$0xff] %v732
  %847 = vst [vmem:[#allocation2 + $0xf8] sm:$0xff] %v734
  %848 = vst [vmem:[#allocation2 + $0x100] sm:$0xff] %v339
  %849 = vst [vmem:[#allocation2 + $0x108] sm:$0xff] %v341
  %850 = vst [vmem:[#allocation2 + $0x110] sm:$0xff] %v472
  %851 = vst [vmem:[#allocation2 + $0x118] sm:$0xff] %v474
  %852 = vst [vmem:[#allocation2 + $0x120] sm:$0xff] %v605
  %853 = vst [vmem:[#allocation2 + $0x128] sm:$0xff] %v607
  %854 = vst [vmem:[#allocation2 + $0x130] sm:$0xff] %v738
  %855 = vst [vmem:[#allocation2 + $0x138] sm:$0xff] %v740
  %856 = vst [vmem:[#allocation2 + $0x140] sm:$0xff] %v343
  %857 = vst [vmem:[#allocation2 + $0x148] sm:$0xff] %v345
  %858 = vst [vmem:[#allocation2 + $0x150] sm:$0xff] %v476
  %859 = vst [vmem:[#allocation2 + $0x158] sm:$0xff] %v478
  %860 = vst [vmem:[#allocation2 + $0x160] sm:$0xff] %v609
  %861 = vst [vmem:[#allocation2 + $0x168] sm:$0xff] %v611
  %862 = vst [vmem:[#allocation2 + $0x170] sm:$0xff] %v742
  %863 = vst [vmem:[#allocation2 + $0x178] sm:$0xff] %v744
  %864 = vst [vmem:[#allocation2 + $0x180] sm:$0xff] %v349
  %865 = vst [vmem:[#allocation2 + $0x188] sm:$0xff] %v351
  %866 = vst [vmem:[#allocation2 + $0x190] sm:$0xff] %v482
  %867 = vst [vmem:[#allocation2 + $0x198] sm:$0xff] %v484
  %868 = vst [vmem:[#allocation2 + $0x1a0] sm:$0xff] %v615
  %869 = vst [vmem:[#allocation2 + $0x1a8] sm:$0xff] %v617
  %870 = vst [vmem:[#allocation2 + $0x1b0] sm:$0xff] %v748
  %871 = vst [vmem:[#allocation2 + $0x1b8] sm:$0xff] %v750
  %872 = vst [vmem:[#allocation2 + $0x1c0] sm:$0xff] %v353
  %873 = vst [vmem:[#allocation2 + $0x1c8] sm:$0xff] %v355
  %874 = vst [vmem:[#allocation2 + $0x1d0] sm:$0xff] %v486
  %875 = vst [vmem:[#allocation2 + $0x1d8] sm:$0xff] %v488
  %876 = vst [vmem:[#allocation2 + $0x1e0] sm:$0xff] %v619
  %877 = vst [vmem:[#allocation2 + $0x1e8] sm:$0xff] %v621
  %878 = vst [vmem:[#allocation2 + $0x1f0] sm:$0xff] %v752
  %879 = vst [vmem:[#allocation2 + $0x1f8] sm:$0xff] %v754
  %880 = vst [vmem:[#allocation2 + $0x200] sm:$0xff] %v359
  %881 = vst [vmem:[#allocation2 + $0x208] sm:$0xff] %v361
  %882 = vst [vmem:[#allocation2 + $0x210] sm:$0xff] %v492
  %883 = vst [vmem:[#allocation2 + $0x218] sm:$0xff] %v494
  %884 = vst [vmem:[#allocation2 + $0x220] sm:$0xff] %v625
  %885 = vst [vmem:[#allocation2 + $0x228] sm:$0xff] %v627
  %886 = vst [vmem:[#allocation2 + $0x230] sm:$0xff] %v758
  %887 = vst [vmem:[#allocation2 + $0x238] sm:$0xff] %v760
  %888 = vst [vmem:[#allocation2 + $0x240] sm:$0xff] %v363
  %889 = vst [vmem:[#allocation2 + $0x248] sm:$0xff] %v365
  %890 = vst [vmem:[#allocation2 + $0x250] sm:$0xff] %v496
  %891 = vst [vmem:[#allocation2 + $0x258] sm:$0xff] %v498
  %892 = vst [vmem:[#allocation2 + $0x260] sm:$0xff] %v629
  %893 = vst [vmem:[#allocation2 + $0x268] sm:$0xff] %v631
  %894 = vst [vmem:[#allocation2 + $0x270] sm:$0xff] %v762
  %895 = vst [vmem:[#allocation2 + $0x278] sm:$0xff] %v764
  %896 = vst [vmem:[#allocation2 + $0x280] sm:$0xff] %v369
  %897 = vst [vmem:[#allocation2 + $0x288] sm:$0xff] %v371
  %898 = vst [vmem:[#allocation2 + $0x290] sm:$0xff] %v502
  %899 = vst [vmem:[#allocation2 + $0x298] sm:$0xff] %v504
  %900 = vst [vmem:[#allocation2 + $0x2a0] sm:$0xff] %v635
  %901 = vst [vmem:[#allocation2 + $0x2a8] sm:$0xff] %v637
  %902 = vst [vmem:[#allocation2 + $0x2b0] sm:$0xff] %v768
  %903 = vst [vmem:[#allocation2 + $0x2b8] sm:$0xff] %v770
  %904 = vst [vmem:[#allocation2 + $0x2c0] sm:$0xff] %v373
  %905 = vst [vmem:[#allocation2 + $0x2c8] sm:$0xff] %v375
  %906 = vst [vmem:[#allocation2 + $0x2d0] sm:$0xff] %v506
  %907 = vst [vmem:[#allocation2 + $0x2d8] sm:$0xff] %v508
  %908 = vst [vmem:[#allocation2 + $0x2e0] sm:$0xff] %v639
  %909 = vst [vmem:[#allocation2 + $0x2e8] sm:$0xff] %v641
  %910 = vst [vmem:[#allocation2 + $0x2f0] sm:$0xff] %v772
  %911 = vst [vmem:[#allocation2 + $0x2f8] sm:$0xff] %v774
  %912 = vst [vmem:[#allocation2 + $0x300] sm:$0xff] %v379
  %913 = vst [vmem:[#allocation2 + $0x308] sm:$0xff] %v381
  %914 = vst [vmem:[#allocation2 + $0x310] sm:$0xff] %v512
  %915 = vst [vmem:[#allocation2 + $0x318] sm:$0xff] %v514
  %916 = vst [vmem:[#allocation2 + $0x320] sm:$0xff] %v645
  %917 = vst [vmem:[#allocation2 + $0x328] sm:$0xff] %v647
  %918 = vst [vmem:[#allocation2 + $0x330] sm:$0xff] %v778
  %919 = vst [vmem:[#allocation2 + $0x338] sm:$0xff] %v780
  %920 = vst [vmem:[#allocation2 + $0x340] sm:$0xff] %v383
  %921 = vst [vmem:[#allocation2 + $0x348] sm:$0xff] %v385
  %922 = vst [vmem:[#allocation2 + $0x350] sm:$0xff] %v516
  %923 = vst [vmem:[#allocation2 + $0x358] sm:$0xff] %v518
  %924 = vst [vmem:[#allocation2 + $0x360] sm:$0xff] %v649
  %925 = vst [vmem:[#allocation2 + $0x368] sm:$0xff] %v651
  %926 = vst [vmem:[#allocation2 + $0x370] sm:$0xff] %v782
  %927 = vst [vmem:[#allocation2 + $0x378] sm:$0xff] %v784
  %928 = vst [vmem:[#allocation2 + $0x380] sm:$0xff] %v389
  %929 = vst [vmem:[#allocation2 + $0x388] sm:$0xff] %v391
  %930 = vst [vmem:[#allocation2 + $0x390] sm:$0xff] %v522
  %931 = vst [vmem:[#allocation2 + $0x398] sm:$0xff] %v524
  %932 = vst [vmem:[#allocation2 + $0x3a0] sm:$0xff] %v655
  %933 = vst [vmem:[#allocation2 + $0x3a8] sm:$0xff] %v657
  %934 = vst [vmem:[#allocation2 + $0x3b0] sm:$0xff] %v788
  %935 = vst [vmem:[#allocation2 + $0x3b8] sm:$0xff] %v790
  %936 = vst [vmem:[#allocation2 + $0x3c0] sm:$0xff] %v393
  %937 = vst [vmem:[#allocation2 + $0x3c8] sm:$0xff] %v395
  %938 = vst [vmem:[#allocation2 + $0x3d0] sm:$0xff] %v526
  %939 = vst [vmem:[#allocation2 + $0x3d8] sm:$0xff] %v528
  %940 = vst [vmem:[#allocation2 + $0x3e0] sm:$0xff] %v659
  %941 = vst [vmem:[#allocation2 + $0x3e8] sm:$0xff] %v661
  %942 = vst [vmem:[#allocation2 + $0x3f0] sm:$0xff] %v792
  %943 = vst [vmem:[#allocation2 + $0x3f8] sm:$0xff] %v794
  %944 = vst [vmem:[#allocation2 + $0x400] sm:$0xff] %v399
  %945 = vst [vmem:[#allocation2 + $0x408] sm:$0xff] %v401
  %946 = vst [vmem:[#allocation2 + $0x410] sm:$0xff] %v532
  %947 = vst [vmem:[#allocation2 + $0x418] sm:$0xff] %v534
  %948 = vst [vmem:[#allocation2 + $0x420] sm:$0xff] %v665
  %949 = vst [vmem:[#allocation2 + $0x428] sm:$0xff] %v667
  %950 = vst [vmem:[#allocation2 + $0x430] sm:$0xff] %v798
  %951 = vst [vmem:[#allocation2 + $0x438] sm:$0xff] %v800
  %952 = vst [vmem:[#allocation2 + $0x440] sm:$0xff] %v403
  %953 = vst [vmem:[#allocation2 + $0x448] sm:$0xff] %v405
  %954 = vst [vmem:[#allocation2 + $0x450] sm:$0xff] %v536
  %955 = vst [vmem:[#allocation2 + $0x458] sm:$0xff] %v538
  %956 = vst [vmem:[#allocation2 + $0x460] sm:$0xff] %v669
  %957 = vst [vmem:[#allocation2 + $0x468] sm:$0xff] %v671
  %958 = vst [vmem:[#allocation2 + $0x470] sm:$0xff] %v802
  %959 = vst [vmem:[#allocation2 + $0x478] sm:$0xff] %v804
  %960 = vst [vmem:[#allocation2 + $0x480] sm:$0xff] %v409
  %961 = vst [vmem:[#allocation2 + $0x488] sm:$0xff] %v411
  %962 = vst [vmem:[#allocation2 + $0x490] sm:$0xff] %v542
  %963 = vst [vmem:[#allocation2 + $0x498] sm:$0xff] %v544
  %964 = vst [vmem:[#allocation2 + $0x4a0] sm:$0xff] %v675
  %965 = vst [vmem:[#allocation2 + $0x4a8] sm:$0xff] %v677
  %966 = vst [vmem:[#allocation2 + $0x4b0] sm:$0xff] %v808
  %967 = vst [vmem:[#allocation2 + $0x4b8] sm:$0xff] %v810
  %968 = vst [vmem:[#allocation2 + $0x4c0] sm:$0xff] %v413
  %969 = vst [vmem:[#allocation2 + $0x4c8] sm:$0xff] %v415
  %970 = vst [vmem:[#allocation2 + $0x4d0] sm:$0xff] %v546
  %971 = vst [vmem:[#allocation2 + $0x4d8] sm:$0xff] %v548
  %972 = vst [vmem:[#allocation2 + $0x4e0] sm:$0xff] %v679
  %973 = vst [vmem:[#allocation2 + $0x4e8] sm:$0xff] %v681
  %974 = vst [vmem:[#allocation2 + $0x4f0] sm:$0xff] %v812
  %975 = vst [vmem:[#allocation2 + $0x4f8] sm:$0xff] %v814
  %v976 = vld [vmem:[%s1] sm:$0xff]
  %v977 = vld [vmem:[%s1 + $0x8] sm:$0xff]
  %s978 = smul.u32 0, 8
  %s979 = smul.addr %s978, 8
  %s980 = scalar_lea.vmem [#allocation2], %s979
  %v981 = vld [vmem:[%s980] sm:$0xff]
  %v982 = vld [vmem:[%s980 + $0x8] sm:$0xff]
  %v983 = vld [vmem:[%s980 + $0x10] sm:$0xff]
  %v984 = vld [vmem:[%s980 + $0x18] sm:$0xff]
  %v985 = vld [vmem:[%s980 + $0x40] sm:$0xff]
  %v986 = vld [vmem:[%s980 + $0x48] sm:$0xff]
  %v987 = vld [vmem:[%s980 + $0x50] sm:$0xff]
  %v988 = vld [vmem:[%s980 + $0x58] sm:$0xff]
  %s989 = smul.u32 18, 8
  %s990 = smul.addr %s989, 8
  %s991 = scalar_lea.vmem [#allocation2], %s990
  %v992 = vld [vmem:[%s991 + $0x20] sm:$0xff]
  %v993 = vld [vmem:[%s991 + $0x28] sm:$0xff]
  %v994 = vld [vmem:[%s991 + $0x30] sm:$0xff]
  %v995 = vld [vmem:[%s991 + $0x38] sm:$0xff]
  %v996 = vld [vmem:[%s991 + $0x60] sm:$0xff]
  %v997 = vld [vmem:[%s991 + $0x68] sm:$0xff]
  %v998 = vld [vmem:[%s991 + $0x70] sm:$0xff]
  %v999 = vld [vmem:[%s991 + $0x78] sm:$0xff]
  %v1000 = vld [vmem:[%s4] sm:$0xff]
  %v1001 = vld [vmem:[%s4 + $0x8] sm:$0xff]
  %v1002 = vld [vmem:[%s4 + $0x10] sm:$0xff]
  %v1003 = vld [vmem:[%s4 + $0x18] sm:$0xff]
  %v1004 = vld [vmem:[%s4 + $0x20] sm:$0xff]
  %v1005 = vld [vmem:[%s4 + $0x28] sm:$0xff]
  %v1006 = vld [vmem:[%s4 + $0x30] sm:$0xff]
  %v1007 = vld [vmem:[%s4 + $0x38] sm:$0xff]
  %v1008 = vld [vmem:[%s4 + $0x40] sm:$0xff]
  %v1009 = vld [vmem:[%s4 + $0x48] sm:$0xff]
  %v1010 = vld [vmem:[%s4 + $0x50] sm:$0xff]
  %v1011 = vld [vmem:[%s4 + $0x58] sm:$0xff]
  %v1012 = vld [vmem:[%s4 + $0x60] sm:$0xff]
  %v1013 = vld [vmem:[%s4 + $0x68] sm:$0xff]
  %v1014 = vld [vmem:[%s4 + $0x70] sm:$0xff]
  %v1015 = vld [vmem:[%s4 + $0x78] sm:$0xff]
  %v1016 = vld [vmem:[%s4 + $0x80] sm:$0xff]
  %v1017 = vld [vmem:[%s4 + $0x88] sm:$0xff]
  %v1018 = vld [vmem:[%s4 + $0x90] sm:$0xff]
  %v1019 = vld [vmem:[%s4 + $0x98] sm:$0xff]
  %v1020 = vld [vmem:[%s4 + $0xa0] sm:$0xff]
  %v1021 = vld [vmem:[%s4 + $0xa8] sm:$0xff]
  %v1022 = vld [vmem:[%s4 + $0xb0] sm:$0xff]
  %v1023 = vld [vmem:[%s4 + $0xb8] sm:$0xff]
  %v1024 = vld [vmem:[%s4 + $0xc0] sm:$0xff]
  %v1025 = vld [vmem:[%s4 + $0xc8] sm:$0xff]
  %v1026 = vld [vmem:[%s4 + $0xd0] sm:$0xff]
  %v1027 = vld [vmem:[%s4 + $0xd8] sm:$0xff]
  %v1028 = vld [vmem:[%s4 + $0xe0] sm:$0xff]
  %v1029 = vld [vmem:[%s4 + $0xe8] sm:$0xff]
  %v1030 = vld [vmem:[%s4 + $0xf0] sm:$0xff]
  %v1031 = vld [vmem:[%s4 + $0xf8] sm:$0xff]
  %v1064 = vunpack.c.l.b16 %v1000
  %v1065 = vunpack.c.h.b16 %v1000
  %v1066 = vunpack.c.l.b16 %v1001
  %v1067 = vunpack.c.h.b16 %v1001
  %v1068 = vunpack.c.l.b16 %v1002
  %v1069 = vunpack.c.h.b16 %v1002
  %v1070 = vunpack.c.l.b16 %v1003
  %v1071 = vunpack.c.h.b16 %v1003
  %v1072 = vunpack.c.l.b16 %v1004
  %v1073 = vunpack.c.h.b16 %v1004
  %v1074 = vunpack.c.l.b16 %v1005
  %v1075 = vunpack.c.h.b16 %v1005
  %v1076 = vunpack.c.l.b16 %v1006
  %v1077 = vunpack.c.h.b16 %v1006
  %v1078 = vunpack.c.l.b16 %v1007
  %v1079 = vunpack.c.h.b16 %v1007
  %v1080 = vunpack.c.l.b16 %v1008
  %v1081 = vunpack.c.h.b16 %v1008
  %v1082 = vunpack.c.l.b16 %v1009
  %v1083 = vunpack.c.h.b16 %v1009
  %v1084 = vunpack.c.l.b16 %v1010
  %v1085 = vunpack.c.h.b16 %v1010
  %v1086 = vunpack.c.l.b16 %v1011
  %v1087 = vunpack.c.h.b16 %v1011
  %v1088 = vunpack.c.l.b16 %v1012
  %v1089 = vunpack.c.h.b16 %v1012
  %v1090 = vunpack.c.l.b16 %v1013
  %v1091 = vunpack.c.h.b16 %v1013
  %v1092 = vunpack.c.l.b16 %v1014
  %v1093 = vunpack.c.h.b16 %v1014
  %v1094 = vunpack.c.l.b16 %v1015
  %v1095 = vunpack.c.h.b16 %v1015
  %v1096 = vunpack.c.l.b16 %v1016
  %v1097 = vunpack.c.h.b16 %v1016
  %v1098 = vunpack.c.l.b16 %v1017
  %v1099 = vunpack.c.h.b16 %v1017
  %v1100 = vunpack.c.l.b16 %v1018
  %v1101 = vunpack.c.h.b16 %v1018
  %v1102 = vunpack.c.l.b16 %v1019
  %v1103 = vunpack.c.h.b16 %v1019
  %v1104 = vunpack.c.l.b16 %v1020
  %v1105 = vunpack.c.h.b16 %v1020
  %v1106 = vunpack.c.l.b16 %v1021
  %v1107 = vunpack.c.h.b16 %v1021
  %v1108 = vunpack.c.l.b16 %v1022
  %v1109 = vunpack.c.h.b16 %v1022
  %v1110 = vunpack.c.l.b16 %v1023
  %v1111 = vunpack.c.h.b16 %v1023
  %v1112 = vunpack.c.l.b16 %v1024
  %v1113 = vunpack.c.h.b16 %v1024
  %v1114 = vunpack.c.l.b16 %v1025
  %v1115 = vunpack.c.h.b16 %v1025
  %v1116 = vunpack.c.l.b16 %v1026
  %v1117 = vunpack.c.h.b16 %v1026
  %v1118 = vunpack.c.l.b16 %v1027
  %v1119 = vunpack.c.h.b16 %v1027
  %v1120 = vunpack.c.l.b16 %v1028
  %v1121 = vunpack.c.h.b16 %v1028
  %v1122 = vunpack.c.l.b16 %v1029
  %v1123 = vunpack.c.h.b16 %v1029
  %v1124 = vunpack.c.l.b16 %v1030
  %v1125 = vunpack.c.h.b16 %v1030
  %v1126 = vunpack.c.l.b16 %v1031
  %v1127 = vunpack.c.h.b16 %v1031
  %v1128 = vpack.c.b16 %v1068, %v1064
  %v1129 = vpack.c.b16 %v1069, %v1065
  %v1130 = vpack.c.b16 %v1070, %v1066
  %v1131 = vpack.c.b16 %v1071, %v1067
  %v1132 = vpack.c.b16 %v1076, %v1072
  %v1133 = vpack.c.b16 %v1077, %v1073
  %v1134 = vpack.c.b16 %v1078, %v1074
  %v1135 = vpack.c.b16 %v1079, %v1075
  %v1136 = vpack.c.b16 %v1084, %v1080
  %v1137 = vpack.c.b16 %v1085, %v1081
  %v1138 = vpack.c.b16 %v1086, %v1082
  %v1139 = vpack.c.b16 %v1087, %v1083
  %v1140 = vpack.c.b16 %v1092, %v1088
  %v1141 = vpack.c.b16 %v1093, %v1089
  %v1142 = vpack.c.b16 %v1094, %v1090
  %v1143 = vpack.c.b16 %v1095, %v1091
  %v1144 = vpack.c.b16 %v1100, %v1096
  %v1145 = vpack.c.b16 %v1101, %v1097
  %v1146 = vpack.c.b16 %v1102, %v1098
  %v1147 = vpack.c.b16 %v1103, %v1099
  %v1148 = vpack.c.b16 %v1108, %v1104
  %v1149 = vpack.c.b16 %v1109, %v1105
  %v1150 = vpack.c.b16 %v1110, %v1106
  %v1151 = vpack.c.b16 %v1111, %v1107
  %v1152 = vpack.c.b16 %v1116, %v1112
  %v1153 = vpack.c.b16 %v1117, %v1113
  %v1154 = vpack.c.b16 %v1118, %v1114
  %v1155 = vpack.c.b16 %v1119, %v1115
  %v1156 = vpack.c.b16 %v1124, %v1120
  %v1157 = vpack.c.b16 %v1125, %v1121
  %v1158 = vpack.c.b16 %v1126, %v1122
  %v1159 = vpack.c.b16 %v1127, %v1123
  %1192 = vmatprep.subr.bf16.mxu0 %v1129
  %1193 = vmatpush1.bf16.msra.mxu0 %v1128
  %1194 = vmatprep.subr.bf16.mxu0 %v1133
  %1195 = vmatpush1.bf16.msra.mxu0 %v1132
  %1196 = vmatprep.subr.bf16.mxu0 %v1137
  %1197 = vmatpush1.bf16.msra.mxu0 %v1136
  %1198 = vmatprep.subr.bf16.mxu0 %v1141
  %1199 = vmatpush1.bf16.msra.mxu0 %v1140
  %1200 = vmatprep.subr.bf16.mxu0 %v1145
  %1201 = vmatpush1.bf16.msra.mxu0 %v1144
  %1202 = vmatprep.subr.bf16.mxu0 %v1149
  %1203 = vmatpush1.bf16.msra.mxu0 %v1148
  %1204 = vmatprep.subr.bf16.mxu0 %v1153
  %1205 = vmatpush1.bf16.msra.mxu0 %v1152
  %1206 = vmatprep.subr.bf16.mxu0 %v1157
  %1207 = vmatpush1.bf16.msra.mxu0 %v1156
  %1208 = vmatprep.subr.bf16.mxu0 0
  %1209 = vmatpush1.bf16.msra.mxu0 0
  %1210 = vmatprep.subr.bf16.mxu0 0
  %1211 = vmatpush1.bf16.msra.mxu0 0
  %1212 = vmatprep.subr.bf16.mxu0 0
  %1213 = vmatpush1.bf16.msra.mxu0 0
  %1214 = vmatprep.subr.bf16.mxu0 0
  %1215 = vmatpush1.bf16.msra.mxu0 0
  %1216 = vmatprep.subr.bf16.mxu0 0
  %1217 = vmatpush1.bf16.msra.mxu0 0
  %1218 = vmatprep.subr.bf16.mxu0 0
  %1219 = vmatpush1.bf16.msra.mxu0 0
  %1220 = vmatprep.subr.bf16.mxu0 0
  %1221 = vmatpush1.bf16.msra.mxu0 0
  %1222 = vmatprep.subr.bf16.mxu0 0
  %1223 = vmatpush1.bf16.msra.mxu0 0
  %1224 = vmatprep.mubr.bf16.mxu0 0
  %1225 = vmatmul.mubr.bf16.gmra.mrb[0].mxu0 0
  %v1226 = vpop.f32.mrb[0].mxu0
  %v1227 = vadd.f32 0.0, %v1226
  %v1228 = vpop.f32.mrb[0].mxu0
  %v1229 = vadd.f32 0.0, %v1228
  %v1230 = vpop.f32.mrb[0].mxu0
  %v1231 = vadd.f32 0.0, %v1230
  %v1232 = vpop.f32.mrb[0].mxu0
  %v1233 = vadd.f32 0.0, %v1232
  %1234 = vdwg.mxu0
  %1235 = vmatprep.subr.bf16.mxu0 %v1131
  %1236 = vmatpush1.bf16.msra.mxu0 %v1130
  %1237 = vmatprep.subr.bf16.mxu0 %v1135
  %1238 = vmatpush1.bf16.msra.mxu0 %v1134
  %1239 = vmatprep.subr.bf16.mxu0 %v1139
  %1240 = vmatpush1.bf16.msra.mxu0 %v1138
  %1241 = vmatprep.subr.bf16.mxu0 %v1143
  %1242 = vmatpush1.bf16.msra.mxu0 %v1142
  %1243 = vmatprep.subr.bf16.mxu0 %v1147
  %1244 = vmatpush1.bf16.msra.mxu0 %v1146
  %1245 = vmatprep.subr.bf16.mxu0 %v1151
  %1246 = vmatpush1.bf16.msra.mxu0 %v1150
  %1247 = vmatprep.subr.bf16.mxu0 %v1155
  %1248 = vmatpush1.bf16.msra.mxu0 %v1154
  %1249 = vmatprep.subr.bf16.mxu0 %v1159
  %1250 = vmatpush1.bf16.msra.mxu0 %v1158
  %1251 = vmatprep.subr.bf16.mxu0 0
  %1252 = vmatpush1.bf16.msra.mxu0 0
  %1253 = vmatprep.subr.bf16.mxu0 0
  %1254 = vmatpush1.bf16.msra.mxu0 0
  %1255 = vmatprep.subr.bf16.mxu0 0
  %1256 = vmatpush1.bf16.msra.mxu0 0
  %1257 = vmatprep.subr.bf16.mxu0 0
  %1258 = vmatpush1.bf16.msra.mxu0 0
  %1259 = vmatprep.subr.bf16.mxu0 0
  %1260 = vmatpush1.bf16.msra.mxu0 0
  %1261 = vmatprep.subr.bf16.mxu0 0
  %1262 = vmatpush1.bf16.msra.mxu0 0
  %1263 = vmatprep.subr.bf16.mxu0 0
  %1264 = vmatpush1.bf16.msra.mxu0 0
  %1265 = vmatprep.subr.bf16.mxu0 0
  %1266 = vmatpush1.bf16.msra.mxu0 0
  %1267 = vmatprep.mubr.bf16.mxu0 0
  %1268 = vmatmul.mubr.bf16.gmra.mrb[0].mxu0 0
  %v1269 = vpop.f32.mrb[0].mxu0
  %v1270 = vadd.f32 0.0, %v1269
  %v1271 = vpop.f32.mrb[0].mxu0
  %v1272 = vadd.f32 0.0, %v1271
  %v1273 = vpop.f32.mrb[0].mxu0
  %v1274 = vadd.f32 0.0, %v1273
  %v1275 = vpop.f32.mrb[0].mxu0
  %v1276 = vadd.f32 0.0, %v1275
  %1277 = vdwg.mxu0
  %v1278 = vadd.f32 %v981, %v1227
  %v1279 = vadd.f32 %v982, %v1229
  %v1280 = vadd.f32 %v983, %v1270
  %v1281 = vadd.f32 %v984, %v1272
  %v1282 = vadd.f32 %v985, %v1231
  %v1283 = vadd.f32 %v986, %v1233
  %v1284 = vadd.f32 %v987, %v1274
  %v1285 = vadd.f32 %v988, %v1276
  %v1286 = vld [vmem:[%s5] sm:$0xff]
  %v1287 = vld [vmem:[%s5 + $0x8] sm:$0xff]
  %v1288 = vld [vmem:[%s5 + $0x10] sm:$0xff]
  %v1289 = vld [vmem:[%s5 + $0x18] sm:$0xff]
  %v1290 = vld [vmem:[%s5 + $0x20] sm:$0xff]
  %v1291 = vld [vmem:[%s5 + $0x28] sm:$0xff]
  %v1292 = vld [vmem:[%s5 + $0x30] sm:$0xff]
  %v1293 = vld [vmem:[%s5 + $0x38] sm:$0xff]
  %v1294 = vld [vmem:[%s5 + $0x40] sm:$0xff]
  %v1295 = vld [vmem:[%s5 + $0x48] sm:$0xff]
  %v1296 = vld [vmem:[%s5 + $0x50] sm:$0xff]
  %v1297 = vld [vmem:[%s5 + $0x58] sm:$0xff]
  %v1298 = vld [vmem:[%s5 + $0x60] sm:$0xff]
  %v1299 = vld [vmem:[%s5 + $0x68] sm:$0xff]
  %v1300 = vld [vmem:[%s5 + $0x70] sm:$0xff]
  %v1301 = vld [vmem:[%s5 + $0x78] sm:$0xff]
  %v1302 = vld [vmem:[%s5 + $0x80] sm:$0xff]
  %v1303 = vld [vmem:[%s5 + $0x88] sm:$0xff]
  %v1304 = vld [vmem:[%s5 + $0x90] sm:$0xff]
  %v1305 = vld [vmem:[%s5 + $0x98] sm:$0xff]
  %v1306 = vld [vmem:[%s5 + $0xa0] sm:$0xff]
  %v1307 = vld [vmem:[%s5 + $0xa8] sm:$0xff]
  %v1308 = vld [vmem:[%s5 + $0xb0] sm:$0xff]
  %v1309 = vld [vmem:[%s5 + $0xb8] sm:$0xff]
  %v1310 = vld [vmem:[%s5 + $0xc0] sm:$0xff]
  %v1311 = vld [vmem:[%s5 + $0xc8] sm:$0xff]
  %v1312 = vld [vmem:[%s5 + $0xd0] sm:$0xff]
  %v1313 = vld [vmem:[%s5 + $0xd8] sm:$0xff]
  %v1314 = vld [vmem:[%s5 + $0xe0] sm:$0xff]
  %v1315 = vld [vmem:[%s5 + $0xe8] sm:$0xff]
  %v1316 = vld [vmem:[%s5 + $0xf0] sm:$0xff]
  %v1317 = vld [vmem:[%s5 + $0xf8] sm:$0xff]
  %v1350 = vunpack.c.l.b16 %v1286
  %v1351 = vunpack.c.h.b16 %v1286
  %v1352 = vunpack.c.l.b16 %v1287
  %v1353 = vunpack.c.h.b16 %v1287
  %v1354 = vunpack.c.l.b16 %v1288
  %v1355 = vunpack.c.h.b16 %v1288
  %v1356 = vunpack.c.l.b16 %v1289
  %v1357 = vunpack.c.h.b16 %v1289
  %v1358 = vunpack.c.l.b16 %v1290
  %v1359 = vunpack.c.h.b16 %v1290
  %v1360 = vunpack.c.l.b16 %v1291
  %v1361 = vunpack.c.h.b16 %v1291
  %v1362 = vunpack.c.l.b16 %v1292
  %v1363 = vunpack.c.h.b16 %v1292
  %v1364 = vunpack.c.l.b16 %v1293
  %v1365 = vunpack.c.h.b16 %v1293
  %v1366 = vunpack.c.l.b16 %v1294
  %v1367 = vunpack.c.h.b16 %v1294
  %v1368 = vunpack.c.l.b16 %v1295
  %v1369 = vunpack.c.h.b16 %v1295
  %v1370 = vunpack.c.l.b16 %v1296
  %v1371 = vunpack.c.h.b16 %v1296
  %v1372 = vunpack.c.l.b16 %v1297
  %v1373 = vunpack.c.h.b16 %v1297
  %v1374 = vunpack.c.l.b16 %v1298
  %v1375 = vunpack.c.h.b16 %v1298
  %v1376 = vunpack.c.l.b16 %v1299
  %v1377 = vunpack.c.h.b16 %v1299
  %v1378 = vunpack.c.l.b16 %v1300
  %v1379 = vunpack.c.h.b16 %v1300
  %v1380 = vunpack.c.l.b16 %v1301
  %v1381 = vunpack.c.h.b16 %v1301
  %v1382 = vunpack.c.l.b16 %v1302
  %v1383 = vunpack.c.h.b16 %v1302
  %v1384 = vunpack.c.l.b16 %v1303
  %v1385 = vunpack.c.h.b16 %v1303
  %v1386 = vunpack.c.l.b16 %v1304
  %v1387 = vunpack.c.h.b16 %v1304
  %v1388 = vunpack.c.l.b16 %v1305
  %v1389 = vunpack.c.h.b16 %v1305
  %v1390 = vunpack.c.l.b16 %v1306
  %v1391 = vunpack.c.h.b16 %v1306
  %v1392 = vunpack.c.l.b16 %v1307
  %v1393 = vunpack.c.h.b16 %v1307
  %v1394 = vunpack.c.l.b16 %v1308
  %v1395 = vunpack.c.h.b16 %v1308
  %v1396 = vunpack.c.l.b16 %v1309
  %v1397 = vunpack.c.h.b16 %v1309
  %v1398 = vunpack.c.l.b16 %v1310
  %v1399 = vunpack.c.h.b16 %v1310
  %v1400 = vunpack.c.l.b16 %v1311
  %v1401 = vunpack.c.h.b16 %v1311
  %v1402 = vunpack.c.l.b16 %v1312
  %v1403 = vunpack.c.h.b16 %v1312
  %v1404 = vunpack.c.l.b16 %v1313
  %v1405 = vunpack.c.h.b16 %v1313
  %v1406 = vunpack.c.l.b16 %v1314
  %v1407 = vunpack.c.h.b16 %v1314
  %v1408 = vunpack.c.l.b16 %v1315
  %v1409 = vunpack.c.h.b16 %v1315
  %v1410 = vunpack.c.l.b16 %v1316
  %v1411 = vunpack.c.h.b16 %v1316
  %v1412 = vunpack.c.l.b16 %v1317
  %v1413 = vunpack.c.h.b16 %v1317
  %v1414 = vpack.c.b16 %v1354, %v1350
  %v1415 = vpack.c.b16 %v1355, %v1351
  %v1416 = vpack.c.b16 %v1356, %v1352
  %v1417 = vpack.c.b16 %v1357, %v1353
  %v1418 = vpack.c.b16 %v1362, %v1358
  %v1419 = vpack.c.b16 %v1363, %v1359
  %v1420 = vpack.c.b16 %v1364, %v1360
  %v1421 = vpack.c.b16 %v1365, %v1361
  %v1422 = vpack.c.b16 %v1370, %v1366
  %v1423 = vpack.c.b16 %v1371, %v1367
  %v1424 = vpack.c.b16 %v1372, %v1368
  %v1425 = vpack.c.b16 %v1373, %v1369
  %v1426 = vpack.c.b16 %v1378, %v1374
  %v1427 = vpack.c.b16 %v1379, %v1375
  %v1428 = vpack.c.b16 %v1380, %v1376
  %v1429 = vpack.c.b16 %v1381, %v1377
  %v1430 = vpack.c.b16 %v1386, %v1382
  %v1431 = vpack.c.b16 %v1387, %v1383
  %v1432 = vpack.c.b16 %v1388, %v1384
  %v1433 = vpack.c.b16 %v1389, %v1385
  %v1434 = vpack.c.b16 %v1394, %v1390
  %v1435 = vpack.c.b16 %v1395, %v1391
  %v1436 = vpack.c.b16 %v1396, %v1392
  %v1437 = vpack.c.b16 %v1397, %v1393
  %v1438 = vpack.c.b16 %v1402, %v1398
  %v1439 = vpack.c.b16 %v1403, %v1399
  %v1440 = vpack.c.b16 %v1404, %v1400
  %v1441 = vpack.c.b16 %v1405, %v1401
  %v1442 = vpack.c.b16 %v1410, %v1406
  %v1443 = vpack.c.b16 %v1411, %v1407
  %v1444 = vpack.c.b16 %v1412, %v1408
  %v1445 = vpack.c.b16 %v1413, %v1409
  %1478 = vmatprep.subr.bf16.mxu0 %v1415
  %1479 = vmatpush1.bf16.msra.mxu0 %v1414
  %1480 = vmatprep.subr.bf16.mxu0 %v1419
  %1481 = vmatpush1.bf16.msra.mxu0 %v1418
  %1482 = vmatprep.subr.bf16.mxu0 %v1423
  %1483 = vmatpush1.bf16.msra.mxu0 %v1422
  %1484 = vmatprep.subr.bf16.mxu0 %v1427
  %1485 = vmatpush1.bf16.msra.mxu0 %v1426
  %1486 = vmatprep.subr.bf16.mxu0 %v1431
  %1487 = vmatpush1.bf16.msra.mxu0 %v1430
  %1488 = vmatprep.subr.bf16.mxu0 %v1435
  %1489 = vmatpush1.bf16.msra.mxu0 %v1434
  %1490 = vmatprep.subr.bf16.mxu0 %v1439
  %1491 = vmatpush1.bf16.msra.mxu0 %v1438
  %1492 = vmatprep.subr.bf16.mxu0 %v1443
  %1493 = vmatpush1.bf16.msra.mxu0 %v1442
  %1494 = vmatprep.subr.bf16.mxu0 0
  %1495 = vmatpush1.bf16.msra.mxu0 0
  %1496 = vmatprep.subr.bf16.mxu0 0
  %1497 = vmatpush1.bf16.msra.mxu0 0
  %1498 = vmatprep.subr.bf16.mxu0 0
  %1499 = vmatpush1.bf16.msra.mxu0 0
  %1500 = vmatprep.subr.bf16.mxu0 0
  %1501 = vmatpush1.bf16.msra.mxu0 0
  %1502 = vmatprep.subr.bf16.mxu0 0
  %1503 = vmatpush1.bf16.msra.mxu0 0
  %1504 = vmatprep.subr.bf16.mxu0 0
  %1505 = vmatpush1.bf16.msra.mxu0 0
  %1506 = vmatprep.subr.bf16.mxu0 0
  %1507 = vmatpush1.bf16.msra.mxu0 0
  %1508 = vmatprep.subr.bf16.mxu0 0
  %1509 = vmatpush1.bf16.msra.mxu0 0
  %1510 = vmatprep.mubr.bf16.mxu0 0
  %1511 = vmatmul.mubr.bf16.gmra.mrb[0].mxu0 0
  %v1512 = vpop.f32.mrb[0].mxu0
  %v1513 = vadd.f32 0.0, %v1512
  %v1514 = vpop.f32.mrb[0].mxu0
  %v1515 = vadd.f32 0.0, %v1514
  %v1516 = vpop.f32.mrb[0].mxu0
  %v1517 = vadd.f32 0.0, %v1516
  %v1518 = vpop.f32.mrb[0].mxu0
  %v1519 = vadd.f32 0.0, %v1518
  %1520 = vdwg.mxu0
  %1521 = vmatprep.subr.bf16.mxu0 %v1417
  %1522 = vmatpush1.bf16.msra.mxu0 %v1416
  %1523 = vmatprep.subr.bf16.mxu0 %v1421
  %1524 = vmatpush1.bf16.msra.mxu0 %v1420
  %1525 = vmatprep.subr.bf16.mxu0 %v1425
  %1526 = vmatpush1.bf16.msra.mxu0 %v1424
  %1527 = vmatprep.subr.bf16.mxu0 %v1429
  %1528 = vmatpush1.bf16.msra.mxu0 %v1428
  %1529 = vmatprep.subr.bf16.mxu0 %v1433
  %1530 = vmatpush1.bf16.msra.mxu0 %v1432
  %1531 = vmatprep.subr.bf16.mxu0 %v1437
  %1532 = vmatpush1.bf16.msra.mxu0 %v1436
  %1533 = vmatprep.subr.bf16.mxu0 %v1441
  %1534 = vmatpush1.bf16.msra.mxu0 %v1440
  %1535 = vmatprep.subr.bf16.mxu0 %v1445
  %1536 = vmatpush1.bf16.msra.mxu0 %v1444
  %1537 = vmatprep.subr.bf16.mxu0 0
  %1538 = vmatpush1.bf16.msra.mxu0 0
  %1539 = vmatprep.subr.bf16.mxu0 0
  %1540 = vmatpush1.bf16.msra.mxu0 0
  %1541 = vmatprep.subr.bf16.mxu0 0
  %1542 = vmatpush1.bf16.msra.mxu0 0
  %1543 = vmatprep.subr.bf16.mxu0 0
  %1544 = vmatpush1.bf16.msra.mxu0 0
  %1545 = vmatprep.subr.bf16.mxu0 0
  %1546 = vmatpush1.bf16.msra.mxu0 0
  %1547 = vmatprep.subr.bf16.mxu0 0
  %1548 = vmatpush1.bf16.msra.mxu0 0
  %1549 = vmatprep.subr.bf16.mxu0 0
  %1550 = vmatpush1.bf16.msra.mxu0 0
  %1551 = vmatprep.subr.bf16.mxu0 0
  %1552 = vmatpush1.bf16.msra.mxu0 0
  %1553 = vmatprep.mubr.bf16.mxu0 0
  %1554 = vmatmul.mubr.bf16.gmra.mrb[0].mxu0 0
  %v1555 = vpop.f32.mrb[0].mxu0
  %v1556 = vadd.f32 0.0, %v1555
  %v1557 = vpop.f32.mrb[0].mxu0
  %v1558 = vadd.f32 0.0, %v1557
  %v1559 = vpop.f32.mrb[0].mxu0
  %v1560 = vadd.f32 0.0, %v1559
  %v1561 = vpop.f32.mrb[0].mxu0
  %v1562 = vadd.f32 0.0, %v1561
  %1563 = vdwg.mxu0
  %v1564 = vadd.f32 %v992, %v1513
  %v1565 = vadd.f32 %v993, %v1515
  %v1566 = vadd.f32 %v994, %v1556
  %v1567 = vadd.f32 %v995, %v1558
  %v1568 = vadd.f32 %v996, %v1517
  %v1569 = vadd.f32 %v997, %v1519
  %v1570 = vadd.f32 %v998, %v1560
  %v1571 = vadd.f32 %v999, %v1562
  %vm1572 = vcmp.gt.s32.totalorder %v976, 0
  %vm1573 = vcmp.gt.s32.totalorder %v977, 0
  %v1574 = vxor.u32 %v1278, 2147483648
  %v1575 = vxor.u32 %v1282, 2147483648
  %v1576 = vmul.f32 %v1574, 1.442695
  %v1577 = vpow.pop %v1576
  %v1578 = vmul.f32 %v1575, 1.442695
  %v1579 = vpow.pop %v1578
  %v1580 = vadd.f32 %v1577, 1.0
  %v1581 = vadd.f32 %v1579, 1.0
  %v1582 = vrcp.pop %v1580
  %v1583 = vmul.f32 1.0, %v1582
  %v1584 = vrcp.pop %v1581
  %v1585 = vmul.f32 1.0, %v1584
  %v1586 = vxor.u32 %v1279, 2147483648
  %v1587 = vxor.u32 %v1283, 2147483648
  %v1588 = vmul.f32 %v1586, 1.442695
  %v1589 = vpow.pop %v1588
  %v1590 = vmul.f32 %v1587, 1.442695
  %v1591 = vpow.pop %v1590
  %v1592 = vadd.f32 %v1589, 1.0
  %v1593 = vadd.f32 %v1591, 1.0
  %v1594 = vrcp.pop %v1592
  %v1595 = vmul.f32 1.0, %v1594
  %v1596 = vrcp.pop %v1593
  %v1597 = vmul.f32 1.0, %v1596
  %v1598 = vtanh.pop %v1280
  %v1599 = vtanh.pop %v1284
  %v1600 = vxor.u32 %v1281, 2147483648
  %v1601 = vxor.u32 %v1285, 2147483648
  %v1602 = vmul.f32 %v1600, 1.442695
  %v1603 = vpow.pop %v1602
  %v1604 = vmul.f32 %v1601, 1.442695
  %v1605 = vpow.pop %v1604
  %v1606 = vadd.f32 %v1603, 1.0
  %v1607 = vadd.f32 %v1605, 1.0
  %v1608 = vrcp.pop %v1606
  %v1609 = vmul.f32 1.0, %v1608
  %v1610 = vrcp.pop %v1607
  %v1611 = vmul.f32 1.0, %v1610
  %v1612 = vmul.f32 %v1595, 0.0
  %v1613 = vmul.f32 %v1597, 0.0
  %v1614 = vmul.f32 %v1583, %v1598
  %v1615 = vmul.f32 %v1585, %v1599
  %v1616 = vadd.f32 %v1612, %v1614
  %v1617 = vadd.f32 %v1613, %v1615
  %v1618 = vtanh.pop %v1616
  %v1619 = vtanh.pop %v1617
  %v1620 = vmul.f32 %v1609, %v1618
  %v1621 = vmul.f32 %v1611, %v1619
  %v1622 = vsel %vm1572, 1, 0
  %v1623 = vsel %vm1573, 1, 0
  %1624 = vset.pattern.permute.xlu0 0
  %1625 = vperm.xlu0 %1624, %v1622
  %v1626 = vpop.permute.xlu0 %1625
  %1627 = vset.pattern.permute.xlu0 0
  %1628 = vperm.xlu0 %1627, %v1623
  %v1629 = vpop.permute.xlu0 %1628
  %vm1630 = vcmp.eq.s32.totalorder %v1626, 1
  %vm1631 = vcmp.eq.s32.totalorder %v1629, 1
  %v1632 = vsel %vm1630, %v1620, 0.0
  %v1633 = vsel %vm1631, %v1621, 0.0
  %v1634 = vsel %vm1630, %v1616, 0.0
  %v1635 = vsel %vm1631, %v1617, 0.0
  %vm1636 = vcmp.gt.s32.totalorder %v976, 9
  %vm1637 = vcmp.gt.s32.totalorder %v977, 9
  %v1638 = vxor.u32 %v1564, 2147483648
  %v1639 = vxor.u32 %v1568, 2147483648
  %v1640 = vmul.f32 %v1638, 1.442695
  %v1641 = vpow.pop %v1640
  %v1642 = vmul.f32 %v1639, 1.442695
  %v1643 = vpow.pop %v1642
  %v1644 = vadd.f32 %v1641, 1.0
  %v1645 = vadd.f32 %v1643, 1.0
  %v1646 = vrcp.pop %v1644
  %v1647 = vmul.f32 1.0, %v1646
  %v1648 = vrcp.pop %v1645
  %v1649 = vmul.f32 1.0, %v1648
  %v1650 = vxor.u32 %v1565, 2147483648
  %v1651 = vxor.u32 %v1569, 2147483648
  %v1652 = vmul.f32 %v1650, 1.442695
  %v1653 = vpow.pop %v1652
  %v1654 = vmul.f32 %v1651, 1.442695
  %v1655 = vpow.pop %v1654
  %v1656 = vadd.f32 %v1653, 1.0
  %v1657 = vadd.f32 %v1655, 1.0
  %v1658 = vrcp.pop %v1656
  %v1659 = vmul.f32 1.0, %v1658
  %v1660 = vrcp.pop %v1657
  %v1661 = vmul.f32 1.0, %v1660
  %v1662 = vtanh.pop %v1566
  %v1663 = vtanh.pop %v1570
  %v1664 = vxor.u32 %v1567, 2147483648
  %v1665 = vxor.u32 %v1571, 2147483648
  %v1666 = vmul.f32 %v1664, 1.442695
  %v1667 = vpow.pop %v1666
  %v1668 = vmul.f32 %v1665, 1.442695
  %v1669 = vpow.pop %v1668
  %v1670 = vadd.f32 %v1667, 1.0
  %v1671 = vadd.f32 %v1669, 1.0
  %v1672 = vrcp.pop %v1670
  %v1673 = vmul.f32 1.0, %v1672
  %v1674 = vrcp.pop %v1671
  %v1675 = vmul.f32 1.0, %v1674
  %v1676 = vmul.f32 %v1659, 0.0
  %v1677 = vmul.f32 %v1661, 0.0
  %v1678 = vmul.f32 %v1647, %v1662
  %v1679 = vmul.f32 %v1649, %v1663
  %v1680 = vadd.f32 %v1676, %v1678
  %v1681 = vadd.f32 %v1677, %v1679
  %v1682 = vtanh.pop %v1680
  %v1683 = vtanh.pop %v1681
  %v1684 = vmul.f32 %v1673, %v1682
  %v1685 = vmul.f32 %v1675, %v1683
  %v1686 = vsel %vm1636, 1, 0
  %v1687 = vsel %vm1637, 1, 0
  %1688 = vset.pattern.permute.xlu0 0
  %1689 = vperm.xlu0 %1688, %v1686
  %v1690 = vpop.permute.xlu0 %1689
  %1691 = vset.pattern.permute.xlu0 0
  %1692 = vperm.xlu0 %1691, %v1687
  %v1693 = vpop.permute.xlu0 %1692
  %vm1694 = vcmp.eq.s32.totalorder %v1690, 1
  %vm1695 = vcmp.eq.s32.totalorder %v1693, 1
  %v1696 = vsel %vm1694, %v1684, 0.0
  %v1697 = vsel %vm1695, %v1685, 0.0
  %v1698 = vsel %vm1694, %v1680, 0.0
  %v1699 = vsel %vm1695, %v1681, 0.0
  %s1700 = smul.u32 2, 8
  %s1701 = smul.addr %s1700, 8
  %s1702 = scalar_lea.vmem [#allocation2], %s1701
  %v1703 = vld [vmem:[%s1702] sm:$0xff]
  %v1704 = vld [vmem:[%s1702 + $0x8] sm:$0xff]
  %v1705 = vld [vmem:[%s1702 + $0x10] sm:$0xff]
  %v1706 = vld [vmem:[%s1702 + $0x18] sm:$0xff]
  %v1707 = vld [vmem:[%s1702 + $0x40] sm:$0xff]
  %v1708 = vld [vmem:[%s1702 + $0x48] sm:$0xff]
  %v1709 = vld [vmem:[%s1702 + $0x50] sm:$0xff]
  %v1710 = vld [vmem:[%s1702 + $0x58] sm:$0xff]
  %s1711 = smul.u32 16, 8
  %s1712 = smul.addr %s1711, 8
  %s1713 = scalar_lea.vmem [#allocation2], %s1712
  %v1714 = vld [vmem:[%s1713 + $0x20] sm:$0xff]
  %v1715 = vld [vmem:[%s1713 + $0x28] sm:$0xff]
  %v1716 = vld [vmem:[%s1713 + $0x30] sm:$0xff]
  %v1717 = vld [vmem:[%s1713 + $0x38] sm:$0xff]
  %v1718 = vld [vmem:[%s1713 + $0x60] sm:$0xff]
  %v1719 = vld [vmem:[%s1713 + $0x68] sm:$0xff]
  %v1720 = vld [vmem:[%s1713 + $0x70] sm:$0xff]
  %v1721 = vld [vmem:[%s1713 + $0x78] sm:$0xff]
  %v1722 = vpack.c.bf16 %v1633, %v1632
  %1723 = vmatprep.subr.bf16.mxu0 %v1129
  %1724 = vmatpush1.bf16.msra.mxu0 %v1128
  %1725 = vmatprep.subr.bf16.mxu0 %v1133
  %1726 = vmatpush1.bf16.msra.mxu0 %v1132
  %1727 = vmatprep.subr.bf16.mxu0 %v1137
  %1728 = vmatpush1.bf16.msra.mxu0 %v1136
  %1729 = vmatprep.subr.bf16.mxu0 %v1141
  %1730 = vmatpush1.bf16.msra.mxu0 %v1140
  %1731 = vmatprep.subr.bf16.mxu0 %v1145
  %1732 = vmatpush1.bf16.msra.mxu0 %v1144
  %1733 = vmatprep.subr.bf16.mxu0 %v1149
  %1734 = vmatpush1.bf16.msra.mxu0 %v1148
  %1735 = vmatprep.subr.bf16.mxu0 %v1153
  %1736 = vmatpush1.bf16.msra.mxu0 %v1152
  %1737 = vmatprep.subr.bf16.mxu0 %v1157
  %1738 = vmatpush1.bf16.msra.mxu0 %v1156
  %1739 = vmatprep.subr.bf16.mxu0 0
  %1740 = vmatpush1.bf16.msra.mxu0 0
  %1741 = vmatprep.subr.bf16.mxu0 0
  %1742 = vmatpush1.bf16.msra.mxu0 0
  %1743 = vmatprep.subr.bf16.mxu0 0
  %1744 = vmatpush1.bf16.msra.mxu0 0
  %1745 = vmatprep.subr.bf16.mxu0 0
  %1746 = vmatpush1.bf16.msra.mxu0 0
  %1747 = vmatprep.subr.bf16.mxu0 0
  %1748 = vmatpush1.bf16.msra.mxu0 0
  %1749 = vmatprep.subr.bf16.mxu0 0
  %1750 = vmatpush1.bf16.msra.mxu0 0
  %1751 = vmatprep.subr.bf16.mxu0 0
  %1752 = vmatpush1.bf16.msra.mxu0 0
  %1753 = vmatprep.subr.bf16.mxu0 0
  %1754 = vmatpush1.bf16.msra.mxu0 0
  %1755 = vmatprep.mubr.bf16.mxu0 0
  %1756 = vmatmul.mubr.bf16.gmra.mrb[0].mxu0 %v1722
  %v1757 = vpop.f32.mrb[0].mxu0
  %v1758 = vadd.f32 0.0, %v1757
  %v1759 = vpop.f32.mrb[0].mxu0
  %v1760 = vadd.f32 0.0, %v1759
  %v1761 = vpop.f32.mrb[0].mxu0
  %v1762 = vadd.f32 0.0, %v1761
  %v1763 = vpop.f32.mrb[0].mxu0
  %v1764 = vadd.f32 0.0, %v1763
  %1765 = vdwg.mxu0
  %1766 = vmatprep.subr.bf16.mxu0 %v1131
  %1767 = vmatpush1.bf16.msra.mxu0 %v1130
  %1768 = vmatprep.subr.bf16.mxu0 %v1135
  %1769 = vmatpush1.bf16.msra.mxu0 %v1134
  %1770 = vmatprep.subr.bf16.mxu0 %v1139
  %1771 = vmatpush1.bf16.msra.mxu0 %v1138
  %1772 = vmatprep.subr.bf16.mxu0 %v1143
  %1773 = vmatpush1.bf16.msra.mxu0 %v1142
  %1774 = vmatprep.subr.bf16.mxu0 %v1147
  %1775 = vmatpush1.bf16.msra.mxu0 %v1146
  %1776 = vmatprep.subr.bf16.mxu0 %v1151
  %1777 = vmatpush1.bf16.msra.mxu0 %v1150
  %1778 = vmatprep.subr.bf16.mxu0 %v1155
  %1779 = vmatpush1.bf16.msra.mxu0 %v1154
  %1780 = vmatprep.subr.bf16.mxu0 %v1159
  %1781 = vmatpush1.bf16.msra.mxu0 %v1158
  %1782 = vmatprep.subr.bf16.mxu0 0
  %1783 = vmatpush1.bf16.msra.mxu0 0
  %1784 = vmatprep.subr.bf16.mxu0 0
  %1785 = vmatpush1.bf16.msra.mxu0 0
  %1786 = vmatprep.subr.bf16.mxu0 0
  %1787 = vmatpush1.bf16.msra.mxu0 0
  %1788 = vmatprep.subr.bf16.mxu0 0
  %1789 = vmatpush1.bf16.msra.mxu0 0
  %1790 = vmatprep.subr.bf16.mxu0 0
  %1791 = vmatpush1.bf16.msra.mxu0 0
  %1792 = vmatprep.subr.bf16.mxu0 0
  %1793 = vmatpush1.bf16.msra.mxu0 0
  %1794 = vmatprep.subr.bf16.mxu0 0
  %1795 = vmatpush1.bf16.msra.mxu0 0
  %1796 = vmatprep.subr.bf16.mxu0 0
  %1797 = vmatpush1.bf16.msra.mxu0 0
  %1798 = vmatprep.mubr.bf16.mxu0 0
  %1799 = vmatmul.mubr.bf16.gmra.mrb[0].mxu0 %v1722
  %v1800 = vpop.f32.mrb[0].mxu0
  %v1801 = vadd.f32 0.0, %v1800
  %v1802 = vpop.f32.mrb[0].mxu0
  %v1803 = vadd.f32 0.0, %v1802
  %v1804 = vpop.f32.mrb[0].mxu0
  %v1805 = vadd.f32 0.0, %v1804
  %v1806 = vpop.f32.mrb[0].mxu0
  %v1807 = vadd.f32 0.0, %v1806
  %1808 = vdwg.mxu0
  %v1809 = vadd.f32 %v1703, %v1758
  %v1810 = vadd.f32 %v1704, %v1760
  %v1811 = vadd.f32 %v1705, %v1801
  %v1812 = vadd.f32 %v1706, %v1803
  %v1813 = vadd.f32 %v1707, %v1762
  %v1814 = vadd.f32 %v1708, %v1764
  %v1815 = vadd.f32 %v1709, %v1805
  %v1816 = vadd.f32 %v1710, %v1807
  %v1817 = vpack.c.bf16 %v1697, %v1696
  %1818 = vmatprep.subr.bf16.mxu0 %v1415
  %1819 = vmatpush1.bf16.msra.mxu0 %v1414
  %1820 = vmatprep.subr.bf16.mxu0 %v1419
  %1821 = vmatpush1.bf16.msra.mxu0 %v1418
  %1822 = vmatprep.subr.bf16.mxu0 %v1423
  %1823 = vmatpush1.bf16.msra.mxu0 %v1422
  %1824 = vmatprep.subr.bf16.mxu0 %v1427
  %1825 = vmatpush1.bf16.msra.mxu0 %v1426
  %1826 = vmatprep.subr.bf16.mxu0 %v1431
  %1827 = vmatpush1.bf16.msra.mxu0 %v1430
  %1828 = vmatprep.subr.bf16.mxu0 %v1435
  %1829 = vmatpush1.bf16.msra.mxu0 %v1434
  %1830 = vmatprep.subr.bf16.mxu0 %v1439
  %1831 = vmatpush1.bf16.msra.mxu0 %v1438
  %1832 = vmatprep.subr.bf16.mxu0 %v1443
  %1833 = vmatpush1.bf16.msra.mxu0 %v1442
  %1834 = vmatprep.subr.bf16.mxu0 0
  %1835 = vmatpush1.bf16.msra.mxu0 0
  %1836 = vmatprep.subr.bf16.mxu0 0
  %1837 = vmatpush1.bf16.msra.mxu0 0
  %1838 = vmatprep.subr.bf16.mxu0 0
  %1839 = vmatpush1.bf16.msra.mxu0 0
  %1840 = vmatprep.subr.bf16.mxu0 0
  %1841 = vmatpush1.bf16.msra.mxu0 0
  %1842 = vmatprep.subr.bf16.mxu0 0
  %1843 = vmatpush1.bf16.msra.mxu0 0
  %1844 = vmatprep.subr.bf16.mxu0 0
  %1845 = vmatpush1.bf16.msra.mxu0 0
  %1846 = vmatprep.subr.bf16.mxu0 0
  %1847 = vmatpush1.bf16.msra.mxu0 0
  %1848 = vmatprep.subr.bf16.mxu0 0
  %1849 = vmatpush1.bf16.msra.mxu0 0
  %1850 = vmatprep.mubr.bf16.mxu0 0
  %1851 = vmatmul.mubr.bf16.gmra.mrb[0].mxu0 %v1817
  %v1852 = vpop.f32.mrb[0].mxu0
  %v1853 = vadd.f32 0.0, %v1852
  %v1854 = vpop.f32.mrb[0].mxu0
  %v1855 = vadd.f32 0.0, %v1854
  %v1856 = vpop.f32.mrb[0].mxu0
  %v1857 = vadd.f32 0.0, %v1856
  %v1858 = vpop.f32.mrb[0].mxu0
  %v1859 = vadd.f32 0.0, %v1858
  %1860 = vdwg.mxu0
  %1861 = vmatprep.subr.bf16.mxu0 %v1417
  %1862 = vmatpush1.bf16.msra.mxu0 %v1416
  %1863 = vmatprep.subr.bf16.mxu0 %v1421
  %1864 = vmatpush1.bf16.msra.mxu0 %v1420
  %1865 = vmatprep.subr.bf16.mxu0 %v1425
  %1866 = vmatpush1.bf16.msra.mxu0 %v1424
  %1867 = vmatprep.subr.bf16.mxu0 %v1429
  %1868 = vmatpush1.bf16.msra.mxu0 %v1428
  %1869 = vmatprep.subr.bf16.mxu0 %v1433
  %1870 = vmatpush1.bf16.msra.mxu0 %v1432
  %1871 = vmatprep.subr.bf16.mxu0 %v1437
  %1872 = vmatpush1.bf16.msra.mxu0 %v1436
  %1873 = vmatprep.subr.bf16.mxu0 %v1441
  %1874 = vmatpush1.bf16.msra.mxu0 %v1440
  %1875 = vmatprep.subr.bf16.mxu0 %v1445
  %1876 = vmatpush1.bf16.msra.mxu0 %v1444
  %1877 = vmatprep.subr.bf16.mxu0 0
  %1878 = vmatpush1.bf16.msra.mxu0 0
  %1879 = vmatprep.subr.bf16.mxu0 0
  %1880 = vmatpush1.bf16.msra.mxu0 0
  %1881 = vmatprep.subr.bf16.mxu0 0
  %1882 = vmatpush1.bf16.msra.mxu0 0
  %1883 = vmatprep.subr.bf16.mxu0 0
  %1884 = vmatpush1.bf16.msra.mxu0 0
  %1885 = vmatprep.subr.bf16.mxu0 0
  %1886 = vmatpush1.bf16.msra.mxu0 0
  %1887 = vmatprep.subr.bf16.mxu0 0
  %1888 = vmatpush1.bf16.msra.mxu0 0
  %1889 = vmatprep.subr.bf16.mxu0 0
  %1890 = vmatpush1.bf16.msra.mxu0 0
  %1891 = vmatprep.subr.bf16.mxu0 0
  %1892 = vmatpush1.bf16.msra.mxu0 0
  %1893 = vmatprep.mubr.bf16.mxu0 0
  %1894 = vmatmul.mubr.bf16.gmra.mrb[0].mxu0 %v1817
  %v1895 = vpop.f32.mrb[0].mxu0
  %v1896 = vadd.f32 0.0, %v1895
  %v1897 = vpop.f32.mrb[0].mxu0
  %v1898 = vadd.f32 0.0, %v1897
  %v1899 = vpop.f32.mrb[0].mxu0
  %v1900 = vadd.f32 0.0, %v1899
  %v1901 = vpop.f32.mrb[0].mxu0
  %v1902 = vadd.f32 0.0, %v1901
  %1903 = vdwg.mxu0
  %v1904 = vadd.f32 %v1714, %v1853
  %v1905 = vadd.f32 %v1715, %v1855
  %v1906 = vadd.f32 %v1716, %v1896
  %v1907 = vadd.f32 %v1717, %v1898
  %v1908 = vadd.f32 %v1718, %v1857
  %v1909 = vadd.f32 %v1719, %v1859
  %v1910 = vadd.f32 %v1720, %v1900
  %v1911 = vadd.f32 %v1721, %v1902
  %vm1912 = vcmp.gt.s32.totalorder %v976, 1
  %vm1913 = vcmp.gt.s32.totalorder %v977, 1
  %v1914 = vxor.u32 %v1809, 2147483648
  %v1915 = vxor.u32 %v1813, 2147483648
  %v1916 = vmul.f32 %v1914, 1.442695
  %v1917 = vpow.pop %v1916
  %v1918 = vmul.f32 %v1915, 1.442695
  %v1919 = vpow.pop %v1918
  %v1920 = vadd.f32 %v1917, 1.0
  %v1921 = vadd.f32 %v1919, 1.0
  %v1922 = vrcp.pop %v1920
  %v1923 = vmul.f32 1.0, %v1922
  %v1924 = vrcp.pop %v1921
  %v1925 = vmul.f32 1.0, %v1924
  %v1926 = vxor.u32 %v1810, 2147483648
  %v1927 = vxor.u32 %v1814, 2147483648
  %v1928 = vmul.f32 %v1926, 1.442695
  %v1929 = vpow.pop %v1928
  %v1930 = vmul.f32 %v1927, 1.442695
  %v1931 = vpow.pop %v1930
  %v1932 = vadd.f32 %v1929, 1.0
  %v1933 = vadd.f32 %v1931, 1.0
  %v1934 = vrcp.pop %v1932
  %v1935 = vmul.f32 1.0, %v1934
  %v1936 = vrcp.pop %v1933
  %v1937 = vmul.f32 1.0, %v1936
  %v1938 = vtanh.pop %v1811
  %v1939 = vtanh.pop %v1815
  %v1940 = vxor.u32 %v1812, 2147483648
  %v1941 = vxor.u32 %v1816, 2147483648
  %v1942 = vmul.f32 %v1940, 1.442695
  %v1943 = vpow.pop %v1942
  %v1944 = vmul.f32 %v1941, 1.442695
  %v1945 = vpow.pop %v1944
  %v1946 = vadd.f32 %v1943, 1.0
  %v1947 = vadd.f32 %v1945, 1.0
  %v1948 = vrcp.pop %v1946
  %v1949 = vmul.f32 1.0, %v1948
  %v1950 = vrcp.pop %v1947
  %v1951 = vmul.f32 1.0, %v1950
  %v1952 = vmul.f32 %v1935, %v1634
  %v1953 = vmul.f32 %v1937, %v1635
  %v1954 = vmul.f32 %v1923, %v1938
  %v1955 = vmul.f32 %v1925, %v1939
  %v1956 = vadd.f32 %v1952, %v1954
  %v1957 = vadd.f32 %v1953, %v1955
  %v1958 = vtanh.pop %v1956
  %v1959 = vtanh.pop %v1957
  %v1960 = vmul.f32 %v1949, %v1958
  %v1961 = vmul.f32 %v1951, %v1959
  %v1962 = vsel %vm1912, 1, 0
  %v1963 = vsel %vm1913, 1, 0
  %1964 = vset.pattern.permute.xlu0 0
  %1965 = vperm.xlu0 %1964, %v1962
  %v1966 = vpop.permute.xlu0 %1965
  %1967 = vset.pattern.permute.xlu0 0
  %1968 = vperm.xlu0 %1967, %v1963
  %v1969 = vpop.permute.xlu0 %1968
  %vm1970 = vcmp.eq.s32.totalorder %v1966, 1
  %vm1971 = vcmp.eq.s32.totalorder %v1969, 1
  %v1972 = vsel %vm1970, %v1960, %v1632
  %v1973 = vsel %vm1971, %v1961, %v1633
  %v1974 = vsel %vm1970, %v1956, %v1634
  %v1975 = vsel %vm1971, %v1957, %v1635
  %vm1976 = vcmp.gt.s32.totalorder %v976, 8
  %vm1977 = vcmp.gt.s32.totalorder %v977, 8
  %v1978 = vxor.u32 %v1904, 2147483648
  %v1979 = vxor.u32 %v1908, 2147483648
  %v1980 = vmul.f32 %v1978, 1.442695
  %v1981 = vpow.pop %v1980
  %v1982 = vmul.f32 %v1979, 1.442695
  %v1983 = vpow.pop %v1982
  %v1984 = vadd.f32 %v1981, 1.0
  %v1985 = vadd.f32 %v1983, 1.0
  %v1986 = vrcp.pop %v1984
  %v1987 = vmul.f32 1.0, %v1986
  %v1988 = vrcp.pop %v1985
  %v1989 = vmul.f32 1.0, %v1988
  %v1990 = vxor.u32 %v1905, 2147483648
  %v1991 = vxor.u32 %v1909, 2147483648
  %v1992 = vmul.f32 %v1990, 1.442695
  %v1993 = vpow.pop %v1992
  %v1994 = vmul.f32 %v1991, 1.442695
  %v1995 = vpow.pop %v1994
  %v1996 = vadd.f32 %v1993, 1.0
  %v1997 = vadd.f32 %v1995, 1.0
  %v1998 = vrcp.pop %v1996
  %v1999 = vmul.f32 1.0, %v1998
  %v2000 = vrcp.pop %v1997
  %v2001 = vmul.f32 1.0, %v2000
  %v2002 = vtanh.pop %v1906
  %v2003 = vtanh.pop %v1910
  %v2004 = vxor.u32 %v1907, 2147483648
  %v2005 = vxor.u32 %v1911, 2147483648
  %v2006 = vmul.f32 %v2004, 1.442695
  %v2007 = vpow.pop %v2006
  %v2008 = vmul.f32 %v2005, 1.442695
  %v2009 = vpow.pop %v2008
  %v2010 = vadd.f32 %v2007, 1.0
  %v2011 = vadd.f32 %v2009, 1.0
  %v2012 = vrcp.pop %v2010
  %v2013 = vmul.f32 1.0, %v2012
  %v2014 = vrcp.pop %v2011
  %v2015 = vmul.f32 1.0, %v2014
  %v2016 = vmul.f32 %v1999, %v1698
  %v2017 = vmul.f32 %v2001, %v1699
  %v2018 = vmul.f32 %v1987, %v2002
  %v2019 = vmul.f32 %v1989, %v2003
  %v2020 = vadd.f32 %v2016, %v2018
  %v2021 = vadd.f32 %v2017, %v2019
  %v2022 = vtanh.pop %v2020
  %v2023 = vtanh.pop %v2021
  %v2024 = vmul.f32 %v2013, %v2022
  %v2025 = vmul.f32 %v2015, %v2023
  %v2026 = vsel %vm1976, 1, 0
  %v2027 = vsel %vm1977, 1, 0
  %2028 = vset.pattern.permute.xlu0 0
  %2029 = vperm.xlu0 %2028, %v2026
  %v2030 = vpop.permute.xlu0 %2029
  %2031 = vset.pattern.permute.xlu0 0
  %2032 = vperm.xlu0 %2031, %v2027
  %v2033 = vpop.permute.xlu0 %2032
  %vm2034 = vcmp.eq.s32.totalorder %v2030, 1
  %vm2035 = vcmp.eq.s32.totalorder %v2033, 1
  %v2036 = vsel %vm2034, %v2024, %v1696
  %v2037 = vsel %vm2035, %v2025, %v1697
  %v2038 = vsel %vm2034, %v2020, %v1698
  %v2039 = vsel %vm2035, %v2021, %v1699
  %s2040 = smul.u32 4, 8
  %s2041 = smul.addr %s2040, 8
  %s2042 = scalar_lea.vmem [#allocation2], %s2041
  %v2043 = vld [vmem:[%s2042] sm:$0xff]
  %v2044 = vld [vmem:[%s2042 + $0x8] sm:$0xff]
  %v2045 = vld [vmem:[%s2042 + $0x10] sm:$0xff]
  %v2046 = vld [vmem:[%s2042 + $0x18] sm:$0xff]
  %v2047 = vld [vmem:[%s2042 + $0x40] sm:$0xff]
  %v2048 = vld [vmem:[%s2042 + $0x48] sm:$0xff]
  %v2049 = vld [vmem:[%s2042 + $0x50] sm:$0xff]
  %v2050 = vld [vmem:[%s2042 + $0x58] sm:$0xff]
  %s2051 = smul.u32 14, 8
  %s2052 = smul.addr %s2051, 8
  %s2053 = scalar_lea.vmem [#allocation2], %s2052
  %v2054 = vld [vmem:[%s2053 + $0x20] sm:$0xff]
  %v2055 = vld [vmem:[%s2053 + $0x28] sm:$0xff]
  %v2056 = vld [vmem:[%s2053 + $0x30] sm:$0xff]
  %v2057 = vld [vmem:[%s2053 + $0x38] sm:$0xff]
  %v2058 = vld [vmem:[%s2053 + $0x60] sm:$0xff]
  %v2059 = vld [vmem:[%s2053 + $0x68] sm:$0xff]
  %v2060 = vld [vmem:[%s2053 + $0x70] sm:$0xff]
  %v2061 = vld [vmem:[%s2053 + $0x78] sm:$0xff]
  %v2062 = vpack.c.bf16 %v1973, %v1972
  %2063 = vmatprep.subr.bf16.mxu0 %v1129
  %2064 = vmatpush1.bf16.msra.mxu0 %v1128
  %2065 = vmatprep.subr.bf16.mxu0 %v1133
  %2066 = vmatpush1.bf16.msra.mxu0 %v1132
  %2067 = vmatprep.subr.bf16.mxu0 %v1137
  %2068 = vmatpush1.bf16.msra.mxu0 %v1136
  %2069 = vmatprep.subr.bf16.mxu0 %v1141
  %2070 = vmatpush1.bf16.msra.mxu0 %v1140
  %2071 = vmatprep.subr.bf16.mxu0 %v1145
  %2072 = vmatpush1.bf16.msra.mxu0 %v1144
  %2073 = vmatprep.subr.bf16.mxu0 %v1149
  %2074 = vmatpush1.bf16.msra.mxu0 %v1148
  %2075 = vmatprep.subr.bf16.mxu0 %v1153
  %2076 = vmatpush1.bf16.msra.mxu0 %v1152
  %2077 = vmatprep.subr.bf16.mxu0 %v1157
  %2078 = vmatpush1.bf16.msra.mxu0 %v1156
  %2079 = vmatprep.subr.bf16.mxu0 0
  %2080 = vmatpush1.bf16.msra.mxu0 0
  %2081 = vmatprep.subr.bf16.mxu0 0
  %2082 = vmatpush1.bf16.msra.mxu0 0
  %2083 = vmatprep.subr.bf16.mxu0 0
  %2084 = vmatpush1.bf16.msra.mxu0 0
  %2085 = vmatprep.subr.bf16.mxu0 0
  %2086 = vmatpush1.bf16.msra.mxu0 0
  %2087 = vmatprep.subr.bf16.mxu0 0
  %2088 = vmatpush1.bf16.msra.mxu0 0
  %2089 = vmatprep.subr.bf16.mxu0 0
  %2090 = vmatpush1.bf16.msra.mxu0 0
  %2091 = vmatprep.subr.bf16.mxu0 0
  %2092 = vmatpush1.bf16.msra.mxu0 0
  %2093 = vmatprep.subr.bf16.mxu0 0
  %2094 = vmatpush1.bf16.msra.mxu0 0
  %2095 = vmatprep.mubr.bf16.mxu0 0
  %2096 = vmatmul.mubr.bf16.gmra.mrb[0].mxu0 %v2062
  %v2097 = vpop.f32.mrb[0].mxu0
  %v2098 = vadd.f32 0.0, %v2097
  %v2099 = vpop.f32.mrb[0].mxu0
  %v2100 = vadd.f32 0.0, %v2099
  %v2101 = vpop.f32.mrb[0].mxu0
  %v2102 = vadd.f32 0.0, %v2101
  %v2103 = vpop.f32.mrb[0].mxu0
  %v2104 = vadd.f32 0.0, %v2103
  %2105 = vdwg.mxu0
  %2106 = vmatprep.subr.bf16.mxu0 %v1131
  %2107 = vmatpush1.bf16.msra.mxu0 %v1130
  %2108 = vmatprep.subr.bf16.mxu0 %v1135
  %2109 = vmatpush1.bf16.msra.mxu0 %v1134
  %2110 = vmatprep.subr.bf16.mxu0 %v1139
  %2111 = vmatpush1.bf16.msra.mxu0 %v1138
  %2112 = vmatprep.subr.bf16.mxu0 %v1143
  %2113 = vmatpush1.bf16.msra.mxu0 %v1142
  %2114 = vmatprep.subr.bf16.mxu0 %v1147
  %2115 = vmatpush1.bf16.msra.mxu0 %v1146
  %2116 = vmatprep.subr.bf16.mxu0 %v1151
  %2117 = vmatpush1.bf16.msra.mxu0 %v1150
  %2118 = vmatprep.subr.bf16.mxu0 %v1155
  %2119 = vmatpush1.bf16.msra.mxu0 %v1154
  %2120 = vmatprep.subr.bf16.mxu0 %v1159
  %2121 = vmatpush1.bf16.msra.mxu0 %v1158
  %2122 = vmatprep.subr.bf16.mxu0 0
  %2123 = vmatpush1.bf16.msra.mxu0 0
  %2124 = vmatprep.subr.bf16.mxu0 0
  %2125 = vmatpush1.bf16.msra.mxu0 0
  %2126 = vmatprep.subr.bf16.mxu0 0
  %2127 = vmatpush1.bf16.msra.mxu0 0
  %2128 = vmatprep.subr.bf16.mxu0 0
  %2129 = vmatpush1.bf16.msra.mxu0 0
  %2130 = vmatprep.subr.bf16.mxu0 0
  %2131 = vmatpush1.bf16.msra.mxu0 0
  %2132 = vmatprep.subr.bf16.mxu0 0
  %2133 = vmatpush1.bf16.msra.mxu0 0
  %2134 = vmatprep.subr.bf16.mxu0 0
  %2135 = vmatpush1.bf16.msra.mxu0 0
  %2136 = vmatprep.subr.bf16.mxu0 0
  %2137 = vmatpush1.bf16.msra.mxu0 0
  %2138 = vmatprep.mubr.bf16.mxu0 0
  %2139 = vmatmul.mubr.bf16.gmra.mrb[0].mxu0 %v2062
  %v2140 = vpop.f32.mrb[0].mxu0
  %v2141 = vadd.f32 0.0, %v2140
  %v2142 = vpop.f32.mrb[0].mxu0
  %v2143 = vadd.f32 0.0, %v2142
  %v2144 = vpop.f32.mrb[0].mxu0
  %v2145 = vadd.f32 0.0, %v2144
  %v2146 = vpop.f32.mrb[0].mxu0
  %v2147 = vadd.f32 0.0, %v2146
  %2148 = vdwg.mxu0
  %v2149 = vadd.f32 %v2043, %v2098
  %v2150 = vadd.f32 %v2044, %v2100
  %v2151 = vadd.f32 %v2045, %v2141
  %v2152 = vadd.f32 %v2046, %v2143
  %v2153 = vadd.f32 %v2047, %v2102
  %v2154 = vadd.f32 %v2048, %v2104
  %v2155 = vadd.f32 %v2049, %v2145
  %v2156 = vadd.f32 %v2050, %v2147
  %v2157 = vpack.c.bf16 %v2037, %v2036
  %2158 = vmatprep.subr.bf16.mxu0 %v1415
  %2159 = vmatpush1.bf16.msra.mxu0 %v1414
  %2160 = vmatprep.subr.bf16.mxu0 %v1419
  %2161 = vmatpush1.bf16.msra.mxu0 %v1418
  %2162 = vmatprep.subr.bf16.mxu0 %v1423
  %2163 = vmatpush1.bf16.msra.mxu0 %v1422
  %2164 = vmatprep.subr.bf16.mxu0 %v1427
  %2165 = vmatpush1.bf16.msra.mxu0 %v1426
  %2166 = vmatprep.subr.bf16.mxu0 %v1431
  %2167 = vmatpush1.bf16.msra.mxu0 %v1430
  %2168 = vmatprep.subr.bf16.mxu0 %v1435
  %2169 = vmatpush1.bf16.msra.mxu0 %v1434
  %2170 = vmatprep.subr.bf16.mxu0 %v1439
  %2171 = vmatpush1.bf16.msra.mxu0 %v1438
  %2172 = vmatprep.subr.bf16.mxu0 %v1443
  %2173 = vmatpush1.bf16.msra.mxu0 %v1442
  %2174 = vmatprep.subr.bf16.mxu0 0
  %2175 = vmatpush1.bf16.msra.mxu0 0
  %2176 = vmatprep.subr.bf16.mxu0 0
  %2177 = vmatpush1.bf16.msra.mxu0 0
  %2178 = vmatprep.subr.bf16.mxu0 0
  %2179 = vmatpush1.bf16.msra.mxu0 0
  %2180 = vmatprep.subr.bf16.mxu0 0
  %2181 = vmatpush1.bf16.msra.mxu0 0
  %2182 = vmatprep.subr.bf16.mxu0 0
  %2183 = vmatpush1.bf16.msra.mxu0 0
  %2184 = vmatprep.subr.bf16.mxu0 0
  %2185 = vmatpush1.bf16.msra.mxu0 0
  %2186 = vmatprep.subr.bf16.mxu0 0
  %2187 = vmatpush1.bf16.msra.mxu0 0
  %2188 = vmatprep.subr.bf16.mxu0 0
  %2189 = vmatpush1.bf16.msra.mxu0 0
  %2190 = vmatprep.mubr.bf16.mxu0 0
  %2191 = vmatmul.mubr.bf16.gmra.mrb[0].mxu0 %v2157
  %v2192 = vpop.f32.mrb[0].mxu0
  %v2193 = vadd.f32 0.0, %v2192
  %v2194 = vpop.f32.mrb[0].mxu0
  %v2195 = vadd.f32 0.0, %v2194
  %v2196 = vpop.f32.mrb[0].mxu0
  %v2197 = vadd.f32 0.0, %v2196
  %v2198 = vpop.f32.mrb[0].mxu0
  %v2199 = vadd.f32 0.0, %v2198
  %2200 = vdwg.mxu0
  %2201 = vmatprep.subr.bf16.mxu0 %v1417
  %2202 = vmatpush1.bf16.msra.mxu0 %v1416
  %2203 = vmatprep.subr.bf16.mxu0 %v1421
  %2204 = vmatpush1.bf16.msra.mxu0 %v1420
  %2205 = vmatprep.subr.bf16.mxu0 %v1425
  %2206 = vmatpush1.bf16.msra.mxu0 %v1424
  %2207 = vmatprep.subr.bf16.mxu0 %v1429
  %2208 = vmatpush1.bf16.msra.mxu0 %v1428
  %2209 = vmatprep.subr.bf16.mxu0 %v1433
  %2210 = vmatpush1.bf16.msra.mxu0 %v1432
  %2211 = vmatprep.subr.bf16.mxu0 %v1437
  %2212 = vmatpush1.bf16.msra.mxu0 %v1436
  %2213 = vmatprep.subr.bf16.mxu0 %v1441
  %2214 = vmatpush1.bf16.msra.mxu0 %v1440
  %2215 = vmatprep.subr.bf16.mxu0 %v1445
  %2216 = vmatpush1.bf16.msra.mxu0 %v1444
  %2217 = vmatprep.subr.bf16.mxu0 0
  %2218 = vmatpush1.bf16.msra.mxu0 0
  %2219 = vmatprep.subr.bf16.mxu0 0
  %2220 = vmatpush1.bf16.msra.mxu0 0
  %2221 = vmatprep.subr.bf16.mxu0 0
  %2222 = vmatpush1.bf16.msra.mxu0 0
  %2223 = vmatprep.subr.bf16.mxu0 0
  %2224 = vmatpush1.bf16.msra.mxu0 0
  %2225 = vmatprep.subr.bf16.mxu0 0
  %2226 = vmatpush1.bf16.msra.mxu0 0
  %2227 = vmatprep.subr.bf16.mxu0 0
  %2228 = vmatpush1.bf16.msra.mxu0 0
  %2229 = vmatprep.subr.bf16.mxu0 0
  %2230 = vmatpush1.bf16.msra.mxu0 0
  %2231 = vmatprep.subr.bf16.mxu0 0
  %2232 = vmatpush1.bf16.msra.mxu0 0
  %2233 = vmatprep.mubr.bf16.mxu0 0
  %2234 = vmatmul.mubr.bf16.gmra.mrb[0].mxu0 %v2157
  %v2235 = vpop.f32.mrb[0].mxu0
  %v2236 = vadd.f32 0.0, %v2235
  %v2237 = vpop.f32.mrb[0].mxu0
  %v2238 = vadd.f32 0.0, %v2237
  %v2239 = vpop.f32.mrb[0].mxu0
  %v2240 = vadd.f32 0.0, %v2239
  %v2241 = vpop.f32.mrb[0].mxu0
  %v2242 = vadd.f32 0.0, %v2241
  %2243 = vdwg.mxu0
  %v2244 = vadd.f32 %v2054, %v2193
  %v2245 = vadd.f32 %v2055, %v2195
  %v2246 = vadd.f32 %v2056, %v2236
  %v2247 = vadd.f32 %v2057, %v2238
  %v2248 = vadd.f32 %v2058, %v2197
  %v2249 = vadd.f32 %v2059, %v2199
  %v2250 = vadd.f32 %v2060, %v2240
  %v2251 = vadd.f32 %v2061, %v2242
  %vm2252 = vcmp.gt.s32.totalorder %v976, 2
  %vm2253 = vcmp.gt.s32.totalorder %v977, 2
  %v2254 = vxor.u32 %v2149, 2147483648
  %v2255 = vxor.u32 %v2153, 2147483648
  %v2256 = vmul.f32 %v2254, 1.442695
  %v2257 = vpow.pop %v2256
  %v2258 = vmul.f32 %v2255, 1.442695
  %v2259 = vpow.pop %v2258
  %v2260 = vadd.f32 %v2257, 1.0
  %v2261 = vadd.f32 %v2259, 1.0
  %v2262 = vrcp.pop %v2260
  %v2263 = vmul.f32 1.0, %v2262
  %v2264 = vrcp.pop %v2261
  %v2265 = vmul.f32 1.0, %v2264
  %v2266 = vxor.u32 %v2150, 2147483648
  %v2267 = vxor.u32 %v2154, 2147483648
  %v2268 = vmul.f32 %v2266, 1.442695
  %v2269 = vpow.pop %v2268
  %v2270 = vmul.f32 %v2267, 1.442695
  %v2271 = vpow.pop %v2270
  %v2272 = vadd.f32 %v2269, 1.0
  %v2273 = vadd.f32 %v2271, 1.0
  %v2274 = vrcp.pop %v2272
  %v2275 = vmul.f32 1.0, %v2274
  %v2276 = vrcp.pop %v2273
  %v2277 = vmul.f32 1.0, %v2276
  %v2278 = vtanh.pop %v2151
  %v2279 = vtanh.pop %v2155
  %v2280 = vxor.u32 %v2152, 2147483648
  %v2281 = vxor.u32 %v2156, 2147483648
  %v2282 = vmul.f32 %v2280, 1.442695
  %v2283 = vpow.pop %v2282
  %v2284 = vmul.f32 %v2281, 1.442695
  %v2285 = vpow.pop %v2284
  %v2286 = vadd.f32 %v2283, 1.0
  %v2287 = vadd.f32 %v2285, 1.0
  %v2288 = vrcp.pop %v2286
  %v2289 = vmul.f32 1.0, %v2288
  %v2290 = vrcp.pop %v2287
  %v2291 = vmul.f32 1.0, %v2290
  %v2292 = vmul.f32 %v2275, %v1974
  %v2293 = vmul.f32 %v2277, %v1975
  %v2294 = vmul.f32 %v2263, %v2278
  %v2295 = vmul.f32 %v2265, %v2279
  %v2296 = vadd.f32 %v2292, %v2294
  %v2297 = vadd.f32 %v2293, %v2295
  %v2298 = vtanh.pop %v2296
  %v2299 = vtanh.pop %v2297
  %v2300 = vmul.f32 %v2289, %v2298
  %v2301 = vmul.f32 %v2291, %v2299
  %v2302 = vsel %vm2252, 1, 0
  %v2303 = vsel %vm2253, 1, 0
  %2304 = vset.pattern.permute.xlu0 0
  %2305 = vperm.xlu0 %2304, %v2302
  %v2306 = vpop.permute.xlu0 %2305
  %2307 = vset.pattern.permute.xlu0 0
  %2308 = vperm.xlu0 %2307, %v2303
  %v2309 = vpop.permute.xlu0 %2308
  %vm2310 = vcmp.eq.s32.totalorder %v2306, 1
  %vm2311 = vcmp.eq.s32.totalorder %v2309, 1
  %v2312 = vsel %vm2310, %v2300, %v1972
  %v2313 = vsel %vm2311, %v2301, %v1973
  %v2314 = vsel %vm2310, %v2296, %v1974
  %v2315 = vsel %vm2311, %v2297, %v1975
  %vm2316 = vcmp.gt.s32.totalorder %v976, 7
  %vm2317 = vcmp.gt.s32.totalorder %v977, 7
  %v2318 = vxor.u32 %v2244, 2147483648
  %v2319 = vxor.u32 %v2248, 2147483648
  %v2320 = vmul.f32 %v2318, 1.442695
  %v2321 = vpow.pop %v2320
  %v2322 = vmul.f32 %v2319, 1.442695
  %v2323 = vpow.pop %v2322
  %v2324 = vadd.f32 %v2321, 1.0
  %v2325 = vadd.f32 %v2323, 1.0
  %v2326 = vrcp.pop %v2324
  %v2327 = vmul.f32 1.0, %v2326
  %v2328 = vrcp.pop %v2325
  %v2329 = vmul.f32 1.0, %v2328
  %v2330 = vxor.u32 %v2245, 2147483648
  %v2331 = vxor.u32 %v2249, 2147483648
  %v2332 = vmul.f32 %v2330, 1.442695
  %v2333 = vpow.pop %v2332
  %v2334 = vmul.f32 %v2331, 1.442695
  %v2335 = vpow.pop %v2334
  %v2336 = vadd.f32 %v2333, 1.0
  %v2337 = vadd.f32 %v2335, 1.0
  %v2338 = vrcp.pop %v2336
  %v2339 = vmul.f32 1.0, %v2338
  %v2340 = vrcp.pop %v2337
  %v2341 = vmul.f32 1.0, %v2340
  %v2342 = vtanh.pop %v2246
  %v2343 = vtanh.pop %v2250
  %v2344 = vxor.u32 %v2247, 2147483648
  %v2345 = vxor.u32 %v2251, 2147483648
  %v2346 = vmul.f32 %v2344, 1.442695
  %v2347 = vpow.pop %v2346
  %v2348 = vmul.f32 %v2345, 1.442695
  %v2349 = vpow.pop %v2348
  %v2350 = vadd.f32 %v2347, 1.0
  %v2351 = vadd.f32 %v2349, 1.0
  %v2352 = vrcp.pop %v2350
  %v2353 = vmul.f32 1.0, %v2352
  %v2354 = vrcp.pop %v2351
  %v2355 = vmul.f32 1.0, %v2354
  %v2356 = vmul.f32 %v2339, %v2038
  %v2357 = vmul.f32 %v2341, %v2039
  %v2358 = vmul.f32 %v2327, %v2342
  %v2359 = vmul.f32 %v2329, %v2343
  %v2360 = vadd.f32 %v2356, %v2358
  %v2361 = vadd.f32 %v2357, %v2359
  %v2362 = vtanh.pop %v2360
  %v2363 = vtanh.pop %v2361
  %v2364 = vmul.f32 %v2353, %v2362
  %v2365 = vmul.f32 %v2355, %v2363
  %v2366 = vsel %vm2316, 1, 0
  %v2367 = vsel %vm2317, 1, 0
  %2368 = vset.pattern.permute.xlu0 0
  %2369 = vperm.xlu0 %2368, %v2366
  %v2370 = vpop.permute.xlu0 %2369
  %2371 = vset.pattern.permute.xlu0 0
  %2372 = vperm.xlu0 %2371, %v2367
  %v2373 = vpop.permute.xlu0 %2372
  %vm2374 = vcmp.eq.s32.totalorder %v2370, 1
  %vm2375 = vcmp.eq.s32.totalorder %v2373, 1
  %v2376 = vsel %vm2374, %v2364, %v2036
  %v2377 = vsel %vm2375, %v2365, %v2037
  %v2378 = vsel %vm2374, %v2360, %v2038
  %v2379 = vsel %vm2375, %v2361, %v2039
  %s2380 = smul.u32 6, 8
  %s2381 = smul.addr %s2380, 8
  %s2382 = scalar_lea.vmem [#allocation2], %s2381
  %v2383 = vld [vmem:[%s2382] sm:$0xff]
  %v2384 = vld [vmem:[%s2382 + $0x8] sm:$0xff]
  %v2385 = vld [vmem:[%s2382 + $0x10] sm:$0xff]
  %v2386 = vld [vmem:[%s2382 + $0x18] sm:$0xff]
  %v2387 = vld [vmem:[%s2382 + $0x40] sm:$0xff]
  %v2388 = vld [vmem:[%s2382 + $0x48] sm:$0xff]
  %v2389 = vld [vmem:[%s2382 + $0x50] sm:$0xff]
  %v2390 = vld [vmem:[%s2382 + $0x58] sm:$0xff]
  %s2391 = smul.u32 12, 8
  %s2392 = smul.addr %s2391, 8
  %s2393 = scalar_lea.vmem [#allocation2], %s2392
  %v2394 = vld [vmem:[%s2393 + $0x20] sm:$0xff]
  %v2395 = vld [vmem:[%s2393 + $0x28] sm:$0xff]
  %v2396 = vld [vmem:[%s2393 + $0x30] sm:$0xff]
  %v2397 = vld [vmem:[%s2393 + $0x38] sm:$0xff]
  %v2398 = vld [vmem:[%s2393 + $0x60] sm:$0xff]
  %v2399 = vld [vmem:[%s2393 + $0x68] sm:$0xff]
  %v2400 = vld [vmem:[%s2393 + $0x70] sm:$0xff]
  %v2401 = vld [vmem:[%s2393 + $0x78] sm:$0xff]
  %v2402 = vpack.c.bf16 %v2313, %v2312
  %2403 = vmatprep.subr.bf16.mxu0 %v1129
  %2404 = vmatpush1.bf16.msra.mxu0 %v1128
  %2405 = vmatprep.subr.bf16.mxu0 %v1133
  %2406 = vmatpush1.bf16.msra.mxu0 %v1132
  %2407 = vmatprep.subr.bf16.mxu0 %v1137
  %2408 = vmatpush1.bf16.msra.mxu0 %v1136
  %2409 = vmatprep.subr.bf16.mxu0 %v1141
  %2410 = vmatpush1.bf16.msra.mxu0 %v1140
  %2411 = vmatprep.subr.bf16.mxu0 %v1145
  %2412 = vmatpush1.bf16.msra.mxu0 %v1144
  %2413 = vmatprep.subr.bf16.mxu0 %v1149
  %2414 = vmatpush1.bf16.msra.mxu0 %v1148
  %2415 = vmatprep.subr.bf16.mxu0 %v1153
  %2416 = vmatpush1.bf16.msra.mxu0 %v1152
  %2417 = vmatprep.subr.bf16.mxu0 %v1157
  %2418 = vmatpush1.bf16.msra.mxu0 %v1156
  %2419 = vmatprep.subr.bf16.mxu0 0
  %2420 = vmatpush1.bf16.msra.mxu0 0
  %2421 = vmatprep.subr.bf16.mxu0 0
  %2422 = vmatpush1.bf16.msra.mxu0 0
  %2423 = vmatprep.subr.bf16.mxu0 0
  %2424 = vmatpush1.bf16.msra.mxu0 0
  %2425 = vmatprep.subr.bf16.mxu0 0
  %2426 = vmatpush1.bf16.msra.mxu0 0
  %2427 = vmatprep.subr.bf16.mxu0 0
  %2428 = vmatpush1.bf16.msra.mxu0 0
  %2429 = vmatprep.subr.bf16.mxu0 0
  %2430 = vmatpush1.bf16.msra.mxu0 0
  %2431 = vmatprep.subr.bf16.mxu0 0
  %2432 = vmatpush1.bf16.msra.mxu0 0
  %2433 = vmatprep.subr.bf16.mxu0 0
  %2434 = vmatpush1.bf16.msra.mxu0 0
  %2435 = vmatprep.mubr.bf16.mxu0 0
  %2436 = vmatmul.mubr.bf16.gmra.mrb[0].mxu0 %v2402
  %v2437 = vpop.f32.mrb[0].mxu0
  %v2438 = vadd.f32 0.0, %v2437
  %v2439 = vpop.f32.mrb[0].mxu0
  %v2440 = vadd.f32 0.0, %v2439
  %v2441 = vpop.f32.mrb[0].mxu0
  %v2442 = vadd.f32 0.0, %v2441
  %v2443 = vpop.f32.mrb[0].mxu0
  %v2444 = vadd.f32 0.0, %v2443
  %2445 = vdwg.mxu0
  %2446 = vmatprep.subr.bf16.mxu0 %v1131
  %2447 = vmatpush1.bf16.msra.mxu0 %v1130
  %2448 = vmatprep.subr.bf16.mxu0 %v1135
  %2449 = vmatpush1.bf16.msra.mxu0 %v1134
  %2450 = vmatprep.subr.bf16.mxu0 %v1139
  %2451 = vmatpush1.bf16.msra.mxu0 %v1138
  %2452 = vmatprep.subr.bf16.mxu0 %v1143
  %2453 = vmatpush1.bf16.msra.mxu0 %v1142
  %2454 = vmatprep.subr.bf16.mxu0 %v1147
  %2455 = vmatpush1.bf16.msra.mxu0 %v1146
  %2456 = vmatprep.subr.bf16.mxu0 %v1151
  %2457 = vmatpush1.bf16.msra.mxu0 %v1150
  %2458 = vmatprep.subr.bf16.mxu0 %v1155
  %2459 = vmatpush1.bf16.msra.mxu0 %v1154
  %2460 = vmatprep.subr.bf16.mxu0 %v1159
  %2461 = vmatpush1.bf16.msra.mxu0 %v1158
  %2462 = vmatprep.subr.bf16.mxu0 0
  %2463 = vmatpush1.bf16.msra.mxu0 0
  %2464 = vmatprep.subr.bf16.mxu0 0
  %2465 = vmatpush1.bf16.msra.mxu0 0
  %2466 = vmatprep.subr.bf16.mxu0 0
  %2467 = vmatpush1.bf16.msra.mxu0 0
  %2468 = vmatprep.subr.bf16.mxu0 0
  %2469 = vmatpush1.bf16.msra.mxu0 0
  %2470 = vmatprep.subr.bf16.mxu0 0
  %2471 = vmatpush1.bf16.msra.mxu0 0
  %2472 = vmatprep.subr.bf16.mxu0 0
  %2473 = vmatpush1.bf16.msra.mxu0 0
  %2474 = vmatprep.subr.bf16.mxu0 0
  %2475 = vmatpush1.bf16.msra.mxu0 0
  %2476 = vmatprep.subr.bf16.mxu0 0
  %2477 = vmatpush1.bf16.msra.mxu0 0
  %2478 = vmatprep.mubr.bf16.mxu0 0
  %2479 = vmatmul.mubr.bf16.gmra.mrb[0].mxu0 %v2402
  %v2480 = vpop.f32.mrb[0].mxu0
  %v2481 = vadd.f32 0.0, %v2480
  %v2482 = vpop.f32.mrb[0].mxu0
  %v2483 = vadd.f32 0.0, %v2482
  %v2484 = vpop.f32.mrb[0].mxu0
  %v2485 = vadd.f32 0.0, %v2484
  %v2486 = vpop.f32.mrb[0].mxu0
  %v2487 = vadd.f32 0.0, %v2486
  %2488 = vdwg.mxu0
  %v2489 = vadd.f32 %v2383, %v2438
  %v2490 = vadd.f32 %v2384, %v2440
  %v2491 = vadd.f32 %v2385, %v2481
  %v2492 = vadd.f32 %v2386, %v2483
  %v2493 = vadd.f32 %v2387, %v2442
  %v2494 = vadd.f32 %v2388, %v2444
  %v2495 = vadd.f32 %v2389, %v2485
  %v2496 = vadd.f32 %v2390, %v2487
  %v2497 = vpack.c.bf16 %v2377, %v2376
  %2498 = vmatprep.subr.bf16.mxu0 %v1415
  %2499 = vmatpush1.bf16.msra.mxu0 %v1414
  %2500 = vmatprep.subr.bf16.mxu0 %v1419
  %2501 = vmatpush1.bf16.msra.mxu0 %v1418
  %2502 = vmatprep.subr.bf16.mxu0 %v1423
  %2503 = vmatpush1.bf16.msra.mxu0 %v1422
  %2504 = vmatprep.subr.bf16.mxu0 %v1427
  %2505 = vmatpush1.bf16.msra.mxu0 %v1426
  %2506 = vmatprep.subr.bf16.mxu0 %v1431
  %2507 = vmatpush1.bf16.msra.mxu0 %v1430
  %2508 = vmatprep.subr.bf16.mxu0 %v1435
  %2509 = vmatpush1.bf16.msra.mxu0 %v1434
  %2510 = vmatprep.subr.bf16.mxu0 %v1439
  %2511 = vmatpush1.bf16.msra.mxu0 %v1438
  %2512 = vmatprep.subr.bf16.mxu0 %v1443
  %2513 = vmatpush1.bf16.msra.mxu0 %v1442
  %2514 = vmatprep.subr.bf16.mxu0 0
  %2515 = vmatpush1.bf16.msra.mxu0 0
  %2516 = vmatprep.subr.bf16.mxu0 0
  %2517 = vmatpush1.bf16.msra.mxu0 0
  %2518 = vmatprep.subr.bf16.mxu0 0
  %2519 = vmatpush1.bf16.msra.mxu0 0
  %2520 = vmatprep.subr.bf16.mxu0 0
  %2521 = vmatpush1.bf16.msra.mxu0 0
  %2522 = vmatprep.subr.bf16.mxu0 0
  %2523 = vmatpush1.bf16.msra.mxu0 0
  %2524 = vmatprep.subr.bf16.mxu0 0
  %2525 = vmatpush1.bf16.msra.mxu0 0
  %2526 = vmatprep.subr.bf16.mxu0 0
  %2527 = vmatpush1.bf16.msra.mxu0 0
  %2528 = vmatprep.subr.bf16.mxu0 0
  %2529 = vmatpush1.bf16.msra.mxu0 0
  %2530 = vmatprep.mubr.bf16.mxu0 0
  %2531 = vmatmul.mubr.bf16.gmra.mrb[0].mxu0 %v2497
  %v2532 = vpop.f32.mrb[0].mxu0
  %v2533 = vadd.f32 0.0, %v2532
  %v2534 = vpop.f32.mrb[0].mxu0
  %v2535 = vadd.f32 0.0, %v2534
  %v2536 = vpop.f32.mrb[0].mxu0
  %v2537 = vadd.f32 0.0, %v2536
  %v2538 = vpop.f32.mrb[0].mxu0
  %v2539 = vadd.f32 0.0, %v2538
  %2540 = vdwg.mxu0
  %2541 = vmatprep.subr.bf16.mxu0 %v1417
  %2542 = vmatpush1.bf16.msra.mxu0 %v1416
  %2543 = vmatprep.subr.bf16.mxu0 %v1421
  %2544 = vmatpush1.bf16.msra.mxu0 %v1420
  %2545 = vmatprep.subr.bf16.mxu0 %v1425
  %2546 = vmatpush1.bf16.msra.mxu0 %v1424
  %2547 = vmatprep.subr.bf16.mxu0 %v1429
  %2548 = vmatpush1.bf16.msra.mxu0 %v1428
  %2549 = vmatprep.subr.bf16.mxu0 %v1433
  %2550 = vmatpush1.bf16.msra.mxu0 %v1432
  %2551 = vmatprep.subr.bf16.mxu0 %v1437
  %2552 = vmatpush1.bf16.msra.mxu0 %v1436
  %2553 = vmatprep.subr.bf16.mxu0 %v1441
  %2554 = vmatpush1.bf16.msra.mxu0 %v1440
  %2555 = vmatprep.subr.bf16.mxu0 %v1445
  %2556 = vmatpush1.bf16.msra.mxu0 %v1444
  %2557 = vmatprep.subr.bf16.mxu0 0
  %2558 = vmatpush1.bf16.msra.mxu0 0
  %2559 = vmatprep.subr.bf16.mxu0 0
  %2560 = vmatpush1.bf16.msra.mxu0 0
  %2561 = vmatprep.subr.bf16.mxu0 0
  %2562 = vmatpush1.bf16.msra.mxu0 0
  %2563 = vmatprep.subr.bf16.mxu0 0
  %2564 = vmatpush1.bf16.msra.mxu0 0
  %2565 = vmatprep.subr.bf16.mxu0 0
  %2566 = vmatpush1.bf16.msra.mxu0 0
  %2567 = vmatprep.subr.bf16.mxu0 0
  %2568 = vmatpush1.bf16.msra.mxu0 0
  %2569 = vmatprep.subr.bf16.mxu0 0
  %2570 = vmatpush1.bf16.msra.mxu0 0
  %2571 = vmatprep.subr.bf16.mxu0 0
  %2572 = vmatpush1.bf16.msra.mxu0 0
  %2573 = vmatprep.mubr.bf16.mxu0 0
  %2574 = vmatmul.mubr.bf16.gmra.mrb[0].mxu0 %v2497
  %v2575 = vpop.f32.mrb[0].mxu0
  %v2576 = vadd.f32 0.0, %v2575
  %v2577 = vpop.f32.mrb[0].mxu0
  %v2578 = vadd.f32 0.0, %v2577
  %v2579 = vpop.f32.mrb[0].mxu0
  %v2580 = vadd.f32 0.0, %v2579
  %v2581 = vpop.f32.mrb[0].mxu0
  %v2582 = vadd.f32 0.0, %v2581
  %2583 = vdwg.mxu0
  %v2584 = vadd.f32 %v2394, %v2533
  %v2585 = vadd.f32 %v2395, %v2535
  %v2586 = vadd.f32 %v2396, %v2576
  %v2587 = vadd.f32 %v2397, %v2578
  %v2588 = vadd.f32 %v2398, %v2537
  %v2589 = vadd.f32 %v2399, %v2539
  %v2590 = vadd.f32 %v2400, %v2580
  %v2591 = vadd.f32 %v2401, %v2582
  %vm2592 = vcmp.gt.s32.totalorder %v976, 3
  %vm2593 = vcmp.gt.s32.totalorder %v977, 3
  %v2594 = vxor.u32 %v2489, 2147483648
  %v2595 = vxor.u32 %v2493, 2147483648
  %v2596 = vmul.f32 %v2594, 1.442695
  %v2597 = vpow.pop %v2596
  %v2598 = vmul.f32 %v2595, 1.442695
  %v2599 = vpow.pop %v2598
  %v2600 = vadd.f32 %v2597, 1.0
  %v2601 = vadd.f32 %v2599, 1.0
  %v2602 = vrcp.pop %v2600
  %v2603 = vmul.f32 1.0, %v2602
  %v2604 = vrcp.pop %v2601
  %v2605 = vmul.f32 1.0, %v2604
  %v2606 = vxor.u32 %v2490, 2147483648
  %v2607 = vxor.u32 %v2494, 2147483648
  %v2608 = vmul.f32 %v2606, 1.442695
  %v2609 = vpow.pop %v2608
  %v2610 = vmul.f32 %v2607, 1.442695
  %v2611 = vpow.pop %v2610
  %v2612 = vadd.f32 %v2609, 1.0
  %v2613 = vadd.f32 %v2611, 1.0
  %v2614 = vrcp.pop %v2612
  %v2615 = vmul.f32 1.0, %v2614
  %v2616 = vrcp.pop %v2613
  %v2617 = vmul.f32 1.0, %v2616
  %v2618 = vtanh.pop %v2491
  %v2619 = vtanh.pop %v2495
  %v2620 = vxor.u32 %v2492, 2147483648
  %v2621 = vxor.u32 %v2496, 2147483648
  %v2622 = vmul.f32 %v2620, 1.442695
  %v2623 = vpow.pop %v2622
  %v2624 = vmul.f32 %v2621, 1.442695
  %v2625 = vpow.pop %v2624
  %v2626 = vadd.f32 %v2623, 1.0
  %v2627 = vadd.f32 %v2625, 1.0
  %v2628 = vrcp.pop %v2626
  %v2629 = vmul.f32 1.0, %v2628
  %v2630 = vrcp.pop %v2627
  %v2631 = vmul.f32 1.0, %v2630
  %v2632 = vmul.f32 %v2615, %v2314
  %v2633 = vmul.f32 %v2617, %v2315
  %v2634 = vmul.f32 %v2603, %v2618
  %v2635 = vmul.f32 %v2605, %v2619
  %v2636 = vadd.f32 %v2632, %v2634
  %v2637 = vadd.f32 %v2633, %v2635
  %v2638 = vtanh.pop %v2636
  %v2639 = vtanh.pop %v2637
  %v2640 = vmul.f32 %v2629, %v2638
  %v2641 = vmul.f32 %v2631, %v2639
  %v2642 = vsel %vm2592, 1, 0
  %v2643 = vsel %vm2593, 1, 0
  %2644 = vset.pattern.permute.xlu0 0
  %2645 = vperm.xlu0 %2644, %v2642
  %v2646 = vpop.permute.xlu0 %2645
  %2647 = vset.pattern.permute.xlu0 0
  %2648 = vperm.xlu0 %2647, %v2643
  %v2649 = vpop.permute.xlu0 %2648
  %vm2650 = vcmp.eq.s32.totalorder %v2646, 1
  %vm2651 = vcmp.eq.s32.totalorder %v2649, 1
  %v2652 = vsel %vm2650, %v2640, %v2312
  %v2653 = vsel %vm2651, %v2641, %v2313
  %v2654 = vsel %vm2650, %v2636, %v2314
  %v2655 = vsel %vm2651, %v2637, %v2315
  %vm2656 = vcmp.gt.s32.totalorder %v976, 6
  %vm2657 = vcmp.gt.s32.totalorder %v977, 6
  %v2658 = vxor.u32 %v2584, 2147483648
  %v2659 = vxor.u32 %v2588, 2147483648
  %v2660 = vmul.f32 %v2658, 1.442695
  %v2661 = vpow.pop %v2660
  %v2662 = vmul.f32 %v2659, 1.442695
  %v2663 = vpow.pop %v2662
  %v2664 = vadd.f32 %v2661, 1.0
  %v2665 = vadd.f32 %v2663, 1.0
  %v2666 = vrcp.pop %v2664
  %v2667 = vmul.f32 1.0, %v2666
  %v2668 = vrcp.pop %v2665
  %v2669 = vmul.f32 1.0, %v2668
  %v2670 = vxor.u32 %v2585, 2147483648
  %v2671 = vxor.u32 %v2589, 2147483648
  %v2672 = vmul.f32 %v2670, 1.442695
  %v2673 = vpow.pop %v2672
  %v2674 = vmul.f32 %v2671, 1.442695
  %v2675 = vpow.pop %v2674
  %v2676 = vadd.f32 %v2673, 1.0
  %v2677 = vadd.f32 %v2675, 1.0
  %v2678 = vrcp.pop %v2676
  %v2679 = vmul.f32 1.0, %v2678
  %v2680 = vrcp.pop %v2677
  %v2681 = vmul.f32 1.0, %v2680
  %v2682 = vtanh.pop %v2586
  %v2683 = vtanh.pop %v2590
  %v2684 = vxor.u32 %v2587, 2147483648
  %v2685 = vxor.u32 %v2591, 2147483648
  %v2686 = vmul.f32 %v2684, 1.442695
  %v2687 = vpow.pop %v2686
  %v2688 = vmul.f32 %v2685, 1.442695
  %v2689 = vpow.pop %v2688
  %v2690 = vadd.f32 %v2687, 1.0
  %v2691 = vadd.f32 %v2689, 1.0
  %v2692 = vrcp.pop %v2690
  %v2693 = vmul.f32 1.0, %v2692
  %v2694 = vrcp.pop %v2691
  %v2695 = vmul.f32 1.0, %v2694
  %v2696 = vmul.f32 %v2679, %v2378
  %v2697 = vmul.f32 %v2681, %v2379
  %v2698 = vmul.f32 %v2667, %v2682
  %v2699 = vmul.f32 %v2669, %v2683
  %v2700 = vadd.f32 %v2696, %v2698
  %v2701 = vadd.f32 %v2697, %v2699
  %v2702 = vtanh.pop %v2700
  %v2703 = vtanh.pop %v2701
  %v2704 = vmul.f32 %v2693, %v2702
  %v2705 = vmul.f32 %v2695, %v2703
  %v2706 = vsel %vm2656, 1, 0
  %v2707 = vsel %vm2657, 1, 0
  %2708 = vset.pattern.permute.xlu0 0
  %2709 = vperm.xlu0 %2708, %v2706
  %v2710 = vpop.permute.xlu0 %2709
  %2711 = vset.pattern.permute.xlu0 0
  %2712 = vperm.xlu0 %2711, %v2707
  %v2713 = vpop.permute.xlu0 %2712
  %vm2714 = vcmp.eq.s32.totalorder %v2710, 1
  %vm2715 = vcmp.eq.s32.totalorder %v2713, 1
  %v2716 = vsel %vm2714, %v2704, %v2376
  %v2717 = vsel %vm2715, %v2705, %v2377
  %v2718 = vsel %vm2714, %v2700, %v2378
  %v2719 = vsel %vm2715, %v2701, %v2379
  %s2720 = smul.u32 8, 8
  %s2721 = smul.addr %s2720, 8
  %s2722 = scalar_lea.vmem [#allocation2], %s2721
  %v2723 = vld [vmem:[%s2722] sm:$0xff]
  %v2724 = vld [vmem:[%s2722 + $0x8] sm:$0xff]
  %v2725 = vld [vmem:[%s2722 + $0x10] sm:$0xff]
  %v2726 = vld [vmem:[%s2722 + $0x18] sm:$0xff]
  %v2727 = vld [vmem:[%s2722 + $0x40] sm:$0xff]
  %v2728 = vld [vmem:[%s2722 + $0x48] sm:$0xff]
  %v2729 = vld [vmem:[%s2722 + $0x50] sm:$0xff]
  %v2730 = vld [vmem:[%s2722 + $0x58] sm:$0xff]
  %s2731 = smul.u32 10, 8
  %s2732 = smul.addr %s2731, 8
  %s2733 = scalar_lea.vmem [#allocation2], %s2732
  %v2734 = vld [vmem:[%s2733 + $0x20] sm:$0xff]
  %v2735 = vld [vmem:[%s2733 + $0x28] sm:$0xff]
  %v2736 = vld [vmem:[%s2733 + $0x30] sm:$0xff]
  %v2737 = vld [vmem:[%s2733 + $0x38] sm:$0xff]
  %v2738 = vld [vmem:[%s2733 + $0x60] sm:$0xff]
  %v2739 = vld [vmem:[%s2733 + $0x68] sm:$0xff]
  %v2740 = vld [vmem:[%s2733 + $0x70] sm:$0xff]
  %v2741 = vld [vmem:[%s2733 + $0x78] sm:$0xff]
  %v2742 = vpack.c.bf16 %v2653, %v2652
  %2743 = vmatprep.subr.bf16.mxu0 %v1129
  %2744 = vmatpush1.bf16.msra.mxu0 %v1128
  %2745 = vmatprep.subr.bf16.mxu0 %v1133
  %2746 = vmatpush1.bf16.msra.mxu0 %v1132
  %2747 = vmatprep.subr.bf16.mxu0 %v1137
  %2748 = vmatpush1.bf16.msra.mxu0 %v1136
  %2749 = vmatprep.subr.bf16.mxu0 %v1141
  %2750 = vmatpush1.bf16.msra.mxu0 %v1140
  %2751 = vmatprep.subr.bf16.mxu0 %v1145
  %2752 = vmatpush1.bf16.msra.mxu0 %v1144
  %2753 = vmatprep.subr.bf16.mxu0 %v1149
  %2754 = vmatpush1.bf16.msra.mxu0 %v1148
  %2755 = vmatprep.subr.bf16.mxu0 %v1153
  %2756 = vmatpush1.bf16.msra.mxu0 %v1152
  %2757 = vmatprep.subr.bf16.mxu0 %v1157
  %2758 = vmatpush1.bf16.msra.mxu0 %v1156
  %2759 = vmatprep.subr.bf16.mxu0 0
  %2760 = vmatpush1.bf16.msra.mxu0 0
  %2761 = vmatprep.subr.bf16.mxu0 0
  %2762 = vmatpush1.bf16.msra.mxu0 0
  %2763 = vmatprep.subr.bf16.mxu0 0
  %2764 = vmatpush1.bf16.msra.mxu0 0
  %2765 = vmatprep.subr.bf16.mxu0 0
  %2766 = vmatpush1.bf16.msra.mxu0 0
  %2767 = vmatprep.subr.bf16.mxu0 0
  %2768 = vmatpush1.bf16.msra.mxu0 0
  %2769 = vmatprep.subr.bf16.mxu0 0
  %2770 = vmatpush1.bf16.msra.mxu0 0
  %2771 = vmatprep.subr.bf16.mxu0 0
  %2772 = vmatpush1.bf16.msra.mxu0 0
  %2773 = vmatprep.subr.bf16.mxu0 0
  %2774 = vmatpush1.bf16.msra.mxu0 0
  %2775 = vmatprep.mubr.bf16.mxu0 0
  %2776 = vmatmul.mubr.bf16.gmra.mrb[0].mxu0 %v2742
  %v2777 = vpop.f32.mrb[0].mxu0
  %v2778 = vadd.f32 0.0, %v2777
  %v2779 = vpop.f32.mrb[0].mxu0
  %v2780 = vadd.f32 0.0, %v2779
  %v2781 = vpop.f32.mrb[0].mxu0
  %v2782 = vadd.f32 0.0, %v2781
  %v2783 = vpop.f32.mrb[0].mxu0
  %v2784 = vadd.f32 0.0, %v2783
  %2785 = vdwg.mxu0
  %2786 = vmatprep.subr.bf16.mxu0 %v1131
  %2787 = vmatpush1.bf16.msra.mxu0 %v1130
  %2788 = vmatprep.subr.bf16.mxu0 %v1135
  %2789 = vmatpush1.bf16.msra.mxu0 %v1134
  %2790 = vmatprep.subr.bf16.mxu0 %v1139
  %2791 = vmatpush1.bf16.msra.mxu0 %v1138
  %2792 = vmatprep.subr.bf16.mxu0 %v1143
  %2793 = vmatpush1.bf16.msra.mxu0 %v1142
  %2794 = vmatprep.subr.bf16.mxu0 %v1147
  %2795 = vmatpush1.bf16.msra.mxu0 %v1146
  %2796 = vmatprep.subr.bf16.mxu0 %v1151
  %2797 = vmatpush1.bf16.msra.mxu0 %v1150
  %2798 = vmatprep.subr.bf16.mxu0 %v1155
  %2799 = vmatpush1.bf16.msra.mxu0 %v1154
  %2800 = vmatprep.subr.bf16.mxu0 %v1159
  %2801 = vmatpush1.bf16.msra.mxu0 %v1158
  %2802 = vmatprep.subr.bf16.mxu0 0
  %2803 = vmatpush1.bf16.msra.mxu0 0
  %2804 = vmatprep.subr.bf16.mxu0 0
  %2805 = vmatpush1.bf16.msra.mxu0 0
  %2806 = vmatprep.subr.bf16.mxu0 0
  %2807 = vmatpush1.bf16.msra.mxu0 0
  %2808 = vmatprep.subr.bf16.mxu0 0
  %2809 = vmatpush1.bf16.msra.mxu0 0
  %2810 = vmatprep.subr.bf16.mxu0 0
  %2811 = vmatpush1.bf16.msra.mxu0 0
  %2812 = vmatprep.subr.bf16.mxu0 0
  %2813 = vmatpush1.bf16.msra.mxu0 0
  %2814 = vmatprep.subr.bf16.mxu0 0
  %2815 = vmatpush1.bf16.msra.mxu0 0
  %2816 = vmatprep.subr.bf16.mxu0 0
  %2817 = vmatpush1.bf16.msra.mxu0 0
  %2818 = vmatprep.mubr.bf16.mxu0 0
  %2819 = vmatmul.mubr.bf16.gmra.mrb[0].mxu0 %v2742
  %v2820 = vpop.f32.mrb[0].mxu0
  %v2821 = vadd.f32 0.0, %v2820
  %v2822 = vpop.f32.mrb[0].mxu0
  %v2823 = vadd.f32 0.0, %v2822
  %v2824 = vpop.f32.mrb[0].mxu0
  %v2825 = vadd.f32 0.0, %v2824
  %v2826 = vpop.f32.mrb[0].mxu0
  %v2827 = vadd.f32 0.0, %v2826
  %2828 = vdwg.mxu0
  %v2829 = vadd.f32 %v2723, %v2778
  %v2830 = vadd.f32 %v2724, %v2780
  %v2831 = vadd.f32 %v2725, %v2821
  %v2832 = vadd.f32 %v2726, %v2823
  %v2833 = vadd.f32 %v2727, %v2782
  %v2834 = vadd.f32 %v2728, %v2784
  %v2835 = vadd.f32 %v2729, %v2825
  %v2836 = vadd.f32 %v2730, %v2827
  %v2837 = vpack.c.bf16 %v2717, %v2716
  %2838 = vmatprep.subr.bf16.mxu0 %v1415
  %2839 = vmatpush1.bf16.msra.mxu0 %v1414
  %2840 = vmatprep.subr.bf16.mxu0 %v1419
  %2841 = vmatpush1.bf16.msra.mxu0 %v1418
  %2842 = vmatprep.subr.bf16.mxu0 %v1423
  %2843 = vmatpush1.bf16.msra.mxu0 %v1422
  %2844 = vmatprep.subr.bf16.mxu0 %v1427
  %2845 = vmatpush1.bf16.msra.mxu0 %v1426
  %2846 = vmatprep.subr.bf16.mxu0 %v1431
  %2847 = vmatpush1.bf16.msra.mxu0 %v1430
  %2848 = vmatprep.subr.bf16.mxu0 %v1435
  %2849 = vmatpush1.bf16.msra.mxu0 %v1434
  %2850 = vmatprep.subr.bf16.mxu0 %v1439
  %2851 = vmatpush1.bf16.msra.mxu0 %v1438
  %2852 = vmatprep.subr.bf16.mxu0 %v1443
  %2853 = vmatpush1.bf16.msra.mxu0 %v1442
  %2854 = vmatprep.subr.bf16.mxu0 0
  %2855 = vmatpush1.bf16.msra.mxu0 0
  %2856 = vmatprep.subr.bf16.mxu0 0
  %2857 = vmatpush1.bf16.msra.mxu0 0
  %2858 = vmatprep.subr.bf16.mxu0 0
  %2859 = vmatpush1.bf16.msra.mxu0 0
  %2860 = vmatprep.subr.bf16.mxu0 0
  %2861 = vmatpush1.bf16.msra.mxu0 0
  %2862 = vmatprep.subr.bf16.mxu0 0
  %2863 = vmatpush1.bf16.msra.mxu0 0
  %2864 = vmatprep.subr.bf16.mxu0 0
  %2865 = vmatpush1.bf16.msra.mxu0 0
  %2866 = vmatprep.subr.bf16.mxu0 0
  %2867 = vmatpush1.bf16.msra.mxu0 0
  %2868 = vmatprep.subr.bf16.mxu0 0
  %2869 = vmatpush1.bf16.msra.mxu0 0
  %2870 = vmatprep.mubr.bf16.mxu0 0
  %2871 = vmatmul.mubr.bf16.gmra.mrb[0].mxu0 %v2837
  %v2872 = vpop.f32.mrb[0].mxu0
  %v2873 = vadd.f32 0.0, %v2872
  %v2874 = vpop.f32.mrb[0].mxu0
  %v2875 = vadd.f32 0.0, %v2874
  %v2876 = vpop.f32.mrb[0].mxu0
  %v2877 = vadd.f32 0.0, %v2876
  %v2878 = vpop.f32.mrb[0].mxu0
  %v2879 = vadd.f32 0.0, %v2878
  %2880 = vdwg.mxu0
  %2881 = vmatprep.subr.bf16.mxu0 %v1417
  %2882 = vmatpush1.bf16.msra.mxu0 %v1416
  %2883 = vmatprep.subr.bf16.mxu0 %v1421
  %2884 = vmatpush1.bf16.msra.mxu0 %v1420
  %2885 = vmatprep.subr.bf16.mxu0 %v1425
  %2886 = vmatpush1.bf16.msra.mxu0 %v1424
  %2887 = vmatprep.subr.bf16.mxu0 %v1429
  %2888 = vmatpush1.bf16.msra.mxu0 %v1428
  %2889 = vmatprep.subr.bf16.mxu0 %v1433
  %2890 = vmatpush1.bf16.msra.mxu0 %v1432
  %2891 = vmatprep.subr.bf16.mxu0 %v1437
  %2892 = vmatpush1.bf16.msra.mxu0 %v1436
  %2893 = vmatprep.subr.bf16.mxu0 %v1441
  %2894 = vmatpush1.bf16.msra.mxu0 %v1440
  %2895 = vmatprep.subr.bf16.mxu0 %v1445
  %2896 = vmatpush1.bf16.msra.mxu0 %v1444
  %2897 = vmatprep.subr.bf16.mxu0 0
  %2898 = vmatpush1.bf16.msra.mxu0 0
  %2899 = vmatprep.subr.bf16.mxu0 0
  %2900 = vmatpush1.bf16.msra.mxu0 0
  %2901 = vmatprep.subr.bf16.mxu0 0
  %2902 = vmatpush1.bf16.msra.mxu0 0
  %2903 = vmatprep.subr.bf16.mxu0 0
  %2904 = vmatpush1.bf16.msra.mxu0 0
  %2905 = vmatprep.subr.bf16.mxu0 0
  %2906 = vmatpush1.bf16.msra.mxu0 0
  %2907 = vmatprep.subr.bf16.mxu0 0
  %2908 = vmatpush1.bf16.msra.mxu0 0
  %2909 = vmatprep.subr.bf16.mxu0 0
  %2910 = vmatpush1.bf16.msra.mxu0 0
  %2911 = vmatprep.subr.bf16.mxu0 0
  %2912 = vmatpush1.bf16.msra.mxu0 0
  %2913 = vmatprep.mubr.bf16.mxu0 0
  %2914 = vmatmul.mubr.bf16.gmra.mrb[0].mxu0 %v2837
  %v2915 = vpop.f32.mrb[0].mxu0
  %v2916 = vadd.f32 0.0, %v2915
  %v2917 = vpop.f32.mrb[0].mxu0
  %v2918 = vadd.f32 0.0, %v2917
  %v2919 = vpop.f32.mrb[0].mxu0
  %v2920 = vadd.f32 0.0, %v2919
  %v2921 = vpop.f32.mrb[0].mxu0
  %v2922 = vadd.f32 0.0, %v2921
  %2923 = vdwg.mxu0
  %v2924 = vadd.f32 %v2734, %v2873
  %v2925 = vadd.f32 %v2735, %v2875
  %v2926 = vadd.f32 %v2736, %v2916
  %v2927 = vadd.f32 %v2737, %v2918
  %v2928 = vadd.f32 %v2738, %v2877
  %v2929 = vadd.f32 %v2739, %v2879
  %v2930 = vadd.f32 %v2740, %v2920
  %v2931 = vadd.f32 %v2741, %v2922
  %vm2932 = vcmp.gt.s32.totalorder %v976, 4
  %vm2933 = vcmp.gt.s32.totalorder %v977, 4
  %v2934 = vxor.u32 %v2829, 2147483648
  %v2935 = vxor.u32 %v2833, 2147483648
  %v2936 = vmul.f32 %v2934, 1.442695
  %v2937 = vpow.pop %v2936
  %v2938 = vmul.f32 %v2935, 1.442695
  %v2939 = vpow.pop %v2938
  %v2940 = vadd.f32 %v2937, 1.0
  %v2941 = vadd.f32 %v2939, 1.0
  %v2942 = vrcp.pop %v2940
  %v2943 = vmul.f32 1.0, %v2942
  %v2944 = vrcp.pop %v2941
  %v2945 = vmul.f32 1.0, %v2944
  %v2946 = vxor.u32 %v2830, 2147483648
  %v2947 = vxor.u32 %v2834, 2147483648
  %v2948 = vmul.f32 %v2946, 1.442695
  %v2949 = vpow.pop %v2948
  %v2950 = vmul.f32 %v2947, 1.442695
  %v2951 = vpow.pop %v2950
  %v2952 = vadd.f32 %v2949, 1.0
  %v2953 = vadd.f32 %v2951, 1.0
  %v2954 = vrcp.pop %v2952
  %v2955 = vmul.f32 1.0, %v2954
  %v2956 = vrcp.pop %v2953
  %v2957 = vmul.f32 1.0, %v2956
  %v2958 = vtanh.pop %v2831
  %v2959 = vtanh.pop %v2835
  %v2960 = vxor.u32 %v2832, 2147483648
  %v2961 = vxor.u32 %v2836, 2147483648
  %v2962 = vmul.f32 %v2960, 1.442695
  %v2963 = vpow.pop %v2962
  %v2964 = vmul.f32 %v2961, 1.442695
  %v2965 = vpow.pop %v2964
  %v2966 = vadd.f32 %v2963, 1.0
  %v2967 = vadd.f32 %v2965, 1.0
  %v2968 = vrcp.pop %v2966
  %v2969 = vmul.f32 1.0, %v2968
  %v2970 = vrcp.pop %v2967
  %v2971 = vmul.f32 1.0, %v2970
  %v2972 = vmul.f32 %v2955, %v2654
  %v2973 = vmul.f32 %v2957, %v2655
  %v2974 = vmul.f32 %v2943, %v2958
  %v2975 = vmul.f32 %v2945, %v2959
  %v2976 = vadd.f32 %v2972, %v2974
  %v2977 = vadd.f32 %v2973, %v2975
  %v2978 = vtanh.pop %v2976
  %v2979 = vtanh.pop %v2977
  %v2980 = vmul.f32 %v2969, %v2978
  %v2981 = vmul.f32 %v2971, %v2979
  %v2982 = vsel %vm2932, 1, 0
  %v2983 = vsel %vm2933, 1, 0
  %2984 = vset.pattern.permute.xlu0 0
  %2985 = vperm.xlu0 %2984, %v2982
  %v2986 = vpop.permute.xlu0 %2985
  %2987 = vset.pattern.permute.xlu0 0
  %2988 = vperm.xlu0 %2987, %v2983
  %v2989 = vpop.permute.xlu0 %2988
  %vm2990 = vcmp.eq.s32.totalorder %v2986, 1
  %vm2991 = vcmp.eq.s32.totalorder %v2989, 1
  %v2992 = vsel %vm2990, %v2980, %v2652
  %v2993 = vsel %vm2991, %v2981, %v2653
  %v2994 = vsel %vm2990, %v2976, %v2654
  %v2995 = vsel %vm2991, %v2977, %v2655
  %vm2996 = vcmp.gt.s32.totalorder %v976, 5
  %vm2997 = vcmp.gt.s32.totalorder %v977, 5
  %v2998 = vxor.u32 %v2924, 2147483648
  %v2999 = vxor.u32 %v2928, 2147483648
  %v3000 = vmul.f32 %v2998, 1.442695
  %v3001 = vpow.pop %v3000
  %v3002 = vmul.f32 %v2999, 1.442695
  %v3003 = vpow.pop %v3002
  %v3004 = vadd.f32 %v3001, 1.0
  %v3005 = vadd.f32 %v3003, 1.0
  %v3006 = vrcp.pop %v3004
  %v3007 = vmul.f32 1.0, %v3006
  %v3008 = vrcp.pop %v3005
  %v3009 = vmul.f32 1.0, %v3008
  %v3010 = vxor.u32 %v2925, 2147483648
  %v3011 = vxor.u32 %v2929, 2147483648
  %v3012 = vmul.f32 %v3010, 1.442695
  %v3013 = vpow.pop %v3012
  %v3014 = vmul.f32 %v3011, 1.442695
  %v3015 = vpow.pop %v3014
  %v3016 = vadd.f32 %v3013, 1.0
  %v3017 = vadd.f32 %v3015, 1.0
  %v3018 = vrcp.pop %v3016
  %v3019 = vmul.f32 1.0, %v3018
  %v3020 = vrcp.pop %v3017
  %v3021 = vmul.f32 1.0, %v3020
  %v3022 = vtanh.pop %v2926
  %v3023 = vtanh.pop %v2930
  %v3024 = vxor.u32 %v2927, 2147483648
  %v3025 = vxor.u32 %v2931, 2147483648
  %v3026 = vmul.f32 %v3024, 1.442695
  %v3027 = vpow.pop %v3026
  %v3028 = vmul.f32 %v3025, 1.442695
  %v3029 = vpow.pop %v3028
  %v3030 = vadd.f32 %v3027, 1.0
  %v3031 = vadd.f32 %v3029, 1.0
  %v3032 = vrcp.pop %v3030
  %v3033 = vmul.f32 1.0, %v3032
  %v3034 = vrcp.pop %v3031
  %v3035 = vmul.f32 1.0, %v3034
  %v3036 = vmul.f32 %v3019, %v2718
  %v3037 = vmul.f32 %v3021, %v2719
  %v3038 = vmul.f32 %v3007, %v3022
  %v3039 = vmul.f32 %v3009, %v3023
  %v3040 = vadd.f32 %v3036, %v3038
  %v3041 = vadd.f32 %v3037, %v3039
  %v3042 = vtanh.pop %v3040
  %v3043 = vtanh.pop %v3041
  %v3044 = vmul.f32 %v3033, %v3042
  %v3045 = vmul.f32 %v3035, %v3043
  %v3046 = vsel %vm2996, 1, 0
  %v3047 = vsel %vm2997, 1, 0
  %3048 = vset.pattern.permute.xlu0 0
  %3049 = vperm.xlu0 %3048, %v3046
  %v3050 = vpop.permute.xlu0 %3049
  %3051 = vset.pattern.permute.xlu0 0
  %3052 = vperm.xlu0 %3051, %v3047
  %v3053 = vpop.permute.xlu0 %3052
  %vm3054 = vcmp.eq.s32.totalorder %v3050, 1
  %vm3055 = vcmp.eq.s32.totalorder %v3053, 1
  %v3056 = vsel %vm3054, %v3044, %v2716
  %v3057 = vsel %vm3055, %v3045, %v2717
  %v3058 = vsel %vm3054, %v3040, %v2718
  %v3059 = vsel %vm3055, %v3041, %v2719
  %v3060 = vld [vmem:[%s2733] sm:$0xff]
  %v3061 = vld [vmem:[%s2733 + $0x8] sm:$0xff]
  %v3062 = vld [vmem:[%s2733 + $0x10] sm:$0xff]
  %v3063 = vld [vmem:[%s2733 + $0x18] sm:$0xff]
  %v3064 = vld [vmem:[%s2733 + $0x40] sm:$0xff]
  %v3065 = vld [vmem:[%s2733 + $0x48] sm:$0xff]
  %v3066 = vld [vmem:[%s2733 + $0x50] sm:$0xff]
  %v3067 = vld [vmem:[%s2733 + $0x58] sm:$0xff]
  %v3068 = vld [vmem:[%s2722 + $0x20] sm:$0xff]
  %v3069 = vld [vmem:[%s2722 + $0x28] sm:$0xff]
  %v3070 = vld [vmem:[%s2722 + $0x30] sm:$0xff]
  %v3071 = vld [vmem:[%s2722 + $0x38] sm:$0xff]
  %v3072 = vld [vmem:[%s2722 + $0x60] sm:$0xff]
  %v3073 = vld [vmem:[%s2722 + $0x68] sm:$0xff]
  %v3074 = vld [vmem:[%s2722 + $0x70] sm:$0xff]
  %v3075 = vld [vmem:[%s2722 + $0x78] sm:$0xff]
  %v3076 = vpack.c.bf16 %v2993, %v2992
  %3077 = vmatprep.subr.bf16.mxu0 %v1129
  %3078 = vmatpush1.bf16.msra.mxu0 %v1128
  %3079 = vmatprep.subr.bf16.mxu0 %v1133
  %3080 = vmatpush1.bf16.msra.mxu0 %v1132
  %3081 = vmatprep.subr.bf16.mxu0 %v1137
  %3082 = vmatpush1.bf16.msra.mxu0 %v1136
  %3083 = vmatprep.subr.bf16.mxu0 %v1141
  %3084 = vmatpush1.bf16.msra.mxu0 %v1140
  %3085 = vmatprep.subr.bf16.mxu0 %v1145
  %3086 = vmatpush1.bf16.msra.mxu0 %v1144
  %3087 = vmatprep.subr.bf16.mxu0 %v1149
  %3088 = vmatpush1.bf16.msra.mxu0 %v1148
  %3089 = vmatprep.subr.bf16.mxu0 %v1153
  %3090 = vmatpush1.bf16.msra.mxu0 %v1152
  %3091 = vmatprep.subr.bf16.mxu0 %v1157
  %3092 = vmatpush1.bf16.msra.mxu0 %v1156
  %3093 = vmatprep.subr.bf16.mxu0 0
  %3094 = vmatpush1.bf16.msra.mxu0 0
  %3095 = vmatprep.subr.bf16.mxu0 0
  %3096 = vmatpush1.bf16.msra.mxu0 0
  %3097 = vmatprep.subr.bf16.mxu0 0
  %3098 = vmatpush1.bf16.msra.mxu0 0
  %3099 = vmatprep.subr.bf16.mxu0 0
  %3100 = vmatpush1.bf16.msra.mxu0 0
  %3101 = vmatprep.subr.bf16.mxu0 0
  %3102 = vmatpush1.bf16.msra.mxu0 0
  %3103 = vmatprep.subr.bf16.mxu0 0
  %3104 = vmatpush1.bf16.msra.mxu0 0
  %3105 = vmatprep.subr.bf16.mxu0 0
  %3106 = vmatpush1.bf16.msra.mxu0 0
  %3107 = vmatprep.subr.bf16.mxu0 0
  %3108 = vmatpush1.bf16.msra.mxu0 0
  %3109 = vmatprep.mubr.bf16.mxu0 0
  %3110 = vmatmul.mubr.bf16.gmra.mrb[0].mxu0 %v3076
  %v3111 = vpop.f32.mrb[0].mxu0
  %v3112 = vadd.f32 0.0, %v3111
  %v3113 = vpop.f32.mrb[0].mxu0
  %v3114 = vadd.f32 0.0, %v3113
  %v3115 = vpop.f32.mrb[0].mxu0
  %v3116 = vadd.f32 0.0, %v3115
  %v3117 = vpop.f32.mrb[0].mxu0
  %v3118 = vadd.f32 0.0, %v3117
  %3119 = vdwg.mxu0
  %3120 = vmatprep.subr.bf16.mxu0 %v1131
  %3121 = vmatpush1.bf16.msra.mxu0 %v1130
  %3122 = vmatprep.subr.bf16.mxu0 %v1135
  %3123 = vmatpush1.bf16.msra.mxu0 %v1134
  %3124 = vmatprep.subr.bf16.mxu0 %v1139
  %3125 = vmatpush1.bf16.msra.mxu0 %v1138
  %3126 = vmatprep.subr.bf16.mxu0 %v1143
  %3127 = vmatpush1.bf16.msra.mxu0 %v1142
  %3128 = vmatprep.subr.bf16.mxu0 %v1147
  %3129 = vmatpush1.bf16.msra.mxu0 %v1146
  %3130 = vmatprep.subr.bf16.mxu0 %v1151
  %3131 = vmatpush1.bf16.msra.mxu0 %v1150
  %3132 = vmatprep.subr.bf16.mxu0 %v1155
  %3133 = vmatpush1.bf16.msra.mxu0 %v1154
  %3134 = vmatprep.subr.bf16.mxu0 %v1159
  %3135 = vmatpush1.bf16.msra.mxu0 %v1158
  %3136 = vmatprep.subr.bf16.mxu0 0
  %3137 = vmatpush1.bf16.msra.mxu0 0
  %3138 = vmatprep.subr.bf16.mxu0 0
  %3139 = vmatpush1.bf16.msra.mxu0 0
  %3140 = vmatprep.subr.bf16.mxu0 0
  %3141 = vmatpush1.bf16.msra.mxu0 0
  %3142 = vmatprep.subr.bf16.mxu0 0
  %3143 = vmatpush1.bf16.msra.mxu0 0
  %3144 = vmatprep.subr.bf16.mxu0 0
  %3145 = vmatpush1.bf16.msra.mxu0 0
  %3146 = vmatprep.subr.bf16.mxu0 0
  %3147 = vmatpush1.bf16.msra.mxu0 0
  %3148 = vmatprep.subr.bf16.mxu0 0
  %3149 = vmatpush1.bf16.msra.mxu0 0
  %3150 = vmatprep.subr.bf16.mxu0 0
  %3151 = vmatpush1.bf16.msra.mxu0 0
  %3152 = vmatprep.mubr.bf16.mxu0 0
  %3153 = vmatmul.mubr.bf16.gmra.mrb[0].mxu0 %v3076
  %v3154 = vpop.f32.mrb[0].mxu0
  %v3155 = vadd.f32 0.0, %v3154
  %v3156 = vpop.f32.mrb[0].mxu0
  %v3157 = vadd.f32 0.0, %v3156
  %v3158 = vpop.f32.mrb[0].mxu0
  %v3159 = vadd.f32 0.0, %v3158
  %v3160 = vpop.f32.mrb[0].mxu0
  %v3161 = vadd.f32 0.0, %v3160
  %3162 = vdwg.mxu0
  %v3163 = vadd.f32 %v3060, %v3112
  %v3164 = vadd.f32 %v3061, %v3114
  %v3165 = vadd.f32 %v3062, %v3155
  %v3166 = vadd.f32 %v3063, %v3157
  %v3167 = vadd.f32 %v3064, %v3116
  %v3168 = vadd.f32 %v3065, %v3118
  %v3169 = vadd.f32 %v3066, %v3159
  %v3170 = vadd.f32 %v3067, %v3161
  %v3171 = vpack.c.bf16 %v3057, %v3056
  %3172 = vmatprep.subr.bf16.mxu0 %v1415
  %3173 = vmatpush1.bf16.msra.mxu0 %v1414
  %3174 = vmatprep.subr.bf16.mxu0 %v1419
  %3175 = vmatpush1.bf16.msra.mxu0 %v1418
  %3176 = vmatprep.subr.bf16.mxu0 %v1423
  %3177 = vmatpush1.bf16.msra.mxu0 %v1422
  %3178 = vmatprep.subr.bf16.mxu0 %v1427
  %3179 = vmatpush1.bf16.msra.mxu0 %v1426
  %3180 = vmatprep.subr.bf16.mxu0 %v1431
  %3181 = vmatpush1.bf16.msra.mxu0 %v1430
  %3182 = vmatprep.subr.bf16.mxu0 %v1435
  %3183 = vmatpush1.bf16.msra.mxu0 %v1434
  %3184 = vmatprep.subr.bf16.mxu0 %v1439
  %3185 = vmatpush1.bf16.msra.mxu0 %v1438
  %3186 = vmatprep.subr.bf16.mxu0 %v1443
  %3187 = vmatpush1.bf16.msra.mxu0 %v1442
  %3188 = vmatprep.subr.bf16.mxu0 0
  %3189 = vmatpush1.bf16.msra.mxu0 0
  %3190 = vmatprep.subr.bf16.mxu0 0
  %3191 = vmatpush1.bf16.msra.mxu0 0
  %3192 = vmatprep.subr.bf16.mxu0 0
  %3193 = vmatpush1.bf16.msra.mxu0 0
  %3194 = vmatprep.subr.bf16.mxu0 0
  %3195 = vmatpush1.bf16.msra.mxu0 0
  %3196 = vmatprep.subr.bf16.mxu0 0
  %3197 = vmatpush1.bf16.msra.mxu0 0
  %3198 = vmatprep.subr.bf16.mxu0 0
  %3199 = vmatpush1.bf16.msra.mxu0 0
  %3200 = vmatprep.subr.bf16.mxu0 0
  %3201 = vmatpush1.bf16.msra.mxu0 0
  %3202 = vmatprep.subr.bf16.mxu0 0
  %3203 = vmatpush1.bf16.msra.mxu0 0
  %3204 = vmatprep.mubr.bf16.mxu0 0
  %3205 = vmatmul.mubr.bf16.gmra.mrb[0].mxu0 %v3171
  %v3206 = vpop.f32.mrb[0].mxu0
  %v3207 = vadd.f32 0.0, %v3206
  %v3208 = vpop.f32.mrb[0].mxu0
  %v3209 = vadd.f32 0.0, %v3208
  %v3210 = vpop.f32.mrb[0].mxu0
  %v3211 = vadd.f32 0.0, %v3210
  %v3212 = vpop.f32.mrb[0].mxu0
  %v3213 = vadd.f32 0.0, %v3212
  %3214 = vdwg.mxu0
  %3215 = vmatprep.subr.bf16.mxu0 %v1417
  %3216 = vmatpush1.bf16.msra.mxu0 %v1416
  %3217 = vmatprep.subr.bf16.mxu0 %v1421
  %3218 = vmatpush1.bf16.msra.mxu0 %v1420
  %3219 = vmatprep.subr.bf16.mxu0 %v1425
  %3220 = vmatpush1.bf16.msra.mxu0 %v1424
  %3221 = vmatprep.subr.bf16.mxu0 %v1429
  %3222 = vmatpush1.bf16.msra.mxu0 %v1428
  %3223 = vmatprep.subr.bf16.mxu0 %v1433
  %3224 = vmatpush1.bf16.msra.mxu0 %v1432
  %3225 = vmatprep.subr.bf16.mxu0 %v1437
  %3226 = vmatpush1.bf16.msra.mxu0 %v1436
  %3227 = vmatprep.subr.bf16.mxu0 %v1441
  %3228 = vmatpush1.bf16.msra.mxu0 %v1440
  %3229 = vmatprep.subr.bf16.mxu0 %v1445
  %3230 = vmatpush1.bf16.msra.mxu0 %v1444
  %3231 = vmatprep.subr.bf16.mxu0 0
  %3232 = vmatpush1.bf16.msra.mxu0 0
  %3233 = vmatprep.subr.bf16.mxu0 0
  %3234 = vmatpush1.bf16.msra.mxu0 0
  %3235 = vmatprep.subr.bf16.mxu0 0
  %3236 = vmatpush1.bf16.msra.mxu0 0
  %3237 = vmatprep.subr.bf16.mxu0 0
  %3238 = vmatpush1.bf16.msra.mxu0 0
  %3239 = vmatprep.subr.bf16.mxu0 0
  %3240 = vmatpush1.bf16.msra.mxu0 0
  %3241 = vmatprep.subr.bf16.mxu0 0
  %3242 = vmatpush1.bf16.msra.mxu0 0
  %3243 = vmatprep.subr.bf16.mxu0 0
  %3244 = vmatpush1.bf16.msra.mxu0 0
  %3245 = vmatprep.subr.bf16.mxu0 0
  %3246 = vmatpush1.bf16.msra.mxu0 0
  %3247 = vmatprep.mubr.bf16.mxu0 0
  %3248 = vmatmul.mubr.bf16.gmra.mrb[0].mxu0 %v3171
  %v3249 = vpop.f32.mrb[0].mxu0
  %v3250 = vadd.f32 0.0, %v3249
  %v3251 = vpop.f32.mrb[0].mxu0
  %v3252 = vadd.f32 0.0, %v3251
  %v3253 = vpop.f32.mrb[0].mxu0
  %v3254 = vadd.f32 0.0, %v3253
  %v3255 = vpop.f32.mrb[0].mxu0
  %v3256 = vadd.f32 0.0, %v3255
  %3257 = vdwg.mxu0
  %v3258 = vadd.f32 %v3068, %v3207
  %v3259 = vadd.f32 %v3069, %v3209
  %v3260 = vadd.f32 %v3070, %v3250
  %v3261 = vadd.f32 %v3071, %v3252
  %v3262 = vadd.f32 %v3072, %v3211
  %v3263 = vadd.f32 %v3073, %v3213
  %v3264 = vadd.f32 %v3074, %v3254
  %v3265 = vadd.f32 %v3075, %v3256
  %v3266 = vxor.u32 %v3163, 2147483648
  %v3267 = vxor.u32 %v3167, 2147483648
  %v3268 = vmul.f32 %v3266, 1.442695
  %v3269 = vpow.pop %v3268
  %v3270 = vmul.f32 %v3267, 1.442695
  %v3271 = vpow.pop %v3270
  %v3272 = vadd.f32 %v3269, 1.0
  %v3273 = vadd.f32 %v3271, 1.0
  %v3274 = vrcp.pop %v3272
  %v3275 = vmul.f32 1.0, %v3274
  %v3276 = vrcp.pop %v3273
  %v3277 = vmul.f32 1.0, %v3276
  %v3278 = vxor.u32 %v3164, 2147483648
  %v3279 = vxor.u32 %v3168, 2147483648
  %v3280 = vmul.f32 %v3278, 1.442695
  %v3281 = vpow.pop %v3280
  %v3282 = vmul.f32 %v3279, 1.442695
  %v3283 = vpow.pop %v3282
  %v3284 = vadd.f32 %v3281, 1.0
  %v3285 = vadd.f32 %v3283, 1.0
  %v3286 = vrcp.pop %v3284
  %v3287 = vmul.f32 1.0, %v3286
  %v3288 = vrcp.pop %v3285
  %v3289 = vmul.f32 1.0, %v3288
  %v3290 = vtanh.pop %v3165
  %v3291 = vtanh.pop %v3169
  %v3292 = vxor.u32 %v3166, 2147483648
  %v3293 = vxor.u32 %v3170, 2147483648
  %v3294 = vmul.f32 %v3292, 1.442695
  %v3295 = vpow.pop %v3294
  %v3296 = vmul.f32 %v3293, 1.442695
  %v3297 = vpow.pop %v3296
  %v3298 = vadd.f32 %v3295, 1.0
  %v3299 = vadd.f32 %v3297, 1.0
  %v3300 = vrcp.pop %v3298
  %v3301 = vmul.f32 1.0, %v3300
  %v3302 = vrcp.pop %v3299
  %v3303 = vmul.f32 1.0, %v3302
  %v3304 = vmul.f32 %v3287, %v2994
  %v3305 = vmul.f32 %v3289, %v2995
  %v3306 = vmul.f32 %v3275, %v3290
  %v3307 = vmul.f32 %v3277, %v3291
  %v3308 = vadd.f32 %v3304, %v3306
  %v3309 = vadd.f32 %v3305, %v3307
  %v3310 = vtanh.pop %v3308
  %v3311 = vtanh.pop %v3309
  %v3312 = vmul.f32 %v3301, %v3310
  %v3313 = vmul.f32 %v3303, %v3311
  %v3314 = vsel %vm3054, %v3312, %v2992
  %v3315 = vsel %vm3055, %v3313, %v2993
  %v3316 = vsel %vm3054, %v3308, %v2994
  %v3317 = vsel %vm3055, %v3309, %v2995
  %v3318 = vxor.u32 %v3258, 2147483648
  %v3319 = vxor.u32 %v3262, 2147483648
  %v3320 = vmul.f32 %v3318, 1.442695
  %v3321 = vpow.pop %v3320
  %v3322 = vmul.f32 %v3319, 1.442695
  %v3323 = vpow.pop %v3322
  %v3324 = vadd.f32 %v3321, 1.0
  %v3325 = vadd.f32 %v3323, 1.0
  %v3326 = vrcp.pop %v3324
  %v3327 = vmul.f32 1.0, %v3326
  %v3328 = vrcp.pop %v3325
  %v3329 = vmul.f32 1.0, %v3328
  %v3330 = vxor.u32 %v3259, 2147483648
  %v3331 = vxor.u32 %v3263, 2147483648
  %v3332 = vmul.f32 %v3330, 1.442695
  %v3333 = vpow.pop %v3332
  %v3334 = vmul.f32 %v3331, 1.442695
  %v3335 = vpow.pop %v3334
  %v3336 = vadd.f32 %v3333, 1.0
  %v3337 = vadd.f32 %v3335, 1.0
  %v3338 = vrcp.pop %v3336
  %v3339 = vmul.f32 1.0, %v3338
  %v3340 = vrcp.pop %v3337
  %v3341 = vmul.f32 1.0, %v3340
  %v3342 = vtanh.pop %v3260
  %v3343 = vtanh.pop %v3264
  %v3344 = vxor.u32 %v3261, 2147483648
  %v3345 = vxor.u32 %v3265, 2147483648
  %v3346 = vmul.f32 %v3344, 1.442695
  %v3347 = vpow.pop %v3346
  %v3348 = vmul.f32 %v3345, 1.442695
  %v3349 = vpow.pop %v3348
  %v3350 = vadd.f32 %v3347, 1.0
  %v3351 = vadd.f32 %v3349, 1.0
  %v3352 = vrcp.pop %v3350
  %v3353 = vmul.f32 1.0, %v3352
  %v3354 = vrcp.pop %v3351
  %v3355 = vmul.f32 1.0, %v3354
  %v3356 = vmul.f32 %v3339, %v3058
  %v3357 = vmul.f32 %v3341, %v3059
  %v3358 = vmul.f32 %v3327, %v3342
  %v3359 = vmul.f32 %v3329, %v3343
  %v3360 = vadd.f32 %v3356, %v3358
  %v3361 = vadd.f32 %v3357, %v3359
  %v3362 = vtanh.pop %v3360
  %v3363 = vtanh.pop %v3361
  %v3364 = vmul.f32 %v3353, %v3362
  %v3365 = vmul.f32 %v3355, %v3363
  %v3366 = vsel %vm2990, %v3364, %v3056
  %v3367 = vsel %vm2991, %v3365, %v3057
  %v3368 = vsel %vm2990, %v3360, %v3058
  %v3369 = vsel %vm2991, %v3361, %v3059
  %v3370 = vld [vmem:[%s2393] sm:$0xff]
  %v3371 = vld [vmem:[%s2393 + $0x8] sm:$0xff]
  %v3372 = vld [vmem:[%s2393 + $0x10] sm:$0xff]
  %v3373 = vld [vmem:[%s2393 + $0x18] sm:$0xff]
  %v3374 = vld [vmem:[%s2393 + $0x40] sm:$0xff]
  %v3375 = vld [vmem:[%s2393 + $0x48] sm:$0xff]
  %v3376 = vld [vmem:[%s2393 + $0x50] sm:$0xff]
  %v3377 = vld [vmem:[%s2393 + $0x58] sm:$0xff]
  %v3378 = vld [vmem:[%s2382 + $0x20] sm:$0xff]
  %v3379 = vld [vmem:[%s2382 + $0x28] sm:$0xff]
  %v3380 = vld [vmem:[%s2382 + $0x30] sm:$0xff]
  %v3381 = vld [vmem:[%s2382 + $0x38] sm:$0xff]
  %v3382 = vld [vmem:[%s2382 + $0x60] sm:$0xff]
  %v3383 = vld [vmem:[%s2382 + $0x68] sm:$0xff]
  %v3384 = vld [vmem:[%s2382 + $0x70] sm:$0xff]
  %v3385 = vld [vmem:[%s2382 + $0x78] sm:$0xff]
  %v3386 = vpack.c.bf16 %v3315, %v3314
  %3387 = vmatprep.subr.bf16.mxu0 %v1129
  %3388 = vmatpush1.bf16.msra.mxu0 %v1128
  %3389 = vmatprep.subr.bf16.mxu0 %v1133
  %3390 = vmatpush1.bf16.msra.mxu0 %v1132
  %3391 = vmatprep.subr.bf16.mxu0 %v1137
  %3392 = vmatpush1.bf16.msra.mxu0 %v1136
  %3393 = vmatprep.subr.bf16.mxu0 %v1141
  %3394 = vmatpush1.bf16.msra.mxu0 %v1140
  %3395 = vmatprep.subr.bf16.mxu0 %v1145
  %3396 = vmatpush1.bf16.msra.mxu0 %v1144
  %3397 = vmatprep.subr.bf16.mxu0 %v1149
  %3398 = vmatpush1.bf16.msra.mxu0 %v1148
  %3399 = vmatprep.subr.bf16.mxu0 %v1153
  %3400 = vmatpush1.bf16.msra.mxu0 %v1152
  %3401 = vmatprep.subr.bf16.mxu0 %v1157
  %3402 = vmatpush1.bf16.msra.mxu0 %v1156
  %3403 = vmatprep.subr.bf16.mxu0 0
  %3404 = vmatpush1.bf16.msra.mxu0 0
  %3405 = vmatprep.subr.bf16.mxu0 0
  %3406 = vmatpush1.bf16.msra.mxu0 0
  %3407 = vmatprep.subr.bf16.mxu0 0
  %3408 = vmatpush1.bf16.msra.mxu0 0
  %3409 = vmatprep.subr.bf16.mxu0 0
  %3410 = vmatpush1.bf16.msra.mxu0 0
  %3411 = vmatprep.subr.bf16.mxu0 0
  %3412 = vmatpush1.bf16.msra.mxu0 0
  %3413 = vmatprep.subr.bf16.mxu0 0
  %3414 = vmatpush1.bf16.msra.mxu0 0
  %3415 = vmatprep.subr.bf16.mxu0 0
  %3416 = vmatpush1.bf16.msra.mxu0 0
  %3417 = vmatprep.subr.bf16.mxu0 0
  %3418 = vmatpush1.bf16.msra.mxu0 0
  %3419 = vmatprep.mubr.bf16.mxu0 0
  %3420 = vmatmul.mubr.bf16.gmra.mrb[0].mxu0 %v3386
  %v3421 = vpop.f32.mrb[0].mxu0
  %v3422 = vadd.f32 0.0, %v3421
  %v3423 = vpop.f32.mrb[0].mxu0
  %v3424 = vadd.f32 0.0, %v3423
  %v3425 = vpop.f32.mrb[0].mxu0
  %v3426 = vadd.f32 0.0, %v3425
  %v3427 = vpop.f32.mrb[0].mxu0
  %v3428 = vadd.f32 0.0, %v3427
  %3429 = vdwg.mxu0
  %3430 = vmatprep.subr.bf16.mxu0 %v1131
  %3431 = vmatpush1.bf16.msra.mxu0 %v1130
  %3432 = vmatprep.subr.bf16.mxu0 %v1135
  %3433 = vmatpush1.bf16.msra.mxu0 %v1134
  %3434 = vmatprep.subr.bf16.mxu0 %v1139
  %3435 = vmatpush1.bf16.msra.mxu0 %v1138
  %3436 = vmatprep.subr.bf16.mxu0 %v1143
  %3437 = vmatpush1.bf16.msra.mxu0 %v1142
  %3438 = vmatprep.subr.bf16.mxu0 %v1147
  %3439 = vmatpush1.bf16.msra.mxu0 %v1146
  %3440 = vmatprep.subr.bf16.mxu0 %v1151
  %3441 = vmatpush1.bf16.msra.mxu0 %v1150
  %3442 = vmatprep.subr.bf16.mxu0 %v1155
  %3443 = vmatpush1.bf16.msra.mxu0 %v1154
  %3444 = vmatprep.subr.bf16.mxu0 %v1159
  %3445 = vmatpush1.bf16.msra.mxu0 %v1158
  %3446 = vmatprep.subr.bf16.mxu0 0
  %3447 = vmatpush1.bf16.msra.mxu0 0
  %3448 = vmatprep.subr.bf16.mxu0 0
  %3449 = vmatpush1.bf16.msra.mxu0 0
  %3450 = vmatprep.subr.bf16.mxu0 0
  %3451 = vmatpush1.bf16.msra.mxu0 0
  %3452 = vmatprep.subr.bf16.mxu0 0
  %3453 = vmatpush1.bf16.msra.mxu0 0
  %3454 = vmatprep.subr.bf16.mxu0 0
  %3455 = vmatpush1.bf16.msra.mxu0 0
  %3456 = vmatprep.subr.bf16.mxu0 0
  %3457 = vmatpush1.bf16.msra.mxu0 0
  %3458 = vmatprep.subr.bf16.mxu0 0
  %3459 = vmatpush1.bf16.msra.mxu0 0
  %3460 = vmatprep.subr.bf16.mxu0 0
  %3461 = vmatpush1.bf16.msra.mxu0 0
  %3462 = vmatprep.mubr.bf16.mxu0 0
  %3463 = vmatmul.mubr.bf16.gmra.mrb[0].mxu0 %v3386
  %v3464 = vpop.f32.mrb[0].mxu0
  %v3465 = vadd.f32 0.0, %v3464
  %v3466 = vpop.f32.mrb[0].mxu0
  %v3467 = vadd.f32 0.0, %v3466
  %v3468 = vpop.f32.mrb[0].mxu0
  %v3469 = vadd.f32 0.0, %v3468
  %v3470 = vpop.f32.mrb[0].mxu0
  %v3471 = vadd.f32 0.0, %v3470
  %3472 = vdwg.mxu0
  %v3473 = vadd.f32 %v3370, %v3422
  %v3474 = vadd.f32 %v3371, %v3424
  %v3475 = vadd.f32 %v3372, %v3465
  %v3476 = vadd.f32 %v3373, %v3467
  %v3477 = vadd.f32 %v3374, %v3426
  %v3478 = vadd.f32 %v3375, %v3428
  %v3479 = vadd.f32 %v3376, %v3469
  %v3480 = vadd.f32 %v3377, %v3471
  %v3481 = vpack.c.bf16 %v3367, %v3366
  %3482 = vmatprep.subr.bf16.mxu0 %v1415
  %3483 = vmatpush1.bf16.msra.mxu0 %v1414
  %3484 = vmatprep.subr.bf16.mxu0 %v1419
  %3485 = vmatpush1.bf16.msra.mxu0 %v1418
  %3486 = vmatprep.subr.bf16.mxu0 %v1423
  %3487 = vmatpush1.bf16.msra.mxu0 %v1422
  %3488 = vmatprep.subr.bf16.mxu0 %v1427
  %3489 = vmatpush1.bf16.msra.mxu0 %v1426
  %3490 = vmatprep.subr.bf16.mxu0 %v1431
  %3491 = vmatpush1.bf16.msra.mxu0 %v1430
  %3492 = vmatprep.subr.bf16.mxu0 %v1435
  %3493 = vmatpush1.bf16.msra.mxu0 %v1434
  %3494 = vmatprep.subr.bf16.mxu0 %v1439
  %3495 = vmatpush1.bf16.msra.mxu0 %v1438
  %3496 = vmatprep.subr.bf16.mxu0 %v1443
  %3497 = vmatpush1.bf16.msra.mxu0 %v1442
  %3498 = vmatprep.subr.bf16.mxu0 0
  %3499 = vmatpush1.bf16.msra.mxu0 0
  %3500 = vmatprep.subr.bf16.mxu0 0
  %3501 = vmatpush1.bf16.msra.mxu0 0
  %3502 = vmatprep.subr.bf16.mxu0 0
  %3503 = vmatpush1.bf16.msra.mxu0 0
  %3504 = vmatprep.subr.bf16.mxu0 0
  %3505 = vmatpush1.bf16.msra.mxu0 0
  %3506 = vmatprep.subr.bf16.mxu0 0
  %3507 = vmatpush1.bf16.msra.mxu0 0
  %3508 = vmatprep.subr.bf16.mxu0 0
  %3509 = vmatpush1.bf16.msra.mxu0 0
  %3510 = vmatprep.subr.bf16.mxu0 0
  %3511 = vmatpush1.bf16.msra.mxu0 0
  %3512 = vmatprep.subr.bf16.mxu0 0
  %3513 = vmatpush1.bf16.msra.mxu0 0
  %3514 = vmatprep.mubr.bf16.mxu0 0
  %3515 = vmatmul.mubr.bf16.gmra.mrb[0].mxu0 %v3481
  %v3516 = vpop.f32.mrb[0].mxu0
  %v3517 = vadd.f32 0.0, %v3516
  %v3518 = vpop.f32.mrb[0].mxu0
  %v3519 = vadd.f32 0.0, %v3518
  %v3520 = vpop.f32.mrb[0].mxu0
  %v3521 = vadd.f32 0.0, %v3520
  %v3522 = vpop.f32.mrb[0].mxu0
  %v3523 = vadd.f32 0.0, %v3522
  %3524 = vdwg.mxu0
  %3525 = vmatprep.subr.bf16.mxu0 %v1417
  %3526 = vmatpush1.bf16.msra.mxu0 %v1416
  %3527 = vmatprep.subr.bf16.mxu0 %v1421
  %3528 = vmatpush1.bf16.msra.mxu0 %v1420
  %3529 = vmatprep.subr.bf16.mxu0 %v1425
  %3530 = vmatpush1.bf16.msra.mxu0 %v1424
  %3531 = vmatprep.subr.bf16.mxu0 %v1429
  %3532 = vmatpush1.bf16.msra.mxu0 %v1428
  %3533 = vmatprep.subr.bf16.mxu0 %v1433
  %3534 = vmatpush1.bf16.msra.mxu0 %v1432
  %3535 = vmatprep.subr.bf16.mxu0 %v1437
  %3536 = vmatpush1.bf16.msra.mxu0 %v1436
  %3537 = vmatprep.subr.bf16.mxu0 %v1441
  %3538 = vmatpush1.bf16.msra.mxu0 %v1440
  %3539 = vmatprep.subr.bf16.mxu0 %v1445
  %3540 = vmatpush1.bf16.msra.mxu0 %v1444
  %3541 = vmatprep.subr.bf16.mxu0 0
  %3542 = vmatpush1.bf16.msra.mxu0 0
  %3543 = vmatprep.subr.bf16.mxu0 0
  %3544 = vmatpush1.bf16.msra.mxu0 0
  %3545 = vmatprep.subr.bf16.mxu0 0
  %3546 = vmatpush1.bf16.msra.mxu0 0
  %3547 = vmatprep.subr.bf16.mxu0 0
  %3548 = vmatpush1.bf16.msra.mxu0 0
  %3549 = vmatprep.subr.bf16.mxu0 0
  %3550 = vmatpush1.bf16.msra.mxu0 0
  %3551 = vmatprep.subr.bf16.mxu0 0
  %3552 = vmatpush1.bf16.msra.mxu0 0
  %3553 = vmatprep.subr.bf16.mxu0 0
  %3554 = vmatpush1.bf16.msra.mxu0 0
  %3555 = vmatprep.subr.bf16.mxu0 0
  %3556 = vmatpush1.bf16.msra.mxu0 0
  %3557 = vmatprep.mubr.bf16.mxu0 0
  %3558 = vmatmul.mubr.bf16.gmra.mrb[0].mxu0 %v3481
  %v3559 = vpop.f32.mrb[0].mxu0
  %v3560 = vadd.f32 0.0, %v3559
  %v3561 = vpop.f32.mrb[0].mxu0
  %v3562 = vadd.f32 0.0, %v3561
  %v3563 = vpop.f32.mrb[0].mxu0
  %v3564 = vadd.f32 0.0, %v3563
  %v3565 = vpop.f32.mrb[0].mxu0
  %v3566 = vadd.f32 0.0, %v3565
  %3567 = vdwg.mxu0
  %v3568 = vadd.f32 %v3378, %v3517
  %v3569 = vadd.f32 %v3379, %v3519
  %v3570 = vadd.f32 %v3380, %v3560
  %v3571 = vadd.f32 %v3381, %v3562
  %v3572 = vadd.f32 %v3382, %v3521
  %v3573 = vadd.f32 %v3383, %v3523
  %v3574 = vadd.f32 %v3384, %v3564
  %v3575 = vadd.f32 %v3385, %v3566
  %v3576 = vxor.u32 %v3473, 2147483648
  %v3577 = vxor.u32 %v3477, 2147483648
  %v3578 = vmul.f32 %v3576, 1.442695
  %v3579 = vpow.pop %v3578
  %v3580 = vmul.f32 %v3577, 1.442695
  %v3581 = vpow.pop %v3580
  %v3582 = vadd.f32 %v3579, 1.0
  %v3583 = vadd.f32 %v3581, 1.0
  %v3584 = vrcp.pop %v3582
  %v3585 = vmul.f32 1.0, %v3584
  %v3586 = vrcp.pop %v3583
  %v3587 = vmul.f32 1.0, %v3586
  %v3588 = vxor.u32 %v3474, 2147483648
  %v3589 = vxor.u32 %v3478, 2147483648
  %v3590 = vmul.f32 %v3588, 1.442695
  %v3591 = vpow.pop %v3590
  %v3592 = vmul.f32 %v3589, 1.442695
  %v3593 = vpow.pop %v3592
  %v3594 = vadd.f32 %v3591, 1.0
  %v3595 = vadd.f32 %v3593, 1.0
  %v3596 = vrcp.pop %v3594
  %v3597 = vmul.f32 1.0, %v3596
  %v3598 = vrcp.pop %v3595
  %v3599 = vmul.f32 1.0, %v3598
  %v3600 = vtanh.pop %v3475
  %v3601 = vtanh.pop %v3479
  %v3602 = vxor.u32 %v3476, 2147483648
  %v3603 = vxor.u32 %v3480, 2147483648
  %v3604 = vmul.f32 %v3602, 1.442695
  %v3605 = vpow.pop %v3604
  %v3606 = vmul.f32 %v3603, 1.442695
  %v3607 = vpow.pop %v3606
  %v3608 = vadd.f32 %v3605, 1.0
  %v3609 = vadd.f32 %v3607, 1.0
  %v3610 = vrcp.pop %v3608
  %v3611 = vmul.f32 1.0, %v3610
  %v3612 = vrcp.pop %v3609
  %v3613 = vmul.f32 1.0, %v3612
  %v3614 = vmul.f32 %v3597, %v3316
  %v3615 = vmul.f32 %v3599, %v3317
  %v3616 = vmul.f32 %v3585, %v3600
  %v3617 = vmul.f32 %v3587, %v3601
  %v3618 = vadd.f32 %v3614, %v3616
  %v3619 = vadd.f32 %v3615, %v3617
  %v3620 = vtanh.pop %v3618
  %v3621 = vtanh.pop %v3619
  %v3622 = vmul.f32 %v3611, %v3620
  %v3623 = vmul.f32 %v3613, %v3621
  %v3624 = vsel %vm2714, %v3622, %v3314
  %v3625 = vsel %vm2715, %v3623, %v3315
  %v3626 = vsel %vm2714, %v3618, %v3316
  %v3627 = vsel %vm2715, %v3619, %v3317
  %v3628 = vxor.u32 %v3568, 2147483648
  %v3629 = vxor.u32 %v3572, 2147483648
  %v3630 = vmul.f32 %v3628, 1.442695
  %v3631 = vpow.pop %v3630
  %v3632 = vmul.f32 %v3629, 1.442695
  %v3633 = vpow.pop %v3632
  %v3634 = vadd.f32 %v3631, 1.0
  %v3635 = vadd.f32 %v3633, 1.0
  %v3636 = vrcp.pop %v3634
  %v3637 = vmul.f32 1.0, %v3636
  %v3638 = vrcp.pop %v3635
  %v3639 = vmul.f32 1.0, %v3638
  %v3640 = vxor.u32 %v3569, 2147483648
  %v3641 = vxor.u32 %v3573, 2147483648
  %v3642 = vmul.f32 %v3640, 1.442695
  %v3643 = vpow.pop %v3642
  %v3644 = vmul.f32 %v3641, 1.442695
  %v3645 = vpow.pop %v3644
  %v3646 = vadd.f32 %v3643, 1.0
  %v3647 = vadd.f32 %v3645, 1.0
  %v3648 = vrcp.pop %v3646
  %v3649 = vmul.f32 1.0, %v3648
  %v3650 = vrcp.pop %v3647
  %v3651 = vmul.f32 1.0, %v3650
  %v3652 = vtanh.pop %v3570
  %v3653 = vtanh.pop %v3574
  %v3654 = vxor.u32 %v3571, 2147483648
  %v3655 = vxor.u32 %v3575, 2147483648
  %v3656 = vmul.f32 %v3654, 1.442695
  %v3657 = vpow.pop %v3656
  %v3658 = vmul.f32 %v3655, 1.442695
  %v3659 = vpow.pop %v3658
  %v3660 = vadd.f32 %v3657, 1.0
  %v3661 = vadd.f32 %v3659, 1.0
  %v3662 = vrcp.pop %v3660
  %v3663 = vmul.f32 1.0, %v3662
  %v3664 = vrcp.pop %v3661
  %v3665 = vmul.f32 1.0, %v3664
  %v3666 = vmul.f32 %v3649, %v3368
  %v3667 = vmul.f32 %v3651, %v3369
  %v3668 = vmul.f32 %v3637, %v3652
  %v3669 = vmul.f32 %v3639, %v3653
  %v3670 = vadd.f32 %v3666, %v3668
  %v3671 = vadd.f32 %v3667, %v3669
  %v3672 = vtanh.pop %v3670
  %v3673 = vtanh.pop %v3671
  %v3674 = vmul.f32 %v3663, %v3672
  %v3675 = vmul.f32 %v3665, %v3673
  %v3676 = vsel %vm2650, %v3674, %v3366
  %v3677 = vsel %vm2651, %v3675, %v3367
  %v3678 = vsel %vm2650, %v3670, %v3368
  %v3679 = vsel %vm2651, %v3671, %v3369
  %v3680 = vld [vmem:[%s2053] sm:$0xff]
  %v3681 = vld [vmem:[%s2053 + $0x8] sm:$0xff]
  %v3682 = vld [vmem:[%s2053 + $0x10] sm:$0xff]
  %v3683 = vld [vmem:[%s2053 + $0x18] sm:$0xff]
  %v3684 = vld [vmem:[%s2053 + $0x40] sm:$0xff]
  %v3685 = vld [vmem:[%s2053 + $0x48] sm:$0xff]
  %v3686 = vld [vmem:[%s2053 + $0x50] sm:$0xff]
  %v3687 = vld [vmem:[%s2053 + $0x58] sm:$0xff]
  %v3688 = vld [vmem:[%s2042 + $0x20] sm:$0xff]
  %v3689 = vld [vmem:[%s2042 + $0x28] sm:$0xff]
  %v3690 = vld [vmem:[%s2042 + $0x30] sm:$0xff]
  %v3691 = vld [vmem:[%s2042 + $0x38] sm:$0xff]
  %v3692 = vld [vmem:[%s2042 + $0x60] sm:$0xff]
  %v3693 = vld [vmem:[%s2042 + $0x68] sm:$0xff]
  %v3694 = vld [vmem:[%s2042 + $0x70] sm:$0xff]
  %v3695 = vld [vmem:[%s2042 + $0x78] sm:$0xff]
  %v3696 = vpack.c.bf16 %v3625, %v3624
  %3697 = vmatprep.subr.bf16.mxu0 %v1129
  %3698 = vmatpush1.bf16.msra.mxu0 %v1128
  %3699 = vmatprep.subr.bf16.mxu0 %v1133
  %3700 = vmatpush1.bf16.msra.mxu0 %v1132
  %3701 = vmatprep.subr.bf16.mxu0 %v1137
  %3702 = vmatpush1.bf16.msra.mxu0 %v1136
  %3703 = vmatprep.subr.bf16.mxu0 %v1141
  %3704 = vmatpush1.bf16.msra.mxu0 %v1140
  %3705 = vmatprep.subr.bf16.mxu0 %v1145
  %3706 = vmatpush1.bf16.msra.mxu0 %v1144
  %3707 = vmatprep.subr.bf16.mxu0 %v1149
  %3708 = vmatpush1.bf16.msra.mxu0 %v1148
  %3709 = vmatprep.subr.bf16.mxu0 %v1153
  %3710 = vmatpush1.bf16.msra.mxu0 %v1152
  %3711 = vmatprep.subr.bf16.mxu0 %v1157
  %3712 = vmatpush1.bf16.msra.mxu0 %v1156
  %3713 = vmatprep.subr.bf16.mxu0 0
  %3714 = vmatpush1.bf16.msra.mxu0 0
  %3715 = vmatprep.subr.bf16.mxu0 0
  %3716 = vmatpush1.bf16.msra.mxu0 0
  %3717 = vmatprep.subr.bf16.mxu0 0
  %3718 = vmatpush1.bf16.msra.mxu0 0
  %3719 = vmatprep.subr.bf16.mxu0 0
  %3720 = vmatpush1.bf16.msra.mxu0 0
  %3721 = vmatprep.subr.bf16.mxu0 0
  %3722 = vmatpush1.bf16.msra.mxu0 0
  %3723 = vmatprep.subr.bf16.mxu0 0
  %3724 = vmatpush1.bf16.msra.mxu0 0
  %3725 = vmatprep.subr.bf16.mxu0 0
  %3726 = vmatpush1.bf16.msra.mxu0 0
  %3727 = vmatprep.subr.bf16.mxu0 0
  %3728 = vmatpush1.bf16.msra.mxu0 0
  %3729 = vmatprep.mubr.bf16.mxu0 0
  %3730 = vmatmul.mubr.bf16.gmra.mrb[0].mxu0 %v3696
  %v3731 = vpop.f32.mrb[0].mxu0
  %v3732 = vadd.f32 0.0, %v3731
  %v3733 = vpop.f32.mrb[0].mxu0
  %v3734 = vadd.f32 0.0, %v3733
  %v3735 = vpop.f32.mrb[0].mxu0
  %v3736 = vadd.f32 0.0, %v3735
  %v3737 = vpop.f32.mrb[0].mxu0
  %v3738 = vadd.f32 0.0, %v3737
  %3739 = vdwg.mxu0
  %3740 = vmatprep.subr.bf16.mxu0 %v1131
  %3741 = vmatpush1.bf16.msra.mxu0 %v1130
  %3742 = vmatprep.subr.bf16.mxu0 %v1135
  %3743 = vmatpush1.bf16.msra.mxu0 %v1134
  %3744 = vmatprep.subr.bf16.mxu0 %v1139
  %3745 = vmatpush1.bf16.msra.mxu0 %v1138
  %3746 = vmatprep.subr.bf16.mxu0 %v1143
  %3747 = vmatpush1.bf16.msra.mxu0 %v1142
  %3748 = vmatprep.subr.bf16.mxu0 %v1147
  %3749 = vmatpush1.bf16.msra.mxu0 %v1146
  %3750 = vmatprep.subr.bf16.mxu0 %v1151
  %3751 = vmatpush1.bf16.msra.mxu0 %v1150
  %3752 = vmatprep.subr.bf16.mxu0 %v1155
  %3753 = vmatpush1.bf16.msra.mxu0 %v1154
  %3754 = vmatprep.subr.bf16.mxu0 %v1159
  %3755 = vmatpush1.bf16.msra.mxu0 %v1158
  %3756 = vmatprep.subr.bf16.mxu0 0
  %3757 = vmatpush1.bf16.msra.mxu0 0
  %3758 = vmatprep.subr.bf16.mxu0 0
  %3759 = vmatpush1.bf16.msra.mxu0 0
  %3760 = vmatprep.subr.bf16.mxu0 0
  %3761 = vmatpush1.bf16.msra.mxu0 0
  %3762 = vmatprep.subr.bf16.mxu0 0
  %3763 = vmatpush1.bf16.msra.mxu0 0
  %3764 = vmatprep.subr.bf16.mxu0 0
  %3765 = vmatpush1.bf16.msra.mxu0 0
  %3766 = vmatprep.subr.bf16.mxu0 0
  %3767 = vmatpush1.bf16.msra.mxu0 0
  %3768 = vmatprep.subr.bf16.mxu0 0
  %3769 = vmatpush1.bf16.msra.mxu0 0
  %3770 = vmatprep.subr.bf16.mxu0 0
  %3771 = vmatpush1.bf16.msra.mxu0 0
  %3772 = vmatprep.mubr.bf16.mxu0 0
  %3773 = vmatmul.mubr.bf16.gmra.mrb[0].mxu0 %v3696
  %v3774 = vpop.f32.mrb[0].mxu0
  %v3775 = vadd.f32 0.0, %v3774
  %v3776 = vpop.f32.mrb[0].mxu0
  %v3777 = vadd.f32 0.0, %v3776
  %v3778 = vpop.f32.mrb[0].mxu0
  %v3779 = vadd.f32 0.0, %v3778
  %v3780 = vpop.f32.mrb[0].mxu0
  %v3781 = vadd.f32 0.0, %v3780
  %3782 = vdwg.mxu0
  %v3783 = vadd.f32 %v3680, %v3732
  %v3784 = vadd.f32 %v3681, %v3734
  %v3785 = vadd.f32 %v3682, %v3775
  %v3786 = vadd.f32 %v3683, %v3777
  %v3787 = vadd.f32 %v3684, %v3736
  %v3788 = vadd.f32 %v3685, %v3738
  %v3789 = vadd.f32 %v3686, %v3779
  %v3790 = vadd.f32 %v3687, %v3781
  %v3791 = vpack.c.bf16 %v3677, %v3676
  %3792 = vmatprep.subr.bf16.mxu0 %v1415
  %3793 = vmatpush1.bf16.msra.mxu0 %v1414
  %3794 = vmatprep.subr.bf16.mxu0 %v1419
  %3795 = vmatpush1.bf16.msra.mxu0 %v1418
  %3796 = vmatprep.subr.bf16.mxu0 %v1423
  %3797 = vmatpush1.bf16.msra.mxu0 %v1422
  %3798 = vmatprep.subr.bf16.mxu0 %v1427
  %3799 = vmatpush1.bf16.msra.mxu0 %v1426
  %3800 = vmatprep.subr.bf16.mxu0 %v1431
  %3801 = vmatpush1.bf16.msra.mxu0 %v1430
  %3802 = vmatprep.subr.bf16.mxu0 %v1435
  %3803 = vmatpush1.bf16.msra.mxu0 %v1434
  %3804 = vmatprep.subr.bf16.mxu0 %v1439
  %3805 = vmatpush1.bf16.msra.mxu0 %v1438
  %3806 = vmatprep.subr.bf16.mxu0 %v1443
  %3807 = vmatpush1.bf16.msra.mxu0 %v1442
  %3808 = vmatprep.subr.bf16.mxu0 0
  %3809 = vmatpush1.bf16.msra.mxu0 0
  %3810 = vmatprep.subr.bf16.mxu0 0
  %3811 = vmatpush1.bf16.msra.mxu0 0
  %3812 = vmatprep.subr.bf16.mxu0 0
  %3813 = vmatpush1.bf16.msra.mxu0 0
  %3814 = vmatprep.subr.bf16.mxu0 0
  %3815 = vmatpush1.bf16.msra.mxu0 0
  %3816 = vmatprep.subr.bf16.mxu0 0
  %3817 = vmatpush1.bf16.msra.mxu0 0
  %3818 = vmatprep.subr.bf16.mxu0 0
  %3819 = vmatpush1.bf16.msra.mxu0 0
  %3820 = vmatprep.subr.bf16.mxu0 0
  %3821 = vmatpush1.bf16.msra.mxu0 0
  %3822 = vmatprep.subr.bf16.mxu0 0
  %3823 = vmatpush1.bf16.msra.mxu0 0
  %3824 = vmatprep.mubr.bf16.mxu0 0
  %3825 = vmatmul.mubr.bf16.gmra.mrb[0].mxu0 %v3791
  %v3826 = vpop.f32.mrb[0].mxu0
  %v3827 = vadd.f32 0.0, %v3826
  %v3828 = vpop.f32.mrb[0].mxu0
  %v3829 = vadd.f32 0.0, %v3828
  %v3830 = vpop.f32.mrb[0].mxu0
  %v3831 = vadd.f32 0.0, %v3830
  %v3832 = vpop.f32.mrb[0].mxu0
  %v3833 = vadd.f32 0.0, %v3832
  %3834 = vdwg.mxu0
  %3835 = vmatprep.subr.bf16.mxu0 %v1417
  %3836 = vmatpush1.bf16.msra.mxu0 %v1416
  %3837 = vmatprep.subr.bf16.mxu0 %v1421
  %3838 = vmatpush1.bf16.msra.mxu0 %v1420
  %3839 = vmatprep.subr.bf16.mxu0 %v1425
  %3840 = vmatpush1.bf16.msra.mxu0 %v1424
  %3841 = vmatprep.subr.bf16.mxu0 %v1429
  %3842 = vmatpush1.bf16.msra.mxu0 %v1428
  %3843 = vmatprep.subr.bf16.mxu0 %v1433
  %3844 = vmatpush1.bf16.msra.mxu0 %v1432
  %3845 = vmatprep.subr.bf16.mxu0 %v1437
  %3846 = vmatpush1.bf16.msra.mxu0 %v1436
  %3847 = vmatprep.subr.bf16.mxu0 %v1441
  %3848 = vmatpush1.bf16.msra.mxu0 %v1440
  %3849 = vmatprep.subr.bf16.mxu0 %v1445
  %3850 = vmatpush1.bf16.msra.mxu0 %v1444
  %3851 = vmatprep.subr.bf16.mxu0 0
  %3852 = vmatpush1.bf16.msra.mxu0 0
  %3853 = vmatprep.subr.bf16.mxu0 0
  %3854 = vmatpush1.bf16.msra.mxu0 0
  %3855 = vmatprep.subr.bf16.mxu0 0
  %3856 = vmatpush1.bf16.msra.mxu0 0
  %3857 = vmatprep.subr.bf16.mxu0 0
  %3858 = vmatpush1.bf16.msra.mxu0 0
  %3859 = vmatprep.subr.bf16.mxu0 0
  %3860 = vmatpush1.bf16.msra.mxu0 0
  %3861 = vmatprep.subr.bf16.mxu0 0
  %3862 = vmatpush1.bf16.msra.mxu0 0
  %3863 = vmatprep.subr.bf16.mxu0 0
  %3864 = vmatpush1.bf16.msra.mxu0 0
  %3865 = vmatprep.subr.bf16.mxu0 0
  %3866 = vmatpush1.bf16.msra.mxu0 0
  %3867 = vmatprep.mubr.bf16.mxu0 0
  %3868 = vmatmul.mubr.bf16.gmra.mrb[0].mxu0 %v3791
  %v3869 = vpop.f32.mrb[0].mxu0
  %v3870 = vadd.f32 0.0, %v3869
  %v3871 = vpop.f32.mrb[0].mxu0
  %v3872 = vadd.f32 0.0, %v3871
  %v3873 = vpop.f32.mrb[0].mxu0
  %v3874 = vadd.f32 0.0, %v3873
  %v3875 = vpop.f32.mrb[0].mxu0
  %v3876 = vadd.f32 0.0, %v3875
  %3877 = vdwg.mxu0
  %v3878 = vadd.f32 %v3688, %v3827
  %v3879 = vadd.f32 %v3689, %v3829
  %v3880 = vadd.f32 %v3690, %v3870
  %v3881 = vadd.f32 %v3691, %v3872
  %v3882 = vadd.f32 %v3692, %v3831
  %v3883 = vadd.f32 %v3693, %v3833
  %v3884 = vadd.f32 %v3694, %v3874
  %v3885 = vadd.f32 %v3695, %v3876
  %v3886 = vxor.u32 %v3783, 2147483648
  %v3887 = vxor.u32 %v3787, 2147483648
  %v3888 = vmul.f32 %v3886, 1.442695
  %v3889 = vpow.pop %v3888
  %v3890 = vmul.f32 %v3887, 1.442695
  %v3891 = vpow.pop %v3890
  %v3892 = vadd.f32 %v3889, 1.0
  %v3893 = vadd.f32 %v3891, 1.0
  %v3894 = vrcp.pop %v3892
  %v3895 = vmul.f32 1.0, %v3894
  %v3896 = vrcp.pop %v3893
  %v3897 = vmul.f32 1.0, %v3896
  %v3898 = vxor.u32 %v3784, 2147483648
  %v3899 = vxor.u32 %v3788, 2147483648
  %v3900 = vmul.f32 %v3898, 1.442695
  %v3901 = vpow.pop %v3900
  %v3902 = vmul.f32 %v3899, 1.442695
  %v3903 = vpow.pop %v3902
  %v3904 = vadd.f32 %v3901, 1.0
  %v3905 = vadd.f32 %v3903, 1.0
  %v3906 = vrcp.pop %v3904
  %v3907 = vmul.f32 1.0, %v3906
  %v3908 = vrcp.pop %v3905
  %v3909 = vmul.f32 1.0, %v3908
  %v3910 = vtanh.pop %v3785
  %v3911 = vtanh.pop %v3789
  %v3912 = vxor.u32 %v3786, 2147483648
  %v3913 = vxor.u32 %v3790, 2147483648
  %v3914 = vmul.f32 %v3912, 1.442695
  %v3915 = vpow.pop %v3914
  %v3916 = vmul.f32 %v3913, 1.442695
  %v3917 = vpow.pop %v3916
  %v3918 = vadd.f32 %v3915, 1.0
  %v3919 = vadd.f32 %v3917, 1.0
  %v3920 = vrcp.pop %v3918
  %v3921 = vmul.f32 1.0, %v3920
  %v3922 = vrcp.pop %v3919
  %v3923 = vmul.f32 1.0, %v3922
  %v3924 = vmul.f32 %v3907, %v3626
  %v3925 = vmul.f32 %v3909, %v3627
  %v3926 = vmul.f32 %v3895, %v3910
  %v3927 = vmul.f32 %v3897, %v3911
  %v3928 = vadd.f32 %v3924, %v3926
  %v3929 = vadd.f32 %v3925, %v3927
  %v3930 = vtanh.pop %v3928
  %v3931 = vtanh.pop %v3929
  %v3932 = vmul.f32 %v3921, %v3930
  %v3933 = vmul.f32 %v3923, %v3931
  %v3934 = vsel %vm2374, %v3932, %v3624
  %v3935 = vsel %vm2375, %v3933, %v3625
  %v3936 = vsel %vm2374, %v3928, %v3626
  %v3937 = vsel %vm2375, %v3929, %v3627
  %v3938 = vxor.u32 %v3878, 2147483648
  %v3939 = vxor.u32 %v3882, 2147483648
  %v3940 = vmul.f32 %v3938, 1.442695
  %v3941 = vpow.pop %v3940
  %v3942 = vmul.f32 %v3939, 1.442695
  %v3943 = vpow.pop %v3942
  %v3944 = vadd.f32 %v3941, 1.0
  %v3945 = vadd.f32 %v3943, 1.0
  %v3946 = vrcp.pop %v3944
  %v3947 = vmul.f32 1.0, %v3946
  %v3948 = vrcp.pop %v3945
  %v3949 = vmul.f32 1.0, %v3948
  %v3950 = vxor.u32 %v3879, 2147483648
  %v3951 = vxor.u32 %v3883, 2147483648
  %v3952 = vmul.f32 %v3950, 1.442695
  %v3953 = vpow.pop %v3952
  %v3954 = vmul.f32 %v3951, 1.442695
  %v3955 = vpow.pop %v3954
  %v3956 = vadd.f32 %v3953, 1.0
  %v3957 = vadd.f32 %v3955, 1.0
  %v3958 = vrcp.pop %v3956
  %v3959 = vmul.f32 1.0, %v3958
  %v3960 = vrcp.pop %v3957
  %v3961 = vmul.f32 1.0, %v3960
  %v3962 = vtanh.pop %v3880
  %v3963 = vtanh.pop %v3884
  %v3964 = vxor.u32 %v3881, 2147483648
  %v3965 = vxor.u32 %v3885, 2147483648
  %v3966 = vmul.f32 %v3964, 1.442695
  %v3967 = vpow.pop %v3966
  %v3968 = vmul.f32 %v3965, 1.442695
  %v3969 = vpow.pop %v3968
  %v3970 = vadd.f32 %v3967, 1.0
  %v3971 = vadd.f32 %v3969, 1.0
  %v3972 = vrcp.pop %v3970
  %v3973 = vmul.f32 1.0, %v3972
  %v3974 = vrcp.pop %v3971
  %v3975 = vmul.f32 1.0, %v3974
  %v3976 = vmul.f32 %v3959, %v3678
  %v3977 = vmul.f32 %v3961, %v3679
  %v3978 = vmul.f32 %v3947, %v3962
  %v3979 = vmul.f32 %v3949, %v3963
  %v3980 = vadd.f32 %v3976, %v3978
  %v3981 = vadd.f32 %v3977, %v3979
  %v3982 = vtanh.pop %v3980
  %v3983 = vtanh.pop %v3981
  %v3984 = vmul.f32 %v3973, %v3982
  %v3985 = vmul.f32 %v3975, %v3983
  %v3986 = vsel %vm2310, %v3984, %v3676
  %v3987 = vsel %vm2311, %v3985, %v3677
  %v3988 = vsel %vm2310, %v3980, %v3678
  %v3989 = vsel %vm2311, %v3981, %v3679
  %v3990 = vld [vmem:[%s1713] sm:$0xff]
  %v3991 = vld [vmem:[%s1713 + $0x8] sm:$0xff]
  %v3992 = vld [vmem:[%s1713 + $0x10] sm:$0xff]
  %v3993 = vld [vmem:[%s1713 + $0x18] sm:$0xff]
  %v3994 = vld [vmem:[%s1713 + $0x40] sm:$0xff]
  %v3995 = vld [vmem:[%s1713 + $0x48] sm:$0xff]
  %v3996 = vld [vmem:[%s1713 + $0x50] sm:$0xff]
  %v3997 = vld [vmem:[%s1713 + $0x58] sm:$0xff]
  %v3998 = vld [vmem:[%s1702 + $0x20] sm:$0xff]
  %v3999 = vld [vmem:[%s1702 + $0x28] sm:$0xff]
  %v4000 = vld [vmem:[%s1702 + $0x30] sm:$0xff]
  %v4001 = vld [vmem:[%s1702 + $0x38] sm:$0xff]
  %v4002 = vld [vmem:[%s1702 + $0x60] sm:$0xff]
  %v4003 = vld [vmem:[%s1702 + $0x68] sm:$0xff]
  %v4004 = vld [vmem:[%s1702 + $0x70] sm:$0xff]
  %v4005 = vld [vmem:[%s1702 + $0x78] sm:$0xff]
  %v4006 = vpack.c.bf16 %v3935, %v3934
  %4007 = vmatprep.subr.bf16.mxu0 %v1129
  %4008 = vmatpush1.bf16.msra.mxu0 %v1128
  %4009 = vmatprep.subr.bf16.mxu0 %v1133
  %4010 = vmatpush1.bf16.msra.mxu0 %v1132
  %4011 = vmatprep.subr.bf16.mxu0 %v1137
  %4012 = vmatpush1.bf16.msra.mxu0 %v1136
  %4013 = vmatprep.subr.bf16.mxu0 %v1141
  %4014 = vmatpush1.bf16.msra.mxu0 %v1140
  %4015 = vmatprep.subr.bf16.mxu0 %v1145
  %4016 = vmatpush1.bf16.msra.mxu0 %v1144
  %4017 = vmatprep.subr.bf16.mxu0 %v1149
  %4018 = vmatpush1.bf16.msra.mxu0 %v1148
  %4019 = vmatprep.subr.bf16.mxu0 %v1153
  %4020 = vmatpush1.bf16.msra.mxu0 %v1152
  %4021 = vmatprep.subr.bf16.mxu0 %v1157
  %4022 = vmatpush1.bf16.msra.mxu0 %v1156
  %4023 = vmatprep.subr.bf16.mxu0 0
  %4024 = vmatpush1.bf16.msra.mxu0 0
  %4025 = vmatprep.subr.bf16.mxu0 0
  %4026 = vmatpush1.bf16.msra.mxu0 0
  %4027 = vmatprep.subr.bf16.mxu0 0
  %4028 = vmatpush1.bf16.msra.mxu0 0
  %4029 = vmatprep.subr.bf16.mxu0 0
  %4030 = vmatpush1.bf16.msra.mxu0 0
  %4031 = vmatprep.subr.bf16.mxu0 0
  %4032 = vmatpush1.bf16.msra.mxu0 0
  %4033 = vmatprep.subr.bf16.mxu0 0
  %4034 = vmatpush1.bf16.msra.mxu0 0
  %4035 = vmatprep.subr.bf16.mxu0 0
  %4036 = vmatpush1.bf16.msra.mxu0 0
  %4037 = vmatprep.subr.bf16.mxu0 0
  %4038 = vmatpush1.bf16.msra.mxu0 0
  %4039 = vmatprep.mubr.bf16.mxu0 0
  %4040 = vmatmul.mubr.bf16.gmra.mrb[0].mxu0 %v4006
  %v4041 = vpop.f32.mrb[0].mxu0
  %v4042 = vadd.f32 0.0, %v4041
  %v4043 = vpop.f32.mrb[0].mxu0
  %v4044 = vadd.f32 0.0, %v4043
  %v4045 = vpop.f32.mrb[0].mxu0
  %v4046 = vadd.f32 0.0, %v4045
  %v4047 = vpop.f32.mrb[0].mxu0
  %v4048 = vadd.f32 0.0, %v4047
  %4049 = vdwg.mxu0
  %4050 = vmatprep.subr.bf16.mxu0 %v1131
  %4051 = vmatpush1.bf16.msra.mxu0 %v1130
  %4052 = vmatprep.subr.bf16.mxu0 %v1135
  %4053 = vmatpush1.bf16.msra.mxu0 %v1134
  %4054 = vmatprep.subr.bf16.mxu0 %v1139
  %4055 = vmatpush1.bf16.msra.mxu0 %v1138
  %4056 = vmatprep.subr.bf16.mxu0 %v1143
  %4057 = vmatpush1.bf16.msra.mxu0 %v1142
  %4058 = vmatprep.subr.bf16.mxu0 %v1147
  %4059 = vmatpush1.bf16.msra.mxu0 %v1146
  %4060 = vmatprep.subr.bf16.mxu0 %v1151
  %4061 = vmatpush1.bf16.msra.mxu0 %v1150
  %4062 = vmatprep.subr.bf16.mxu0 %v1155
  %4063 = vmatpush1.bf16.msra.mxu0 %v1154
  %4064 = vmatprep.subr.bf16.mxu0 %v1159
  %4065 = vmatpush1.bf16.msra.mxu0 %v1158
  %4066 = vmatprep.subr.bf16.mxu0 0
  %4067 = vmatpush1.bf16.msra.mxu0 0
  %4068 = vmatprep.subr.bf16.mxu0 0
  %4069 = vmatpush1.bf16.msra.mxu0 0
  %4070 = vmatprep.subr.bf16.mxu0 0
  %4071 = vmatpush1.bf16.msra.mxu0 0
  %4072 = vmatprep.subr.bf16.mxu0 0
  %4073 = vmatpush1.bf16.msra.mxu0 0
  %4074 = vmatprep.subr.bf16.mxu0 0
  %4075 = vmatpush1.bf16.msra.mxu0 0
  %4076 = vmatprep.subr.bf16.mxu0 0
  %4077 = vmatpush1.bf16.msra.mxu0 0
  %4078 = vmatprep.subr.bf16.mxu0 0
  %4079 = vmatpush1.bf16.msra.mxu0 0
  %4080 = vmatprep.subr.bf16.mxu0 0
  %4081 = vmatpush1.bf16.msra.mxu0 0
  %4082 = vmatprep.mubr.bf16.mxu0 0
  %4083 = vmatmul.mubr.bf16.gmra.mrb[0].mxu0 %v4006
  %v4084 = vpop.f32.mrb[0].mxu0
  %v4085 = vadd.f32 0.0, %v4084
  %v4086 = vpop.f32.mrb[0].mxu0
  %v4087 = vadd.f32 0.0, %v4086
  %v4088 = vpop.f32.mrb[0].mxu0
  %v4089 = vadd.f32 0.0, %v4088
  %v4090 = vpop.f32.mrb[0].mxu0
  %v4091 = vadd.f32 0.0, %v4090
  %4092 = vdwg.mxu0
  %v4093 = vadd.f32 %v3990, %v4042
  %v4094 = vadd.f32 %v3991, %v4044
  %v4095 = vadd.f32 %v3992, %v4085
  %v4096 = vadd.f32 %v3993, %v4087
  %v4097 = vadd.f32 %v3994, %v4046
  %v4098 = vadd.f32 %v3995, %v4048
  %v4099 = vadd.f32 %v3996, %v4089
  %v4100 = vadd.f32 %v3997, %v4091
  %v4101 = vpack.c.bf16 %v3987, %v3986
  %4102 = vmatprep.subr.bf16.mxu0 %v1415
  %4103 = vmatpush1.bf16.msra.mxu0 %v1414
  %4104 = vmatprep.subr.bf16.mxu0 %v1419
  %4105 = vmatpush1.bf16.msra.mxu0 %v1418
  %4106 = vmatprep.subr.bf16.mxu0 %v1423
  %4107 = vmatpush1.bf16.msra.mxu0 %v1422
  %4108 = vmatprep.subr.bf16.mxu0 %v1427
  %4109 = vmatpush1.bf16.msra.mxu0 %v1426
  %4110 = vmatprep.subr.bf16.mxu0 %v1431
  %4111 = vmatpush1.bf16.msra.mxu0 %v1430
  %4112 = vmatprep.subr.bf16.mxu0 %v1435
  %4113 = vmatpush1.bf16.msra.mxu0 %v1434
  %4114 = vmatprep.subr.bf16.mxu0 %v1439
  %4115 = vmatpush1.bf16.msra.mxu0 %v1438
  %4116 = vmatprep.subr.bf16.mxu0 %v1443
  %4117 = vmatpush1.bf16.msra.mxu0 %v1442
  %4118 = vmatprep.subr.bf16.mxu0 0
  %4119 = vmatpush1.bf16.msra.mxu0 0
  %4120 = vmatprep.subr.bf16.mxu0 0
  %4121 = vmatpush1.bf16.msra.mxu0 0
  %4122 = vmatprep.subr.bf16.mxu0 0
  %4123 = vmatpush1.bf16.msra.mxu0 0
  %4124 = vmatprep.subr.bf16.mxu0 0
  %4125 = vmatpush1.bf16.msra.mxu0 0
  %4126 = vmatprep.subr.bf16.mxu0 0
  %4127 = vmatpush1.bf16.msra.mxu0 0
  %4128 = vmatprep.subr.bf16.mxu0 0
  %4129 = vmatpush1.bf16.msra.mxu0 0
  %4130 = vmatprep.subr.bf16.mxu0 0
  %4131 = vmatpush1.bf16.msra.mxu0 0
  %4132 = vmatprep.subr.bf16.mxu0 0
  %4133 = vmatpush1.bf16.msra.mxu0 0
  %4134 = vmatprep.mubr.bf16.mxu0 0
  %4135 = vmatmul.mubr.bf16.gmra.mrb[0].mxu0 %v4101
  %v4136 = vpop.f32.mrb[0].mxu0
  %v4137 = vadd.f32 0.0, %v4136
  %v4138 = vpop.f32.mrb[0].mxu0
  %v4139 = vadd.f32 0.0, %v4138
  %v4140 = vpop.f32.mrb[0].mxu0
  %v4141 = vadd.f32 0.0, %v4140
  %v4142 = vpop.f32.mrb[0].mxu0
  %v4143 = vadd.f32 0.0, %v4142
  %4144 = vdwg.mxu0
  %4145 = vmatprep.subr.bf16.mxu0 %v1417
  %4146 = vmatpush1.bf16.msra.mxu0 %v1416
  %4147 = vmatprep.subr.bf16.mxu0 %v1421
  %4148 = vmatpush1.bf16.msra.mxu0 %v1420
  %4149 = vmatprep.subr.bf16.mxu0 %v1425
  %4150 = vmatpush1.bf16.msra.mxu0 %v1424
  %4151 = vmatprep.subr.bf16.mxu0 %v1429
  %4152 = vmatpush1.bf16.msra.mxu0 %v1428
  %4153 = vmatprep.subr.bf16.mxu0 %v1433
  %4154 = vmatpush1.bf16.msra.mxu0 %v1432
  %4155 = vmatprep.subr.bf16.mxu0 %v1437
  %4156 = vmatpush1.bf16.msra.mxu0 %v1436
  %4157 = vmatprep.subr.bf16.mxu0 %v1441
  %4158 = vmatpush1.bf16.msra.mxu0 %v1440
  %4159 = vmatprep.subr.bf16.mxu0 %v1445
  %4160 = vmatpush1.bf16.msra.mxu0 %v1444
  %4161 = vmatprep.subr.bf16.mxu0 0
  %4162 = vmatpush1.bf16.msra.mxu0 0
  %4163 = vmatprep.subr.bf16.mxu0 0
  %4164 = vmatpush1.bf16.msra.mxu0 0
  %4165 = vmatprep.subr.bf16.mxu0 0
  %4166 = vmatpush1.bf16.msra.mxu0 0
  %4167 = vmatprep.subr.bf16.mxu0 0
  %4168 = vmatpush1.bf16.msra.mxu0 0
  %4169 = vmatprep.subr.bf16.mxu0 0
  %4170 = vmatpush1.bf16.msra.mxu0 0
  %4171 = vmatprep.subr.bf16.mxu0 0
  %4172 = vmatpush1.bf16.msra.mxu0 0
  %4173 = vmatprep.subr.bf16.mxu0 0
  %4174 = vmatpush1.bf16.msra.mxu0 0
  %4175 = vmatprep.subr.bf16.mxu0 0
  %4176 = vmatpush1.bf16.msra.mxu0 0
  %4177 = vmatprep.mubr.bf16.mxu0 0
  %4178 = vmatmul.mubr.bf16.gmra.mrb[0].mxu0 %v4101
  %v4179 = vpop.f32.mrb[0].mxu0
  %v4180 = vadd.f32 0.0, %v4179
  %v4181 = vpop.f32.mrb[0].mxu0
  %v4182 = vadd.f32 0.0, %v4181
  %v4183 = vpop.f32.mrb[0].mxu0
  %v4184 = vadd.f32 0.0, %v4183
  %v4185 = vpop.f32.mrb[0].mxu0
  %v4186 = vadd.f32 0.0, %v4185
  %4187 = vdwg.mxu0
  %v4188 = vadd.f32 %v3998, %v4137
  %v4189 = vadd.f32 %v3999, %v4139
  %v4190 = vadd.f32 %v4000, %v4180
  %v4191 = vadd.f32 %v4001, %v4182
  %v4192 = vadd.f32 %v4002, %v4141
  %v4193 = vadd.f32 %v4003, %v4143
  %v4194 = vadd.f32 %v4004, %v4184
  %v4195 = vadd.f32 %v4005, %v4186
  %v4196 = vxor.u32 %v4093, 2147483648
  %v4197 = vxor.u32 %v4097, 2147483648
  %v4198 = vmul.f32 %v4196, 1.442695
  %v4199 = vpow.pop %v4198
  %v4200 = vmul.f32 %v4197, 1.442695
  %v4201 = vpow.pop %v4200
  %v4202 = vadd.f32 %v4199, 1.0
  %v4203 = vadd.f32 %v4201, 1.0
  %v4204 = vrcp.pop %v4202
  %v4205 = vmul.f32 1.0, %v4204
  %v4206 = vrcp.pop %v4203
  %v4207 = vmul.f32 1.0, %v4206
  %v4208 = vxor.u32 %v4094, 2147483648
  %v4209 = vxor.u32 %v4098, 2147483648
  %v4210 = vmul.f32 %v4208, 1.442695
  %v4211 = vpow.pop %v4210
  %v4212 = vmul.f32 %v4209, 1.442695
  %v4213 = vpow.pop %v4212
  %v4214 = vadd.f32 %v4211, 1.0
  %v4215 = vadd.f32 %v4213, 1.0
  %v4216 = vrcp.pop %v4214
  %v4217 = vmul.f32 1.0, %v4216
  %v4218 = vrcp.pop %v4215
  %v4219 = vmul.f32 1.0, %v4218
  %v4220 = vtanh.pop %v4095
  %v4221 = vtanh.pop %v4099
  %v4222 = vxor.u32 %v4096, 2147483648
  %v4223 = vxor.u32 %v4100, 2147483648
  %v4224 = vmul.f32 %v4222, 1.442695
  %v4225 = vpow.pop %v4224
  %v4226 = vmul.f32 %v4223, 1.442695
  %v4227 = vpow.pop %v4226
  %v4228 = vadd.f32 %v4225, 1.0
  %v4229 = vadd.f32 %v4227, 1.0
  %v4230 = vrcp.pop %v4228
  %v4231 = vmul.f32 1.0, %v4230
  %v4232 = vrcp.pop %v4229
  %v4233 = vmul.f32 1.0, %v4232
  %v4234 = vmul.f32 %v4217, %v3936
  %v4235 = vmul.f32 %v4219, %v3937
  %v4236 = vmul.f32 %v4205, %v4220
  %v4237 = vmul.f32 %v4207, %v4221
  %v4238 = vadd.f32 %v4234, %v4236
  %v4239 = vadd.f32 %v4235, %v4237
  %v4240 = vtanh.pop %v4238
  %v4241 = vtanh.pop %v4239
  %v4242 = vmul.f32 %v4231, %v4240
  %v4243 = vmul.f32 %v4233, %v4241
  %v4244 = vsel %vm2034, %v4242, %v3934
  %v4245 = vsel %vm2035, %v4243, %v3935
  %v4246 = vsel %vm2034, %v4238, %v3936
  %v4247 = vsel %vm2035, %v4239, %v3937
  %v4248 = vxor.u32 %v4188, 2147483648
  %v4249 = vxor.u32 %v4192, 2147483648
  %v4250 = vmul.f32 %v4248, 1.442695
  %v4251 = vpow.pop %v4250
  %v4252 = vmul.f32 %v4249, 1.442695
  %v4253 = vpow.pop %v4252
  %v4254 = vadd.f32 %v4251, 1.0
  %v4255 = vadd.f32 %v4253, 1.0
  %v4256 = vrcp.pop %v4254
  %v4257 = vmul.f32 1.0, %v4256
  %v4258 = vrcp.pop %v4255
  %v4259 = vmul.f32 1.0, %v4258
  %v4260 = vxor.u32 %v4189, 2147483648
  %v4261 = vxor.u32 %v4193, 2147483648
  %v4262 = vmul.f32 %v4260, 1.442695
  %v4263 = vpow.pop %v4262
  %v4264 = vmul.f32 %v4261, 1.442695
  %v4265 = vpow.pop %v4264
  %v4266 = vadd.f32 %v4263, 1.0
  %v4267 = vadd.f32 %v4265, 1.0
  %v4268 = vrcp.pop %v4266
  %v4269 = vmul.f32 1.0, %v4268
  %v4270 = vrcp.pop %v4267
  %v4271 = vmul.f32 1.0, %v4270
  %v4272 = vtanh.pop %v4190
  %v4273 = vtanh.pop %v4194
  %v4274 = vxor.u32 %v4191, 2147483648
  %v4275 = vxor.u32 %v4195, 2147483648
  %v4276 = vmul.f32 %v4274, 1.442695
  %v4277 = vpow.pop %v4276
  %v4278 = vmul.f32 %v4275, 1.442695
  %v4279 = vpow.pop %v4278
  %v4280 = vadd.f32 %v4277, 1.0
  %v4281 = vadd.f32 %v4279, 1.0
  %v4282 = vrcp.pop %v4280
  %v4283 = vmul.f32 1.0, %v4282
  %v4284 = vrcp.pop %v4281
  %v4285 = vmul.f32 1.0, %v4284
  %v4286 = vmul.f32 %v4269, %v3988
  %v4287 = vmul.f32 %v4271, %v3989
  %v4288 = vmul.f32 %v4257, %v4272
  %v4289 = vmul.f32 %v4259, %v4273
  %v4290 = vadd.f32 %v4286, %v4288
  %v4291 = vadd.f32 %v4287, %v4289
  %v4292 = vtanh.pop %v4290
  %v4293 = vtanh.pop %v4291
  %v4294 = vmul.f32 %v4283, %v4292
  %v4295 = vmul.f32 %v4285, %v4293
  %v4296 = vsel %vm1970, %v4294, %v3986
  %v4297 = vsel %vm1971, %v4295, %v3987
  %v4298 = vsel %vm1970, %v4290, %v3988
  %v4299 = vsel %vm1971, %v4291, %v3989
  %v4300 = vld [vmem:[%s991] sm:$0xff]
  %v4301 = vld [vmem:[%s991 + $0x8] sm:$0xff]
  %v4302 = vld [vmem:[%s991 + $0x10] sm:$0xff]
  %v4303 = vld [vmem:[%s991 + $0x18] sm:$0xff]
  %v4304 = vld [vmem:[%s991 + $0x40] sm:$0xff]
  %v4305 = vld [vmem:[%s991 + $0x48] sm:$0xff]
  %v4306 = vld [vmem:[%s991 + $0x50] sm:$0xff]
  %v4307 = vld [vmem:[%s991 + $0x58] sm:$0xff]
  %v4308 = vld [vmem:[%s980 + $0x20] sm:$0xff]
  %v4309 = vld [vmem:[%s980 + $0x28] sm:$0xff]
  %v4310 = vld [vmem:[%s980 + $0x30] sm:$0xff]
  %v4311 = vld [vmem:[%s980 + $0x38] sm:$0xff]
  %v4312 = vld [vmem:[%s980 + $0x60] sm:$0xff]
  %v4313 = vld [vmem:[%s980 + $0x68] sm:$0xff]
  %v4314 = vld [vmem:[%s980 + $0x70] sm:$0xff]
  %v4315 = vld [vmem:[%s980 + $0x78] sm:$0xff]
  %v4316 = vpack.c.bf16 %v4245, %v4244
  %4317 = vmatprep.subr.bf16.mxu0 %v1129
  %4318 = vmatpush1.bf16.msra.mxu0 %v1128
  %4319 = vmatprep.subr.bf16.mxu0 %v1133
  %4320 = vmatpush1.bf16.msra.mxu0 %v1132
  %4321 = vmatprep.subr.bf16.mxu0 %v1137
  %4322 = vmatpush1.bf16.msra.mxu0 %v1136
  %4323 = vmatprep.subr.bf16.mxu0 %v1141
  %4324 = vmatpush1.bf16.msra.mxu0 %v1140
  %4325 = vmatprep.subr.bf16.mxu0 %v1145
  %4326 = vmatpush1.bf16.msra.mxu0 %v1144
  %4327 = vmatprep.subr.bf16.mxu0 %v1149
  %4328 = vmatpush1.bf16.msra.mxu0 %v1148
  %4329 = vmatprep.subr.bf16.mxu0 %v1153
  %4330 = vmatpush1.bf16.msra.mxu0 %v1152
  %4331 = vmatprep.subr.bf16.mxu0 %v1157
  %4332 = vmatpush1.bf16.msra.mxu0 %v1156
  %4333 = vmatprep.subr.bf16.mxu0 0
  %4334 = vmatpush1.bf16.msra.mxu0 0
  %4335 = vmatprep.subr.bf16.mxu0 0
  %4336 = vmatpush1.bf16.msra.mxu0 0
  %4337 = vmatprep.subr.bf16.mxu0 0
  %4338 = vmatpush1.bf16.msra.mxu0 0
  %4339 = vmatprep.subr.bf16.mxu0 0
  %4340 = vmatpush1.bf16.msra.mxu0 0
  %4341 = vmatprep.subr.bf16.mxu0 0
  %4342 = vmatpush1.bf16.msra.mxu0 0
  %4343 = vmatprep.subr.bf16.mxu0 0
  %4344 = vmatpush1.bf16.msra.mxu0 0
  %4345 = vmatprep.subr.bf16.mxu0 0
  %4346 = vmatpush1.bf16.msra.mxu0 0
  %4347 = vmatprep.subr.bf16.mxu0 0
  %4348 = vmatpush1.bf16.msra.mxu0 0
  %4349 = vmatprep.mubr.bf16.mxu0 0
  %4350 = vmatmul.mubr.bf16.gmra.mrb[0].mxu0 %v4316
  %v4351 = vpop.f32.mrb[0].mxu0
  %v4352 = vadd.f32 0.0, %v4351
  %v4353 = vpop.f32.mrb[0].mxu0
  %v4354 = vadd.f32 0.0, %v4353
  %v4355 = vpop.f32.mrb[0].mxu0
  %v4356 = vadd.f32 0.0, %v4355
  %v4357 = vpop.f32.mrb[0].mxu0
  %v4358 = vadd.f32 0.0, %v4357
  %4359 = vdwg.mxu0
  %4360 = vmatprep.subr.bf16.mxu0 %v1131
  %4361 = vmatpush1.bf16.msra.mxu0 %v1130
  %4362 = vmatprep.subr.bf16.mxu0 %v1135
  %4363 = vmatpush1.bf16.msra.mxu0 %v1134
  %4364 = vmatprep.subr.bf16.mxu0 %v1139
  %4365 = vmatpush1.bf16.msra.mxu0 %v1138
  %4366 = vmatprep.subr.bf16.mxu0 %v1143
  %4367 = vmatpush1.bf16.msra.mxu0 %v1142
  %4368 = vmatprep.subr.bf16.mxu0 %v1147
  %4369 = vmatpush1.bf16.msra.mxu0 %v1146
  %4370 = vmatprep.subr.bf16.mxu0 %v1151
  %4371 = vmatpush1.bf16.msra.mxu0 %v1150
  %4372 = vmatprep.subr.bf16.mxu0 %v1155
  %4373 = vmatpush1.bf16.msra.mxu0 %v1154
  %4374 = vmatprep.subr.bf16.mxu0 %v1159
  %4375 = vmatpush1.bf16.msra.mxu0 %v1158
  %4376 = vmatprep.subr.bf16.mxu0 0
  %4377 = vmatpush1.bf16.msra.mxu0 0
  %4378 = vmatprep.subr.bf16.mxu0 0
  %4379 = vmatpush1.bf16.msra.mxu0 0
  %4380 = vmatprep.subr.bf16.mxu0 0
  %4381 = vmatpush1.bf16.msra.mxu0 0
  %4382 = vmatprep.subr.bf16.mxu0 0
  %4383 = vmatpush1.bf16.msra.mxu0 0
  %4384 = vmatprep.subr.bf16.mxu0 0
  %4385 = vmatpush1.bf16.msra.mxu0 0
  %4386 = vmatprep.subr.bf16.mxu0 0
  %4387 = vmatpush1.bf16.msra.mxu0 0
  %4388 = vmatprep.subr.bf16.mxu0 0
  %4389 = vmatpush1.bf16.msra.mxu0 0
  %4390 = vmatprep.subr.bf16.mxu0 0
  %4391 = vmatpush1.bf16.msra.mxu0 0
  %4392 = vmatprep.mubr.bf16.mxu0 0
  %4393 = vmatmul.mubr.bf16.gmra.mrb[0].mxu0 %v4316
  %v4394 = vpop.f32.mrb[0].mxu0
  %v4395 = vadd.f32 0.0, %v4394
  %v4396 = vpop.f32.mrb[0].mxu0
  %v4397 = vadd.f32 0.0, %v4396
  %v4398 = vpop.f32.mrb[0].mxu0
  %v4399 = vadd.f32 0.0, %v4398
  %v4400 = vpop.f32.mrb[0].mxu0
  %v4401 = vadd.f32 0.0, %v4400
  %4402 = vdwg.mxu0
  %v4403 = vadd.f32 %v4300, %v4352
  %v4404 = vadd.f32 %v4301, %v4354
  %v4405 = vadd.f32 %v4302, %v4395
  %v4406 = vadd.f32 %v4303, %v4397
  %v4407 = vadd.f32 %v4304, %v4356
  %v4408 = vadd.f32 %v4305, %v4358
  %v4409 = vadd.f32 %v4306, %v4399
  %v4410 = vadd.f32 %v4307, %v4401
  %v4411 = vpack.c.bf16 %v4297, %v4296
  %4412 = vmatprep.subr.bf16.mxu0 %v1415
  %4413 = vmatpush1.bf16.msra.mxu0 %v1414
  %4414 = vmatprep.subr.bf16.mxu0 %v1419
  %4415 = vmatpush1.bf16.msra.mxu0 %v1418
  %4416 = vmatprep.subr.bf16.mxu0 %v1423
  %4417 = vmatpush1.bf16.msra.mxu0 %v1422
  %4418 = vmatprep.subr.bf16.mxu0 %v1427
  %4419 = vmatpush1.bf16.msra.mxu0 %v1426
  %4420 = vmatprep.subr.bf16.mxu0 %v1431
  %4421 = vmatpush1.bf16.msra.mxu0 %v1430
  %4422 = vmatprep.subr.bf16.mxu0 %v1435
  %4423 = vmatpush1.bf16.msra.mxu0 %v1434
  %4424 = vmatprep.subr.bf16.mxu0 %v1439
  %4425 = vmatpush1.bf16.msra.mxu0 %v1438
  %4426 = vmatprep.subr.bf16.mxu0 %v1443
  %4427 = vmatpush1.bf16.msra.mxu0 %v1442
  %4428 = vmatprep.subr.bf16.mxu0 0
  %4429 = vmatpush1.bf16.msra.mxu0 0
  %4430 = vmatprep.subr.bf16.mxu0 0
  %4431 = vmatpush1.bf16.msra.mxu0 0
  %4432 = vmatprep.subr.bf16.mxu0 0
  %4433 = vmatpush1.bf16.msra.mxu0 0
  %4434 = vmatprep.subr.bf16.mxu0 0
  %4435 = vmatpush1.bf16.msra.mxu0 0
  %4436 = vmatprep.subr.bf16.mxu0 0
  %4437 = vmatpush1.bf16.msra.mxu0 0
  %4438 = vmatprep.subr.bf16.mxu0 0
  %4439 = vmatpush1.bf16.msra.mxu0 0
  %4440 = vmatprep.subr.bf16.mxu0 0
  %4441 = vmatpush1.bf16.msra.mxu0 0
  %4442 = vmatprep.subr.bf16.mxu0 0
  %4443 = vmatpush1.bf16.msra.mxu0 0
  %4444 = vmatprep.mubr.bf16.mxu0 0
  %4445 = vmatmul.mubr.bf16.gmra.mrb[0].mxu0 %v4411
  %v4446 = vpop.f32.mrb[0].mxu0
  %v4447 = vadd.f32 0.0, %v4446
  %v4448 = vpop.f32.mrb[0].mxu0
  %v4449 = vadd.f32 0.0, %v4448
  %v4450 = vpop.f32.mrb[0].mxu0
  %v4451 = vadd.f32 0.0, %v4450
  %v4452 = vpop.f32.mrb[0].mxu0
  %v4453 = vadd.f32 0.0, %v4452
  %4454 = vdwg.mxu0
  %4455 = vmatprep.subr.bf16.mxu0 %v1417
  %4456 = vmatpush1.bf16.msra.mxu0 %v1416
  %4457 = vmatprep.subr.bf16.mxu0 %v1421
  %4458 = vmatpush1.bf16.msra.mxu0 %v1420
  %4459 = vmatprep.subr.bf16.mxu0 %v1425
  %4460 = vmatpush1.bf16.msra.mxu0 %v1424
  %4461 = vmatprep.subr.bf16.mxu0 %v1429
  %4462 = vmatpush1.bf16.msra.mxu0 %v1428
  %4463 = vmatprep.subr.bf16.mxu0 %v1433
  %4464 = vmatpush1.bf16.msra.mxu0 %v1432
  %4465 = vmatprep.subr.bf16.mxu0 %v1437
  %4466 = vmatpush1.bf16.msra.mxu0 %v1436
  %4467 = vmatprep.subr.bf16.mxu0 %v1441
  %4468 = vmatpush1.bf16.msra.mxu0 %v1440
  %4469 = vmatprep.subr.bf16.mxu0 %v1445
  %4470 = vmatpush1.bf16.msra.mxu0 %v1444
  %4471 = vmatprep.subr.bf16.mxu0 0
  %4472 = vmatpush1.bf16.msra.mxu0 0
  %4473 = vmatprep.subr.bf16.mxu0 0
  %4474 = vmatpush1.bf16.msra.mxu0 0
  %4475 = vmatprep.subr.bf16.mxu0 0
  %4476 = vmatpush1.bf16.msra.mxu0 0
  %4477 = vmatprep.subr.bf16.mxu0 0
  %4478 = vmatpush1.bf16.msra.mxu0 0
  %4479 = vmatprep.subr.bf16.mxu0 0
  %4480 = vmatpush1.bf16.msra.mxu0 0
  %4481 = vmatprep.subr.bf16.mxu0 0
  %4482 = vmatpush1.bf16.msra.mxu0 0
  %4483 = vmatprep.subr.bf16.mxu0 0
  %4484 = vmatpush1.bf16.msra.mxu0 0
  %4485 = vmatprep.subr.bf16.mxu0 0
  %4486 = vmatpush1.bf16.msra.mxu0 0
  %4487 = vmatprep.mubr.bf16.mxu0 0
  %4488 = vmatmul.mubr.bf16.gmra.mrb[0].mxu0 %v4411
  %v4489 = vpop.f32.mrb[0].mxu0
  %v4490 = vadd.f32 0.0, %v4489
  %v4491 = vpop.f32.mrb[0].mxu0
  %v4492 = vadd.f32 0.0, %v4491
  %v4493 = vpop.f32.mrb[0].mxu0
  %v4494 = vadd.f32 0.0, %v4493
  %v4495 = vpop.f32.mrb[0].mxu0
  %v4496 = vadd.f32 0.0, %v4495
  %4497 = vdwg.mxu0
  %v4498 = vadd.f32 %v4308, %v4447
  %v4499 = vadd.f32 %v4309, %v4449
  %v4500 = vadd.f32 %v4310, %v4490
  %v4501 = vadd.f32 %v4311, %v4492
  %v4502 = vadd.f32 %v4312, %v4451
  %v4503 = vadd.f32 %v4313, %v4453
  %v4504 = vadd.f32 %v4314, %v4494
  %v4505 = vadd.f32 %v4315, %v4496
  %v4506 = vxor.u32 %v4403, 2147483648
  %v4507 = vxor.u32 %v4407, 2147483648
  %v4508 = vmul.f32 %v4506, 1.442695
  %v4509 = vpow.pop %v4508
  %v4510 = vmul.f32 %v4507, 1.442695
  %v4511 = vpow.pop %v4510
  %v4512 = vadd.f32 %v4509, 1.0
  %v4513 = vadd.f32 %v4511, 1.0
  %v4514 = vrcp.pop %v4512
  %v4515 = vmul.f32 1.0, %v4514
  %v4516 = vrcp.pop %v4513
  %v4517 = vmul.f32 1.0, %v4516
  %v4518 = vxor.u32 %v4404, 2147483648
  %v4519 = vxor.u32 %v4408, 2147483648
  %v4520 = vmul.f32 %v4518, 1.442695
  %v4521 = vpow.pop %v4520
  %v4522 = vmul.f32 %v4519, 1.442695
  %v4523 = vpow.pop %v4522
  %v4524 = vadd.f32 %v4521, 1.0
  %v4525 = vadd.f32 %v4523, 1.0
  %v4526 = vrcp.pop %v4524
  %v4527 = vmul.f32 1.0, %v4526
  %v4528 = vrcp.pop %v4525
  %v4529 = vmul.f32 1.0, %v4528
  %v4530 = vtanh.pop %v4405
  %v4531 = vtanh.pop %v4409
  %v4532 = vxor.u32 %v4406, 2147483648
  %v4533 = vxor.u32 %v4410, 2147483648
  %v4534 = vmul.f32 %v4532, 1.442695
  %v4535 = vpow.pop %v4534
  %v4536 = vmul.f32 %v4533, 1.442695
  %v4537 = vpow.pop %v4536
  %v4538 = vadd.f32 %v4535, 1.0
  %v4539 = vadd.f32 %v4537, 1.0
  %v4540 = vrcp.pop %v4538
  %v4541 = vmul.f32 1.0, %v4540
  %v4542 = vrcp.pop %v4539
  %v4543 = vmul.f32 1.0, %v4542
  %v4544 = vmul.f32 %v4527, %v4246
  %v4545 = vmul.f32 %v4529, %v4247
  %v4546 = vmul.f32 %v4515, %v4530
  %v4547 = vmul.f32 %v4517, %v4531
  %v4548 = vadd.f32 %v4544, %v4546
  %v4549 = vadd.f32 %v4545, %v4547
  %v4550 = vtanh.pop %v4548
  %v4551 = vtanh.pop %v4549
  %v4552 = vmul.f32 %v4541, %v4550
  %v4553 = vmul.f32 %v4543, %v4551
  %v4554 = vsel %vm1694, %v4552, %v4244
  %v4555 = vsel %vm1695, %v4553, %v4245
  %v4556 = vxor.u32 %v4498, 2147483648
  %v4557 = vxor.u32 %v4502, 2147483648
  %v4558 = vmul.f32 %v4556, 1.442695
  %v4559 = vpow.pop %v4558
  %v4560 = vmul.f32 %v4557, 1.442695
  %v4561 = vpow.pop %v4560
  %v4562 = vadd.f32 %v4559, 1.0
  %v4563 = vadd.f32 %v4561, 1.0
  %v4564 = vrcp.pop %v4562
  %v4565 = vmul.f32 1.0, %v4564
  %v4566 = vrcp.pop %v4563
  %v4567 = vmul.f32 1.0, %v4566
  %v4568 = vxor.u32 %v4499, 2147483648
  %v4569 = vxor.u32 %v4503, 2147483648
  %v4570 = vmul.f32 %v4568, 1.442695
  %v4571 = vpow.pop %v4570
  %v4572 = vmul.f32 %v4569, 1.442695
  %v4573 = vpow.pop %v4572
  %v4574 = vadd.f32 %v4571, 1.0
  %v4575 = vadd.f32 %v4573, 1.0
  %v4576 = vrcp.pop %v4574
  %v4577 = vmul.f32 1.0, %v4576
  %v4578 = vrcp.pop %v4575
  %v4579 = vmul.f32 1.0, %v4578
  %v4580 = vtanh.pop %v4500
  %v4581 = vtanh.pop %v4504
  %v4582 = vxor.u32 %v4501, 2147483648
  %v4583 = vxor.u32 %v4505, 2147483648
  %v4584 = vmul.f32 %v4582, 1.442695
  %v4585 = vpow.pop %v4584
  %v4586 = vmul.f32 %v4583, 1.442695
  %v4587 = vpow.pop %v4586
  %v4588 = vadd.f32 %v4585, 1.0
  %v4589 = vadd.f32 %v4587, 1.0
  %v4590 = vrcp.pop %v4588
  %v4591 = vmul.f32 1.0, %v4590
  %v4592 = vrcp.pop %v4589
  %v4593 = vmul.f32 1.0, %v4592
  %v4594 = vmul.f32 %v4577, %v4298
  %v4595 = vmul.f32 %v4579, %v4299
  %v4596 = vmul.f32 %v4565, %v4580
  %v4597 = vmul.f32 %v4567, %v4581
  %v4598 = vadd.f32 %v4594, %v4596
  %v4599 = vadd.f32 %v4595, %v4597
  %v4600 = vtanh.pop %v4598
  %v4601 = vtanh.pop %v4599
  %v4602 = vmul.f32 %v4591, %v4600
  %v4603 = vmul.f32 %v4593, %v4601
  %v4604 = vsel %vm1630, %v4602, %v4296
  %v4605 = vsel %vm1631, %v4603, %v4297
  %v4606 = vpack.c.bf16 %v4554, %v4554
  %v4607 = vpack.c.bf16 %v4555, %v4555
  %v4608 = vpack.c.bf16 %v4604, %v4604
  %v4609 = vpack.c.bf16 %v4605, %v4605
  %v4610 = vld [vmem:[%s6] sm:$0xf]
  %v4611 = vld [vmem:[%s6 + $0x4] sm:$0xf]
  %v4612 = vld [vmem:[%s6 + $0x8] sm:$0xf]
  %v4613 = vld [vmem:[%s6 + $0xc] sm:$0xf]
  %v4614 = vld [vmem:[%s6 + $0x10] sm:$0xf]
  %v4615 = vld [vmem:[%s6 + $0x14] sm:$0xf]
  %v4616 = vld [vmem:[%s6 + $0x18] sm:$0xf]
  %v4617 = vld [vmem:[%s6 + $0x1c] sm:$0xf]
  %v4618 = vld [vmem:[%s6 + $0x20] sm:$0xf]
  %v4619 = vld [vmem:[%s6 + $0x24] sm:$0xf]
  %v4620 = vld [vmem:[%s6 + $0x28] sm:$0xf]
  %v4621 = vld [vmem:[%s6 + $0x2c] sm:$0xf]
  %v4622 = vld [vmem:[%s6 + $0x30] sm:$0xf]
  %v4623 = vld [vmem:[%s6 + $0x34] sm:$0xf]
  %v4624 = vld [vmem:[%s6 + $0x38] sm:$0xf]
  %v4625 = vld [vmem:[%s6 + $0x3c] sm:$0xf]
  %v4626 = vld [vmem:[%s7] sm:$0xf]
  %v4627 = vld [vmem:[%s7 + $0x4] sm:$0xf]
  %v4628 = vld [vmem:[%s7 + $0x8] sm:$0xf]
  %v4629 = vld [vmem:[%s7 + $0xc] sm:$0xf]
  %v4630 = vld [vmem:[%s7 + $0x10] sm:$0xf]
  %v4631 = vld [vmem:[%s7 + $0x14] sm:$0xf]
  %v4632 = vld [vmem:[%s7 + $0x18] sm:$0xf]
  %v4633 = vld [vmem:[%s7 + $0x1c] sm:$0xf]
  %v4634 = vld [vmem:[%s7 + $0x20] sm:$0xf]
  %v4635 = vld [vmem:[%s7 + $0x24] sm:$0xf]
  %v4636 = vld [vmem:[%s7 + $0x28] sm:$0xf]
  %v4637 = vld [vmem:[%s7 + $0x2c] sm:$0xf]
  %v4638 = vld [vmem:[%s7 + $0x30] sm:$0xf]
  %v4639 = vld [vmem:[%s7 + $0x34] sm:$0xf]
  %v4640 = vld [vmem:[%s7 + $0x38] sm:$0xf]
  %v4641 = vld [vmem:[%s7 + $0x3c] sm:$0xf]
  %v4642 = vld [vmem:[%s8] sm:$0xf]
  %v4643 = vld [vmem:[%s8 + $0x4] sm:$0xf]
  %v4644 = vld [vmem:[%s8 + $0x8] sm:$0xf]
  %v4645 = vld [vmem:[%s8 + $0xc] sm:$0xf]
  %v4646 = vld [vmem:[%s8 + $0x10] sm:$0xf]
  %v4647 = vld [vmem:[%s8 + $0x14] sm:$0xf]
  %v4648 = vld [vmem:[%s8 + $0x18] sm:$0xf]
  %v4649 = vld [vmem:[%s8 + $0x1c] sm:$0xf]
  %v4650 = vld [vmem:[%s8 + $0x20] sm:$0xf]
  %v4651 = vld [vmem:[%s8 + $0x24] sm:$0xf]
  %v4652 = vld [vmem:[%s8 + $0x28] sm:$0xf]
  %v4653 = vld [vmem:[%s8 + $0x2c] sm:$0xf]
  %v4654 = vld [vmem:[%s8 + $0x30] sm:$0xf]
  %v4655 = vld [vmem:[%s8 + $0x34] sm:$0xf]
  %v4656 = vld [vmem:[%s8 + $0x38] sm:$0xf]
  %v4657 = vld [vmem:[%s8 + $0x3c] sm:$0xf]
  %v4658 = vld [vmem:[%s9] sm:$0xf]
  %v4659 = vld [vmem:[%s9 + $0x4] sm:$0xf]
  %v4660 = vld [vmem:[%s9 + $0x8] sm:$0xf]
  %v4661 = vld [vmem:[%s9 + $0xc] sm:$0xf]
  %v4662 = vld [vmem:[%s9 + $0x10] sm:$0xf]
  %v4663 = vld [vmem:[%s9 + $0x14] sm:$0xf]
  %v4664 = vld [vmem:[%s9 + $0x18] sm:$0xf]
  %v4665 = vld [vmem:[%s9 + $0x1c] sm:$0xf]
  %v4666 = vld [vmem:[%s9 + $0x20] sm:$0xf]
  %v4667 = vld [vmem:[%s9 + $0x24] sm:$0xf]
  %v4668 = vld [vmem:[%s9 + $0x28] sm:$0xf]
  %v4669 = vld [vmem:[%s9 + $0x2c] sm:$0xf]
  %v4670 = vld [vmem:[%s9 + $0x30] sm:$0xf]
  %v4671 = vld [vmem:[%s9 + $0x34] sm:$0xf]
  %v4672 = vld [vmem:[%s9 + $0x38] sm:$0xf]
  %v4673 = vld [vmem:[%s9 + $0x3c] sm:$0xf]
  %v4674 = vld [vmem:[%s10] sm:$0x1]
  %v4691 = vunpack.c.l.b16 %v4626
  %v4692 = vunpack.c.l.b16 %v4627
  %v4693 = vunpack.c.l.b16 %v4628
  %v4694 = vunpack.c.l.b16 %v4629
  %v4695 = vunpack.c.l.b16 %v4630
  %v4696 = vunpack.c.l.b16 %v4631
  %v4697 = vunpack.c.l.b16 %v4632
  %v4698 = vunpack.c.l.b16 %v4633
  %v4699 = vunpack.c.l.b16 %v4634
  %v4700 = vunpack.c.l.b16 %v4635
  %v4701 = vunpack.c.l.b16 %v4636
  %v4702 = vunpack.c.l.b16 %v4637
  %v4703 = vunpack.c.l.b16 %v4638
  %v4704 = vunpack.c.l.b16 %v4639
  %v4705 = vunpack.c.l.b16 %v4640
  %v4706 = vunpack.c.l.b16 %v4641
  %v4707 = vpack.c.b16 %v4692, %v4691
  %v4708 = vpack.c.b16 %v4694, %v4693
  %v4709 = vpack.c.b16 %v4696, %v4695
  %v4710 = vpack.c.b16 %v4698, %v4697
  %v4711 = vpack.c.b16 %v4700, %v4699
  %v4712 = vpack.c.b16 %v4702, %v4701
  %v4713 = vpack.c.b16 %v4704, %v4703
  %v4714 = vpack.c.b16 %v4706, %v4705
  %4723 = vmatprep.subr.bf16.mxu0 0
  %4724 = vmatpush1.bf16.msra.mxu0 %v4707
  %4725 = vmatprep.subr.bf16.mxu0 0
  %4726 = vmatpush1.bf16.msra.mxu0 %v4708
  %4727 = vmatprep.subr.bf16.mxu0 0
  %4728 = vmatpush1.bf16.msra.mxu0 %v4709
  %4729 = vmatprep.subr.bf16.mxu0 0
  %4730 = vmatpush1.bf16.msra.mxu0 %v4710
  %4731 = vmatprep.subr.bf16.mxu0 0
  %4732 = vmatpush1.bf16.msra.mxu0 %v4711
  %4733 = vmatprep.subr.bf16.mxu0 0
  %4734 = vmatpush1.bf16.msra.mxu0 %v4712
  %4735 = vmatprep.subr.bf16.mxu0 0
  %4736 = vmatpush1.bf16.msra.mxu0 %v4713
  %4737 = vmatprep.subr.bf16.mxu0 0
  %4738 = vmatpush1.bf16.msra.mxu0 %v4714
  %4739 = vmatprep.subr.bf16.mxu0 0
  %4740 = vmatpush1.bf16.msra.mxu0 0
  %4741 = vmatprep.subr.bf16.mxu0 0
  %4742 = vmatpush1.bf16.msra.mxu0 0
  %4743 = vmatprep.subr.bf16.mxu0 0
  %4744 = vmatpush1.bf16.msra.mxu0 0
  %4745 = vmatprep.subr.bf16.mxu0 0
  %4746 = vmatpush1.bf16.msra.mxu0 0
  %4747 = vmatprep.subr.bf16.mxu0 0
  %4748 = vmatpush1.bf16.msra.mxu0 0
  %4749 = vmatprep.subr.bf16.mxu0 0
  %4750 = vmatpush1.bf16.msra.mxu0 0
  %4751 = vmatprep.subr.bf16.mxu0 0
  %4752 = vmatpush1.bf16.msra.mxu0 0
  %4753 = vmatprep.subr.bf16.mxu0 0
  %4754 = vmatpush1.bf16.msra.mxu0 0
  %4755 = vmatprep.mubr.bf16.mxu0 0
  %4756 = vmatmul.mubr.bf16.gmra.mrb[0].mxu0 %v4608
  %v4757 = vpop.f32.mrb[0].mxu0
  %v4758 = vadd.f32 0.0, %v4757
  %v4759 = vpop.f32.mrb[0].mxu0
  %v4760 = vpop.f32.mrb[0].mxu0
  %v4761 = vpop.f32.mrb[0].mxu0
  %4762 = vdwg.mxu0
  %v4779 = vunpack.c.l.b16 %v4610
  %v4780 = vunpack.c.l.b16 %v4611
  %v4781 = vunpack.c.l.b16 %v4612
  %v4782 = vunpack.c.l.b16 %v4613
  %v4783 = vunpack.c.l.b16 %v4614
  %v4784 = vunpack.c.l.b16 %v4615
  %v4785 = vunpack.c.l.b16 %v4616
  %v4786 = vunpack.c.l.b16 %v4617
  %v4787 = vunpack.c.l.b16 %v4618
  %v4788 = vunpack.c.l.b16 %v4619
  %v4789 = vunpack.c.l.b16 %v4620
  %v4790 = vunpack.c.l.b16 %v4621
  %v4791 = vunpack.c.l.b16 %v4622
  %v4792 = vunpack.c.l.b16 %v4623
  %v4793 = vunpack.c.l.b16 %v4624
  %v4794 = vunpack.c.l.b16 %v4625
  %v4795 = vpack.c.b16 %v4780, %v4779
  %v4796 = vpack.c.b16 %v4782, %v4781
  %v4797 = vpack.c.b16 %v4784, %v4783
  %v4798 = vpack.c.b16 %v4786, %v4785
  %v4799 = vpack.c.b16 %v4788, %v4787
  %v4800 = vpack.c.b16 %v4790, %v4789
  %v4801 = vpack.c.b16 %v4792, %v4791
  %v4802 = vpack.c.b16 %v4794, %v4793
  %4811 = vmatprep.subr.bf16.mxu0 0
  %4812 = vmatpush1.bf16.msra.mxu0 %v4795
  %4813 = vmatprep.subr.bf16.mxu0 0
  %4814 = vmatpush1.bf16.msra.mxu0 %v4796
  %4815 = vmatprep.subr.bf16.mxu0 0
  %4816 = vmatpush1.bf16.msra.mxu0 %v4797
  %4817 = vmatprep.subr.bf16.mxu0 0
  %4818 = vmatpush1.bf16.msra.mxu0 %v4798
  %4819 = vmatprep.subr.bf16.mxu0 0
  %4820 = vmatpush1.bf16.msra.mxu0 %v4799
  %4821 = vmatprep.subr.bf16.mxu0 0
  %4822 = vmatpush1.bf16.msra.mxu0 %v4800
  %4823 = vmatprep.subr.bf16.mxu0 0
  %4824 = vmatpush1.bf16.msra.mxu0 %v4801
  %4825 = vmatprep.subr.bf16.mxu0 0
  %4826 = vmatpush1.bf16.msra.mxu0 %v4802
  %4827 = vmatprep.subr.bf16.mxu0 0
  %4828 = vmatpush1.bf16.msra.mxu0 0
  %4829 = vmatprep.subr.bf16.mxu0 0
  %4830 = vmatpush1.bf16.msra.mxu0 0
  %4831 = vmatprep.subr.bf16.mxu0 0
  %4832 = vmatpush1.bf16.msra.mxu0 0
  %4833 = vmatprep.subr.bf16.mxu0 0
  %4834 = vmatpush1.bf16.msra.mxu0 0
  %4835 = vmatprep.subr.bf16.mxu0 0
  %4836 = vmatpush1.bf16.msra.mxu0 0
  %4837 = vmatprep.subr.bf16.mxu0 0
  %4838 = vmatpush1.bf16.msra.mxu0 0
  %4839 = vmatprep.subr.bf16.mxu0 0
  %4840 = vmatpush1.bf16.msra.mxu0 0
  %4841 = vmatprep.subr.bf16.mxu0 0
  %4842 = vmatpush1.bf16.msra.mxu0 0
  %4843 = vmatprep.mubr.bf16.mxu0 0
  %4844 = vmatmul.mubr.bf16.gmra.mrb[0].mxu0 %v4606
  %v4845 = vpop.f32.mrb[0].mxu0
  %v4846 = vadd.f32 %v4758, %v4845
  %v4847 = vpop.f32.mrb[0].mxu0
  %v4848 = vpop.f32.mrb[0].mxu0
  %v4849 = vpop.f32.mrb[0].mxu0
  %4850 = vdwg.mxu0
  %v4867 = vunpack.c.l.b16 %v4642
  %v4868 = vunpack.c.l.b16 %v4643
  %v4869 = vunpack.c.l.b16 %v4644
  %v4870 = vunpack.c.l.b16 %v4645
  %v4871 = vunpack.c.l.b16 %v4646
  %v4872 = vunpack.c.l.b16 %v4647
  %v4873 = vunpack.c.l.b16 %v4648
  %v4874 = vunpack.c.l.b16 %v4649
  %v4875 = vunpack.c.l.b16 %v4650
  %v4876 = vunpack.c.l.b16 %v4651
  %v4877 = vunpack.c.l.b16 %v4652
  %v4878 = vunpack.c.l.b16 %v4653
  %v4879 = vunpack.c.l.b16 %v4654
  %v4880 = vunpack.c.l.b16 %v4655
  %v4881 = vunpack.c.l.b16 %v4656
  %v4882 = vunpack.c.l.b16 %v4657
  %v4883 = vpack.c.b16 %v4868, %v4867
  %v4884 = vpack.c.b16 %v4870, %v4869
  %v4885 = vpack.c.b16 %v4872, %v4871
  %v4886 = vpack.c.b16 %v4874, %v4873
  %v4887 = vpack.c.b16 %v4876, %v4875
  %v4888 = vpack.c.b16 %v4878, %v4877
  %v4889 = vpack.c.b16 %v4880, %v4879
  %v4890 = vpack.c.b16 %v4882, %v4881
  %4899 = vmatprep.subr.bf16.mxu0 0
  %4900 = vmatpush1.bf16.msra.mxu0 %v4883
  %4901 = vmatprep.subr.bf16.mxu0 0
  %4902 = vmatpush1.bf16.msra.mxu0 %v4884
  %4903 = vmatprep.subr.bf16.mxu0 0
  %4904 = vmatpush1.bf16.msra.mxu0 %v4885
  %4905 = vmatprep.subr.bf16.mxu0 0
  %4906 = vmatpush1.bf16.msra.mxu0 %v4886
  %4907 = vmatprep.subr.bf16.mxu0 0
  %4908 = vmatpush1.bf16.msra.mxu0 %v4887
  %4909 = vmatprep.subr.bf16.mxu0 0
  %4910 = vmatpush1.bf16.msra.mxu0 %v4888
  %4911 = vmatprep.subr.bf16.mxu0 0
  %4912 = vmatpush1.bf16.msra.mxu0 %v4889
  %4913 = vmatprep.subr.bf16.mxu0 0
  %4914 = vmatpush1.bf16.msra.mxu0 %v4890
  %4915 = vmatprep.subr.bf16.mxu0 0
  %4916 = vmatpush1.bf16.msra.mxu0 0
  %4917 = vmatprep.subr.bf16.mxu0 0
  %4918 = vmatpush1.bf16.msra.mxu0 0
  %4919 = vmatprep.subr.bf16.mxu0 0
  %4920 = vmatpush1.bf16.msra.mxu0 0
  %4921 = vmatprep.subr.bf16.mxu0 0
  %4922 = vmatpush1.bf16.msra.mxu0 0
  %4923 = vmatprep.subr.bf16.mxu0 0
  %4924 = vmatpush1.bf16.msra.mxu0 0
  %4925 = vmatprep.subr.bf16.mxu0 0
  %4926 = vmatpush1.bf16.msra.mxu0 0
  %4927 = vmatprep.subr.bf16.mxu0 0
  %4928 = vmatpush1.bf16.msra.mxu0 0
  %4929 = vmatprep.subr.bf16.mxu0 0
  %4930 = vmatpush1.bf16.msra.mxu0 0
  %4931 = vmatprep.mubr.bf16.mxu0 0
  %4932 = vmatmul.mubr.bf16.gmra.mrb[0].mxu0 %v4607
  %v4933 = vpop.f32.mrb[0].mxu0
  %v4934 = vadd.f32 0.0, %v4933
  %v4935 = vpop.f32.mrb[0].mxu0
  %v4936 = vpop.f32.mrb[0].mxu0
  %v4937 = vpop.f32.mrb[0].mxu0
  %4938 = vdwg.mxu0
  %v4939 = vadd.f32 %v4846, %v4934
  %v4956 = vunpack.c.l.b16 %v4658
  %v4957 = vunpack.c.l.b16 %v4659
  %v4958 = vunpack.c.l.b16 %v4660
  %v4959 = vunpack.c.l.b16 %v4661
  %v4960 = vunpack.c.l.b16 %v4662
  %v4961 = vunpack.c.l.b16 %v4663
  %v4962 = vunpack.c.l.b16 %v4664
  %v4963 = vunpack.c.l.b16 %v4665
  %v4964 = vunpack.c.l.b16 %v4666
  %v4965 = vunpack.c.l.b16 %v4667
  %v4966 = vunpack.c.l.b16 %v4668
  %v4967 = vunpack.c.l.b16 %v4669
  %v4968 = vunpack.c.l.b16 %v4670
  %v4969 = vunpack.c.l.b16 %v4671
  %v4970 = vunpack.c.l.b16 %v4672
  %v4971 = vunpack.c.l.b16 %v4673
  %v4972 = vpack.c.b16 %v4957, %v4956
  %v4973 = vpack.c.b16 %v4959, %v4958
  %v4974 = vpack.c.b16 %v4961, %v4960
  %v4975 = vpack.c.b16 %v4963, %v4962
  %v4976 = vpack.c.b16 %v4965, %v4964
  %v4977 = vpack.c.b16 %v4967, %v4966
  %v4978 = vpack.c.b16 %v4969, %v4968
  %v4979 = vpack.c.b16 %v4971, %v4970
  %4988 = vmatprep.subr.bf16.mxu0 0
  %4989 = vmatpush1.bf16.msra.mxu0 %v4972
  %4990 = vmatprep.subr.bf16.mxu0 0
  %4991 = vmatpush1.bf16.msra.mxu0 %v4973
  %4992 = vmatprep.subr.bf16.mxu0 0
  %4993 = vmatpush1.bf16.msra.mxu0 %v4974
  %4994 = vmatprep.subr.bf16.mxu0 0
  %4995 = vmatpush1.bf16.msra.mxu0 %v4975
  %4996 = vmatprep.subr.bf16.mxu0 0
  %4997 = vmatpush1.bf16.msra.mxu0 %v4976
  %4998 = vmatprep.subr.bf16.mxu0 0
  %4999 = vmatpush1.bf16.msra.mxu0 %v4977
  %5000 = vmatprep.subr.bf16.mxu0 0
  %5001 = vmatpush1.bf16.msra.mxu0 %v4978
  %5002 = vmatprep.subr.bf16.mxu0 0
  %5003 = vmatpush1.bf16.msra.mxu0 %v4979
  %5004 = vmatprep.subr.bf16.mxu0 0
  %5005 = vmatpush1.bf16.msra.mxu0 0
  %5006 = vmatprep.subr.bf16.mxu0 0
  %5007 = vmatpush1.bf16.msra.mxu0 0
  %5008 = vmatprep.subr.bf16.mxu0 0
  %5009 = vmatpush1.bf16.msra.mxu0 0
  %5010 = vmatprep.subr.bf16.mxu0 0
  %5011 = vmatpush1.bf16.msra.mxu0 0
  %5012 = vmatprep.subr.bf16.mxu0 0
  %5013 = vmatpush1.bf16.msra.mxu0 0
  %5014 = vmatprep.subr.bf16.mxu0 0
  %5015 = vmatpush1.bf16.msra.mxu0 0
  %5016 = vmatprep.subr.bf16.mxu0 0
  %5017 = vmatpush1.bf16.msra.mxu0 0
  %5018 = vmatprep.subr.bf16.mxu0 0
  %5019 = vmatpush1.bf16.msra.mxu0 0
  %5020 = vmatprep.mubr.bf16.mxu0 0
  %5021 = vmatmul.mubr.bf16.gmra.mrb[0].mxu0 %v4609
  %v5022 = vpop.f32.mrb[0].mxu0
  %v5023 = vadd.f32 0.0, %v5022
  %v5024 = vpop.f32.mrb[0].mxu0
  %v5025 = vpop.f32.mrb[0].mxu0
  %v5026 = vpop.f32.mrb[0].mxu0
  %5027 = vdwg.mxu0
  %v5028 = vadd.f32 %v4939, %v5023
  %v5030 = vlaneseq
  %v5031 = vshrl.u32 %v5030, 7
  %v5032 = vsub.s32 0, %v5031
  %v5033 = vrot.slane %v4674, %v5032
  %v5035 = vadd.f32 %v5028, %v5033
  %5036 = vmatprep.subr.bf16.mxu0 0
  %5037 = vmatpush1.bf16.msra.mxu0 %v4707
  %5038 = vmatprep.subr.bf16.mxu0 0
  %5039 = vmatpush1.bf16.msra.mxu0 %v4708
  %5040 = vmatprep.subr.bf16.mxu0 0
  %5041 = vmatpush1.bf16.msra.mxu0 %v4709
  %5042 = vmatprep.subr.bf16.mxu0 0
  %5043 = vmatpush1.bf16.msra.mxu0 %v4710
  %5044 = vmatprep.subr.bf16.mxu0 0
  %5045 = vmatpush1.bf16.msra.mxu0 %v4711
  %5046 = vmatprep.subr.bf16.mxu0 0
  %5047 = vmatpush1.bf16.msra.mxu0 %v4712
  %5048 = vmatprep.subr.bf16.mxu0 0
  %5049 = vmatpush1.bf16.msra.mxu0 %v4713
  %5050 = vmatprep.subr.bf16.mxu0 0
  %5051 = vmatpush1.bf16.msra.mxu0 %v4714
  %5052 = vmatprep.subr.bf16.mxu0 0
  %5053 = vmatpush1.bf16.msra.mxu0 0
  %5054 = vmatprep.subr.bf16.mxu0 0
  %5055 = vmatpush1.bf16.msra.mxu0 0
  %5056 = vmatprep.subr.bf16.mxu0 0
  %5057 = vmatpush1.bf16.msra.mxu0 0
  %5058 = vmatprep.subr.bf16.mxu0 0
  %5059 = vmatpush1.bf16.msra.mxu0 0
  %5060 = vmatprep.subr.bf16.mxu0 0
  %5061 = vmatpush1.bf16.msra.mxu0 0
  %5062 = vmatprep.subr.bf16.mxu0 0
  %5063 = vmatpush1.bf16.msra.mxu0 0
  %5064 = vmatprep.subr.bf16.mxu0 0
  %5065 = vmatpush1.bf16.msra.mxu0 0
  %5066 = vmatprep.subr.bf16.mxu0 0
  %5067 = vmatpush1.bf16.msra.mxu0 0
  %5068 = vmatprep.mubr.bf16.mxu0 0
  %5069 = vmatmul.mubr.bf16.gmra.mrb[0].mxu0 %v4609
  %v5070 = vpop.f32.mrb[0].mxu0
  %v5071 = vadd.f32 0.0, %v5070
  %v5072 = vpop.f32.mrb[0].mxu0
  %v5073 = vpop.f32.mrb[0].mxu0
  %v5074 = vpop.f32.mrb[0].mxu0
  %5075 = vdwg.mxu0
  %5076 = vmatprep.subr.bf16.mxu0 0
  %5077 = vmatpush1.bf16.msra.mxu0 %v4795
  %5078 = vmatprep.subr.bf16.mxu0 0
  %5079 = vmatpush1.bf16.msra.mxu0 %v4796
  %5080 = vmatprep.subr.bf16.mxu0 0
  %5081 = vmatpush1.bf16.msra.mxu0 %v4797
  %5082 = vmatprep.subr.bf16.mxu0 0
  %5083 = vmatpush1.bf16.msra.mxu0 %v4798
  %5084 = vmatprep.subr.bf16.mxu0 0
  %5085 = vmatpush1.bf16.msra.mxu0 %v4799
  %5086 = vmatprep.subr.bf16.mxu0 0
  %5087 = vmatpush1.bf16.msra.mxu0 %v4800
  %5088 = vmatprep.subr.bf16.mxu0 0
  %5089 = vmatpush1.bf16.msra.mxu0 %v4801
  %5090 = vmatprep.subr.bf16.mxu0 0
  %5091 = vmatpush1.bf16.msra.mxu0 %v4802
  %5092 = vmatprep.subr.bf16.mxu0 0
  %5093 = vmatpush1.bf16.msra.mxu0 0
  %5094 = vmatprep.subr.bf16.mxu0 0
  %5095 = vmatpush1.bf16.msra.mxu0 0
  %5096 = vmatprep.subr.bf16.mxu0 0
  %5097 = vmatpush1.bf16.msra.mxu0 0
  %5098 = vmatprep.subr.bf16.mxu0 0
  %5099 = vmatpush1.bf16.msra.mxu0 0
  %5100 = vmatprep.subr.bf16.mxu0 0
  %5101 = vmatpush1.bf16.msra.mxu0 0
  %5102 = vmatprep.subr.bf16.mxu0 0
  %5103 = vmatpush1.bf16.msra.mxu0 0
  %5104 = vmatprep.subr.bf16.mxu0 0
  %5105 = vmatpush1.bf16.msra.mxu0 0
  %5106 = vmatprep.subr.bf16.mxu0 0
  %5107 = vmatpush1.bf16.msra.mxu0 0
  %5108 = vmatprep.mubr.bf16.mxu0 0
  %5109 = vmatmul.mubr.bf16.gmra.mrb[0].mxu0 %v4607
  %v5110 = vpop.f32.mrb[0].mxu0
  %v5111 = vadd.f32 %v5071, %v5110
  %v5112 = vpop.f32.mrb[0].mxu0
  %v5113 = vpop.f32.mrb[0].mxu0
  %v5114 = vpop.f32.mrb[0].mxu0
  %5115 = vdwg.mxu0
  %5116 = vmatprep.subr.bf16.mxu0 0
  %5117 = vmatpush1.bf16.msra.mxu0 %v4883
  %5118 = vmatprep.subr.bf16.mxu0 0
  %5119 = vmatpush1.bf16.msra.mxu0 %v4884
  %5120 = vmatprep.subr.bf16.mxu0 0
  %5121 = vmatpush1.bf16.msra.mxu0 %v4885
  %5122 = vmatprep.subr.bf16.mxu0 0
  %5123 = vmatpush1.bf16.msra.mxu0 %v4886
  %5124 = vmatprep.subr.bf16.mxu0 0
  %5125 = vmatpush1.bf16.msra.mxu0 %v4887
  %5126 = vmatprep.subr.bf16.mxu0 0
  %5127 = vmatpush1.bf16.msra.mxu0 %v4888
  %5128 = vmatprep.subr.bf16.mxu0 0
  %5129 = vmatpush1.bf16.msra.mxu0 %v4889
  %5130 = vmatprep.subr.bf16.mxu0 0
  %5131 = vmatpush1.bf16.msra.mxu0 %v4890
  %5132 = vmatprep.subr.bf16.mxu0 0
  %5133 = vmatpush1.bf16.msra.mxu0 0
  %5134 = vmatprep.subr.bf16.mxu0 0
  %5135 = vmatpush1.bf16.msra.mxu0 0
  %5136 = vmatprep.subr.bf16.mxu0 0
  %5137 = vmatpush1.bf16.msra.mxu0 0
  %5138 = vmatprep.subr.bf16.mxu0 0
  %5139 = vmatpush1.bf16.msra.mxu0 0
  %5140 = vmatprep.subr.bf16.mxu0 0
  %5141 = vmatpush1.bf16.msra.mxu0 0
  %5142 = vmatprep.subr.bf16.mxu0 0
  %5143 = vmatpush1.bf16.msra.mxu0 0
  %5144 = vmatprep.subr.bf16.mxu0 0
  %5145 = vmatpush1.bf16.msra.mxu0 0
  %5146 = vmatprep.subr.bf16.mxu0 0
  %5147 = vmatpush1.bf16.msra.mxu0 0
  %5148 = vmatprep.mubr.bf16.mxu0 0
  %5149 = vmatmul.mubr.bf16.gmra.mrb[0].mxu0 %v4606
  %v5150 = vpop.f32.mrb[0].mxu0
  %v5151 = vadd.f32 0.0, %v5150
  %v5152 = vpop.f32.mrb[0].mxu0
  %v5153 = vpop.f32.mrb[0].mxu0
  %v5154 = vpop.f32.mrb[0].mxu0
  %5155 = vdwg.mxu0
  %v5156 = vadd.f32 %v5111, %v5151
  %5157 = vmatprep.subr.bf16.mxu0 0
  %5158 = vmatpush1.bf16.msra.mxu0 %v4972
  %5159 = vmatprep.subr.bf16.mxu0 0
  %5160 = vmatpush1.bf16.msra.mxu0 %v4973
  %5161 = vmatprep.subr.bf16.mxu0 0
  %5162 = vmatpush1.bf16.msra.mxu0 %v4974
  %5163 = vmatprep.subr.bf16.mxu0 0
  %5164 = vmatpush1.bf16.msra.mxu0 %v4975
  %5165 = vmatprep.subr.bf16.mxu0 0
  %5166 = vmatpush1.bf16.msra.mxu0 %v4976
  %5167 = vmatprep.subr.bf16.mxu0 0
  %5168 = vmatpush1.bf16.msra.mxu0 %v4977
  %5169 = vmatprep.subr.bf16.mxu0 0
  %5170 = vmatpush1.bf16.msra.mxu0 %v4978
  %5171 = vmatprep.subr.bf16.mxu0 0
  %5172 = vmatpush1.bf16.msra.mxu0 %v4979
  %5173 = vmatprep.subr.bf16.mxu0 0
  %5174 = vmatpush1.bf16.msra.mxu0 0
  %5175 = vmatprep.subr.bf16.mxu0 0
  %5176 = vmatpush1.bf16.msra.mxu0 0
  %5177 = vmatprep.subr.bf16.mxu0 0
  %5178 = vmatpush1.bf16.msra.mxu0 0
  %5179 = vmatprep.subr.bf16.mxu0 0
  %5180 = vmatpush1.bf16.msra.mxu0 0
  %5181 = vmatprep.subr.bf16.mxu0 0
  %5182 = vmatpush1.bf16.msra.mxu0 0
  %5183 = vmatprep.subr.bf16.mxu0 0
  %5184 = vmatpush1.bf16.msra.mxu0 0
  %5185 = vmatprep.subr.bf16.mxu0 0
  %5186 = vmatpush1.bf16.msra.mxu0 0
  %5187 = vmatprep.subr.bf16.mxu0 0
  %5188 = vmatpush1.bf16.msra.mxu0 0
  %5189 = vmatprep.mubr.bf16.mxu0 0
  %5190 = vmatmul.mubr.bf16.gmra.mrb[0].mxu0 %v4608
  %v5191 = vpop.f32.mrb[0].mxu0
  %v5192 = vadd.f32 0.0, %v5191
  %v5193 = vpop.f32.mrb[0].mxu0
  %v5194 = vpop.f32.mrb[0].mxu0
  %v5195 = vpop.f32.mrb[0].mxu0
  %5196 = vdwg.mxu0
  %v5197 = vadd.f32 %v5156, %v5192
  %v5198 = vadd.f32 %v5197, %v5033
  %v5199 = vmax.f32 %v5035, 0.0
  %v5200 = vmax.f32 %v5198, 0.0
  %v5201 = vadd.f32 %v5199, %v5200
  %v5202 = vmul.f32 %v5201, 0.5
  %v5203 = vpack.c.bf16 %v5202, %v5202
  %v5204 = vld [vmem:[%s11] sm:$0xf]
  %v5205 = vld [vmem:[%s11 + $0x4] sm:$0xf]
  %v5206 = vld [vmem:[%s11 + $0x8] sm:$0xf]
  %v5207 = vld [vmem:[%s11 + $0xc] sm:$0xf]
  %v5208 = vld [vmem:[%s11 + $0x10] sm:$0xf]
  %v5209 = vld [vmem:[%s11 + $0x14] sm:$0xf]
  %v5210 = vld [vmem:[%s11 + $0x18] sm:$0xf]
  %v5211 = vld [vmem:[%s11 + $0x1c] sm:$0xf]
  %v5212 = vld [vmem:[%s11 + $0x20] sm:$0xf]
  %v5213 = vld [vmem:[%s11 + $0x24] sm:$0xf]
  %v5214 = vld [vmem:[%s11 + $0x28] sm:$0xf]
  %v5215 = vld [vmem:[%s11 + $0x2c] sm:$0xf]
  %v5216 = vld [vmem:[%s11 + $0x30] sm:$0xf]
  %v5217 = vld [vmem:[%s11 + $0x34] sm:$0xf]
  %v5218 = vld [vmem:[%s11 + $0x38] sm:$0xf]
  %v5219 = vld [vmem:[%s11 + $0x3c] sm:$0xf]
  %v5220 = vld [vmem:[%s12] sm:$0x1]
  %v5222 = vlaneseq
  %v5223 = vshrl.u32 %v5222, 7
  %v5224 = vsub.s32 0, %v5223
  %v5225 = vrot.slane %v5220, %v5224
  %v5243 = vunpack.c.l.b16 %v5204
  %v5244 = vunpack.c.l.b16 %v5205
  %v5245 = vunpack.c.l.b16 %v5206
  %v5246 = vunpack.c.l.b16 %v5207
  %v5247 = vunpack.c.l.b16 %v5208
  %v5248 = vunpack.c.l.b16 %v5209
  %v5249 = vunpack.c.l.b16 %v5210
  %v5250 = vunpack.c.l.b16 %v5211
  %v5251 = vunpack.c.l.b16 %v5212
  %v5252 = vunpack.c.l.b16 %v5213
  %v5253 = vunpack.c.l.b16 %v5214
  %v5254 = vunpack.c.l.b16 %v5215
  %v5255 = vunpack.c.l.b16 %v5216
  %v5256 = vunpack.c.l.b16 %v5217
  %v5257 = vunpack.c.l.b16 %v5218
  %v5258 = vunpack.c.l.b16 %v5219
  %v5259 = vpack.c.b16 %v5244, %v5243
  %v5260 = vpack.c.b16 %v5246, %v5245
  %v5261 = vpack.c.b16 %v5248, %v5247
  %v5262 = vpack.c.b16 %v5250, %v5249
  %v5263 = vpack.c.b16 %v5252, %v5251
  %v5264 = vpack.c.b16 %v5254, %v5253
  %v5265 = vpack.c.b16 %v5256, %v5255
  %v5266 = vpack.c.b16 %v5258, %v5257
  %5275 = vmatprep.subr.bf16.mxu0 0
  %5276 = vmatpush1.bf16.msra.mxu0 %v5259
  %5277 = vmatprep.subr.bf16.mxu0 0
  %5278 = vmatpush1.bf16.msra.mxu0 %v5260
  %5279 = vmatprep.subr.bf16.mxu0 0
  %5280 = vmatpush1.bf16.msra.mxu0 %v5261
  %5281 = vmatprep.subr.bf16.mxu0 0
  %5282 = vmatpush1.bf16.msra.mxu0 %v5262
  %5283 = vmatprep.subr.bf16.mxu0 0
  %5284 = vmatpush1.bf16.msra.mxu0 %v5263
  %5285 = vmatprep.subr.bf16.mxu0 0
  %5286 = vmatpush1.bf16.msra.mxu0 %v5264
  %5287 = vmatprep.subr.bf16.mxu0 0
  %5288 = vmatpush1.bf16.msra.mxu0 %v5265
  %5289 = vmatprep.subr.bf16.mxu0 0
  %5290 = vmatpush1.bf16.msra.mxu0 %v5266
  %5291 = vmatprep.subr.bf16.mxu0 0
  %5292 = vmatpush1.bf16.msra.mxu0 0
  %5293 = vmatprep.subr.bf16.mxu0 0
  %5294 = vmatpush1.bf16.msra.mxu0 0
  %5295 = vmatprep.subr.bf16.mxu0 0
  %5296 = vmatpush1.bf16.msra.mxu0 0
  %5297 = vmatprep.subr.bf16.mxu0 0
  %5298 = vmatpush1.bf16.msra.mxu0 0
  %5299 = vmatprep.subr.bf16.mxu0 0
  %5300 = vmatpush1.bf16.msra.mxu0 0
  %5301 = vmatprep.subr.bf16.mxu0 0
  %5302 = vmatpush1.bf16.msra.mxu0 0
  %5303 = vmatprep.subr.bf16.mxu0 0
  %5304 = vmatpush1.bf16.msra.mxu0 0
  %5305 = vmatprep.subr.bf16.mxu0 0
  %5306 = vmatpush1.bf16.msra.mxu0 0
  %5307 = vmatprep.mubr.bf16.mxu0 0
  %5308 = vmatmul.mubr.bf16.gmra.mrb[0].mxu0 %v5203
  %v5309 = vpop.f32.mrb[0].mxu0
  %v5310 = vadd.f32 %v5225, %v5309
  %v5311 = vpop.f32.mrb[0].mxu0
  %v5312 = vpop.f32.mrb[0].mxu0
  %v5313 = vpop.f32.mrb[0].mxu0
  %5314 = vdwg.mxu0
  %5315 = vst [vmem:[%s13] sm:$0xff] %v5310
  // Predicated region
  $region54: #{siamese_lstm_forward.1} parent=0 // pred_check
    _
  $region55: #{siamese_lstm_forward.1} parent=0 // pred_check_branch
    %5317 = sbr.rel (0) target = $region57
  $region56: #{siamese_lstm_forward.1} parent=0 // pred_region
    _
  $region57: #{siamese_lstm_forward.1} parent=0 // pred_fallthru
    _
  // Predicated region
  $region58: #{siamese_lstm_forward.1} parent=0 // pred_check
    _
  $region59: #{siamese_lstm_forward.1} parent=0 // pred_check_branch
    %5319 = sbr.rel (0) target = $region61
  $region60: #{siamese_lstm_forward.1} parent=0 // pred_region
    _
  $region61: #{siamese_lstm_forward.1} parent=0 // pred_fallthru
    _

</llo_original>
